<compile_context>
chip_gen: v6e
topology: v6e:2x2x1
jax: 0.10.0
libtpu: 0.0.40
codegen_flags: <defaults>
</compile_context>

<pallas_src>
import functools

import jax
import jax.numpy as jnp
from jax.experimental import pallas as pl
from jax.experimental.pallas import tpu as pltpu


def _graph_encoder_kernel(
    a_ref, node_ref, edget_ref,
    nf1w_ref, nf1b_ref, nf2w_ref, nf2b_ref,
    ef1wt_ref, ef1bt_ref, ef2wt_ref, ef2bt_ref,
    gcw_ref, cbw_ref, cbb_ref,
    lf1w_ref, lf1b_ref, lf2w_ref, lf2b_ref,
    out_ref, *, num_layers, graphs_per_block):
  f32, bf16 = jnp.float32, jnp.bfloat16
  dot = functools.partial(jnp.dot, preferred_element_type=f32)

  GN, N = a_ref.shape                    # stacked node rows, nodes per graph
  G = GN // N
  E, GNN = edget_ref.shape               # edge features, stacked pair count
  H = nf2w_ref.shape[-1]

  # ---- node MLP over all G*N rows at once (large MXU M dimension) ----------
  h = jnp.tanh(dot(node_ref[...], nf1w_ref[...]) + nf1b_ref[...])           # (GN, 256)
  h = jnp.tanh(dot(h.astype(bf16), nf2w_ref[...]) + nf2b_ref[...])          # (GN, H)

  # ---- edge MLP, transposed: pair index lives in lanes ----------------------
  # Layer 1 (K == E == 4) as E broadcast-FMAs on the VPU: no MXU pass wasted on
  # a K=4 contraction, and the edge input block stays lane-dense in VMEM.
  eh1t = jnp.broadcast_to(ef1bt_ref[...], (ef1bt_ref.shape[0], GNN)).astype(f32)
  for e in range(E):
    eh1t = eh1t + (ef1wt_ref[:, e:e + 1].astype(f32) *
                   edget_ref[e:e + 1, :].astype(f32))
  eh1t = jnp.tanh(eh1t)                                                     # (256, GNN)
  # Layer 2 on the MXU: output dimension is the full GNN lane width.
  eh2t = jnp.tanh(dot(ef2wt_ref[...], eh1t.astype(bf16)) + ef2bt_ref[...])  # (H, GNN)
  # Back to row orientation (small XLU transpose), then channel-sum:
  #   einsum('bijc,bjk->bik', edge_hidden, x) == (sum_c edge_hidden) @ x
  eh2 = eh2t.T                                                              # (GNN, H)
  e_stack = jnp.sum(eh2.reshape(GN, N, H), axis=-1)                         # (GN, N) f32

  # ---- block-diagonal per-superblock operators (built once, reused/layer) ---
  # Graphs are grouped into superblocks of <= 128 rows; for each we build
  # (SBN, SBN) block-diagonal A_norm / E_sum so each layer's conv and msg are
  # a single matmul instead of 2*G tiny (N,N)@(N,H) matmuls with MXU drains.
  a_rows = a_ref[...]                                                       # (GN, N) bf16
  superblocks = []
  for g0 in range(0, G, graphs_per_block):
    sg = min(graphs_per_block, G - g0)
    sbn = sg * N
    rs = slice(g0 * N, g0 * N + sbn)
    a_blk = a_rows[rs, :]                                                   # (SBN, N)
    e_blk = e_stack[rs, :].astype(bf16)                                     # (SBN, N)
    if sg == 1:
      a_bd, e_bd = a_blk, e_blk
    else:
      # Replication matrix R[j, c] = 1 iff c == j + g*N, built purely from
      # iota comparisons (no integer div/mod, no lane concatenation).
      rj = jax.lax.broadcasted_iota(jnp.int32, (N, sbn), 0)
      rc = jax.lax.broadcasted_iota(jnp.int32, (N, sbn), 1)
      rsel = jnp.zeros((N, sbn), f32)
      for g in range(sg):
        rsel = rsel + (rc == rj + g * N).astype(f32)
      rsel = rsel.astype(bf16)
      # Same-graph block mask from threshold sums (== floor-division by N).
      ri = jax.lax.broadcasted_iota(jnp.int32, (sbn, sbn), 0)
      ci = jax.lax.broadcasted_iota(jnp.int32, (sbn, sbn), 1)
      rgid = jnp.zeros((sbn, sbn), jnp.int32)
      cgid = jnp.zeros((sbn, sbn), jnp.int32)
      for g in range(1, sg):
        rgid = rgid + (ri >= g * N).astype(jnp.int32)
        cgid = cgid + (ci >= g * N).astype(jnp.int32)
      mask = rgid == cgid
      a_bd = jnp.where(mask, dot(a_blk, rsel), 0.0).astype(bf16)            # (SBN, SBN)
      e_bd = jnp.where(mask, dot(e_blk, rsel), 0.0).astype(bf16)            # (SBN, SBN)
    superblocks.append((rs, a_bd, e_bd))

  # ---- message-passing layers ------------------------------------------------
  all_h = [h]
  hid = h
  for layer in range(num_layers):
    t = dot(hid.astype(bf16), gcw_ref[layer]).astype(bf16)                  # (GN, H)
    conv_parts, msg_parts = [], []
    for rs, a_bd, e_bd in superblocks:
      c = jnp.tanh(dot(a_bd, t[rs, :]))                                     # (SBN, H)
      mg = jnp.tanh(dot(e_bd, c.astype(bf16)))                              # (SBN, H)
      conv_parts.append(c)
      msg_parts.append(mg)
    conv = conv_parts[0] if len(conv_parts) == 1 else jnp.concatenate(conv_parts, 0)
    msg = msg_parts[0] if len(msg_parts) == 1 else jnp.concatenate(msg_parts, 0)
    # Combine: single K = 2H matmul on the lane-concatenated [conv | msg].
    cm = jnp.concatenate([conv, msg], axis=1).astype(bf16)                  # (GN, 2H)
    hid = jnp.tanh(dot(cm, cbw_ref[layer]) + cbb_ref[layer])                # (GN, H)
    all_h.append(hid)

  # ---- latent MLP: one K = (L+1)*H matmul on concat(all_hidden) --------------
  allh = jnp.concatenate(all_h, axis=1).astype(bf16)                        # (GN, (L+1)H)
  lat = jnp.tanh(dot(allh, lf1w_ref[...]) + lf1b_ref[...])                  # (GN, 256)
  lat = jnp.tanh(dot(lat.astype(bf16), lf2w_ref[...]) + lf2b_ref[...])      # (GN, Z)
  out_ref[...] = lat


def _tpu_vmem_and_cores():
  """Best-effort detection of per-core VMEM capacity and 2-TensorCore chips."""
  kind = ""
  try:
    kind = jax.devices()[0].device_kind.lower()
  except Exception:
    pass
  two_cores = ("v7" in kind) or ("7x" in kind)
  if two_cores:
    vmem_cap = 64 * 1024 * 1024
  elif ("v5" in kind) or ("v6" in kind):
    vmem_cap = 128 * 1024 * 1024
  else:
    vmem_cap = 64 * 1024 * 1024          # conservative default
  try:
    vmem_cap = int(pltpu.get_tpu_info().vmem_capacity_bytes)
  except Exception:
    pass
  return vmem_cap, two_cores


def _estimate_step_vmem_bytes(G, N, E, H, num_layers):
  """Rough per-grid-step VMEM working set (bytes)."""
  GN, GNN = G * N, G * N * N
  sbn = min(G, max(1, 128 // N)) * N
  b = 0
  b += 2 * 2 * max(E, 8) * GNN                    # edgeT block (bf16, double buffered)
  b += 2 * 2 * GN * max(N, 128)                   # adjacency rows block
  b += 2 * 2 * GN * 128                           # node-feature block
  b += 2 * 4 * GN * 128                           # output block
  b += GNN * 256 * 6                              # edge layer-1 activations (f32 + bf16)
  b += GNN * H * 12                               # eh2t, transpose, bf16 copies
  b += 2 * 2 * GN * sbn                           # block-diagonal A / E operators (bf16)
  b += (num_layers + 4) * GN * max(H, 128) * 4    # all_h / conv / msg / t
  b += GN * 256 * 4                               # latent intermediate
  b += 2 * 1024 * 1024                            # weights + headroom
  return b


def _pick_graphs_per_step(B, N, E, H, num_layers, vmem_budget, prefer_multistep,
                          target_rows=512):
  """Largest divisor of B whose per-step working set fits the VMEM budget.
  On 2-TensorCore chips (v7x) keep >= 2 grid steps so both cores get work."""
  best = 1
  for g in range(1, B + 1):
    if B % g:
      continue
    if g * N > target_rows:
      continue
    if (g * N * N) % 128 != 0 and g != B:
      continue
    if _estimate_step_vmem_bytes(g, N, E, H, num_layers) > vmem_budget:
      continue
    if prefer_multistep and B // g < 2:
      continue
    best = g
  return best


def graph_encoder_forward(params, adj, node_feat, edge_feat, *, num_layers,
                          graphs_per_step=None):
  B, N, _ = adj.shape
  E = edge_feat.shape[-1]
  node_dim = node_feat.shape[-1]
  H = params["nf2w"].shape[-1]
  Z = params["lf2w"].shape[-1]
  assert N % 8 == 0, "pad graphs to a multiple of 8 nodes"
  assert N <= 128

  f32, bf16 = jnp.float32, jnp.bfloat16
  vmem_cap, two_cores = _tpu_vmem_and_cores()
  vmem_budget = int(vmem_cap * 0.55)
  if graphs_per_step is None:
    G = _pick_graphs_per_step(B, N, E, H, num_layers, vmem_budget, two_cores)
  else:
    G = graphs_per_step
  assert B % G == 0
  GN, GNN = G * N, G * N * N
  graphs_per_block = max(1, min(G, 128 // N))   # block-diag superblock K <= 128 (v5e-safe)

  # Host-side layout prep (free reshapes/casts; normalization done once here).
  deg = jnp.sum(adj.astype(f32), axis=2, keepdims=True) + 1.0   # rowsum(adj + I)
  a_rows = (adj.astype(f32) / deg).reshape(B * N, N).astype(bf16)
  node_rows = node_feat.reshape(B * N, node_dim).astype(bf16)
  edge_t = edge_feat.reshape(B * N * N, E).T.astype(bf16)       # (E, B*N*N), pairs in lanes

  nf1w = params["nf1w"].astype(bf16); nf1b = params["nf1b"].astype(f32)
  nf2w = params["nf2w"].astype(bf16); nf2b = params["nf2b"].astype(f32)
  ef1wt = params["ef1w"].T.astype(bf16); ef1bt = params["ef1b"].T.astype(f32)  # (256,E),(256,1)
  ef2wt = params["ef2w"].T.astype(bf16); ef2bt = params["ef2b"].T.astype(f32)  # (H,256),(H,1)
  gcw = params["gcw"].astype(bf16)
  cbw = params["cbw"].astype(bf16); cbb = params["cbb"].astype(f32)
  lf1w = params["lf1w"].astype(bf16); lf1b = params["lf1b"].astype(f32)
  lf2w = params["lf2w"].astype(bf16); lf2b = params["lf2b"].astype(f32)

  def batched2(shape):
    return pl.BlockSpec(shape, lambda b: (b, 0))

  def shared(arr):
    nd = arr.ndim
    return pl.BlockSpec(arr.shape, lambda b, nd=nd: (0,) * nd)

  in_specs = [
      batched2((GN, N)),                            # normalized adjacency rows
      batched2((GN, node_dim)),                     # node-feature rows
      pl.BlockSpec((E, GNN), lambda b: (0, b)),     # edge features, pairs in lanes
      shared(nf1w), shared(nf1b), shared(nf2w), shared(nf2b),
      shared(ef1wt), shared(ef1bt), shared(ef2wt), shared(ef2bt),
      shared(gcw), shared(cbw), shared(cbb),
      shared(lf1w), shared(lf1b), shared(lf2w), shared(lf2b),
  ]

  # Generation-aware scoped-VMEM limit: ~48-56 MiB on v7x, up to ~100 MiB on
  # v5e/v6e, never below the 32 MiB default.
  vmem_limit = int(min(max(32 * 1024 * 1024, vmem_cap * 0.85),
                       100 * 1024 * 1024))

  out_flat = pl.pallas_call(
      functools.partial(_graph_encoder_kernel, num_layers=num_layers,
                        graphs_per_block=graphs_per_block),
      out_shape=jax.ShapeDtypeStruct((B * N, Z), jnp.float32),
      grid_spec=pltpu.PrefetchScalarGridSpec(
          num_scalar_prefetch=0,
          grid=(B // G,),
          in_specs=in_specs,
          out_specs=batched2((GN, Z))),
      compiler_params=pltpu.CompilerParams(
          dimension_semantics=("parallel",),
          vmem_limit_bytes=vmem_limit),
  )(a_rows, node_rows, edge_t,
    nf1w, nf1b, nf2w, nf2b,
    ef1wt, ef1bt, ef2wt, ef2bt,
    gcw, cbw, cbb,
    lf1w, lf1b, lf2w, lf2b)
  return out_flat.reshape(B, N, Z)


def reference_forward(params, adj, node_feat, edge_feat, *, num_layers,
                      matmul_dtype=jnp.float32):
  """Pure-JAX reference, algebraically identical to the PyTorch forward.
  With matmul_dtype=bfloat16 it mirrors the kernel's cast points."""
  f32 = jnp.float32
  tanh = jnp.tanh

  def mm(a, b):
    return jnp.matmul(a.astype(matmul_dtype), b.astype(matmul_dtype),
                      preferred_element_type=f32)

  h = tanh(mm(node_feat, params["nf1w"]) + params["nf1b"][0])
  h = tanh(mm(h, params["nf2w"]) + params["nf2b"][0])
  eh = tanh(mm(edge_feat, params["ef1w"]) + params["ef1b"][0])
  eh = tanh(mm(eh, params["ef2w"]) + params["ef2b"][0])
  # einsum('bijc,bjk->bik', eh, x) == (sum_c eh) @ x
  e_sum = jnp.sum(eh, axis=-1)                                   # (B, N, N)
  deg = jnp.sum(adj, axis=2) + 1.0                               # rowsum(adj + I)
  adj_norm = (1.0 / deg)[:, :, None] * adj
  all_h = [h]
  hid = h
  for layer in range(num_layers):
    t = mm(hid, params["gcw"][layer])
    conv = tanh(mm(adj_norm, t))                                 # GraphConvSparse
    msg = tanh(mm(e_sum, conv))
    cm = jnp.concatenate([conv, msg], axis=-1)
    hid = tanh(mm(cm, params["cbw"][layer]) + params["cbb"][layer][0])
    all_h.append(hid)
  cat = jnp.concatenate(all_h, axis=-1)
  lat = tanh(mm(cat, params["lf1w"]) + params["lf1b"][0])
  lat = tanh(mm(lat, params["lf2w"]) + params["lf2b"][0])
  return lat


def _glorot(key, shape):
  fan_in, fan_out = shape[-2], shape[-1]
  limit = jnp.sqrt(6.0 / (fan_in + fan_out))
  return jax.random.uniform(key, shape, jnp.float32, -limit, limit)


def make_params(key, *, num_layers, node_dim, edge_dim, hidden_dim, z_dim):
  keys = jax.random.split(key, 16)
  H, Z = hidden_dim, z_dim
  return {
      "nf1w": _glorot(keys[0], (node_dim, 256)),
      "nf1b": 0.01 * jax.random.normal(keys[1], (1, 256), jnp.float32),
      "nf2w": _glorot(keys[2], (256, H)),
      "nf2b": 0.01 * jax.random.normal(keys[3], (1, H), jnp.float32),
      "ef1w": _glorot(keys[4], (edge_dim, 256)),
      "ef1b": 0.01 * jax.random.normal(keys[5], (1, 256), jnp.float32),
      "ef2w": _glorot(keys[6], (256, H)),
      "ef2b": 0.01 * jax.random.normal(keys[7], (1, H), jnp.float32),
      "gcw": _glorot(keys[8], (num_layers, H, H)),
      "cbw": _glorot(keys[9], (num_layers, 2 * H, H)),
      "cbb": 0.01 * jax.random.normal(keys[10], (num_layers, 1, H), jnp.float32),
      "lf1w": _glorot(keys[11], ((num_layers + 1) * H, 256)),
      "lf1b": 0.01 * jax.random.normal(keys[12], (1, 256), jnp.float32),
      "lf2w": _glorot(keys[13], (256, Z)),
      "lf2b": 0.01 * jax.random.normal(keys[14], (1, Z), jnp.float32),
  }


if __name__ == "__main__":
  B, N = 4, 16
  node_dim, edge_dim = 8, 4
  hidden_dim, z_dim = 32, 32
  num_layers = 3

  key = jax.random.PRNGKey(0)
  k_adj, k_node, k_edge, k_par = jax.random.split(key, 4)

  # Symmetric 0/1 adjacency.
  a = jax.random.bernoulli(k_adj, 0.3, (B, N, N)).astype(jnp.float32)
  adj = jnp.maximum(a, jnp.transpose(a, (0, 2, 1)))
  node_feat = jax.random.normal(k_node, (B, N, node_dim), jnp.float32)
  edge_feat = jax.random.normal(k_edge, (B, N, N, edge_dim), jnp.float32)

  params = make_params(k_par, num_layers=num_layers, node_dim=node_dim,
                       edge_dim=edge_dim, hidden_dim=hidden_dim, z_dim=z_dim)

  out = graph_encoder_forward(params, adj, node_feat, edge_feat,
                              num_layers=num_layers)
  out = jax.block_until_ready(out)

  # Tight check against a reference that mirrors the kernel's bf16 matmul cast
  # points, plus a looser check against the full-f32 PyTorch semantics (the
  # bf16 MXU path legitimately drifts a few 1e-2 from pure f32).
  ref_bf16 = jax.block_until_ready(
      reference_forward(params, adj, node_feat, edge_feat,
                        num_layers=num_layers, matmul_dtype=jnp.bfloat16))
  ref_f32 = jax.block_until_ready(
      reference_forward(params, adj, node_feat, edge_feat,
                        num_layers=num_layers, matmul_dtype=jnp.float32))

  err_bf16 = float(jnp.max(jnp.abs(out - ref_bf16)))
  err_f32 = float(jnp.max(jnp.abs(out - ref_f32)))
  assert out.shape == (B, N, z_dim), out.shape
  assert err_bf16 < 2e-2, f"mismatch vs bf16-mirrored reference: {err_bf16}"
  assert err_f32 < 6e-2, f"mismatch vs f32 reference: {err_f32}"
  print("KERNEL_OK")
</pallas_src>

<mosaic_0001>
module attributes {stable_mosaic.version = 11 : i64} {
  func.func @_graph_encoder_kernel(%arg0: i32, %arg1: memref<64x16xbf16, #tpu.memory_space<vmem>>, %arg2: memref<64x8xbf16, #tpu.memory_space<vmem>>, %arg3: memref<4x1024xbf16, #tpu.memory_space<vmem>>, %arg4: memref<8x256xbf16, #tpu.memory_space<vmem>>, %arg5: memref<1x256xf32, #tpu.memory_space<vmem>>, %arg6: memref<256x32xbf16, #tpu.memory_space<vmem>>, %arg7: memref<1x32xf32, #tpu.memory_space<vmem>>, %arg8: memref<256x4xbf16, #tpu.memory_space<vmem>>, %arg9: memref<256x1xf32, #tpu.memory_space<vmem>>, %arg10: memref<32x256xbf16, #tpu.memory_space<vmem>>, %arg11: memref<32x1xf32, #tpu.memory_space<vmem>>, %arg12: memref<3x32x32xbf16, #tpu.memory_space<vmem>>, %arg13: memref<3x64x32xbf16, #tpu.memory_space<vmem>>, %arg14: memref<3x1x32xf32, #tpu.memory_space<vmem>>, %arg15: memref<128x256xbf16, #tpu.memory_space<vmem>>, %arg16: memref<1x256xf32, #tpu.memory_space<vmem>>, %arg17: memref<256x32xbf16, #tpu.memory_space<vmem>>, %arg18: memref<1x32xf32, #tpu.memory_space<vmem>>, %arg19: memref<64x32xf32, #tpu.memory_space<vmem>>) attributes {dimension_semantics = [#tpu.dimension_semantics<parallel>], iteration_bounds = array<i64: 1>, scalar_prefetch = 0 : i64, scratch_operands = 0 : i64, tpu.core_type = #tpu.core_type<tc>, window_params = [{transform_indices = @transform_0, window_bounds = array<i64: 64, 16>}, {transform_indices = @transform_1, window_bounds = array<i64: 64, 8>}, {transform_indices = @transform_2, window_bounds = array<i64: 4, 1024>}, {pipeline_mode = #tpu.pipeline_mode<synchronous>, transform_indices = @transform_3, window_bounds = array<i64: 8, 256>}, {pipeline_mode = #tpu.pipeline_mode<synchronous>, transform_indices = @transform_4, window_bounds = array<i64: 1, 256>}, {pipeline_mode = #tpu.pipeline_mode<synchronous>, transform_indices = @transform_5, window_bounds = array<i64: 256, 32>}, {pipeline_mode = #tpu.pipeline_mode<synchronous>, transform_indices = @transform_6, window_bounds = array<i64: 1, 32>}, {pipeline_mode = #tpu.pipeline_mode<synchronous>, transform_indices = @transform_7, window_bounds = array<i64: 256, 4>}, {pipeline_mode = #tpu.pipeline_mode<synchronous>, transform_indices = @transform_8, window_bounds = array<i64: 256, 1>}, {pipeline_mode = #tpu.pipeline_mode<synchronous>, transform_indices = @transform_9, window_bounds = array<i64: 32, 256>}, {pipeline_mode = #tpu.pipeline_mode<synchronous>, transform_indices = @transform_10, window_bounds = array<i64: 32, 1>}, {pipeline_mode = #tpu.pipeline_mode<synchronous>, transform_indices = @transform_11, window_bounds = array<i64: 3, 32, 32>}, {pipeline_mode = #tpu.pipeline_mode<synchronous>, transform_indices = @transform_12, window_bounds = array<i64: 3, 64, 32>}, {pipeline_mode = #tpu.pipeline_mode<synchronous>, transform_indices = @transform_13, window_bounds = array<i64: 3, 1, 32>}, {pipeline_mode = #tpu.pipeline_mode<synchronous>, transform_indices = @transform_14, window_bounds = array<i64: 128, 256>}, {pipeline_mode = #tpu.pipeline_mode<synchronous>, transform_indices = @transform_15, window_bounds = array<i64: 1, 256>}, {pipeline_mode = #tpu.pipeline_mode<synchronous>, transform_indices = @transform_16, window_bounds = array<i64: 256, 32>}, {pipeline_mode = #tpu.pipeline_mode<synchronous>, transform_indices = @transform_17, window_bounds = array<i64: 1, 32>}, {transform_indices = @transform_18, window_bounds = array<i64: 64, 32>}]} {
    %c0 = arith.constant 0 : index
    %c0_0 = arith.constant 0 : index
    %0 = vector.load %arg2[%c0, %c0_0] : memref<64x8xbf16, #tpu.memory_space<vmem>>, vector<64x8xbf16>
    %c0_1 = arith.constant 0 : index
    %c0_2 = arith.constant 0 : index
    %1 = vector.load %arg4[%c0_1, %c0_2] : memref<8x256xbf16, #tpu.memory_space<vmem>>, vector<8x256xbf16>
    %cst = arith.constant dense<0.000000e+00> : vector<64x256xf32>
    %2 = tpu.matmul %0, %1, %cst {dimension_numbers = #tpu.dot_dimension_numbers<[1], [0], [0], [1], [0, 0, 1, 1], [], []>} : vector<64x8xbf16>, vector<8x256xbf16>, vector<64x256xf32> -> vector<64x256xf32>
    %c0_3 = arith.constant 0 : index
    %c0_4 = arith.constant 0 : index
    %3 = vector.load %arg5[%c0_3, %c0_4] : memref<1x256xf32, #tpu.memory_space<vmem>>, vector<1x256xf32>
    %4 = vector.broadcast %3 : vector<1x256xf32> to vector<64x256xf32>
    %5 = arith.addf %2, %4 : vector<64x256xf32>
    %6 = math.tanh %5 : vector<64x256xf32>
    %7 = arith.truncf %6 : vector<64x256xf32> to vector<64x256xbf16>
    %c0_5 = arith.constant 0 : index
    %c0_6 = arith.constant 0 : index
    %8 = vector.load %arg6[%c0_5, %c0_6] : memref<256x32xbf16, #tpu.memory_space<vmem>>, vector<256x32xbf16>
    %cst_7 = arith.constant dense<0.000000e+00> : vector<64x32xf32>
    %9 = tpu.matmul %7, %8, %cst_7 {dimension_numbers = #tpu.dot_dimension_numbers<[1], [0], [0], [1], [0, 0, 1, 1], [], []>} : vector<64x256xbf16>, vector<256x32xbf16>, vector<64x32xf32> -> vector<64x32xf32>
    %c0_8 = arith.constant 0 : index
    %c0_9 = arith.constant 0 : index
    %10 = vector.load %arg7[%c0_8, %c0_9] : memref<1x32xf32, #tpu.memory_space<vmem>>, vector<1x32xf32>
    %11 = vector.broadcast %10 : vector<1x32xf32> to vector<64x32xf32>
    %12 = arith.addf %9, %11 : vector<64x32xf32>
    %13 = math.tanh %12 : vector<64x32xf32>
    %c0_10 = arith.constant 0 : index
    %c0_11 = arith.constant 0 : index
    %14 = vector.load %arg9[%c0_10, %c0_11] : memref<256x1xf32, #tpu.memory_space<vmem>>, vector<256x1xf32>
    %15 = vector.shape_cast %14 : vector<256x1xf32> to vector<256x1xf32>
    %16 = vector.broadcast %15 : vector<256x1xf32> to vector<256x1024xf32>
    %c0_12 = arith.constant 0 : index
    %c0_13 = arith.constant 0 : index
    %17 = vector.load %arg8[%c0_12, %c0_13] : memref<256x4xbf16, #tpu.memory_space<vmem>>, vector<256x1xbf16>
    %18 = arith.extf %17 : vector<256x1xbf16> to vector<256x1xf32>
    %c0_14 = arith.constant 0 : index
    %c0_15 = arith.constant 0 : index
    %19 = vector.load %arg3[%c0_14, %c0_15] : memref<4x1024xbf16, #tpu.memory_space<vmem>>, vector<1x1024xbf16>
    %20 = arith.extf %19 : vector<1x1024xbf16> to vector<1x1024xf32>
    %21 = vector.broadcast %18 : vector<256x1xf32> to vector<256x1024xf32>
    %22 = vector.broadcast %20 : vector<1x1024xf32> to vector<256x1024xf32>
    %23 = arith.mulf %21, %22 : vector<256x1024xf32>
    %24 = arith.addf %16, %23 : vector<256x1024xf32>
    %c0_16 = arith.constant 0 : index
    %c1 = arith.constant 1 : index
    %25 = vector.load %arg8[%c0_16, %c1] : memref<256x4xbf16, #tpu.memory_space<vmem>>, vector<256x1xbf16>
    %26 = arith.extf %25 : vector<256x1xbf16> to vector<256x1xf32>
    %c1_17 = arith.constant 1 : index
    %c0_18 = arith.constant 0 : index
    %27 = vector.load %arg3[%c1_17, %c0_18] : memref<4x1024xbf16, #tpu.memory_space<vmem>>, vector<1x1024xbf16>
    %28 = arith.extf %27 : vector<1x1024xbf16> to vector<1x1024xf32>
    %29 = vector.broadcast %26 : vector<256x1xf32> to vector<256x1024xf32>
    %30 = vector.broadcast %28 : vector<1x1024xf32> to vector<256x1024xf32>
    %31 = arith.mulf %29, %30 : vector<256x1024xf32>
    %32 = arith.addf %24, %31 : vector<256x1024xf32>
    %c0_19 = arith.constant 0 : index
    %c2 = arith.constant 2 : index
    %33 = vector.load %arg8[%c0_19, %c2] : memref<256x4xbf16, #tpu.memory_space<vmem>>, vector<256x1xbf16>
    %34 = arith.extf %33 : vector<256x1xbf16> to vector<256x1xf32>
    %c2_20 = arith.constant 2 : index
    %c0_21 = arith.constant 0 : index
    %35 = vector.load %arg3[%c2_20, %c0_21] : memref<4x1024xbf16, #tpu.memory_space<vmem>>, vector<1x1024xbf16>
    %36 = arith.extf %35 : vector<1x1024xbf16> to vector<1x1024xf32>
    %37 = vector.broadcast %34 : vector<256x1xf32> to vector<256x1024xf32>
    %38 = vector.broadcast %36 : vector<1x1024xf32> to vector<256x1024xf32>
    %39 = arith.mulf %37, %38 : vector<256x1024xf32>
    %40 = arith.addf %32, %39 : vector<256x1024xf32>
    %c0_22 = arith.constant 0 : index
    %c3 = arith.constant 3 : index
    %41 = vector.load %arg8[%c0_22, %c3] : memref<256x4xbf16, #tpu.memory_space<vmem>>, vector<256x1xbf16>
    %42 = arith.extf %41 : vector<256x1xbf16> to vector<256x1xf32>
    %c3_23 = arith.constant 3 : index
    %c0_24 = arith.constant 0 : index
    %43 = vector.load %arg3[%c3_23, %c0_24] : memref<4x1024xbf16, #tpu.memory_space<vmem>>, vector<1x1024xbf16>
    %44 = arith.extf %43 : vector<1x1024xbf16> to vector<1x1024xf32>
    %45 = vector.broadcast %42 : vector<256x1xf32> to vector<256x1024xf32>
    %46 = vector.broadcast %44 : vector<1x1024xf32> to vector<256x1024xf32>
    %47 = arith.mulf %45, %46 : vector<256x1024xf32>
    %48 = arith.addf %40, %47 : vector<256x1024xf32>
    %49 = math.tanh %48 : vector<256x1024xf32>
    %c0_25 = arith.constant 0 : index
    %c0_26 = arith.constant 0 : index
    %50 = vector.load %arg10[%c0_25, %c0_26] : memref<32x256xbf16, #tpu.memory_space<vmem>>, vector<32x256xbf16>
    %51 = arith.truncf %49 : vector<256x1024xf32> to vector<256x1024xbf16>
    %cst_27 = arith.constant dense<0.000000e+00> : vector<32x1024xf32>
    %52 = tpu.matmul %50, %51, %cst_27 {dimension_numbers = #tpu.dot_dimension_numbers<[1], [0], [0], [1], [0, 0, 1, 1], [], []>} : vector<32x256xbf16>, vector<256x1024xbf16>, vector<32x1024xf32> -> vector<32x1024xf32>
    %c0_28 = arith.constant 0 : index
    %c0_29 = arith.constant 0 : index
    %53 = vector.load %arg11[%c0_28, %c0_29] : memref<32x1xf32, #tpu.memory_space<vmem>>, vector<32x1xf32>
    %54 = vector.broadcast %53 : vector<32x1xf32> to vector<32x1024xf32>
    %55 = arith.addf %52, %54 : vector<32x1024xf32>
    %56 = math.tanh %55 : vector<32x1024xf32>
    %57 = tpu.transpose %56, [1, 0] : vector<32x1024xf32> -> vector<1024x32xf32>
    %58 = vector.shape_cast %57 : vector<1024x32xf32> to vector<64x16x32xf32>
    %cst_30 = arith.constant dense<0.000000e+00> : vector<64x16xf32>
    %59 = vector.multi_reduction <add>, %58, %cst_30 [2] : vector<64x16x32xf32> to vector<64x16xf32>
    %c0_31 = arith.constant 0 : index
    %c0_32 = arith.constant 0 : index
    %60 = vector.load %arg1[%c0_31, %c0_32] : memref<64x16xbf16, #tpu.memory_space<vmem>>, vector<64x16xbf16>
    %61 = arith.truncf %59 : vector<64x16xf32> to vector<64x16xbf16>
    %62 = tpu.iota {dimensions = array<i32: 0>} : vector<16x64xi32>
    %63 = tpu.iota {dimensions = array<i32: 1>} : vector<16x64xi32>
    %cst_33 = arith.constant 0.000000e+00 : f32
    %64 = vector.broadcast %cst_33 : f32 to vector<16x64xf32>
    %c0_i32 = arith.constant 0 : i32
    %65 = vector.broadcast %c0_i32 : i32 to vector<16x64xi32>
    %66 = arith.addi %62, %65 : vector<16x64xi32>
    %67 = arith.cmpi eq, %63, %66 : vector<16x64xi32>
    %68 = arith.extui %67 : vector<16x64xi1> to vector<16x64xi32>
    %69 = arith.sitofp %68 : vector<16x64xi32> to vector<16x64xf32>
    %70 = arith.addf %64, %69 : vector<16x64xf32>
    %c16_i32 = arith.constant 16 : i32
    %71 = vector.broadcast %c16_i32 : i32 to vector<16x64xi32>
    %72 = arith.addi %62, %71 : vector<16x64xi32>
    %73 = arith.cmpi eq, %63, %72 : vector<16x64xi32>
    %74 = arith.extui %73 : vector<16x64xi1> to vector<16x64xi32>
    %75 = arith.sitofp %74 : vector<16x64xi32> to vector<16x64xf32>
    %76 = arith.addf %70, %75 : vector<16x64xf32>
    %c32_i32 = arith.constant 32 : i32
    %77 = vector.broadcast %c32_i32 : i32 to vector<16x64xi32>
    %78 = arith.addi %62, %77 : vector<16x64xi32>
    %79 = arith.cmpi eq, %63, %78 : vector<16x64xi32>
    %80 = arith.extui %79 : vector<16x64xi1> to vector<16x64xi32>
    %81 = arith.sitofp %80 : vector<16x64xi32> to vector<16x64xf32>
    %82 = arith.addf %76, %81 : vector<16x64xf32>
    %c48_i32 = arith.constant 48 : i32
    %83 = vector.broadcast %c48_i32 : i32 to vector<16x64xi32>
    %84 = arith.addi %62, %83 : vector<16x64xi32>
    %85 = arith.cmpi eq, %63, %84 : vector<16x64xi32>
    %86 = arith.extui %85 : vector<16x64xi1> to vector<16x64xi32>
    %87 = arith.sitofp %86 : vector<16x64xi32> to vector<16x64xf32>
    %88 = arith.addf %82, %87 : vector<16x64xf32>
    %89 = arith.truncf %88 : vector<16x64xf32> to vector<16x64xbf16>
    %90 = tpu.iota {dimensions = array<i32: 0>} : vector<64x64xi32>
    %91 = tpu.iota {dimensions = array<i32: 1>} : vector<64x64xi32>
    %c0_i32_34 = arith.constant 0 : i32
    %92 = vector.broadcast %c0_i32_34 : i32 to vector<64x64xi32>
    %c0_i32_35 = arith.constant 0 : i32
    %93 = vector.broadcast %c0_i32_35 : i32 to vector<64x64xi32>
    %c16_i32_36 = arith.constant 16 : i32
    %94 = vector.broadcast %c16_i32_36 : i32 to vector<64x64xi32>
    %95 = arith.cmpi sge, %90, %94 : vector<64x64xi32>
    %96 = arith.extui %95 : vector<64x64xi1> to vector<64x64xi32>
    %97 = arith.addi %92, %96 : vector<64x64xi32>
    %c16_i32_37 = arith.constant 16 : i32
    %98 = vector.broadcast %c16_i32_37 : i32 to vector<64x64xi32>
    %99 = arith.cmpi sge, %91, %98 : vector<64x64xi32>
    %100 = arith.extui %99 : vector<64x64xi1> to vector<64x64xi32>
    %101 = arith.addi %93, %100 : vector<64x64xi32>
    %c32_i32_38 = arith.constant 32 : i32
    %102 = vector.broadcast %c32_i32_38 : i32 to vector<64x64xi32>
    %103 = arith.cmpi sge, %90, %102 : vector<64x64xi32>
    %104 = arith.extui %103 : vector<64x64xi1> to vector<64x64xi32>
    %105 = arith.addi %97, %104 : vector<64x64xi32>
    %c32_i32_39 = arith.constant 32 : i32
    %106 = vector.broadcast %c32_i32_39 : i32 to vector<64x64xi32>
    %107 = arith.cmpi sge, %91, %106 : vector<64x64xi32>
    %108 = arith.extui %107 : vector<64x64xi1> to vector<64x64xi32>
    %109 = arith.addi %101, %108 : vector<64x64xi32>
    %c48_i32_40 = arith.constant 48 : i32
    %110 = vector.broadcast %c48_i32_40 : i32 to vector<64x64xi32>
    %111 = arith.cmpi sge, %90, %110 : vector<64x64xi32>
    %112 = arith.extui %111 : vector<64x64xi1> to vector<64x64xi32>
    %113 = arith.addi %105, %112 : vector<64x64xi32>
    %c48_i32_41 = arith.constant 48 : i32
    %114 = vector.broadcast %c48_i32_41 : i32 to vector<64x64xi32>
    %115 = arith.cmpi sge, %91, %114 : vector<64x64xi32>
    %116 = arith.extui %115 : vector<64x64xi1> to vector<64x64xi32>
    %117 = arith.addi %109, %116 : vector<64x64xi32>
    %118 = arith.cmpi eq, %113, %117 : vector<64x64xi32>
    %cst_42 = arith.constant dense<0.000000e+00> : vector<64x64xf32>
    %119 = tpu.matmul %60, %89, %cst_42 {dimension_numbers = #tpu.dot_dimension_numbers<[1], [0], [0], [1], [0, 0, 1, 1], [], []>} : vector<64x16xbf16>, vector<16x64xbf16>, vector<64x64xf32> -> vector<64x64xf32>
    %cst_43 = arith.constant 0.000000e+00 : f32
    %120 = vector.broadcast %cst_43 : f32 to vector<64x64xf32>
    %121 = arith.select %118, %119, %120 : vector<64x64xi1>, vector<64x64xf32>
    %122 = arith.truncf %121 : vector<64x64xf32> to vector<64x64xbf16>
    %cst_44 = arith.constant dense<0.000000e+00> : vector<64x64xf32>
    %123 = tpu.matmul %61, %89, %cst_44 {dimension_numbers = #tpu.dot_dimension_numbers<[1], [0], [0], [1], [0, 0, 1, 1], [], []>} : vector<64x16xbf16>, vector<16x64xbf16>, vector<64x64xf32> -> vector<64x64xf32>
    %cst_45 = arith.constant 0.000000e+00 : f32
    %124 = vector.broadcast %cst_45 : f32 to vector<64x64xf32>
    %125 = arith.select %118, %123, %124 : vector<64x64xi1>, vector<64x64xf32>
    %126 = arith.truncf %125 : vector<64x64xf32> to vector<64x64xbf16>
    %127 = arith.truncf %13 : vector<64x32xf32> to vector<64x32xbf16>
    %c0_46 = arith.constant 0 : index
    %c0_47 = arith.constant 0 : index
    %c0_48 = arith.constant 0 : index
    %128 = vector.load %arg12[%c0_46, %c0_47, %c0_48] : memref<3x32x32xbf16, #tpu.memory_space<vmem>>, vector<1x32x32xbf16>
    %129 = vector.shape_cast %128 : vector<1x32x32xbf16> to vector<32x32xbf16>
    %cst_49 = arith.constant dense<0.000000e+00> : vector<64x32xf32>
    %130 = tpu.matmul %127, %129, %cst_49 {dimension_numbers = #tpu.dot_dimension_numbers<[1], [0], [0], [1], [0, 0, 1, 1], [], []>} : vector<64x32xbf16>, vector<32x32xbf16>, vector<64x32xf32> -> vector<64x32xf32>
    %131 = arith.truncf %130 : vector<64x32xf32> to vector<64x32xbf16>
    %cst_50 = arith.constant dense<0.000000e+00> : vector<64x32xf32>
    %132 = tpu.matmul %122, %131, %cst_50 {dimension_numbers = #tpu.dot_dimension_numbers<[1], [0], [0], [1], [0, 0, 1, 1], [], []>} : vector<64x64xbf16>, vector<64x32xbf16>, vector<64x32xf32> -> vector<64x32xf32>
    %133 = math.tanh %132 : vector<64x32xf32>
    %134 = arith.truncf %133 : vector<64x32xf32> to vector<64x32xbf16>
    %cst_51 = arith.constant dense<0.000000e+00> : vector<64x32xf32>
    %135 = tpu.matmul %126, %134, %cst_51 {dimension_numbers = #tpu.dot_dimension_numbers<[1], [0], [0], [1], [0, 0, 1, 1], [], []>} : vector<64x64xbf16>, vector<64x32xbf16>, vector<64x32xf32> -> vector<64x32xf32>
    %136 = math.tanh %135 : vector<64x32xf32>
    %137 = tpu.concatenate %133, %136 in 1 : vector<64x32xf32>, vector<64x32xf32> -> vector<64x64xf32>
    %138 = arith.truncf %137 : vector<64x64xf32> to vector<64x64xbf16>
    %c0_52 = arith.constant 0 : index
    %c0_53 = arith.constant 0 : index
    %c0_54 = arith.constant 0 : index
    %139 = vector.load %arg13[%c0_52, %c0_53, %c0_54] : memref<3x64x32xbf16, #tpu.memory_space<vmem>>, vector<1x64x32xbf16>
    %140 = vector.shape_cast %139 : vector<1x64x32xbf16> to vector<64x32xbf16>
    %cst_55 = arith.constant dense<0.000000e+00> : vector<64x32xf32>
    %141 = tpu.matmul %138, %140, %cst_55 {dimension_numbers = #tpu.dot_dimension_numbers<[1], [0], [0], [1], [0, 0, 1, 1], [], []>} : vector<64x64xbf16>, vector<64x32xbf16>, vector<64x32xf32> -> vector<64x32xf32>
    %c0_56 = arith.constant 0 : index
    %c0_57 = arith.constant 0 : index
    %c0_58 = arith.constant 0 : index
    %142 = vector.load %arg14[%c0_56, %c0_57, %c0_58] : memref<3x1x32xf32, #tpu.memory_space<vmem>>, vector<1x1x32xf32>
    %143 = vector.shape_cast %142 : vector<1x1x32xf32> to vector<1x32xf32>
    %144 = vector.broadcast %143 : vector<1x32xf32> to vector<64x32xf32>
    %145 = arith.addf %141, %144 : vector<64x32xf32>
    %146 = math.tanh %145 : vector<64x32xf32>
    %147 = arith.truncf %146 : vector<64x32xf32> to vector<64x32xbf16>
    %c1_59 = arith.constant 1 : index
    %c0_60 = arith.constant 0 : index
    %c0_61 = arith.constant 0 : index
    %148 = vector.load %arg12[%c1_59, %c0_60, %c0_61] : memref<3x32x32xbf16, #tpu.memory_space<vmem>>, vector<1x32x32xbf16>
    %149 = vector.shape_cast %148 : vector<1x32x32xbf16> to vector<32x32xbf16>
    %cst_62 = arith.constant dense<0.000000e+00> : vector<64x32xf32>
    %150 = tpu.matmul %147, %149, %cst_62 {dimension_numbers = #tpu.dot_dimension_numbers<[1], [0], [0], [1], [0, 0, 1, 1], [], []>} : vector<64x32xbf16>, vector<32x32xbf16>, vector<64x32xf32> -> vector<64x32xf32>
    %151 = arith.truncf %150 : vector<64x32xf32> to vector<64x32xbf16>
    %cst_63 = arith.constant dense<0.000000e+00> : vector<64x32xf32>
    %152 = tpu.matmul %122, %151, %cst_63 {dimension_numbers = #tpu.dot_dimension_numbers<[1], [0], [0], [1], [0, 0, 1, 1], [], []>} : vector<64x64xbf16>, vector<64x32xbf16>, vector<64x32xf32> -> vector<64x32xf32>
    %153 = math.tanh %152 : vector<64x32xf32>
    %154 = arith.truncf %153 : vector<64x32xf32> to vector<64x32xbf16>
    %cst_64 = arith.constant dense<0.000000e+00> : vector<64x32xf32>
    %155 = tpu.matmul %126, %154, %cst_64 {dimension_numbers = #tpu.dot_dimension_numbers<[1], [0], [0], [1], [0, 0, 1, 1], [], []>} : vector<64x64xbf16>, vector<64x32xbf16>, vector<64x32xf32> -> vector<64x32xf32>
    %156 = math.tanh %155 : vector<64x32xf32>
    %157 = tpu.concatenate %153, %156 in 1 : vector<64x32xf32>, vector<64x32xf32> -> vector<64x64xf32>
    %158 = arith.truncf %157 : vector<64x64xf32> to vector<64x64xbf16>
    %c1_65 = arith.constant 1 : index
    %c0_66 = arith.constant 0 : index
    %c0_67 = arith.constant 0 : index
    %159 = vector.load %arg13[%c1_65, %c0_66, %c0_67] : memref<3x64x32xbf16, #tpu.memory_space<vmem>>, vector<1x64x32xbf16>
    %160 = vector.shape_cast %159 : vector<1x64x32xbf16> to vector<64x32xbf16>
    %cst_68 = arith.constant dense<0.000000e+00> : vector<64x32xf32>
    %161 = tpu.matmul %158, %160, %cst_68 {dimension_numbers = #tpu.dot_dimension_numbers<[1], [0], [0], [1], [0, 0, 1, 1], [], []>} : vector<64x64xbf16>, vector<64x32xbf16>, vector<64x32xf32> -> vector<64x32xf32>
    %c1_69 = arith.constant 1 : index
    %c0_70 = arith.constant 0 : index
    %c0_71 = arith.constant 0 : index
    %162 = vector.load %arg14[%c1_69, %c0_70, %c0_71] : memref<3x1x32xf32, #tpu.memory_space<vmem>>, vector<1x1x32xf32>
    %163 = vector.shape_cast %162 : vector<1x1x32xf32> to vector<1x32xf32>
    %164 = vector.broadcast %163 : vector<1x32xf32> to vector<64x32xf32>
    %165 = arith.addf %161, %164 : vector<64x32xf32>
    %166 = math.tanh %165 : vector<64x32xf32>
    %167 = arith.truncf %166 : vector<64x32xf32> to vector<64x32xbf16>
    %c2_72 = arith.constant 2 : index
    %c0_73 = arith.constant 0 : index
    %c0_74 = arith.constant 0 : index
    %168 = vector.load %arg12[%c2_72, %c0_73, %c0_74] : memref<3x32x32xbf16, #tpu.memory_space<vmem>>, vector<1x32x32xbf16>
    %169 = vector.shape_cast %168 : vector<1x32x32xbf16> to vector<32x32xbf16>
    %cst_75 = arith.constant dense<0.000000e+00> : vector<64x32xf32>
    %170 = tpu.matmul %167, %169, %cst_75 {dimension_numbers = #tpu.dot_dimension_numbers<[1], [0], [0], [1], [0, 0, 1, 1], [], []>} : vector<64x32xbf16>, vector<32x32xbf16>, vector<64x32xf32> -> vector<64x32xf32>
    %171 = arith.truncf %170 : vector<64x32xf32> to vector<64x32xbf16>
    %cst_76 = arith.constant dense<0.000000e+00> : vector<64x32xf32>
    %172 = tpu.matmul %122, %171, %cst_76 {dimension_numbers = #tpu.dot_dimension_numbers<[1], [0], [0], [1], [0, 0, 1, 1], [], []>} : vector<64x64xbf16>, vector<64x32xbf16>, vector<64x32xf32> -> vector<64x32xf32>
    %173 = math.tanh %172 : vector<64x32xf32>
    %174 = arith.truncf %173 : vector<64x32xf32> to vector<64x32xbf16>
    %cst_77 = arith.constant dense<0.000000e+00> : vector<64x32xf32>
    %175 = tpu.matmul %126, %174, %cst_77 {dimension_numbers = #tpu.dot_dimension_numbers<[1], [0], [0], [1], [0, 0, 1, 1], [], []>} : vector<64x64xbf16>, vector<64x32xbf16>, vector<64x32xf32> -> vector<64x32xf32>
    %176 = math.tanh %175 : vector<64x32xf32>
    %177 = tpu.concatenate %173, %176 in 1 : vector<64x32xf32>, vector<64x32xf32> -> vector<64x64xf32>
    %178 = arith.truncf %177 : vector<64x64xf32> to vector<64x64xbf16>
    %c2_78 = arith.constant 2 : index
    %c0_79 = arith.constant 0 : index
    %c0_80 = arith.constant 0 : index
    %179 = vector.load %arg13[%c2_78, %c0_79, %c0_80] : memref<3x64x32xbf16, #tpu.memory_space<vmem>>, vector<1x64x32xbf16>
    %180 = vector.shape_cast %179 : vector<1x64x32xbf16> to vector<64x32xbf16>
    %cst_81 = arith.constant dense<0.000000e+00> : vector<64x32xf32>
    %181 = tpu.matmul %178, %180, %cst_81 {dimension_numbers = #tpu.dot_dimension_numbers<[1], [0], [0], [1], [0, 0, 1, 1], [], []>} : vector<64x64xbf16>, vector<64x32xbf16>, vector<64x32xf32> -> vector<64x32xf32>
    %c2_82 = arith.constant 2 : index
    %c0_83 = arith.constant 0 : index
    %c0_84 = arith.constant 0 : index
    %182 = vector.load %arg14[%c2_82, %c0_83, %c0_84] : memref<3x1x32xf32, #tpu.memory_space<vmem>>, vector<1x1x32xf32>
    %183 = vector.shape_cast %182 : vector<1x1x32xf32> to vector<1x32xf32>
    %184 = vector.broadcast %183 : vector<1x32xf32> to vector<64x32xf32>
    %185 = arith.addf %181, %184 : vector<64x32xf32>
    %186 = math.tanh %185 : vector<64x32xf32>
    %187 = tpu.concatenate %13, %146, %166, %186 in 1 : vector<64x32xf32>, vector<64x32xf32>, vector<64x32xf32>, vector<64x32xf32> -> vector<64x128xf32>
    %188 = arith.truncf %187 : vector<64x128xf32> to vector<64x128xbf16>
    %c0_85 = arith.constant 0 : index
    %c0_86 = arith.constant 0 : index
    %189 = vector.load %arg15[%c0_85, %c0_86] : memref<128x256xbf16, #tpu.memory_space<vmem>>, vector<128x256xbf16>
    %cst_87 = arith.constant dense<0.000000e+00> : vector<64x256xf32>
    %190 = tpu.matmul %188, %189, %cst_87 {dimension_numbers = #tpu.dot_dimension_numbers<[1], [0], [0], [1], [0, 0, 1, 1], [], []>} : vector<64x128xbf16>, vector<128x256xbf16>, vector<64x256xf32> -> vector<64x256xf32>
    %c0_88 = arith.constant 0 : index
    %c0_89 = arith.constant 0 : index
    %191 = vector.load %arg16[%c0_88, %c0_89] : memref<1x256xf32, #tpu.memory_space<vmem>>, vector<1x256xf32>
    %192 = vector.broadcast %191 : vector<1x256xf32> to vector<64x256xf32>
    %193 = arith.addf %190, %192 : vector<64x256xf32>
    %194 = math.tanh %193 : vector<64x256xf32>
    %195 = arith.truncf %194 : vector<64x256xf32> to vector<64x256xbf16>
    %c0_90 = arith.constant 0 : index
    %c0_91 = arith.constant 0 : index
    %196 = vector.load %arg17[%c0_90, %c0_91] : memref<256x32xbf16, #tpu.memory_space<vmem>>, vector<256x32xbf16>
    %cst_92 = arith.constant dense<0.000000e+00> : vector<64x32xf32>
    %197 = tpu.matmul %195, %196, %cst_92 {dimension_numbers = #tpu.dot_dimension_numbers<[1], [0], [0], [1], [0, 0, 1, 1], [], []>} : vector<64x256xbf16>, vector<256x32xbf16>, vector<64x32xf32> -> vector<64x32xf32>
    %c0_93 = arith.constant 0 : index
    %c0_94 = arith.constant 0 : index
    %198 = vector.load %arg18[%c0_93, %c0_94] : memref<1x32xf32, #tpu.memory_space<vmem>>, vector<1x32xf32>
    %199 = vector.broadcast %198 : vector<1x32xf32> to vector<64x32xf32>
    %200 = arith.addf %197, %199 : vector<64x32xf32>
    %201 = math.tanh %200 : vector<64x32xf32>
    %c0_95 = arith.constant 0 : index
    %c0_96 = arith.constant 0 : index
    %202 = vector.load %arg19[%c0_95, %c0_96] : memref<64x32xf32, #tpu.memory_space<vmem>>, vector<64x32xf32>
    tpu.vector_store %arg19[%c0_95, %c0_96], %201 {strides = array<i32>} : memref<64x32xf32, #tpu.memory_space<vmem>>, vector<64x32xf32>,
    return
  }
  func.func @transform_0(%arg0: i32) -> (i32, i32) {
    %c0_i32 = arith.constant 0 : i32
    %c0_i32_0 = arith.constant 0 : i32
    return %arg0, %c0_i32 : i32, i32
  }
  func.func @transform_1(%arg0: i32) -> (i32, i32) {
    %c0_i32 = arith.constant 0 : i32
    %c0_i32_0 = arith.constant 0 : i32
    return %arg0, %c0_i32 : i32, i32
  }
  func.func @transform_2(%arg0: i32) -> (i32, i32) {
    %c0_i32 = arith.constant 0 : i32
    %c0_i32_0 = arith.constant 0 : i32
    return %c0_i32, %arg0 : i32, i32
  }
  func.func @transform_3(%arg0: i32) -> (i32, i32) {
    %c0_i32 = arith.constant 0 : i32
    %c0_i32_0 = arith.constant 0 : i32
    %c0_i32_1 = arith.constant 0 : i32
    return %c0_i32, %c0_i32_0 : i32, i32
  }
  func.func @transform_4(%arg0: i32) -> (i32, i32) {
    %c0_i32 = arith.constant 0 : i32
    %c0_i32_0 = arith.constant 0 : i32
    %c0_i32_1 = arith.constant 0 : i32
    return %c0_i32, %c0_i32_0 : i32, i32
  }
  func.func @transform_5(%arg0: i32) -> (i32, i32) {
    %c0_i32 = arith.constant 0 : i32
    %c0_i32_0 = arith.constant 0 : i32
    %c0_i32_1 = arith.constant 0 : i32
    return %c0_i32, %c0_i32_0 : i32, i32
  }
  func.func @transform_6(%arg0: i32) -> (i32, i32) {
    %c0_i32 = arith.constant 0 : i32
    %c0_i32_0 = arith.constant 0 : i32
    %c0_i32_1 = arith.constant 0 : i32
    return %c0_i32, %c0_i32_0 : i32, i32
  }
  func.func @transform_7(%arg0: i32) -> (i32, i32) {
    %c0_i32 = arith.constant 0 : i32
    %c0_i32_0 = arith.constant 0 : i32
    %c0_i32_1 = arith.constant 0 : i32
    return %c0_i32, %c0_i32_0 : i32, i32
  }
  func.func @transform_8(%arg0: i32) -> (i32, i32) {
    %c0_i32 = arith.constant 0 : i32
    %c0_i32_0 = arith.constant 0 : i32
    %c0_i32_1 = arith.constant 0 : i32
    return %c0_i32, %c0_i32_0 : i32, i32
  }
  func.func @transform_9(%arg0: i32) -> (i32, i32) {
    %c0_i32 = arith.constant 0 : i32
    %c0_i32_0 = arith.constant 0 : i32
    %c0_i32_1 = arith.constant 0 : i32
    return %c0_i32, %c0_i32_0 : i32, i32
  }
  func.func @transform_10(%arg0: i32) -> (i32, i32) {
    %c0_i32 = arith.constant 0 : i32
    %c0_i32_0 = arith.constant 0 : i32
    %c0_i32_1 = arith.constant 0 : i32
    return %c0_i32, %c0_i32_0 : i32, i32
  }
  func.func @transform_11(%arg0: i32) -> (i32, i32, i32) {
    %c0_i32 = arith.constant 0 : i32
    %c0_i32_0 = arith.constant 0 : i32
    %c0_i32_1 = arith.constant 0 : i32
    %c0_i32_2 = arith.constant 0 : i32
    return %c0_i32, %c0_i32_0, %c0_i32_1 : i32, i32, i32
  }
  func.func @transform_12(%arg0: i32) -> (i32, i32, i32) {
    %c0_i32 = arith.constant 0 : i32
    %c0_i32_0 = arith.constant 0 : i32
    %c0_i32_1 = arith.constant 0 : i32
    %c0_i32_2 = arith.constant 0 : i32
    return %c0_i32, %c0_i32_0, %c0_i32_1 : i32, i32, i32
  }
  func.func @transform_13(%arg0: i32) -> (i32, i32, i32) {
    %c0_i32 = arith.constant 0 : i32
    %c0_i32_0 = arith.constant 0 : i32
    %c0_i32_1 = arith.constant 0 : i32
    %c0_i32_2 = arith.constant 0 : i32
    return %c0_i32, %c0_i32_0, %c0_i32_1 : i32, i32, i32
  }
  func.func @transform_14(%arg0: i32) -> (i32, i32) {
    %c0_i32 = arith.constant 0 : i32
    %c0_i32_0 = arith.constant 0 : i32
    %c0_i32_1 = arith.constant 0 : i32
    return %c0_i32, %c0_i32_0 : i32, i32
  }
  func.func @transform_15(%arg0: i32) -> (i32, i32) {
    %c0_i32 = arith.constant 0 : i32
    %c0_i32_0 = arith.constant 0 : i32
    %c0_i32_1 = arith.constant 0 : i32
    return %c0_i32, %c0_i32_0 : i32, i32
  }
  func.func @transform_16(%arg0: i32) -> (i32, i32) {
    %c0_i32 = arith.constant 0 : i32
    %c0_i32_0 = arith.constant 0 : i32
    %c0_i32_1 = arith.constant 0 : i32
    return %c0_i32, %c0_i32_0 : i32, i32
  }
  func.func @transform_17(%arg0: i32) -> (i32, i32) {
    %c0_i32 = arith.constant 0 : i32
    %c0_i32_0 = arith.constant 0 : i32
    %c0_i32_1 = arith.constant 0 : i32
    return %c0_i32, %c0_i32_0 : i32, i32
  }
  func.func @transform_18(%arg0: i32) -> (i32, i32) {
    %c0_i32 = arith.constant 0 : i32
    %c0_i32_0 = arith.constant 0 : i32
    return %arg0, %c0_i32 : i32, i32
  }
}

</mosaic_0001>

<llo_original>
// kernel: tpu_custom_call.1
$region0: #{tpu_custom_call.1}
  #allocation0 [shape = 'u32[]', space=smem, size = 0x4, offset = 0x4, fixed_abs, tag = 'smem constant byte address 0x4 - core index']
  #allocation1 [shape = 'u32[144,128]{1,0:T(1,128)}', space=vmem, size = 0x12000, scoped, tag = 'internal scratch']
  %s0 = inlined_call_operand.vmem [shape: bf16[64,16], index: 0, kind: input, shape index: {}]
  %s1 = inlined_call_operand.vmem [shape: bf16[64,8], index: 1, kind: input, shape index: {}]
  %s2 = inlined_call_operand.vmem [shape: bf16[4,1024], index: 2, kind: input, shape index: {}]
  %s3 = inlined_call_operand.vmem [shape: bf16[8,256], index: 3, kind: input, shape index: {}]
  %s4 = inlined_call_operand.vmem [shape: f32[1,256], index: 4, kind: input, shape index: {}]
  %s5 = inlined_call_operand.vmem [shape: bf16[256,32], index: 5, kind: input, shape index: {}]
  %s6 = inlined_call_operand.vmem [shape: f32[1,32], index: 6, kind: input, shape index: {}]
  %s7 = inlined_call_operand.vmem [shape: bf16[256,4], index: 7, kind: input, shape index: {}]
  %s8 = inlined_call_operand.vmem [shape: f32[256,1], index: 8, kind: input, shape index: {}]
  %s9 = inlined_call_operand.vmem [shape: bf16[32,256], index: 9, kind: input, shape index: {}]
  %s10 = inlined_call_operand.vmem [shape: f32[32,1], index: 10, kind: input, shape index: {}]
  %s11 = inlined_call_operand.vmem [shape: bf16[3,32,32], index: 11, kind: input, shape index: {}]
  %s12 = inlined_call_operand.vmem [shape: bf16[3,64,32], index: 12, kind: input, shape index: {}]
  %s13 = inlined_call_operand.vmem [shape: f32[3,1,32], index: 13, kind: input, shape index: {}]
  %s14 = inlined_call_operand.vmem [shape: bf16[128,256], index: 14, kind: input, shape index: {}]
  %s15 = inlined_call_operand.vmem [shape: f32[1,256], index: 15, kind: input, shape index: {}]
  %s16 = inlined_call_operand.vmem [shape: bf16[256,32], index: 16, kind: input, shape index: {}]
  %s17 = inlined_call_operand.vmem [shape: f32[1,32], index: 17, kind: input, shape index: {}]
  %s18 = inlined_call_operand.vmem [shape: f32[64,32], index: 18, kind: output, shape index: {}]
  %s19 = sld [smem:[#allocation0]]
  $region82: #{tpu_custom_call.1} parent=0
    _
  %s21 = ssub.s32 1, %s19
  %s22 = scalar_select 0, %s21, %s19
  // Predicated region
  $region2: #{tpu_custom_call.1} parent=0 // pred_check
    _
  $region3: #{tpu_custom_call.1} parent=0 // pred_check_branch
    %24 = sbr.rel (0) target = $region5
  $region4: #{tpu_custom_call.1} parent=0 // pred_region
    _
  $region5: #{tpu_custom_call.1} parent=0 // pred_fallthru
    _
  // Predicated region
  $region6: #{tpu_custom_call.1} parent=0 // pred_check
    _
  $region7: #{tpu_custom_call.1} parent=0 // pred_check_branch
    %26 = sbr.rel (0) target = $region9
  $region8: #{tpu_custom_call.1} parent=0 // pred_region
    _
  $region9: #{tpu_custom_call.1} parent=0 // pred_fallthru
    _
  // Predicated region
  $region10: #{tpu_custom_call.1} parent=0 // pred_check
    _
  $region11: #{tpu_custom_call.1} parent=0 // pred_check_branch
    %28 = sbr.rel (0) target = $region13
  $region12: #{tpu_custom_call.1} parent=0 // pred_region
    _
  $region13: #{tpu_custom_call.1} parent=0 // pred_fallthru
    _
  // Predicated region
  $region14: #{tpu_custom_call.1} parent=0 // pred_check
    _
  $region15: #{tpu_custom_call.1} parent=0 // pred_check_branch
    %30 = sbr.rel (0) target = $region17
  $region16: #{tpu_custom_call.1} parent=0 // pred_region
    _
  $region17: #{tpu_custom_call.1} parent=0 // pred_fallthru
    _
  // Predicated region
  $region18: #{tpu_custom_call.1} parent=0 // pred_check
    _
  $region19: #{tpu_custom_call.1} parent=0 // pred_check_branch
    %32 = sbr.rel (0) target = $region21
  $region20: #{tpu_custom_call.1} parent=0 // pred_region
    _
  $region21: #{tpu_custom_call.1} parent=0 // pred_fallthru
    _
  // Predicated region
  $region22: #{tpu_custom_call.1} parent=0 // pred_check
    _
  $region23: #{tpu_custom_call.1} parent=0 // pred_check_branch
    %34 = sbr.rel (0) target = $region25
  $region24: #{tpu_custom_call.1} parent=0 // pred_region
    _
  $region25: #{tpu_custom_call.1} parent=0 // pred_fallthru
    _
  // Predicated region
  $region26: #{tpu_custom_call.1} parent=0 // pred_check
    _
  $region27: #{tpu_custom_call.1} parent=0 // pred_check_branch
    %36 = sbr.rel (0) target = $region29
  $region28: #{tpu_custom_call.1} parent=0 // pred_region
    _
  $region29: #{tpu_custom_call.1} parent=0 // pred_fallthru
    _
  // Predicated region
  $region30: #{tpu_custom_call.1} parent=0 // pred_check
    _
  $region31: #{tpu_custom_call.1} parent=0 // pred_check_branch
    %38 = sbr.rel (0) target = $region33
  $region32: #{tpu_custom_call.1} parent=0 // pred_region
    _
  $region33: #{tpu_custom_call.1} parent=0 // pred_fallthru
    _
  // Predicated region
  $region34: #{tpu_custom_call.1} parent=0 // pred_check
    _
  $region35: #{tpu_custom_call.1} parent=0 // pred_check_branch
    %40 = sbr.rel (0) target = $region37
  $region36: #{tpu_custom_call.1} parent=0 // pred_region
    _
  $region37: #{tpu_custom_call.1} parent=0 // pred_fallthru
    _
  // Predicated region
  $region38: #{tpu_custom_call.1} parent=0 // pred_check
    _
  $region39: #{tpu_custom_call.1} parent=0 // pred_check_branch
    %42 = sbr.rel (0) target = $region41
  $region40: #{tpu_custom_call.1} parent=0 // pred_region
    _
  $region41: #{tpu_custom_call.1} parent=0 // pred_fallthru
    _
  // Predicated region
  $region42: #{tpu_custom_call.1} parent=0 // pred_check
    _
  $region43: #{tpu_custom_call.1} parent=0 // pred_check_branch
    %44 = sbr.rel (0) target = $region45
  $region44: #{tpu_custom_call.1} parent=0 // pred_region
    _
  $region45: #{tpu_custom_call.1} parent=0 // pred_fallthru
    _
  // Predicated region
  $region46: #{tpu_custom_call.1} parent=0 // pred_check
    _
  $region47: #{tpu_custom_call.1} parent=0 // pred_check_branch
    %46 = sbr.rel (0) target = $region49
  $region48: #{tpu_custom_call.1} parent=0 // pred_region
    _
  $region49: #{tpu_custom_call.1} parent=0 // pred_fallthru
    _
  // Predicated region
  $region50: #{tpu_custom_call.1} parent=0 // pred_check
    _
  $region51: #{tpu_custom_call.1} parent=0 // pred_check_branch
    %48 = sbr.rel (0) target = $region53
  $region52: #{tpu_custom_call.1} parent=0 // pred_region
    _
  $region53: #{tpu_custom_call.1} parent=0 // pred_fallthru
    _
  // Predicated region
  $region54: #{tpu_custom_call.1} parent=0 // pred_check
    _
  $region55: #{tpu_custom_call.1} parent=0 // pred_check_branch
    %50 = sbr.rel (0) target = $region57
  $region56: #{tpu_custom_call.1} parent=0 // pred_region
    _
  $region57: #{tpu_custom_call.1} parent=0 // pred_fallthru
    _
  // Predicated region
  $region58: #{tpu_custom_call.1} parent=0 // pred_check
    _
  $region59: #{tpu_custom_call.1} parent=0 // pred_check_branch
    %52 = sbr.rel (0) target = $region61
  $region60: #{tpu_custom_call.1} parent=0 // pred_region
    _
  $region61: #{tpu_custom_call.1} parent=0 // pred_fallthru
    _
  // Predicated region
  $region62: #{tpu_custom_call.1} parent=0 // pred_check
    _
  $region63: #{tpu_custom_call.1} parent=0 // pred_check_branch
    %54 = sbr.rel (0) target = $region65
  $region64: #{tpu_custom_call.1} parent=0 // pred_region
    _
  $region65: #{tpu_custom_call.1} parent=0 // pred_fallthru
    _
  // Predicated region
  $region66: #{tpu_custom_call.1} parent=0 // pred_check
    _
  $region67: #{tpu_custom_call.1} parent=0 // pred_check_branch
    %56 = sbr.rel (0) target = $region69
  $region68: #{tpu_custom_call.1} parent=0 // pred_region
    _
  $region69: #{tpu_custom_call.1} parent=0 // pred_fallthru
    _
  // Predicated region
  $region70: #{tpu_custom_call.1} parent=0 // pred_check
    _
  $region71: #{tpu_custom_call.1} parent=0 // pred_check_branch
    %58 = sbr.rel (0) target = $region73
  $region72: #{tpu_custom_call.1} parent=0 // pred_region
    _
  $region73: #{tpu_custom_call.1} parent=0 // pred_fallthru
    _
  %v60 = vld [vmem:[%s1] sm:$0xf]
  %v61 = vld [vmem:[%s1 + $0x4] sm:$0xf]
  %v62 = vld [vmem:[%s1 + $0x8] sm:$0xf]
  %v63 = vld [vmem:[%s1 + $0xc] sm:$0xf]
  %v64 = vld [vmem:[%s1 + $0x10] sm:$0xf]
  %v65 = vld [vmem:[%s1 + $0x14] sm:$0xf]
  %v66 = vld [vmem:[%s1 + $0x18] sm:$0xf]
  %v67 = vld [vmem:[%s1 + $0x1c] sm:$0xf]
  %v68 = vld [vmem:[%s3] sm:$0xff]
  %v69 = vld [vmem:[%s4] sm:$0x3]
  %v71 = vlaneseq
  %v72 = vshrl.u32 %v71, 7
  %v73 = vsub.s32 0, %v72
  %v74 = vrot.slane %v69, %v73
  %v75 = vlaneseq
  %v76 = vshrl.u32 %v75, 7
  %v77 = vsub.s32 1, %v76
  %v78 = vrot.slane %v69, %v77
  %v89 = vunpack.c.l.b16 %v60
  %v90 = vunpack.c.l.b16 %v61
  %v91 = vunpack.c.l.b16 %v62
  %v92 = vunpack.c.l.b16 %v63
  %v93 = vunpack.c.l.b16 %v64
  %v94 = vunpack.c.l.b16 %v65
  %v95 = vunpack.c.l.b16 %v66
  %v96 = vunpack.c.l.b16 %v67
  %v97 = vpack.c.b16 %v90, %v89
  %v98 = vpack.c.b16 %v92, %v91
  %v99 = vpack.c.b16 %v94, %v93
  %v100 = vpack.c.b16 %v96, %v95
  %v102 = vunpack.c.l.b16 %v68
  %v103 = vunpack.c.h.b16 %v68
  %v104 = vpack.c.b16 %v102, %v102
  %v105 = vpack.c.b16 %v103, %v103
  %vm106 = vcmask 64512
  %v108 = vsel %vm106, %v97, 0
  %v111 = vsel %vm106, %v98, 0
  %v114 = vsel %vm106, %v99, 0
  %v117 = vsel %vm106, %v100, 0
  %vm119 = vcmask 1043456
  %v121 = vsel %vm119, %v104, 0
  %v124 = vsel %vm119, %v105, 0
  %126 = vmatprep.subr.bf16.mxu0 0
  %127 = vmatpush1.bf16.msra.mxu0 0
  %128 = vmatprep.subr.bf16.mxu0 0
  %129 = vmatpush1.bf16.msra.mxu0 0
  %130 = vmatprep.subr.bf16.mxu0 0
  %131 = vmatpush1.bf16.msra.mxu0 0
  %132 = vmatprep.subr.bf16.mxu0 0
  %133 = vmatpush1.bf16.msra.mxu0 0
  %134 = vmatprep.subr.bf16.mxu0 0
  %135 = vmatpush1.bf16.msra.mxu0 0
  %136 = vmatprep.subr.bf16.mxu0 0
  %137 = vmatpush1.bf16.msra.mxu0 0
  %138 = vmatprep.subr.bf16.mxu0 0
  %139 = vmatpush1.bf16.msra.mxu0 0
  %140 = vmatprep.subr.bf16.mxu0 %v124
  %141 = vmatpush1.bf16.msra.mxu0 %v121
  %142 = vmatprep.subr.bf16.mxu0 0
  %143 = vmatpush2.bf16.msra.mxu0 0
  %144 = vmatprep.subr.bf16.mxu0 0
  %145 = vmatpush2.bf16.msra.mxu0 0
  %146 = vmatprep.subr.bf16.mxu0 0
  %147 = vmatpush2.bf16.msra.mxu0 0
  %148 = vmatprep.subr.bf16.mxu0 0
  %149 = vmatpush2.bf16.msra.mxu0 0
  %150 = vmatprep.subr.bf16.mxu0 0
  %151 = vmatpush2.bf16.msra.mxu0 0
  %152 = vmatprep.subr.bf16.mxu0 0
  %153 = vmatpush2.bf16.msra.mxu0 0
  %154 = vmatprep.subr.bf16.mxu0 0
  %155 = vmatpush2.bf16.msra.mxu0 0
  %156 = vmatprep.subr.bf16.mxu0 0
  %157 = vmatpush2.bf16.msra.mxu0 0
  %158 = vmatprep.mubr.bf16.mxu0 0
  %159 = vmatmul.mubr.bf16.gmra.mxu0 %v108
  %v160 = vpop.f32.mrf.mxu0
  %v161 = vadd.f32 %v74, %v160
  %v162 = vpop.f32.mrf.mxu0
  %v163 = vadd.f32 %v78, %v162
  %v164 = vpop.f32.mrf.mxu0
  %v165 = vadd.f32 %v74, %v164
  %v166 = vpop.f32.mrf.mxu0
  %v167 = vadd.f32 %v78, %v166
  %168 = vmatprep.mubr.bf16.mxu0 0
  %169 = vmatmul.mubr.bf16.gmra.mxu0 %v111
  %v170 = vpop.f32.mrf.mxu0
  %v171 = vadd.f32 %v74, %v170
  %v172 = vpop.f32.mrf.mxu0
  %v173 = vadd.f32 %v78, %v172
  %v174 = vpop.f32.mrf.mxu0
  %v175 = vadd.f32 %v74, %v174
  %v176 = vpop.f32.mrf.mxu0
  %v177 = vadd.f32 %v78, %v176
  %178 = vmatprep.mubr.bf16.mxu0 0
  %179 = vmatmul.mubr.bf16.gmra.mxu0 %v114
  %v180 = vpop.f32.mrf.mxu0
  %v181 = vadd.f32 %v74, %v180
  %v182 = vpop.f32.mrf.mxu0
  %v183 = vadd.f32 %v78, %v182
  %v184 = vpop.f32.mrf.mxu0
  %v185 = vadd.f32 %v74, %v184
  %v186 = vpop.f32.mrf.mxu0
  %v187 = vadd.f32 %v78, %v186
  %188 = vmatprep.mubr.bf16.mxu0 0
  %189 = vmatmul.mubr.bf16.gmra.mxu0 %v117
  %v190 = vpop.f32.mrf.mxu0
  %v191 = vadd.f32 %v74, %v190
  %v192 = vpop.f32.mrf.mxu0
  %v193 = vadd.f32 %v78, %v192
  %v194 = vpop.f32.mrf.mxu0
  %v195 = vadd.f32 %v74, %v194
  %v196 = vpop.f32.mrf.mxu0
  %v197 = vadd.f32 %v78, %v196
  %198 = vdwg.mxu0
  %v199 = vtanh.pop %v161
  %v200 = vtanh.pop %v163
  %v201 = vtanh.pop %v165
  %v202 = vtanh.pop %v167
  %v203 = vtanh.pop %v171
  %v204 = vtanh.pop %v173
  %v205 = vtanh.pop %v175
  %v206 = vtanh.pop %v177
  %v207 = vtanh.pop %v181
  %v208 = vtanh.pop %v183
  %v209 = vtanh.pop %v185
  %v210 = vtanh.pop %v187
  %v211 = vtanh.pop %v191
  %v212 = vtanh.pop %v193
  %v213 = vtanh.pop %v195
  %v214 = vtanh.pop %v197
  %v215 = vpack.c.bf16 %v201, %v199
  %v216 = vpack.c.bf16 %v202, %v200
  %v217 = vpack.c.bf16 %v205, %v203
  %v218 = vpack.c.bf16 %v206, %v204
  %v219 = vpack.c.bf16 %v209, %v207
  %v220 = vpack.c.bf16 %v210, %v208
  %v221 = vpack.c.bf16 %v213, %v211
  %v222 = vpack.c.bf16 %v214, %v212
  %v223 = vld [vmem:[%s5] sm:$0xf]
  %v224 = vld [vmem:[%s5 + $0x4] sm:$0xf]
  %v225 = vld [vmem:[%s5 + $0x8] sm:$0xf]
  %v226 = vld [vmem:[%s5 + $0xc] sm:$0xf]
  %v227 = vld [vmem:[%s5 + $0x10] sm:$0xf]
  %v228 = vld [vmem:[%s5 + $0x14] sm:$0xf]
  %v229 = vld [vmem:[%s5 + $0x18] sm:$0xf]
  %v230 = vld [vmem:[%s5 + $0x1c] sm:$0xf]
  %v231 = vld [vmem:[%s5 + $0x20] sm:$0xf]
  %v232 = vld [vmem:[%s5 + $0x24] sm:$0xf]
  %v233 = vld [vmem:[%s5 + $0x28] sm:$0xf]
  %v234 = vld [vmem:[%s5 + $0x2c] sm:$0xf]
  %v235 = vld [vmem:[%s5 + $0x30] sm:$0xf]
  %v236 = vld [vmem:[%s5 + $0x34] sm:$0xf]
  %v237 = vld [vmem:[%s5 + $0x38] sm:$0xf]
  %v238 = vld [vmem:[%s5 + $0x3c] sm:$0xf]
  %v239 = vld [vmem:[%s5 + $0x40] sm:$0xf]
  %v240 = vld [vmem:[%s5 + $0x44] sm:$0xf]
  %v241 = vld [vmem:[%s5 + $0x48] sm:$0xf]
  %v242 = vld [vmem:[%s5 + $0x4c] sm:$0xf]
  %v243 = vld [vmem:[%s5 + $0x50] sm:$0xf]
  %v244 = vld [vmem:[%s5 + $0x54] sm:$0xf]
  %v245 = vld [vmem:[%s5 + $0x58] sm:$0xf]
  %v246 = vld [vmem:[%s5 + $0x5c] sm:$0xf]
  %v247 = vld [vmem:[%s5 + $0x60] sm:$0xf]
  %v248 = vld [vmem:[%s5 + $0x64] sm:$0xf]
  %v249 = vld [vmem:[%s5 + $0x68] sm:$0xf]
  %v250 = vld [vmem:[%s5 + $0x6c] sm:$0xf]
  %v251 = vld [vmem:[%s5 + $0x70] sm:$0xf]
  %v252 = vld [vmem:[%s5 + $0x74] sm:$0xf]
  %v253 = vld [vmem:[%s5 + $0x78] sm:$0xf]
  %v254 = vld [vmem:[%s5 + $0x7c] sm:$0xf]
  %v255 = vld [vmem:[%s6] sm:$0x1]
  %v257 = vlaneseq
  %v258 = vshrl.u32 %v257, 7
  %v259 = vsub.s32 0, %v258
  %v260 = vrot.slane %v255, %v259
  %v294 = vunpack.c.l.b16 %v223
  %v295 = vunpack.c.l.b16 %v224
  %v296 = vunpack.c.l.b16 %v225
  %v297 = vunpack.c.l.b16 %v226
  %v298 = vunpack.c.l.b16 %v227
  %v299 = vunpack.c.l.b16 %v228
  %v300 = vunpack.c.l.b16 %v229
  %v301 = vunpack.c.l.b16 %v230
  %v302 = vunpack.c.l.b16 %v231
  %v303 = vunpack.c.l.b16 %v232
  %v304 = vunpack.c.l.b16 %v233
  %v305 = vunpack.c.l.b16 %v234
  %v306 = vunpack.c.l.b16 %v235
  %v307 = vunpack.c.l.b16 %v236
  %v308 = vunpack.c.l.b16 %v237
  %v309 = vunpack.c.l.b16 %v238
  %v310 = vunpack.c.l.b16 %v239
  %v311 = vunpack.c.l.b16 %v240
  %v312 = vunpack.c.l.b16 %v241
  %v313 = vunpack.c.l.b16 %v242
  %v314 = vunpack.c.l.b16 %v243
  %v315 = vunpack.c.l.b16 %v244
  %v316 = vunpack.c.l.b16 %v245
  %v317 = vunpack.c.l.b16 %v246
  %v318 = vunpack.c.l.b16 %v247
  %v319 = vunpack.c.l.b16 %v248
  %v320 = vunpack.c.l.b16 %v249
  %v321 = vunpack.c.l.b16 %v250
  %v322 = vunpack.c.l.b16 %v251
  %v323 = vunpack.c.l.b16 %v252
  %v324 = vunpack.c.l.b16 %v253
  %v325 = vunpack.c.l.b16 %v254
  %v326 = vpack.c.b16 %v295, %v294
  %v327 = vpack.c.b16 %v297, %v296
  %v328 = vpack.c.b16 %v299, %v298
  %v329 = vpack.c.b16 %v301, %v300
  %v330 = vpack.c.b16 %v303, %v302
  %v331 = vpack.c.b16 %v305, %v304
  %v332 = vpack.c.b16 %v307, %v306
  %v333 = vpack.c.b16 %v309, %v308
  %v334 = vpack.c.b16 %v311, %v310
  %v335 = vpack.c.b16 %v313, %v312
  %v336 = vpack.c.b16 %v315, %v314
  %v337 = vpack.c.b16 %v317, %v316
  %v338 = vpack.c.b16 %v319, %v318
  %v339 = vpack.c.b16 %v321, %v320
  %v340 = vpack.c.b16 %v323, %v322
  %v341 = vpack.c.b16 %v325, %v324
  %358 = vmatprep.subr.bf16.mxu0 0
  %359 = vmatpush1.bf16.msra.mxu0 %v333
  %360 = vmatprep.subr.bf16.mxu0 0
  %361 = vmatpush1.bf16.msra.mxu0 %v332
  %362 = vmatprep.subr.bf16.mxu0 0
  %363 = vmatpush1.bf16.msra.mxu0 %v331
  %364 = vmatprep.subr.bf16.mxu0 0
  %365 = vmatpush1.bf16.msra.mxu0 %v330
  %366 = vmatprep.subr.bf16.mxu0 0
  %367 = vmatpush1.bf16.msra.mxu0 %v329
  %368 = vmatprep.subr.bf16.mxu0 0
  %369 = vmatpush1.bf16.msra.mxu0 %v328
  %370 = vmatprep.subr.bf16.mxu0 0
  %371 = vmatpush1.bf16.msra.mxu0 %v327
  %372 = vmatprep.subr.bf16.mxu0 0
  %373 = vmatpush1.bf16.msra.mxu0 %v326
  %374 = vmatprep.subr.bf16.mxu0 0
  %375 = vmatpush2.bf16.msra.mxu0 %v341
  %376 = vmatprep.subr.bf16.mxu0 0
  %377 = vmatpush2.bf16.msra.mxu0 %v340
  %378 = vmatprep.subr.bf16.mxu0 0
  %379 = vmatpush2.bf16.msra.mxu0 %v339
  %380 = vmatprep.subr.bf16.mxu0 0
  %381 = vmatpush2.bf16.msra.mxu0 %v338
  %382 = vmatprep.subr.bf16.mxu0 0
  %383 = vmatpush2.bf16.msra.mxu0 %v337
  %384 = vmatprep.subr.bf16.mxu0 0
  %385 = vmatpush2.bf16.msra.mxu0 %v336
  %386 = vmatprep.subr.bf16.mxu0 0
  %387 = vmatpush2.bf16.msra.mxu0 %v335
  %388 = vmatprep.subr.bf16.mxu0 0
  %389 = vmatpush2.bf16.msra.mxu0 %v334
  %390 = vmatprep.mubr.bf16.mxu0 %v216
  %391 = vmatmul.mubr.bf16.gmra.mxu0 %v215
  %v392 = vpop.f32.mrf.mxu0
  %v393 = vadd.f32 %v260, %v392
  %v394 = vpop.f32.mrf.mxu0
  %v395 = vpop.f32.mrf.mxu0
  %v396 = vadd.f32 %v260, %v395
  %v397 = vpop.f32.mrf.mxu0
  %398 = vmatprep.mubr.bf16.mxu0 %v218
  %399 = vmatmul.mubr.bf16.gmra.mxu0 %v217
  %v400 = vpop.f32.mrf.mxu0
  %v401 = vadd.f32 %v260, %v400
  %v402 = vpop.f32.mrf.mxu0
  %v403 = vpop.f32.mrf.mxu0
  %v404 = vadd.f32 %v260, %v403
  %v405 = vpop.f32.mrf.mxu0
  %406 = vmatprep.mubr.bf16.mxu0 %v220
  %407 = vmatmul.mubr.bf16.gmra.mxu0 %v219
  %v408 = vpop.f32.mrf.mxu0
  %v409 = vadd.f32 %v260, %v408
  %v410 = vpop.f32.mrf.mxu0
  %v411 = vpop.f32.mrf.mxu0
  %v412 = vadd.f32 %v260, %v411
  %v413 = vpop.f32.mrf.mxu0
  %414 = vmatprep.mubr.bf16.mxu0 %v222
  %415 = vmatmul.mubr.bf16.gmra.mxu0 %v221
  %v416 = vpop.f32.mrf.mxu0
  %v417 = vadd.f32 %v260, %v416
  %v418 = vpop.f32.mrf.mxu0
  %v419 = vpop.f32.mrf.mxu0
  %v420 = vadd.f32 %v260, %v419
  %v421 = vpop.f32.mrf.mxu0
  %422 = vdwg.mxu0
  %v423 = vtanh.pop %v393
  %v424 = vtanh.pop %v396
  %v425 = vtanh.pop %v401
  %v426 = vtanh.pop %v404
  %v427 = vtanh.pop %v409
  %v428 = vtanh.pop %v412
  %v429 = vtanh.pop %v417
  %v430 = vtanh.pop %v420
  %v431 = vld [vmem:[%s8] sm:$0xff]
  %v432 = vld [vmem:[%s8 + $0x8] sm:$0xff]
  %v433 = vld [vmem:[%s8 + $0x10] sm:$0xff]
  %v434 = vld [vmem:[%s8 + $0x18] sm:$0xff]
  %v435 = vld [vmem:[%s8 + $0x20] sm:$0xff]
  %v436 = vld [vmem:[%s8 + $0x28] sm:$0xff]
  %v437 = vld [vmem:[%s8 + $0x30] sm:$0xff]
  %v438 = vld [vmem:[%s8 + $0x38] sm:$0xff]
  %v439 = vld [vmem:[%s8 + $0x40] sm:$0xff]
  %v440 = vld [vmem:[%s8 + $0x48] sm:$0xff]
  %v441 = vld [vmem:[%s8 + $0x50] sm:$0xff]
  %v442 = vld [vmem:[%s8 + $0x58] sm:$0xff]
  %v443 = vld [vmem:[%s8 + $0x60] sm:$0xff]
  %v444 = vld [vmem:[%s8 + $0x68] sm:$0xff]
  %v445 = vld [vmem:[%s8 + $0x70] sm:$0xff]
  %v446 = vld [vmem:[%s8 + $0x78] sm:$0xff]
  %v447 = vld [vmem:[%s8 + $0x80] sm:$0xff]
  %v448 = vld [vmem:[%s8 + $0x88] sm:$0xff]
  %v449 = vld [vmem:[%s8 + $0x90] sm:$0xff]
  %v450 = vld [vmem:[%s8 + $0x98] sm:$0xff]
  %v451 = vld [vmem:[%s8 + $0xa0] sm:$0xff]
  %v452 = vld [vmem:[%s8 + $0xa8] sm:$0xff]
  %v453 = vld [vmem:[%s8 + $0xb0] sm:$0xff]
  %v454 = vld [vmem:[%s8 + $0xb8] sm:$0xff]
  %v455 = vld [vmem:[%s8 + $0xc0] sm:$0xff]
  %v456 = vld [vmem:[%s8 + $0xc8] sm:$0xff]
  %v457 = vld [vmem:[%s8 + $0xd0] sm:$0xff]
  %v458 = vld [vmem:[%s8 + $0xd8] sm:$0xff]
  %v459 = vld [vmem:[%s8 + $0xe0] sm:$0xff]
  %v460 = vld [vmem:[%s8 + $0xe8] sm:$0xff]
  %v461 = vld [vmem:[%s8 + $0xf0] sm:$0xff]
  %v462 = vld [vmem:[%s8 + $0xf8] sm:$0xff]
  %464 = vset.pattern.permute.xlu0 0
  %465 = vperm.xlu0 %464, %v431
  %v466 = vpop.permute.xlu0 %465
  %469 = vset.pattern.permute.xlu0 0
  %470 = vperm.xlu0 %469, %v432
  %v471 = vpop.permute.xlu0 %470
  %474 = vset.pattern.permute.xlu0 0
  %475 = vperm.xlu0 %474, %v433
  %v476 = vpop.permute.xlu0 %475
  %479 = vset.pattern.permute.xlu0 0
  %480 = vperm.xlu0 %479, %v434
  %v481 = vpop.permute.xlu0 %480
  %484 = vset.pattern.permute.xlu0 0
  %485 = vperm.xlu0 %484, %v435
  %v486 = vpop.permute.xlu0 %485
  %489 = vset.pattern.permute.xlu0 0
  %490 = vperm.xlu0 %489, %v436
  %v491 = vpop.permute.xlu0 %490
  %494 = vset.pattern.permute.xlu0 0
  %495 = vperm.xlu0 %494, %v437
  %v496 = vpop.permute.xlu0 %495
  %499 = vset.pattern.permute.xlu0 0
  %500 = vperm.xlu0 %499, %v438
  %v501 = vpop.permute.xlu0 %500
  %504 = vset.pattern.permute.xlu0 0
  %505 = vperm.xlu0 %504, %v439
  %v506 = vpop.permute.xlu0 %505
  %509 = vset.pattern.permute.xlu0 0
  %510 = vperm.xlu0 %509, %v440
  %v511 = vpop.permute.xlu0 %510
  %514 = vset.pattern.permute.xlu0 0
  %515 = vperm.xlu0 %514, %v441
  %v516 = vpop.permute.xlu0 %515
  %519 = vset.pattern.permute.xlu0 0
  %520 = vperm.xlu0 %519, %v442
  %v521 = vpop.permute.xlu0 %520
  %524 = vset.pattern.permute.xlu0 0
  %525 = vperm.xlu0 %524, %v443
  %v526 = vpop.permute.xlu0 %525
  %529 = vset.pattern.permute.xlu0 0
  %530 = vperm.xlu0 %529, %v444
  %v531 = vpop.permute.xlu0 %530
  %534 = vset.pattern.permute.xlu0 0
  %535 = vperm.xlu0 %534, %v445
  %v536 = vpop.permute.xlu0 %535
  %539 = vset.pattern.permute.xlu0 0
  %540 = vperm.xlu0 %539, %v446
  %v541 = vpop.permute.xlu0 %540
  %544 = vset.pattern.permute.xlu0 0
  %545 = vperm.xlu0 %544, %v447
  %v546 = vpop.permute.xlu0 %545
  %549 = vset.pattern.permute.xlu0 0
  %550 = vperm.xlu0 %549, %v448
  %v551 = vpop.permute.xlu0 %550
  %554 = vset.pattern.permute.xlu0 0
  %555 = vperm.xlu0 %554, %v449
  %v556 = vpop.permute.xlu0 %555
  %559 = vset.pattern.permute.xlu0 0
  %560 = vperm.xlu0 %559, %v450
  %v561 = vpop.permute.xlu0 %560
  %564 = vset.pattern.permute.xlu0 0
  %565 = vperm.xlu0 %564, %v451
  %v566 = vpop.permute.xlu0 %565
  %569 = vset.pattern.permute.xlu0 0
  %570 = vperm.xlu0 %569, %v452
  %v571 = vpop.permute.xlu0 %570
  %574 = vset.pattern.permute.xlu0 0
  %575 = vperm.xlu0 %574, %v453
  %v576 = vpop.permute.xlu0 %575
  %579 = vset.pattern.permute.xlu0 0
  %580 = vperm.xlu0 %579, %v454
  %v581 = vpop.permute.xlu0 %580
  %584 = vset.pattern.permute.xlu0 0
  %585 = vperm.xlu0 %584, %v455
  %v586 = vpop.permute.xlu0 %585
  %589 = vset.pattern.permute.xlu0 0
  %590 = vperm.xlu0 %589, %v456
  %v591 = vpop.permute.xlu0 %590
  %594 = vset.pattern.permute.xlu0 0
  %595 = vperm.xlu0 %594, %v457
  %v596 = vpop.permute.xlu0 %595
  %599 = vset.pattern.permute.xlu0 0
  %600 = vperm.xlu0 %599, %v458
  %v601 = vpop.permute.xlu0 %600
  %604 = vset.pattern.permute.xlu0 0
  %605 = vperm.xlu0 %604, %v459
  %v606 = vpop.permute.xlu0 %605
  %609 = vset.pattern.permute.xlu0 0
  %610 = vperm.xlu0 %609, %v460
  %v611 = vpop.permute.xlu0 %610
  %614 = vset.pattern.permute.xlu0 0
  %615 = vperm.xlu0 %614, %v461
  %v616 = vpop.permute.xlu0 %615
  %619 = vset.pattern.permute.xlu0 0
  %620 = vperm.xlu0 %619, %v462
  %v621 = vpop.permute.xlu0 %620
  %v623 = vld [vmem:[%s7] sm:$0xf]
  %v624 = vld [vmem:[%s7 + $0x4] sm:$0xf]
  %v625 = vld [vmem:[%s7 + $0x8] sm:$0xf]
  %v626 = vld [vmem:[%s7 + $0xc] sm:$0xf]
  %v627 = vld [vmem:[%s7 + $0x10] sm:$0xf]
  %v628 = vld [vmem:[%s7 + $0x14] sm:$0xf]
  %v629 = vld [vmem:[%s7 + $0x18] sm:$0xf]
  %v630 = vld [vmem:[%s7 + $0x1c] sm:$0xf]
  %v631 = vld [vmem:[%s7 + $0x20] sm:$0xf]
  %v632 = vld [vmem:[%s7 + $0x24] sm:$0xf]
  %v633 = vld [vmem:[%s7 + $0x28] sm:$0xf]
  %v634 = vld [vmem:[%s7 + $0x2c] sm:$0xf]
  %v635 = vld [vmem:[%s7 + $0x30] sm:$0xf]
  %v636 = vld [vmem:[%s7 + $0x34] sm:$0xf]
  %v637 = vld [vmem:[%s7 + $0x38] sm:$0xf]
  %v638 = vld [vmem:[%s7 + $0x3c] sm:$0xf]
  %v639 = vld [vmem:[%s7 + $0x40] sm:$0xf]
  %v640 = vld [vmem:[%s7 + $0x44] sm:$0xf]
  %v641 = vld [vmem:[%s7 + $0x48] sm:$0xf]
  %v642 = vld [vmem:[%s7 + $0x4c] sm:$0xf]
  %v643 = vld [vmem:[%s7 + $0x50] sm:$0xf]
  %v644 = vld [vmem:[%s7 + $0x54] sm:$0xf]
  %v645 = vld [vmem:[%s7 + $0x58] sm:$0xf]
  %v646 = vld [vmem:[%s7 + $0x5c] sm:$0xf]
  %v647 = vld [vmem:[%s7 + $0x60] sm:$0xf]
  %v648 = vld [vmem:[%s7 + $0x64] sm:$0xf]
  %v649 = vld [vmem:[%s7 + $0x68] sm:$0xf]
  %v650 = vld [vmem:[%s7 + $0x6c] sm:$0xf]
  %v651 = vld [vmem:[%s7 + $0x70] sm:$0xf]
  %v652 = vld [vmem:[%s7 + $0x74] sm:$0xf]
  %v653 = vld [vmem:[%s7 + $0x78] sm:$0xf]
  %v654 = vld [vmem:[%s7 + $0x7c] sm:$0xf]
  %v655 = vunpack.c.l.bf16 %v623
  %v656 = vunpack.c.l.bf16 %v624
  %v657 = vunpack.c.l.bf16 %v625
  %v658 = vunpack.c.l.bf16 %v626
  %v659 = vunpack.c.l.bf16 %v627
  %v660 = vunpack.c.l.bf16 %v628
  %v661 = vunpack.c.l.bf16 %v629
  %v662 = vunpack.c.l.bf16 %v630
  %v663 = vunpack.c.l.bf16 %v631
  %v664 = vunpack.c.l.bf16 %v632
  %v665 = vunpack.c.l.bf16 %v633
  %v666 = vunpack.c.l.bf16 %v634
  %v667 = vunpack.c.l.bf16 %v635
  %v668 = vunpack.c.l.bf16 %v636
  %v669 = vunpack.c.l.bf16 %v637
  %v670 = vunpack.c.l.bf16 %v638
  %v671 = vunpack.c.l.bf16 %v639
  %v672 = vunpack.c.l.bf16 %v640
  %v673 = vunpack.c.l.bf16 %v641
  %v674 = vunpack.c.l.bf16 %v642
  %v675 = vunpack.c.l.bf16 %v643
  %v676 = vunpack.c.l.bf16 %v644
  %v677 = vunpack.c.l.bf16 %v645
  %v678 = vunpack.c.l.bf16 %v646
  %v679 = vunpack.c.l.bf16 %v647
  %v680 = vunpack.c.l.bf16 %v648
  %v681 = vunpack.c.l.bf16 %v649
  %v682 = vunpack.c.l.bf16 %v650
  %v683 = vunpack.c.l.bf16 %v651
  %v684 = vunpack.c.l.bf16 %v652
  %v685 = vunpack.c.l.bf16 %v653
  %v686 = vunpack.c.l.bf16 %v654
  %v687 = vld [vmem:[%s2] sm:$0x55]
  %v688 = vld [vmem:[%s2 + $0x8] sm:$0x55]
  %v689 = vunpack.c.l.bf16 %v687
  %v690 = vunpack.c.h.bf16 %v687
  %v691 = vunpack.c.l.bf16 %v688
  %v692 = vunpack.c.h.bf16 %v688
  %694 = vset.pattern.permute.xlu0 0
  %695 = vperm.xlu0 %694, %v655
  %v696 = vpop.permute.xlu0 %695
  %699 = vset.pattern.permute.xlu0 0
  %700 = vperm.xlu0 %699, %v656
  %v701 = vpop.permute.xlu0 %700
  %704 = vset.pattern.permute.xlu0 0
  %705 = vperm.xlu0 %704, %v657
  %v706 = vpop.permute.xlu0 %705
  %709 = vset.pattern.permute.xlu0 0
  %710 = vperm.xlu0 %709, %v658
  %v711 = vpop.permute.xlu0 %710
  %714 = vset.pattern.permute.xlu0 0
  %715 = vperm.xlu0 %714, %v659
  %v716 = vpop.permute.xlu0 %715
  %719 = vset.pattern.permute.xlu0 0
  %720 = vperm.xlu0 %719, %v660
  %v721 = vpop.permute.xlu0 %720
  %724 = vset.pattern.permute.xlu0 0
  %725 = vperm.xlu0 %724, %v661
  %v726 = vpop.permute.xlu0 %725
  %729 = vset.pattern.permute.xlu0 0
  %730 = vperm.xlu0 %729, %v662
  %v731 = vpop.permute.xlu0 %730
  %734 = vset.pattern.permute.xlu0 0
  %735 = vperm.xlu0 %734, %v663
  %v736 = vpop.permute.xlu0 %735
  %739 = vset.pattern.permute.xlu0 0
  %740 = vperm.xlu0 %739, %v664
  %v741 = vpop.permute.xlu0 %740
  %744 = vset.pattern.permute.xlu0 0
  %745 = vperm.xlu0 %744, %v665
  %v746 = vpop.permute.xlu0 %745
  %749 = vset.pattern.permute.xlu0 0
  %750 = vperm.xlu0 %749, %v666
  %v751 = vpop.permute.xlu0 %750
  %754 = vset.pattern.permute.xlu0 0
  %755 = vperm.xlu0 %754, %v667
  %v756 = vpop.permute.xlu0 %755
  %759 = vset.pattern.permute.xlu0 0
  %760 = vperm.xlu0 %759, %v668
  %v761 = vpop.permute.xlu0 %760
  %764 = vset.pattern.permute.xlu0 0
  %765 = vperm.xlu0 %764, %v669
  %v766 = vpop.permute.xlu0 %765
  %769 = vset.pattern.permute.xlu0 0
  %770 = vperm.xlu0 %769, %v670
  %v771 = vpop.permute.xlu0 %770
  %774 = vset.pattern.permute.xlu0 0
  %775 = vperm.xlu0 %774, %v671
  %v776 = vpop.permute.xlu0 %775
  %779 = vset.pattern.permute.xlu0 0
  %780 = vperm.xlu0 %779, %v672
  %v781 = vpop.permute.xlu0 %780
  %784 = vset.pattern.permute.xlu0 0
  %785 = vperm.xlu0 %784, %v673
  %v786 = vpop.permute.xlu0 %785
  %789 = vset.pattern.permute.xlu0 0
  %790 = vperm.xlu0 %789, %v674
  %v791 = vpop.permute.xlu0 %790
  %794 = vset.pattern.permute.xlu0 0
  %795 = vperm.xlu0 %794, %v675
  %v796 = vpop.permute.xlu0 %795
  %799 = vset.pattern.permute.xlu0 0
  %800 = vperm.xlu0 %799, %v676
  %v801 = vpop.permute.xlu0 %800
  %804 = vset.pattern.permute.xlu0 0
  %805 = vperm.xlu0 %804, %v677
  %v806 = vpop.permute.xlu0 %805
  %809 = vset.pattern.permute.xlu0 0
  %810 = vperm.xlu0 %809, %v678
  %v811 = vpop.permute.xlu0 %810
  %814 = vset.pattern.permute.xlu0 0
  %815 = vperm.xlu0 %814, %v679
  %v816 = vpop.permute.xlu0 %815
  %819 = vset.pattern.permute.xlu0 0
  %820 = vperm.xlu0 %819, %v680
  %v821 = vpop.permute.xlu0 %820
  %824 = vset.pattern.permute.xlu0 0
  %825 = vperm.xlu0 %824, %v681
  %v826 = vpop.permute.xlu0 %825
  %829 = vset.pattern.permute.xlu0 0
  %830 = vperm.xlu0 %829, %v682
  %v831 = vpop.permute.xlu0 %830
  %834 = vset.pattern.permute.xlu0 0
  %835 = vperm.xlu0 %834, %v683
  %v836 = vpop.permute.xlu0 %835
  %839 = vset.pattern.permute.xlu0 0
  %840 = vperm.xlu0 %839, %v684
  %v841 = vpop.permute.xlu0 %840
  %844 = vset.pattern.permute.xlu0 0
  %845 = vperm.xlu0 %844, %v685
  %v846 = vpop.permute.xlu0 %845
  %849 = vset.pattern.permute.xlu0 0
  %850 = vperm.xlu0 %849, %v686
  %v851 = vpop.permute.xlu0 %850
  %v857 = vlaneseq
  %v858 = vshrl.u32 %v857, 7
  %v859 = vsub.s32 0, %v858
  %v860 = vrot.slane %v689, %v859
  %v861 = vlaneseq
  %v862 = vshrl.u32 %v861, 7
  %v863 = vsub.s32 4, %v862
  %v864 = vrot.slane %v689, %v863
  %v865 = vlaneseq
  %v866 = vshrl.u32 %v865, 7
  %v867 = vsub.s32 0, %v866
  %v868 = vrot.slane %v690, %v867
  %v869 = vlaneseq
  %v870 = vshrl.u32 %v869, 7
  %v871 = vsub.s32 4, %v870
  %v872 = vrot.slane %v690, %v871
  %v873 = vlaneseq
  %v874 = vshrl.u32 %v873, 7
  %v875 = vsub.s32 0, %v874
  %v876 = vrot.slane %v691, %v875
  %v877 = vlaneseq
  %v878 = vshrl.u32 %v877, 7
  %v879 = vsub.s32 4, %v878
  %v880 = vrot.slane %v691, %v879
  %v881 = vlaneseq
  %v882 = vshrl.u32 %v881, 7
  %v883 = vsub.s32 0, %v882
  %v884 = vrot.slane %v692, %v883
  %v885 = vlaneseq
  %v886 = vshrl.u32 %v885, 7
  %v887 = vsub.s32 4, %v886
  %v888 = vrot.slane %v692, %v887
  %v897 = vlaneseq
  %v898 = vshrl.u32 %v897, 7
  %v899 = vsub.s32 0, %v898
  %v900 = vrot.slane %v860, %v899
  %v901 = vlaneseq
  %v902 = vshrl.u32 %v901, 7
  %v903 = vsub.s32 0, %v902
  %v904 = vrot.slane %v864, %v903
  %v905 = vlaneseq
  %v906 = vshrl.u32 %v905, 7
  %v907 = vsub.s32 0, %v906
  %v908 = vrot.slane %v868, %v907
  %v909 = vlaneseq
  %v910 = vshrl.u32 %v909, 7
  %v911 = vsub.s32 0, %v910
  %v912 = vrot.slane %v872, %v911
  %v913 = vlaneseq
  %v914 = vshrl.u32 %v913, 7
  %v915 = vsub.s32 0, %v914
  %v916 = vrot.slane %v876, %v915
  %v917 = vlaneseq
  %v918 = vshrl.u32 %v917, 7
  %v919 = vsub.s32 0, %v918
  %v920 = vrot.slane %v880, %v919
  %v921 = vlaneseq
  %v922 = vshrl.u32 %v921, 7
  %v923 = vsub.s32 0, %v922
  %v924 = vrot.slane %v884, %v923
  %v925 = vlaneseq
  %v926 = vshrl.u32 %v925, 7
  %v927 = vsub.s32 0, %v926
  %v928 = vrot.slane %v888, %v927
  %v929 = vmul.f32 %v696, %v900
  %v930 = vmul.f32 %v696, %v904
  %v931 = vmul.f32 %v696, %v908
  %v932 = vmul.f32 %v696, %v912
  %v933 = vmul.f32 %v696, %v916
  %v934 = vmul.f32 %v696, %v920
  %v935 = vmul.f32 %v696, %v924
  %v936 = vmul.f32 %v696, %v928
  %v937 = vmul.f32 %v701, %v900
  %v938 = vmul.f32 %v701, %v904
  %v939 = vmul.f32 %v701, %v908
  %v940 = vmul.f32 %v701, %v912
  %v941 = vmul.f32 %v701, %v916
  %v942 = vmul.f32 %v701, %v920
  %v943 = vmul.f32 %v701, %v924
  %v944 = vmul.f32 %v701, %v928
  %v945 = vmul.f32 %v706, %v900
  %v946 = vmul.f32 %v706, %v904
  %v947 = vmul.f32 %v706, %v908
  %v948 = vmul.f32 %v706, %v912
  %v949 = vmul.f32 %v706, %v916
  %v950 = vmul.f32 %v706, %v920
  %v951 = vmul.f32 %v706, %v924
  %v952 = vmul.f32 %v706, %v928
  %v953 = vmul.f32 %v711, %v900
  %v954 = vmul.f32 %v711, %v904
  %v955 = vmul.f32 %v711, %v908
  %v956 = vmul.f32 %v711, %v912
  %v957 = vmul.f32 %v711, %v916
  %v958 = vmul.f32 %v711, %v920
  %v959 = vmul.f32 %v711, %v924
  %v960 = vmul.f32 %v711, %v928
  %v961 = vmul.f32 %v716, %v900
  %v962 = vmul.f32 %v716, %v904
  %v963 = vmul.f32 %v716, %v908
  %v964 = vmul.f32 %v716, %v912
  %v965 = vmul.f32 %v716, %v916
  %v966 = vmul.f32 %v716, %v920
  %v967 = vmul.f32 %v716, %v924
  %v968 = vmul.f32 %v716, %v928
  %v969 = vmul.f32 %v721, %v900
  %v970 = vmul.f32 %v721, %v904
  %v971 = vmul.f32 %v721, %v908
  %v972 = vmul.f32 %v721, %v912
  %v973 = vmul.f32 %v721, %v916
  %v974 = vmul.f32 %v721, %v920
  %v975 = vmul.f32 %v721, %v924
  %v976 = vmul.f32 %v721, %v928
  %v977 = vmul.f32 %v726, %v900
  %v978 = vmul.f32 %v726, %v904
  %v979 = vmul.f32 %v726, %v908
  %v980 = vmul.f32 %v726, %v912
  %v981 = vmul.f32 %v726, %v916
  %v982 = vmul.f32 %v726, %v920
  %v983 = vmul.f32 %v726, %v924
  %v984 = vmul.f32 %v726, %v928
  %v985 = vmul.f32 %v731, %v900
  %v986 = vmul.f32 %v731, %v904
  %v987 = vmul.f32 %v731, %v908
  %v988 = vmul.f32 %v731, %v912
  %v989 = vmul.f32 %v731, %v916
  %v990 = vmul.f32 %v731, %v920
  %v991 = vmul.f32 %v731, %v924
  %v992 = vmul.f32 %v731, %v928
  %v993 = vmul.f32 %v736, %v900
  %v994 = vmul.f32 %v736, %v904
  %v995 = vmul.f32 %v736, %v908
  %v996 = vmul.f32 %v736, %v912
  %v997 = vmul.f32 %v736, %v916
  %v998 = vmul.f32 %v736, %v920
  %v999 = vmul.f32 %v736, %v924
  %v1000 = vmul.f32 %v736, %v928
  %v1001 = vmul.f32 %v741, %v900
  %v1002 = vmul.f32 %v741, %v904
  %v1003 = vmul.f32 %v741, %v908
  %v1004 = vmul.f32 %v741, %v912
  %v1005 = vmul.f32 %v741, %v916
  %v1006 = vmul.f32 %v741, %v920
  %v1007 = vmul.f32 %v741, %v924
  %v1008 = vmul.f32 %v741, %v928
  %v1009 = vmul.f32 %v746, %v900
  %v1010 = vmul.f32 %v746, %v904
  %v1011 = vmul.f32 %v746, %v908
  %v1012 = vmul.f32 %v746, %v912
  %v1013 = vmul.f32 %v746, %v916
  %v1014 = vmul.f32 %v746, %v920
  %v1015 = vmul.f32 %v746, %v924
  %v1016 = vmul.f32 %v746, %v928
  %v1017 = vmul.f32 %v751, %v900
  %v1018 = vmul.f32 %v751, %v904
  %v1019 = vmul.f32 %v751, %v908
  %v1020 = vmul.f32 %v751, %v912
  %v1021 = vmul.f32 %v751, %v916
  %v1022 = vmul.f32 %v751, %v920
  %v1023 = vmul.f32 %v751, %v924
  %v1024 = vmul.f32 %v751, %v928
  %v1025 = vmul.f32 %v756, %v900
  %v1026 = vmul.f32 %v756, %v904
  %v1027 = vmul.f32 %v756, %v908
  %v1028 = vmul.f32 %v756, %v912
  %v1029 = vmul.f32 %v756, %v916
  %v1030 = vmul.f32 %v756, %v920
  %v1031 = vmul.f32 %v756, %v924
  %v1032 = vmul.f32 %v756, %v928
  %v1033 = vmul.f32 %v761, %v900
  %v1034 = vmul.f32 %v761, %v904
  %v1035 = vmul.f32 %v761, %v908
  %v1036 = vmul.f32 %v761, %v912
  %v1037 = vmul.f32 %v761, %v916
  %v1038 = vmul.f32 %v761, %v920
  %v1039 = vmul.f32 %v761, %v924
  %v1040 = vmul.f32 %v761, %v928
  %v1041 = vmul.f32 %v766, %v900
  %v1042 = vmul.f32 %v766, %v904
  %v1043 = vmul.f32 %v766, %v908
  %v1044 = vmul.f32 %v766, %v912
  %v1045 = vmul.f32 %v766, %v916
  %v1046 = vmul.f32 %v766, %v920
  %v1047 = vmul.f32 %v766, %v924
  %v1048 = vmul.f32 %v766, %v928
  %v1049 = vmul.f32 %v771, %v900
  %v1050 = vmul.f32 %v771, %v904
  %v1051 = vmul.f32 %v771, %v908
  %v1052 = vmul.f32 %v771, %v912
  %v1053 = vmul.f32 %v771, %v916
  %v1054 = vmul.f32 %v771, %v920
  %v1055 = vmul.f32 %v771, %v924
  %v1056 = vmul.f32 %v771, %v928
  %v1057 = vmul.f32 %v776, %v900
  %v1058 = vmul.f32 %v776, %v904
  %v1059 = vmul.f32 %v776, %v908
  %v1060 = vmul.f32 %v776, %v912
  %v1061 = vmul.f32 %v776, %v916
  %v1062 = vmul.f32 %v776, %v920
  %v1063 = vmul.f32 %v776, %v924
  %v1064 = vmul.f32 %v776, %v928
  %v1065 = vmul.f32 %v781, %v900
  %v1066 = vmul.f32 %v781, %v904
  %v1067 = vmul.f32 %v781, %v908
  %v1068 = vmul.f32 %v781, %v912
  %v1069 = vmul.f32 %v781, %v916
  %v1070 = vmul.f32 %v781, %v920
  %v1071 = vmul.f32 %v781, %v924
  %v1072 = vmul.f32 %v781, %v928
  %v1073 = vmul.f32 %v786, %v900
  %v1074 = vmul.f32 %v786, %v904
  %v1075 = vmul.f32 %v786, %v908
  %v1076 = vmul.f32 %v786, %v912
  %v1077 = vmul.f32 %v786, %v916
  %v1078 = vmul.f32 %v786, %v920
  %v1079 = vmul.f32 %v786, %v924
  %v1080 = vmul.f32 %v786, %v928
  %v1081 = vmul.f32 %v791, %v900
  %v1082 = vmul.f32 %v791, %v904
  %v1083 = vmul.f32 %v791, %v908
  %v1084 = vmul.f32 %v791, %v912
  %v1085 = vmul.f32 %v791, %v916
  %v1086 = vmul.f32 %v791, %v920
  %v1087 = vmul.f32 %v791, %v924
  %v1088 = vmul.f32 %v791, %v928
  %v1089 = vmul.f32 %v796, %v900
  %v1090 = vmul.f32 %v796, %v904
  %v1091 = vmul.f32 %v796, %v908
  %v1092 = vmul.f32 %v796, %v912
  %v1093 = vmul.f32 %v796, %v916
  %v1094 = vmul.f32 %v796, %v920
  %v1095 = vmul.f32 %v796, %v924
  %v1096 = vmul.f32 %v796, %v928
  %v1097 = vmul.f32 %v801, %v900
  %v1098 = vmul.f32 %v801, %v904
  %v1099 = vmul.f32 %v801, %v908
  %v1100 = vmul.f32 %v801, %v912
  %v1101 = vmul.f32 %v801, %v916
  %v1102 = vmul.f32 %v801, %v920
  %v1103 = vmul.f32 %v801, %v924
  %v1104 = vmul.f32 %v801, %v928
  %v1105 = vmul.f32 %v806, %v900
  %v1106 = vmul.f32 %v806, %v904
  %v1107 = vmul.f32 %v806, %v908
  %v1108 = vmul.f32 %v806, %v912
  %v1109 = vmul.f32 %v806, %v916
  %v1110 = vmul.f32 %v806, %v920
  %v1111 = vmul.f32 %v806, %v924
  %v1112 = vmul.f32 %v806, %v928
  %v1113 = vmul.f32 %v811, %v900
  %v1114 = vmul.f32 %v811, %v904
  %v1115 = vmul.f32 %v811, %v908
  %v1116 = vmul.f32 %v811, %v912
  %v1117 = vmul.f32 %v811, %v916
  %v1118 = vmul.f32 %v811, %v920
  %v1119 = vmul.f32 %v811, %v924
  %v1120 = vmul.f32 %v811, %v928
  %v1121 = vmul.f32 %v816, %v900
  %v1122 = vmul.f32 %v816, %v904
  %v1123 = vmul.f32 %v816, %v908
  %v1124 = vmul.f32 %v816, %v912
  %v1125 = vmul.f32 %v816, %v916
  %v1126 = vmul.f32 %v816, %v920
  %v1127 = vmul.f32 %v816, %v924
  %v1128 = vmul.f32 %v816, %v928
  %v1129 = vmul.f32 %v821, %v900
  %v1130 = vmul.f32 %v821, %v904
  %v1131 = vmul.f32 %v821, %v908
  %v1132 = vmul.f32 %v821, %v912
  %v1133 = vmul.f32 %v821, %v916
  %v1134 = vmul.f32 %v821, %v920
  %v1135 = vmul.f32 %v821, %v924
  %v1136 = vmul.f32 %v821, %v928
  %v1137 = vmul.f32 %v826, %v900
  %v1138 = vmul.f32 %v826, %v904
  %v1139 = vmul.f32 %v826, %v908
  %v1140 = vmul.f32 %v826, %v912
  %v1141 = vmul.f32 %v826, %v916
  %v1142 = vmul.f32 %v826, %v920
  %v1143 = vmul.f32 %v826, %v924
  %v1144 = vmul.f32 %v826, %v928
  %v1145 = vmul.f32 %v831, %v900
  %v1146 = vmul.f32 %v831, %v904
  %v1147 = vmul.f32 %v831, %v908
  %v1148 = vmul.f32 %v831, %v912
  %v1149 = vmul.f32 %v831, %v916
  %v1150 = vmul.f32 %v831, %v920
  %v1151 = vmul.f32 %v831, %v924
  %v1152 = vmul.f32 %v831, %v928
  %v1153 = vmul.f32 %v836, %v900
  %v1154 = vmul.f32 %v836, %v904
  %v1155 = vmul.f32 %v836, %v908
  %v1156 = vmul.f32 %v836, %v912
  %v1157 = vmul.f32 %v836, %v916
  %v1158 = vmul.f32 %v836, %v920
  %v1159 = vmul.f32 %v836, %v924
  %v1160 = vmul.f32 %v836, %v928
  %v1161 = vmul.f32 %v841, %v900
  %v1162 = vmul.f32 %v841, %v904
  %v1163 = vmul.f32 %v841, %v908
  %v1164 = vmul.f32 %v841, %v912
  %v1165 = vmul.f32 %v841, %v916
  %v1166 = vmul.f32 %v841, %v920
  %v1167 = vmul.f32 %v841, %v924
  %v1168 = vmul.f32 %v841, %v928
  %v1169 = vmul.f32 %v846, %v900
  %v1170 = vmul.f32 %v846, %v904
  %v1171 = vmul.f32 %v846, %v908
  %v1172 = vmul.f32 %v846, %v912
  %v1173 = vmul.f32 %v846, %v916
  %v1174 = vmul.f32 %v846, %v920
  %v1175 = vmul.f32 %v846, %v924
  %v1176 = vmul.f32 %v846, %v928
  %v1177 = vmul.f32 %v851, %v900
  %v1178 = vmul.f32 %v851, %v904
  %v1179 = vmul.f32 %v851, %v908
  %v1180 = vmul.f32 %v851, %v912
  %v1181 = vmul.f32 %v851, %v916
  %v1182 = vmul.f32 %v851, %v920
  %v1183 = vmul.f32 %v851, %v924
  %v1184 = vmul.f32 %v851, %v928
  %v1185 = vadd.f32 %v466, %v929
  %v1186 = vadd.f32 %v466, %v930
  %v1187 = vadd.f32 %v466, %v931
  %v1188 = vadd.f32 %v466, %v932
  %v1189 = vadd.f32 %v466, %v933
  %v1190 = vadd.f32 %v466, %v934
  %v1191 = vadd.f32 %v466, %v935
  %v1192 = vadd.f32 %v466, %v936
  %v1193 = vadd.f32 %v471, %v937
  %v1194 = vadd.f32 %v471, %v938
  %v1195 = vadd.f32 %v471, %v939
  %v1196 = vadd.f32 %v471, %v940
  %v1197 = vadd.f32 %v471, %v941
  %v1198 = vadd.f32 %v471, %v942
  %v1199 = vadd.f32 %v471, %v943
  %v1200 = vadd.f32 %v471, %v944
  %v1201 = vadd.f32 %v476, %v945
  %v1202 = vadd.f32 %v476, %v946
  %v1203 = vadd.f32 %v476, %v947
  %v1204 = vadd.f32 %v476, %v948
  %v1205 = vadd.f32 %v476, %v949
  %v1206 = vadd.f32 %v476, %v950
  %v1207 = vadd.f32 %v476, %v951
  %v1208 = vadd.f32 %v476, %v952
  %v1209 = vadd.f32 %v481, %v953
  %v1210 = vadd.f32 %v481, %v954
  %v1211 = vadd.f32 %v481, %v955
  %v1212 = vadd.f32 %v481, %v956
  %v1213 = vadd.f32 %v481, %v957
  %v1214 = vadd.f32 %v481, %v958
  %v1215 = vadd.f32 %v481, %v959
  %v1216 = vadd.f32 %v481, %v960
  %v1217 = vadd.f32 %v486, %v961
  %v1218 = vadd.f32 %v486, %v962
  %v1219 = vadd.f32 %v486, %v963
  %v1220 = vadd.f32 %v486, %v964
  %v1221 = vadd.f32 %v486, %v965
  %v1222 = vadd.f32 %v486, %v966
  %v1223 = vadd.f32 %v486, %v967
  %v1224 = vadd.f32 %v486, %v968
  %v1225 = vadd.f32 %v491, %v969
  %v1226 = vadd.f32 %v491, %v970
  %v1227 = vadd.f32 %v491, %v971
  %v1228 = vadd.f32 %v491, %v972
  %v1229 = vadd.f32 %v491, %v973
  %v1230 = vadd.f32 %v491, %v974
  %v1231 = vadd.f32 %v491, %v975
  %v1232 = vadd.f32 %v491, %v976
  %v1233 = vadd.f32 %v496, %v977
  %v1234 = vadd.f32 %v496, %v978
  %v1235 = vadd.f32 %v496, %v979
  %v1236 = vadd.f32 %v496, %v980
  %v1237 = vadd.f32 %v496, %v981
  %v1238 = vadd.f32 %v496, %v982
  %v1239 = vadd.f32 %v496, %v983
  %v1240 = vadd.f32 %v496, %v984
  %v1241 = vadd.f32 %v501, %v985
  %v1242 = vadd.f32 %v501, %v986
  %v1243 = vadd.f32 %v501, %v987
  %v1244 = vadd.f32 %v501, %v988
  %v1245 = vadd.f32 %v501, %v989
  %v1246 = vadd.f32 %v501, %v990
  %v1247 = vadd.f32 %v501, %v991
  %v1248 = vadd.f32 %v501, %v992
  %v1249 = vadd.f32 %v506, %v993
  %v1250 = vadd.f32 %v506, %v994
  %v1251 = vadd.f32 %v506, %v995
  %v1252 = vadd.f32 %v506, %v996
  %v1253 = vadd.f32 %v506, %v997
  %v1254 = vadd.f32 %v506, %v998
  %v1255 = vadd.f32 %v506, %v999
  %v1256 = vadd.f32 %v506, %v1000
  %v1257 = vadd.f32 %v511, %v1001
  %v1258 = vadd.f32 %v511, %v1002
  %v1259 = vadd.f32 %v511, %v1003
  %v1260 = vadd.f32 %v511, %v1004
  %v1261 = vadd.f32 %v511, %v1005
  %v1262 = vadd.f32 %v511, %v1006
  %v1263 = vadd.f32 %v511, %v1007
  %v1264 = vadd.f32 %v511, %v1008
  %v1265 = vadd.f32 %v516, %v1009
  %v1266 = vadd.f32 %v516, %v1010
  %v1267 = vadd.f32 %v516, %v1011
  %v1268 = vadd.f32 %v516, %v1012
  %v1269 = vadd.f32 %v516, %v1013
  %v1270 = vadd.f32 %v516, %v1014
  %v1271 = vadd.f32 %v516, %v1015
  %v1272 = vadd.f32 %v516, %v1016
  %v1273 = vadd.f32 %v521, %v1017
  %v1274 = vadd.f32 %v521, %v1018
  %v1275 = vadd.f32 %v521, %v1019
  %v1276 = vadd.f32 %v521, %v1020
  %v1277 = vadd.f32 %v521, %v1021
  %v1278 = vadd.f32 %v521, %v1022
  %v1279 = vadd.f32 %v521, %v1023
  %v1280 = vadd.f32 %v521, %v1024
  %v1281 = vadd.f32 %v526, %v1025
  %v1282 = vadd.f32 %v526, %v1026
  %v1283 = vadd.f32 %v526, %v1027
  %v1284 = vadd.f32 %v526, %v1028
  %v1285 = vadd.f32 %v526, %v1029
  %v1286 = vadd.f32 %v526, %v1030
  %v1287 = vadd.f32 %v526, %v1031
  %v1288 = vadd.f32 %v526, %v1032
  %v1289 = vadd.f32 %v531, %v1033
  %v1290 = vadd.f32 %v531, %v1034
  %v1291 = vadd.f32 %v531, %v1035
  %v1292 = vadd.f32 %v531, %v1036
  %v1293 = vadd.f32 %v531, %v1037
  %v1294 = vadd.f32 %v531, %v1038
  %v1295 = vadd.f32 %v531, %v1039
  %v1296 = vadd.f32 %v531, %v1040
  %v1297 = vadd.f32 %v536, %v1041
  %v1298 = vadd.f32 %v536, %v1042
  %v1299 = vadd.f32 %v536, %v1043
  %v1300 = vadd.f32 %v536, %v1044
  %v1301 = vadd.f32 %v536, %v1045
  %v1302 = vadd.f32 %v536, %v1046
  %v1303 = vadd.f32 %v536, %v1047
  %v1304 = vadd.f32 %v536, %v1048
  %v1305 = vadd.f32 %v541, %v1049
  %v1306 = vadd.f32 %v541, %v1050
  %v1307 = vadd.f32 %v541, %v1051
  %v1308 = vadd.f32 %v541, %v1052
  %v1309 = vadd.f32 %v541, %v1053
  %v1310 = vadd.f32 %v541, %v1054
  %v1311 = vadd.f32 %v541, %v1055
  %v1312 = vadd.f32 %v541, %v1056
  %v1313 = vadd.f32 %v546, %v1057
  %v1314 = vadd.f32 %v546, %v1058
  %v1315 = vadd.f32 %v546, %v1059
  %v1316 = vadd.f32 %v546, %v1060
  %v1317 = vadd.f32 %v546, %v1061
  %v1318 = vadd.f32 %v546, %v1062
  %v1319 = vadd.f32 %v546, %v1063
  %v1320 = vadd.f32 %v546, %v1064
  %v1321 = vadd.f32 %v551, %v1065
  %v1322 = vadd.f32 %v551, %v1066
  %v1323 = vadd.f32 %v551, %v1067
  %v1324 = vadd.f32 %v551, %v1068
  %v1325 = vadd.f32 %v551, %v1069
  %v1326 = vadd.f32 %v551, %v1070
  %v1327 = vadd.f32 %v551, %v1071
  %v1328 = vadd.f32 %v551, %v1072
  %v1329 = vadd.f32 %v556, %v1073
  %v1330 = vadd.f32 %v556, %v1074
  %v1331 = vadd.f32 %v556, %v1075
  %v1332 = vadd.f32 %v556, %v1076
  %v1333 = vadd.f32 %v556, %v1077
  %v1334 = vadd.f32 %v556, %v1078
  %v1335 = vadd.f32 %v556, %v1079
  %v1336 = vadd.f32 %v556, %v1080
  %v1337 = vadd.f32 %v561, %v1081
  %v1338 = vadd.f32 %v561, %v1082
  %v1339 = vadd.f32 %v561, %v1083
  %v1340 = vadd.f32 %v561, %v1084
  %v1341 = vadd.f32 %v561, %v1085
  %v1342 = vadd.f32 %v561, %v1086
  %v1343 = vadd.f32 %v561, %v1087
  %v1344 = vadd.f32 %v561, %v1088
  %v1345 = vadd.f32 %v566, %v1089
  %v1346 = vadd.f32 %v566, %v1090
  %v1347 = vadd.f32 %v566, %v1091
  %v1348 = vadd.f32 %v566, %v1092
  %v1349 = vadd.f32 %v566, %v1093
  %v1350 = vadd.f32 %v566, %v1094
  %v1351 = vadd.f32 %v566, %v1095
  %v1352 = vadd.f32 %v566, %v1096
  %v1353 = vadd.f32 %v571, %v1097
  %v1354 = vadd.f32 %v571, %v1098
  %v1355 = vadd.f32 %v571, %v1099
  %v1356 = vadd.f32 %v571, %v1100
  %v1357 = vadd.f32 %v571, %v1101
  %v1358 = vadd.f32 %v571, %v1102
  %v1359 = vadd.f32 %v571, %v1103
  %v1360 = vadd.f32 %v571, %v1104
  %v1361 = vadd.f32 %v576, %v1105
  %v1362 = vadd.f32 %v576, %v1106
  %v1363 = vadd.f32 %v576, %v1107
  %v1364 = vadd.f32 %v576, %v1108
  %v1365 = vadd.f32 %v576, %v1109
  %v1366 = vadd.f32 %v576, %v1110
  %v1367 = vadd.f32 %v576, %v1111
  %v1368 = vadd.f32 %v576, %v1112
  %v1369 = vadd.f32 %v581, %v1113
  %v1370 = vadd.f32 %v581, %v1114
  %v1371 = vadd.f32 %v581, %v1115
  %v1372 = vadd.f32 %v581, %v1116
  %v1373 = vadd.f32 %v581, %v1117
  %v1374 = vadd.f32 %v581, %v1118
  %v1375 = vadd.f32 %v581, %v1119
  %v1376 = vadd.f32 %v581, %v1120
  %v1377 = vadd.f32 %v586, %v1121
  %v1378 = vadd.f32 %v586, %v1122
  %v1379 = vadd.f32 %v586, %v1123
  %v1380 = vadd.f32 %v586, %v1124
  %v1381 = vadd.f32 %v586, %v1125
  %v1382 = vadd.f32 %v586, %v1126
  %v1383 = vadd.f32 %v586, %v1127
  %v1384 = vadd.f32 %v586, %v1128
  %v1385 = vadd.f32 %v591, %v1129
  %v1386 = vadd.f32 %v591, %v1130
  %v1387 = vadd.f32 %v591, %v1131
  %v1388 = vadd.f32 %v591, %v1132
  %v1389 = vadd.f32 %v591, %v1133
  %v1390 = vadd.f32 %v591, %v1134
  %v1391 = vadd.f32 %v591, %v1135
  %v1392 = vadd.f32 %v591, %v1136
  %v1393 = vadd.f32 %v596, %v1137
  %v1394 = vadd.f32 %v596, %v1138
  %v1395 = vadd.f32 %v596, %v1139
  %v1396 = vadd.f32 %v596, %v1140
  %v1397 = vadd.f32 %v596, %v1141
  %v1398 = vadd.f32 %v596, %v1142
  %v1399 = vadd.f32 %v596, %v1143
  %v1400 = vadd.f32 %v596, %v1144
  %v1401 = vadd.f32 %v601, %v1145
  %v1402 = vadd.f32 %v601, %v1146
  %v1403 = vadd.f32 %v601, %v1147
  %v1404 = vadd.f32 %v601, %v1148
  %v1405 = vadd.f32 %v601, %v1149
  %v1406 = vadd.f32 %v601, %v1150
  %v1407 = vadd.f32 %v601, %v1151
  %v1408 = vadd.f32 %v601, %v1152
  %v1409 = vadd.f32 %v606, %v1153
  %v1410 = vadd.f32 %v606, %v1154
  %v1411 = vadd.f32 %v606, %v1155
  %v1412 = vadd.f32 %v606, %v1156
  %v1413 = vadd.f32 %v606, %v1157
  %v1414 = vadd.f32 %v606, %v1158
  %v1415 = vadd.f32 %v606, %v1159
  %v1416 = vadd.f32 %v606, %v1160
  %v1417 = vadd.f32 %v611, %v1161
  %v1418 = vadd.f32 %v611, %v1162
  %v1419 = vadd.f32 %v611, %v1163
  %v1420 = vadd.f32 %v611, %v1164
  %v1421 = vadd.f32 %v611, %v1165
  %v1422 = vadd.f32 %v611, %v1166
  %v1423 = vadd.f32 %v611, %v1167
  %v1424 = vadd.f32 %v611, %v1168
  %v1425 = vadd.f32 %v616, %v1169
  %v1426 = vadd.f32 %v616, %v1170
  %v1427 = vadd.f32 %v616, %v1171
  %v1428 = vadd.f32 %v616, %v1172
  %v1429 = vadd.f32 %v616, %v1173
  %v1430 = vadd.f32 %v616, %v1174
  %v1431 = vadd.f32 %v616, %v1175
  %v1432 = vadd.f32 %v616, %v1176
  %v1433 = vadd.f32 %v621, %v1177
  %v1434 = vadd.f32 %v621, %v1178
  %v1435 = vadd.f32 %v621, %v1179
  %v1436 = vadd.f32 %v621, %v1180
  %v1437 = vadd.f32 %v621, %v1181
  %v1438 = vadd.f32 %v621, %v1182
  %v1439 = vadd.f32 %v621, %v1183
  %v1440 = vadd.f32 %v621, %v1184
  %1441 = vset.pattern.permute.xlu0 1
  %1442 = vperm.xlu0 %1441, %v655
  %v1443 = vpop.permute.xlu0 %1442
  %1445 = vset.pattern.permute.xlu0 1
  %1446 = vperm.xlu0 %1445, %v656
  %v1447 = vpop.permute.xlu0 %1446
  %1449 = vset.pattern.permute.xlu0 1
  %1450 = vperm.xlu0 %1449, %v657
  %v1451 = vpop.permute.xlu0 %1450
  %1453 = vset.pattern.permute.xlu0 1
  %1454 = vperm.xlu0 %1453, %v658
  %v1455 = vpop.permute.xlu0 %1454
  %1457 = vset.pattern.permute.xlu0 1
  %1458 = vperm.xlu0 %1457, %v659
  %v1459 = vpop.permute.xlu0 %1458
  %1461 = vset.pattern.permute.xlu0 1
  %1462 = vperm.xlu0 %1461, %v660
  %v1463 = vpop.permute.xlu0 %1462
  %1465 = vset.pattern.permute.xlu0 1
  %1466 = vperm.xlu0 %1465, %v661
  %v1467 = vpop.permute.xlu0 %1466
  %1469 = vset.pattern.permute.xlu0 1
  %1470 = vperm.xlu0 %1469, %v662
  %v1471 = vpop.permute.xlu0 %1470
  %1473 = vset.pattern.permute.xlu0 1
  %1474 = vperm.xlu0 %1473, %v663
  %v1475 = vpop.permute.xlu0 %1474
  %1477 = vset.pattern.permute.xlu0 1
  %1478 = vperm.xlu0 %1477, %v664
  %v1479 = vpop.permute.xlu0 %1478
  %1481 = vset.pattern.permute.xlu0 1
  %1482 = vperm.xlu0 %1481, %v665
  %v1483 = vpop.permute.xlu0 %1482
  %1485 = vset.pattern.permute.xlu0 1
  %1486 = vperm.xlu0 %1485, %v666
  %v1487 = vpop.permute.xlu0 %1486
  %1489 = vset.pattern.permute.xlu0 1
  %1490 = vperm.xlu0 %1489, %v667
  %v1491 = vpop.permute.xlu0 %1490
  %1493 = vset.pattern.permute.xlu0 1
  %1494 = vperm.xlu0 %1493, %v668
  %v1495 = vpop.permute.xlu0 %1494
  %1497 = vset.pattern.permute.xlu0 1
  %1498 = vperm.xlu0 %1497, %v669
  %v1499 = vpop.permute.xlu0 %1498
  %1501 = vset.pattern.permute.xlu0 1
  %1502 = vperm.xlu0 %1501, %v670
  %v1503 = vpop.permute.xlu0 %1502
  %1505 = vset.pattern.permute.xlu0 1
  %1506 = vperm.xlu0 %1505, %v671
  %v1507 = vpop.permute.xlu0 %1506
  %1509 = vset.pattern.permute.xlu0 1
  %1510 = vperm.xlu0 %1509, %v672
  %v1511 = vpop.permute.xlu0 %1510
  %1513 = vset.pattern.permute.xlu0 1
  %1514 = vperm.xlu0 %1513, %v673
  %v1515 = vpop.permute.xlu0 %1514
  %1517 = vset.pattern.permute.xlu0 1
  %1518 = vperm.xlu0 %1517, %v674
  %v1519 = vpop.permute.xlu0 %1518
  %1521 = vset.pattern.permute.xlu0 1
  %1522 = vperm.xlu0 %1521, %v675
  %v1523 = vpop.permute.xlu0 %1522
  %1525 = vset.pattern.permute.xlu0 1
  %1526 = vperm.xlu0 %1525, %v676
  %v1527 = vpop.permute.xlu0 %1526
  %1529 = vset.pattern.permute.xlu0 1
  %1530 = vperm.xlu0 %1529, %v677
  %v1531 = vpop.permute.xlu0 %1530
  %1533 = vset.pattern.permute.xlu0 1
  %1534 = vperm.xlu0 %1533, %v678
  %v1535 = vpop.permute.xlu0 %1534
  %1537 = vset.pattern.permute.xlu0 1
  %1538 = vperm.xlu0 %1537, %v679
  %v1539 = vpop.permute.xlu0 %1538
  %1541 = vset.pattern.permute.xlu0 1
  %1542 = vperm.xlu0 %1541, %v680
  %v1543 = vpop.permute.xlu0 %1542
  %1545 = vset.pattern.permute.xlu0 1
  %1546 = vperm.xlu0 %1545, %v681
  %v1547 = vpop.permute.xlu0 %1546
  %1549 = vset.pattern.permute.xlu0 1
  %1550 = vperm.xlu0 %1549, %v682
  %v1551 = vpop.permute.xlu0 %1550
  %1553 = vset.pattern.permute.xlu0 1
  %1554 = vperm.xlu0 %1553, %v683
  %v1555 = vpop.permute.xlu0 %1554
  %1557 = vset.pattern.permute.xlu0 1
  %1558 = vperm.xlu0 %1557, %v684
  %v1559 = vpop.permute.xlu0 %1558
  %1561 = vset.pattern.permute.xlu0 1
  %1562 = vperm.xlu0 %1561, %v685
  %v1563 = vpop.permute.xlu0 %1562
  %1565 = vset.pattern.permute.xlu0 1
  %1566 = vperm.xlu0 %1565, %v686
  %v1567 = vpop.permute.xlu0 %1566
  %v1569 = vlaneseq
  %v1570 = vshrl.u32 %v1569, 7
  %v1571 = vsub.s32 1, %v1570
  %v1572 = vrot.slane %v689, %v1571
  %v1573 = vlaneseq
  %v1574 = vshrl.u32 %v1573, 7
  %v1575 = vsub.s32 5, %v1574
  %v1576 = vrot.slane %v689, %v1575
  %v1577 = vlaneseq
  %v1578 = vshrl.u32 %v1577, 7
  %v1579 = vsub.s32 1, %v1578
  %v1580 = vrot.slane %v690, %v1579
  %v1581 = vlaneseq
  %v1582 = vshrl.u32 %v1581, 7
  %v1583 = vsub.s32 5, %v1582
  %v1584 = vrot.slane %v690, %v1583
  %v1585 = vlaneseq
  %v1586 = vshrl.u32 %v1585, 7
  %v1587 = vsub.s32 1, %v1586
  %v1588 = vrot.slane %v691, %v1587
  %v1589 = vlaneseq
  %v1590 = vshrl.u32 %v1589, 7
  %v1591 = vsub.s32 5, %v1590
  %v1592 = vrot.slane %v691, %v1591
  %v1593 = vlaneseq
  %v1594 = vshrl.u32 %v1593, 7
  %v1595 = vsub.s32 1, %v1594
  %v1596 = vrot.slane %v692, %v1595
  %v1597 = vlaneseq
  %v1598 = vshrl.u32 %v1597, 7
  %v1599 = vsub.s32 5, %v1598
  %v1600 = vrot.slane %v692, %v1599
  %v1609 = vlaneseq
  %v1610 = vshrl.u32 %v1609, 7
  %v1611 = vsub.s32 1, %v1610
  %v1612 = vrot.slane %v1572, %v1611
  %v1613 = vlaneseq
  %v1614 = vshrl.u32 %v1613, 7
  %v1615 = vsub.s32 1, %v1614
  %v1616 = vrot.slane %v1576, %v1615
  %v1617 = vlaneseq
  %v1618 = vshrl.u32 %v1617, 7
  %v1619 = vsub.s32 1, %v1618
  %v1620 = vrot.slane %v1580, %v1619
  %v1621 = vlaneseq
  %v1622 = vshrl.u32 %v1621, 7
  %v1623 = vsub.s32 1, %v1622
  %v1624 = vrot.slane %v1584, %v1623
  %v1625 = vlaneseq
  %v1626 = vshrl.u32 %v1625, 7
  %v1627 = vsub.s32 1, %v1626
  %v1628 = vrot.slane %v1588, %v1627
  %v1629 = vlaneseq
  %v1630 = vshrl.u32 %v1629, 7
  %v1631 = vsub.s32 1, %v1630
  %v1632 = vrot.slane %v1592, %v1631
  %v1633 = vlaneseq
  %v1634 = vshrl.u32 %v1633, 7
  %v1635 = vsub.s32 1, %v1634
  %v1636 = vrot.slane %v1596, %v1635
  %v1637 = vlaneseq
  %v1638 = vshrl.u32 %v1637, 7
  %v1639 = vsub.s32 1, %v1638
  %v1640 = vrot.slane %v1600, %v1639
  %v1641 = vmul.f32 %v1443, %v1612
  %v1642 = vmul.f32 %v1443, %v1616
  %v1643 = vmul.f32 %v1443, %v1620
  %v1644 = vmul.f32 %v1443, %v1624
  %v1645 = vmul.f32 %v1443, %v1628
  %v1646 = vmul.f32 %v1443, %v1632
  %v1647 = vmul.f32 %v1443, %v1636
  %v1648 = vmul.f32 %v1443, %v1640
  %v1649 = vmul.f32 %v1447, %v1612
  %v1650 = vmul.f32 %v1447, %v1616
  %v1651 = vmul.f32 %v1447, %v1620
  %v1652 = vmul.f32 %v1447, %v1624
  %v1653 = vmul.f32 %v1447, %v1628
  %v1654 = vmul.f32 %v1447, %v1632
  %v1655 = vmul.f32 %v1447, %v1636
  %v1656 = vmul.f32 %v1447, %v1640
  %v1657 = vmul.f32 %v1451, %v1612
  %v1658 = vmul.f32 %v1451, %v1616
  %v1659 = vmul.f32 %v1451, %v1620
  %v1660 = vmul.f32 %v1451, %v1624
  %v1661 = vmul.f32 %v1451, %v1628
  %v1662 = vmul.f32 %v1451, %v1632
  %v1663 = vmul.f32 %v1451, %v1636
  %v1664 = vmul.f32 %v1451, %v1640
  %v1665 = vmul.f32 %v1455, %v1612
  %v1666 = vmul.f32 %v1455, %v1616
  %v1667 = vmul.f32 %v1455, %v1620
  %v1668 = vmul.f32 %v1455, %v1624
  %v1669 = vmul.f32 %v1455, %v1628
  %v1670 = vmul.f32 %v1455, %v1632
  %v1671 = vmul.f32 %v1455, %v1636
  %v1672 = vmul.f32 %v1455, %v1640
  %v1673 = vmul.f32 %v1459, %v1612
  %v1674 = vmul.f32 %v1459, %v1616
  %v1675 = vmul.f32 %v1459, %v1620
  %v1676 = vmul.f32 %v1459, %v1624
  %v1677 = vmul.f32 %v1459, %v1628
  %v1678 = vmul.f32 %v1459, %v1632
  %v1679 = vmul.f32 %v1459, %v1636
  %v1680 = vmul.f32 %v1459, %v1640
  %v1681 = vmul.f32 %v1463, %v1612
  %v1682 = vmul.f32 %v1463, %v1616
  %v1683 = vmul.f32 %v1463, %v1620
  %v1684 = vmul.f32 %v1463, %v1624
  %v1685 = vmul.f32 %v1463, %v1628
  %v1686 = vmul.f32 %v1463, %v1632
  %v1687 = vmul.f32 %v1463, %v1636
  %v1688 = vmul.f32 %v1463, %v1640
  %v1689 = vmul.f32 %v1467, %v1612
  %v1690 = vmul.f32 %v1467, %v1616
  %v1691 = vmul.f32 %v1467, %v1620
  %v1692 = vmul.f32 %v1467, %v1624
  %v1693 = vmul.f32 %v1467, %v1628
  %v1694 = vmul.f32 %v1467, %v1632
  %v1695 = vmul.f32 %v1467, %v1636
  %v1696 = vmul.f32 %v1467, %v1640
  %v1697 = vmul.f32 %v1471, %v1612
  %v1698 = vmul.f32 %v1471, %v1616
  %v1699 = vmul.f32 %v1471, %v1620
  %v1700 = vmul.f32 %v1471, %v1624
  %v1701 = vmul.f32 %v1471, %v1628
  %v1702 = vmul.f32 %v1471, %v1632
  %v1703 = vmul.f32 %v1471, %v1636
  %v1704 = vmul.f32 %v1471, %v1640
  %v1705 = vmul.f32 %v1475, %v1612
  %v1706 = vmul.f32 %v1475, %v1616
  %v1707 = vmul.f32 %v1475, %v1620
  %v1708 = vmul.f32 %v1475, %v1624
  %v1709 = vmul.f32 %v1475, %v1628
  %v1710 = vmul.f32 %v1475, %v1632
  %v1711 = vmul.f32 %v1475, %v1636
  %v1712 = vmul.f32 %v1475, %v1640
  %v1713 = vmul.f32 %v1479, %v1612
  %v1714 = vmul.f32 %v1479, %v1616
  %v1715 = vmul.f32 %v1479, %v1620
  %v1716 = vmul.f32 %v1479, %v1624
  %v1717 = vmul.f32 %v1479, %v1628
  %v1718 = vmul.f32 %v1479, %v1632
  %v1719 = vmul.f32 %v1479, %v1636
  %v1720 = vmul.f32 %v1479, %v1640
  %v1721 = vmul.f32 %v1483, %v1612
  %v1722 = vmul.f32 %v1483, %v1616
  %v1723 = vmul.f32 %v1483, %v1620
  %v1724 = vmul.f32 %v1483, %v1624
  %v1725 = vmul.f32 %v1483, %v1628
  %v1726 = vmul.f32 %v1483, %v1632
  %v1727 = vmul.f32 %v1483, %v1636
  %v1728 = vmul.f32 %v1483, %v1640
  %v1729 = vmul.f32 %v1487, %v1612
  %v1730 = vmul.f32 %v1487, %v1616
  %v1731 = vmul.f32 %v1487, %v1620
  %v1732 = vmul.f32 %v1487, %v1624
  %v1733 = vmul.f32 %v1487, %v1628
  %v1734 = vmul.f32 %v1487, %v1632
  %v1735 = vmul.f32 %v1487, %v1636
  %v1736 = vmul.f32 %v1487, %v1640
  %v1737 = vmul.f32 %v1491, %v1612
  %v1738 = vmul.f32 %v1491, %v1616
  %v1739 = vmul.f32 %v1491, %v1620
  %v1740 = vmul.f32 %v1491, %v1624
  %v1741 = vmul.f32 %v1491, %v1628
  %v1742 = vmul.f32 %v1491, %v1632
  %v1743 = vmul.f32 %v1491, %v1636
  %v1744 = vmul.f32 %v1491, %v1640
  %v1745 = vmul.f32 %v1495, %v1612
  %v1746 = vmul.f32 %v1495, %v1616
  %v1747 = vmul.f32 %v1495, %v1620
  %v1748 = vmul.f32 %v1495, %v1624
  %v1749 = vmul.f32 %v1495, %v1628
  %v1750 = vmul.f32 %v1495, %v1632
  %v1751 = vmul.f32 %v1495, %v1636
  %v1752 = vmul.f32 %v1495, %v1640
  %v1753 = vmul.f32 %v1499, %v1612
  %v1754 = vmul.f32 %v1499, %v1616
  %v1755 = vmul.f32 %v1499, %v1620
  %v1756 = vmul.f32 %v1499, %v1624
  %v1757 = vmul.f32 %v1499, %v1628
  %v1758 = vmul.f32 %v1499, %v1632
  %v1759 = vmul.f32 %v1499, %v1636
  %v1760 = vmul.f32 %v1499, %v1640
  %v1761 = vmul.f32 %v1503, %v1612
  %v1762 = vmul.f32 %v1503, %v1616
  %v1763 = vmul.f32 %v1503, %v1620
  %v1764 = vmul.f32 %v1503, %v1624
  %v1765 = vmul.f32 %v1503, %v1628
  %v1766 = vmul.f32 %v1503, %v1632
  %v1767 = vmul.f32 %v1503, %v1636
  %v1768 = vmul.f32 %v1503, %v1640
  %v1769 = vmul.f32 %v1507, %v1612
  %v1770 = vmul.f32 %v1507, %v1616
  %v1771 = vmul.f32 %v1507, %v1620
  %v1772 = vmul.f32 %v1507, %v1624
  %v1773 = vmul.f32 %v1507, %v1628
  %v1774 = vmul.f32 %v1507, %v1632
  %v1775 = vmul.f32 %v1507, %v1636
  %v1776 = vmul.f32 %v1507, %v1640
  %v1777 = vmul.f32 %v1511, %v1612
  %v1778 = vmul.f32 %v1511, %v1616
  %v1779 = vmul.f32 %v1511, %v1620
  %v1780 = vmul.f32 %v1511, %v1624
  %v1781 = vmul.f32 %v1511, %v1628
  %v1782 = vmul.f32 %v1511, %v1632
  %v1783 = vmul.f32 %v1511, %v1636
  %v1784 = vmul.f32 %v1511, %v1640
  %v1785 = vmul.f32 %v1515, %v1612
  %v1786 = vmul.f32 %v1515, %v1616
  %v1787 = vmul.f32 %v1515, %v1620
  %v1788 = vmul.f32 %v1515, %v1624
  %v1789 = vmul.f32 %v1515, %v1628
  %v1790 = vmul.f32 %v1515, %v1632
  %v1791 = vmul.f32 %v1515, %v1636
  %v1792 = vmul.f32 %v1515, %v1640
  %v1793 = vmul.f32 %v1519, %v1612
  %v1794 = vmul.f32 %v1519, %v1616
  %v1795 = vmul.f32 %v1519, %v1620
  %v1796 = vmul.f32 %v1519, %v1624
  %v1797 = vmul.f32 %v1519, %v1628
  %v1798 = vmul.f32 %v1519, %v1632
  %v1799 = vmul.f32 %v1519, %v1636
  %v1800 = vmul.f32 %v1519, %v1640
  %v1801 = vmul.f32 %v1523, %v1612
  %v1802 = vmul.f32 %v1523, %v1616
  %v1803 = vmul.f32 %v1523, %v1620
  %v1804 = vmul.f32 %v1523, %v1624
  %v1805 = vmul.f32 %v1523, %v1628
  %v1806 = vmul.f32 %v1523, %v1632
  %v1807 = vmul.f32 %v1523, %v1636
  %v1808 = vmul.f32 %v1523, %v1640
  %v1809 = vmul.f32 %v1527, %v1612
  %v1810 = vmul.f32 %v1527, %v1616
  %v1811 = vmul.f32 %v1527, %v1620
  %v1812 = vmul.f32 %v1527, %v1624
  %v1813 = vmul.f32 %v1527, %v1628
  %v1814 = vmul.f32 %v1527, %v1632
  %v1815 = vmul.f32 %v1527, %v1636
  %v1816 = vmul.f32 %v1527, %v1640
  %v1817 = vmul.f32 %v1531, %v1612
  %v1818 = vmul.f32 %v1531, %v1616
  %v1819 = vmul.f32 %v1531, %v1620
  %v1820 = vmul.f32 %v1531, %v1624
  %v1821 = vmul.f32 %v1531, %v1628
  %v1822 = vmul.f32 %v1531, %v1632
  %v1823 = vmul.f32 %v1531, %v1636
  %v1824 = vmul.f32 %v1531, %v1640
  %v1825 = vmul.f32 %v1535, %v1612
  %v1826 = vmul.f32 %v1535, %v1616
  %v1827 = vmul.f32 %v1535, %v1620
  %v1828 = vmul.f32 %v1535, %v1624
  %v1829 = vmul.f32 %v1535, %v1628
  %v1830 = vmul.f32 %v1535, %v1632
  %v1831 = vmul.f32 %v1535, %v1636
  %v1832 = vmul.f32 %v1535, %v1640
  %v1833 = vmul.f32 %v1539, %v1612
  %v1834 = vmul.f32 %v1539, %v1616
  %v1835 = vmul.f32 %v1539, %v1620
  %v1836 = vmul.f32 %v1539, %v1624
  %v1837 = vmul.f32 %v1539, %v1628
  %v1838 = vmul.f32 %v1539, %v1632
  %v1839 = vmul.f32 %v1539, %v1636
  %v1840 = vmul.f32 %v1539, %v1640
  %v1841 = vmul.f32 %v1543, %v1612
  %v1842 = vmul.f32 %v1543, %v1616
  %v1843 = vmul.f32 %v1543, %v1620
  %v1844 = vmul.f32 %v1543, %v1624
  %v1845 = vmul.f32 %v1543, %v1628
  %v1846 = vmul.f32 %v1543, %v1632
  %v1847 = vmul.f32 %v1543, %v1636
  %v1848 = vmul.f32 %v1543, %v1640
  %v1849 = vmul.f32 %v1547, %v1612
  %v1850 = vmul.f32 %v1547, %v1616
  %v1851 = vmul.f32 %v1547, %v1620
  %v1852 = vmul.f32 %v1547, %v1624
  %v1853 = vmul.f32 %v1547, %v1628
  %v1854 = vmul.f32 %v1547, %v1632
  %v1855 = vmul.f32 %v1547, %v1636
  %v1856 = vmul.f32 %v1547, %v1640
  %v1857 = vmul.f32 %v1551, %v1612
  %v1858 = vmul.f32 %v1551, %v1616
  %v1859 = vmul.f32 %v1551, %v1620
  %v1860 = vmul.f32 %v1551, %v1624
  %v1861 = vmul.f32 %v1551, %v1628
  %v1862 = vmul.f32 %v1551, %v1632
  %v1863 = vmul.f32 %v1551, %v1636
  %v1864 = vmul.f32 %v1551, %v1640
  %v1865 = vmul.f32 %v1555, %v1612
  %v1866 = vmul.f32 %v1555, %v1616
  %v1867 = vmul.f32 %v1555, %v1620
  %v1868 = vmul.f32 %v1555, %v1624
  %v1869 = vmul.f32 %v1555, %v1628
  %v1870 = vmul.f32 %v1555, %v1632
  %v1871 = vmul.f32 %v1555, %v1636
  %v1872 = vmul.f32 %v1555, %v1640
  %v1873 = vmul.f32 %v1559, %v1612
  %v1874 = vmul.f32 %v1559, %v1616
  %v1875 = vmul.f32 %v1559, %v1620
  %v1876 = vmul.f32 %v1559, %v1624
  %v1877 = vmul.f32 %v1559, %v1628
  %v1878 = vmul.f32 %v1559, %v1632
  %v1879 = vmul.f32 %v1559, %v1636
  %v1880 = vmul.f32 %v1559, %v1640
  %v1881 = vmul.f32 %v1563, %v1612
  %v1882 = vmul.f32 %v1563, %v1616
  %v1883 = vmul.f32 %v1563, %v1620
  %v1884 = vmul.f32 %v1563, %v1624
  %v1885 = vmul.f32 %v1563, %v1628
  %v1886 = vmul.f32 %v1563, %v1632
  %v1887 = vmul.f32 %v1563, %v1636
  %v1888 = vmul.f32 %v1563, %v1640
  %v1889 = vmul.f32 %v1567, %v1612
  %v1890 = vmul.f32 %v1567, %v1616
  %v1891 = vmul.f32 %v1567, %v1620
  %v1892 = vmul.f32 %v1567, %v1624
  %v1893 = vmul.f32 %v1567, %v1628
  %v1894 = vmul.f32 %v1567, %v1632
  %v1895 = vmul.f32 %v1567, %v1636
  %v1896 = vmul.f32 %v1567, %v1640
  %v1897 = vadd.f32 %v1185, %v1641
  %v1898 = vadd.f32 %v1186, %v1642
  %v1899 = vadd.f32 %v1187, %v1643
  %v1900 = vadd.f32 %v1188, %v1644
  %v1901 = vadd.f32 %v1189, %v1645
  %v1902 = vadd.f32 %v1190, %v1646
  %v1903 = vadd.f32 %v1191, %v1647
  %v1904 = vadd.f32 %v1192, %v1648
  %v1905 = vadd.f32 %v1193, %v1649
  %v1906 = vadd.f32 %v1194, %v1650
  %v1907 = vadd.f32 %v1195, %v1651
  %v1908 = vadd.f32 %v1196, %v1652
  %v1909 = vadd.f32 %v1197, %v1653
  %v1910 = vadd.f32 %v1198, %v1654
  %v1911 = vadd.f32 %v1199, %v1655
  %v1912 = vadd.f32 %v1200, %v1656
  %v1913 = vadd.f32 %v1201, %v1657
  %v1914 = vadd.f32 %v1202, %v1658
  %v1915 = vadd.f32 %v1203, %v1659
  %v1916 = vadd.f32 %v1204, %v1660
  %v1917 = vadd.f32 %v1205, %v1661
  %v1918 = vadd.f32 %v1206, %v1662
  %v1919 = vadd.f32 %v1207, %v1663
  %v1920 = vadd.f32 %v1208, %v1664
  %v1921 = vadd.f32 %v1209, %v1665
  %v1922 = vadd.f32 %v1210, %v1666
  %v1923 = vadd.f32 %v1211, %v1667
  %v1924 = vadd.f32 %v1212, %v1668
  %v1925 = vadd.f32 %v1213, %v1669
  %v1926 = vadd.f32 %v1214, %v1670
  %v1927 = vadd.f32 %v1215, %v1671
  %v1928 = vadd.f32 %v1216, %v1672
  %v1929 = vadd.f32 %v1217, %v1673
  %v1930 = vadd.f32 %v1218, %v1674
  %v1931 = vadd.f32 %v1219, %v1675
  %v1932 = vadd.f32 %v1220, %v1676
  %v1933 = vadd.f32 %v1221, %v1677
  %v1934 = vadd.f32 %v1222, %v1678
  %v1935 = vadd.f32 %v1223, %v1679
  %v1936 = vadd.f32 %v1224, %v1680
  %v1937 = vadd.f32 %v1225, %v1681
  %v1938 = vadd.f32 %v1226, %v1682
  %v1939 = vadd.f32 %v1227, %v1683
  %v1940 = vadd.f32 %v1228, %v1684
  %v1941 = vadd.f32 %v1229, %v1685
  %v1942 = vadd.f32 %v1230, %v1686
  %v1943 = vadd.f32 %v1231, %v1687
  %v1944 = vadd.f32 %v1232, %v1688
  %v1945 = vadd.f32 %v1233, %v1689
  %v1946 = vadd.f32 %v1234, %v1690
  %v1947 = vadd.f32 %v1235, %v1691
  %v1948 = vadd.f32 %v1236, %v1692
  %v1949 = vadd.f32 %v1237, %v1693
  %v1950 = vadd.f32 %v1238, %v1694
  %v1951 = vadd.f32 %v1239, %v1695
  %v1952 = vadd.f32 %v1240, %v1696
  %v1953 = vadd.f32 %v1241, %v1697
  %v1954 = vadd.f32 %v1242, %v1698
  %v1955 = vadd.f32 %v1243, %v1699
  %v1956 = vadd.f32 %v1244, %v1700
  %v1957 = vadd.f32 %v1245, %v1701
  %v1958 = vadd.f32 %v1246, %v1702
  %v1959 = vadd.f32 %v1247, %v1703
  %v1960 = vadd.f32 %v1248, %v1704
  %v1961 = vadd.f32 %v1249, %v1705
  %v1962 = vadd.f32 %v1250, %v1706
  %v1963 = vadd.f32 %v1251, %v1707
  %v1964 = vadd.f32 %v1252, %v1708
  %v1965 = vadd.f32 %v1253, %v1709
  %v1966 = vadd.f32 %v1254, %v1710
  %v1967 = vadd.f32 %v1255, %v1711
  %v1968 = vadd.f32 %v1256, %v1712
  %v1969 = vadd.f32 %v1257, %v1713
  %v1970 = vadd.f32 %v1258, %v1714
  %v1971 = vadd.f32 %v1259, %v1715
  %v1972 = vadd.f32 %v1260, %v1716
  %v1973 = vadd.f32 %v1261, %v1717
  %v1974 = vadd.f32 %v1262, %v1718
  %v1975 = vadd.f32 %v1263, %v1719
  %v1976 = vadd.f32 %v1264, %v1720
  %v1977 = vadd.f32 %v1265, %v1721
  %v1978 = vadd.f32 %v1266, %v1722
  %v1979 = vadd.f32 %v1267, %v1723
  %v1980 = vadd.f32 %v1268, %v1724
  %v1981 = vadd.f32 %v1269, %v1725
  %v1982 = vadd.f32 %v1270, %v1726
  %v1983 = vadd.f32 %v1271, %v1727
  %v1984 = vadd.f32 %v1272, %v1728
  %v1985 = vadd.f32 %v1273, %v1729
  %v1986 = vadd.f32 %v1274, %v1730
  %v1987 = vadd.f32 %v1275, %v1731
  %v1988 = vadd.f32 %v1276, %v1732
  %v1989 = vadd.f32 %v1277, %v1733
  %v1990 = vadd.f32 %v1278, %v1734
  %v1991 = vadd.f32 %v1279, %v1735
  %v1992 = vadd.f32 %v1280, %v1736
  %v1993 = vadd.f32 %v1281, %v1737
  %v1994 = vadd.f32 %v1282, %v1738
  %v1995 = vadd.f32 %v1283, %v1739
  %v1996 = vadd.f32 %v1284, %v1740
  %v1997 = vadd.f32 %v1285, %v1741
  %v1998 = vadd.f32 %v1286, %v1742
  %v1999 = vadd.f32 %v1287, %v1743
  %v2000 = vadd.f32 %v1288, %v1744
  %v2001 = vadd.f32 %v1289, %v1745
  %v2002 = vadd.f32 %v1290, %v1746
  %v2003 = vadd.f32 %v1291, %v1747
  %v2004 = vadd.f32 %v1292, %v1748
  %v2005 = vadd.f32 %v1293, %v1749
  %v2006 = vadd.f32 %v1294, %v1750
  %v2007 = vadd.f32 %v1295, %v1751
  %v2008 = vadd.f32 %v1296, %v1752
  %v2009 = vadd.f32 %v1297, %v1753
  %v2010 = vadd.f32 %v1298, %v1754
  %v2011 = vadd.f32 %v1299, %v1755
  %v2012 = vadd.f32 %v1300, %v1756
  %v2013 = vadd.f32 %v1301, %v1757
  %v2014 = vadd.f32 %v1302, %v1758
  %v2015 = vadd.f32 %v1303, %v1759
  %v2016 = vadd.f32 %v1304, %v1760
  %v2017 = vadd.f32 %v1305, %v1761
  %v2018 = vadd.f32 %v1306, %v1762
  %v2019 = vadd.f32 %v1307, %v1763
  %v2020 = vadd.f32 %v1308, %v1764
  %v2021 = vadd.f32 %v1309, %v1765
  %v2022 = vadd.f32 %v1310, %v1766
  %v2023 = vadd.f32 %v1311, %v1767
  %v2024 = vadd.f32 %v1312, %v1768
  %v2025 = vadd.f32 %v1313, %v1769
  %v2026 = vadd.f32 %v1314, %v1770
  %v2027 = vadd.f32 %v1315, %v1771
  %v2028 = vadd.f32 %v1316, %v1772
  %v2029 = vadd.f32 %v1317, %v1773
  %v2030 = vadd.f32 %v1318, %v1774
  %v2031 = vadd.f32 %v1319, %v1775
  %v2032 = vadd.f32 %v1320, %v1776
  %v2033 = vadd.f32 %v1321, %v1777
  %v2034 = vadd.f32 %v1322, %v1778
  %v2035 = vadd.f32 %v1323, %v1779
  %v2036 = vadd.f32 %v1324, %v1780
  %v2037 = vadd.f32 %v1325, %v1781
  %v2038 = vadd.f32 %v1326, %v1782
  %v2039 = vadd.f32 %v1327, %v1783
  %v2040 = vadd.f32 %v1328, %v1784
  %v2041 = vadd.f32 %v1329, %v1785
  %v2042 = vadd.f32 %v1330, %v1786
  %v2043 = vadd.f32 %v1331, %v1787
  %v2044 = vadd.f32 %v1332, %v1788
  %v2045 = vadd.f32 %v1333, %v1789
  %v2046 = vadd.f32 %v1334, %v1790
  %v2047 = vadd.f32 %v1335, %v1791
  %v2048 = vadd.f32 %v1336, %v1792
  %v2049 = vadd.f32 %v1337, %v1793
  %v2050 = vadd.f32 %v1338, %v1794
  %v2051 = vadd.f32 %v1339, %v1795
  %v2052 = vadd.f32 %v1340, %v1796
  %v2053 = vadd.f32 %v1341, %v1797
  %v2054 = vadd.f32 %v1342, %v1798
  %v2055 = vadd.f32 %v1343, %v1799
  %v2056 = vadd.f32 %v1344, %v1800
  %v2057 = vadd.f32 %v1345, %v1801
  %v2058 = vadd.f32 %v1346, %v1802
  %v2059 = vadd.f32 %v1347, %v1803
  %v2060 = vadd.f32 %v1348, %v1804
  %v2061 = vadd.f32 %v1349, %v1805
  %v2062 = vadd.f32 %v1350, %v1806
  %v2063 = vadd.f32 %v1351, %v1807
  %v2064 = vadd.f32 %v1352, %v1808
  %v2065 = vadd.f32 %v1353, %v1809
  %v2066 = vadd.f32 %v1354, %v1810
  %v2067 = vadd.f32 %v1355, %v1811
  %v2068 = vadd.f32 %v1356, %v1812
  %v2069 = vadd.f32 %v1357, %v1813
  %v2070 = vadd.f32 %v1358, %v1814
  %v2071 = vadd.f32 %v1359, %v1815
  %v2072 = vadd.f32 %v1360, %v1816
  %v2073 = vadd.f32 %v1361, %v1817
  %v2074 = vadd.f32 %v1362, %v1818
  %v2075 = vadd.f32 %v1363, %v1819
  %v2076 = vadd.f32 %v1364, %v1820
  %v2077 = vadd.f32 %v1365, %v1821
  %v2078 = vadd.f32 %v1366, %v1822
  %v2079 = vadd.f32 %v1367, %v1823
  %v2080 = vadd.f32 %v1368, %v1824
  %v2081 = vadd.f32 %v1369, %v1825
  %v2082 = vadd.f32 %v1370, %v1826
  %v2083 = vadd.f32 %v1371, %v1827
  %v2084 = vadd.f32 %v1372, %v1828
  %v2085 = vadd.f32 %v1373, %v1829
  %v2086 = vadd.f32 %v1374, %v1830
  %v2087 = vadd.f32 %v1375, %v1831
  %v2088 = vadd.f32 %v1376, %v1832
  %v2089 = vadd.f32 %v1377, %v1833
  %v2090 = vadd.f32 %v1378, %v1834
  %v2091 = vadd.f32 %v1379, %v1835
  %v2092 = vadd.f32 %v1380, %v1836
  %v2093 = vadd.f32 %v1381, %v1837
  %v2094 = vadd.f32 %v1382, %v1838
  %v2095 = vadd.f32 %v1383, %v1839
  %v2096 = vadd.f32 %v1384, %v1840
  %v2097 = vadd.f32 %v1385, %v1841
  %v2098 = vadd.f32 %v1386, %v1842
  %v2099 = vadd.f32 %v1387, %v1843
  %v2100 = vadd.f32 %v1388, %v1844
  %v2101 = vadd.f32 %v1389, %v1845
  %v2102 = vadd.f32 %v1390, %v1846
  %v2103 = vadd.f32 %v1391, %v1847
  %v2104 = vadd.f32 %v1392, %v1848
  %v2105 = vadd.f32 %v1393, %v1849
  %v2106 = vadd.f32 %v1394, %v1850
  %v2107 = vadd.f32 %v1395, %v1851
  %v2108 = vadd.f32 %v1396, %v1852
  %v2109 = vadd.f32 %v1397, %v1853
  %v2110 = vadd.f32 %v1398, %v1854
  %v2111 = vadd.f32 %v1399, %v1855
  %v2112 = vadd.f32 %v1400, %v1856
  %v2113 = vadd.f32 %v1401, %v1857
  %v2114 = vadd.f32 %v1402, %v1858
  %v2115 = vadd.f32 %v1403, %v1859
  %v2116 = vadd.f32 %v1404, %v1860
  %v2117 = vadd.f32 %v1405, %v1861
  %v2118 = vadd.f32 %v1406, %v1862
  %v2119 = vadd.f32 %v1407, %v1863
  %v2120 = vadd.f32 %v1408, %v1864
  %v2121 = vadd.f32 %v1409, %v1865
  %v2122 = vadd.f32 %v1410, %v1866
  %v2123 = vadd.f32 %v1411, %v1867
  %v2124 = vadd.f32 %v1412, %v1868
  %v2125 = vadd.f32 %v1413, %v1869
  %v2126 = vadd.f32 %v1414, %v1870
  %v2127 = vadd.f32 %v1415, %v1871
  %v2128 = vadd.f32 %v1416, %v1872
  %v2129 = vadd.f32 %v1417, %v1873
  %v2130 = vadd.f32 %v1418, %v1874
  %v2131 = vadd.f32 %v1419, %v1875
  %v2132 = vadd.f32 %v1420, %v1876
  %v2133 = vadd.f32 %v1421, %v1877
  %v2134 = vadd.f32 %v1422, %v1878
  %v2135 = vadd.f32 %v1423, %v1879
  %v2136 = vadd.f32 %v1424, %v1880
  %v2137 = vadd.f32 %v1425, %v1881
  %v2138 = vadd.f32 %v1426, %v1882
  %v2139 = vadd.f32 %v1427, %v1883
  %v2140 = vadd.f32 %v1428, %v1884
  %v2141 = vadd.f32 %v1429, %v1885
  %v2142 = vadd.f32 %v1430, %v1886
  %v2143 = vadd.f32 %v1431, %v1887
  %v2144 = vadd.f32 %v1432, %v1888
  %v2145 = vadd.f32 %v1433, %v1889
  %v2146 = vadd.f32 %v1434, %v1890
  %v2147 = vadd.f32 %v1435, %v1891
  %v2148 = vadd.f32 %v1436, %v1892
  %v2149 = vadd.f32 %v1437, %v1893
  %v2150 = vadd.f32 %v1438, %v1894
  %v2151 = vadd.f32 %v1439, %v1895
  %v2152 = vadd.f32 %v1440, %v1896
  %v2153 = vld [vmem:[%s2] sm:$0xaa]
  %v2154 = vld [vmem:[%s2 + $0x8] sm:$0xaa]
  %v2155 = vunpack.c.l.bf16 %v2153
  %v2156 = vunpack.c.h.bf16 %v2153
  %v2157 = vunpack.c.l.bf16 %v2154
  %v2158 = vunpack.c.h.bf16 %v2154
  %2159 = vset.pattern.permute.xlu0 2
  %2160 = vperm.xlu0 %2159, %v655
  %v2161 = vpop.permute.xlu0 %2160
  %2163 = vset.pattern.permute.xlu0 2
  %2164 = vperm.xlu0 %2163, %v656
  %v2165 = vpop.permute.xlu0 %2164
  %2167 = vset.pattern.permute.xlu0 2
  %2168 = vperm.xlu0 %2167, %v657
  %v2169 = vpop.permute.xlu0 %2168
  %2171 = vset.pattern.permute.xlu0 2
  %2172 = vperm.xlu0 %2171, %v658
  %v2173 = vpop.permute.xlu0 %2172
  %2175 = vset.pattern.permute.xlu0 2
  %2176 = vperm.xlu0 %2175, %v659
  %v2177 = vpop.permute.xlu0 %2176
  %2179 = vset.pattern.permute.xlu0 2
  %2180 = vperm.xlu0 %2179, %v660
  %v2181 = vpop.permute.xlu0 %2180
  %2183 = vset.pattern.permute.xlu0 2
  %2184 = vperm.xlu0 %2183, %v661
  %v2185 = vpop.permute.xlu0 %2184
  %2187 = vset.pattern.permute.xlu0 2
  %2188 = vperm.xlu0 %2187, %v662
  %v2189 = vpop.permute.xlu0 %2188
  %2191 = vset.pattern.permute.xlu0 2
  %2192 = vperm.xlu0 %2191, %v663
  %v2193 = vpop.permute.xlu0 %2192
  %2195 = vset.pattern.permute.xlu0 2
  %2196 = vperm.xlu0 %2195, %v664
  %v2197 = vpop.permute.xlu0 %2196
  %2199 = vset.pattern.permute.xlu0 2
  %2200 = vperm.xlu0 %2199, %v665
  %v2201 = vpop.permute.xlu0 %2200
  %2203 = vset.pattern.permute.xlu0 2
  %2204 = vperm.xlu0 %2203, %v666
  %v2205 = vpop.permute.xlu0 %2204
  %2207 = vset.pattern.permute.xlu0 2
  %2208 = vperm.xlu0 %2207, %v667
  %v2209 = vpop.permute.xlu0 %2208
  %2211 = vset.pattern.permute.xlu0 2
  %2212 = vperm.xlu0 %2211, %v668
  %v2213 = vpop.permute.xlu0 %2212
  %2215 = vset.pattern.permute.xlu0 2
  %2216 = vperm.xlu0 %2215, %v669
  %v2217 = vpop.permute.xlu0 %2216
  %2219 = vset.pattern.permute.xlu0 2
  %2220 = vperm.xlu0 %2219, %v670
  %v2221 = vpop.permute.xlu0 %2220
  %2223 = vset.pattern.permute.xlu0 2
  %2224 = vperm.xlu0 %2223, %v671
  %v2225 = vpop.permute.xlu0 %2224
  %2227 = vset.pattern.permute.xlu0 2
  %2228 = vperm.xlu0 %2227, %v672
  %v2229 = vpop.permute.xlu0 %2228
  %2231 = vset.pattern.permute.xlu0 2
  %2232 = vperm.xlu0 %2231, %v673
  %v2233 = vpop.permute.xlu0 %2232
  %2235 = vset.pattern.permute.xlu0 2
  %2236 = vperm.xlu0 %2235, %v674
  %v2237 = vpop.permute.xlu0 %2236
  %2239 = vset.pattern.permute.xlu0 2
  %2240 = vperm.xlu0 %2239, %v675
  %v2241 = vpop.permute.xlu0 %2240
  %2243 = vset.pattern.permute.xlu0 2
  %2244 = vperm.xlu0 %2243, %v676
  %v2245 = vpop.permute.xlu0 %2244
  %2247 = vset.pattern.permute.xlu0 2
  %2248 = vperm.xlu0 %2247, %v677
  %v2249 = vpop.permute.xlu0 %2248
  %2251 = vset.pattern.permute.xlu0 2
  %2252 = vperm.xlu0 %2251, %v678
  %v2253 = vpop.permute.xlu0 %2252
  %2255 = vset.pattern.permute.xlu0 2
  %2256 = vperm.xlu0 %2255, %v679
  %v2257 = vpop.permute.xlu0 %2256
  %2259 = vset.pattern.permute.xlu0 2
  %2260 = vperm.xlu0 %2259, %v680
  %v2261 = vpop.permute.xlu0 %2260
  %2263 = vset.pattern.permute.xlu0 2
  %2264 = vperm.xlu0 %2263, %v681
  %v2265 = vpop.permute.xlu0 %2264
  %2267 = vset.pattern.permute.xlu0 2
  %2268 = vperm.xlu0 %2267, %v682
  %v2269 = vpop.permute.xlu0 %2268
  %2271 = vset.pattern.permute.xlu0 2
  %2272 = vperm.xlu0 %2271, %v683
  %v2273 = vpop.permute.xlu0 %2272
  %2275 = vset.pattern.permute.xlu0 2
  %2276 = vperm.xlu0 %2275, %v684
  %v2277 = vpop.permute.xlu0 %2276
  %2279 = vset.pattern.permute.xlu0 2
  %2280 = vperm.xlu0 %2279, %v685
  %v2281 = vpop.permute.xlu0 %2280
  %2283 = vset.pattern.permute.xlu0 2
  %2284 = vperm.xlu0 %2283, %v686
  %v2285 = vpop.permute.xlu0 %2284
  %v2291 = vlaneseq
  %v2292 = vshrl.u32 %v2291, 7
  %v2293 = vsub.s32 2, %v2292
  %v2294 = vrot.slane %v2155, %v2293
  %v2295 = vlaneseq
  %v2296 = vshrl.u32 %v2295, 7
  %v2297 = vsub.s32 6, %v2296
  %v2298 = vrot.slane %v2155, %v2297
  %v2299 = vlaneseq
  %v2300 = vshrl.u32 %v2299, 7
  %v2301 = vsub.s32 2, %v2300
  %v2302 = vrot.slane %v2156, %v2301
  %v2303 = vlaneseq
  %v2304 = vshrl.u32 %v2303, 7
  %v2305 = vsub.s32 6, %v2304
  %v2306 = vrot.slane %v2156, %v2305
  %v2307 = vlaneseq
  %v2308 = vshrl.u32 %v2307, 7
  %v2309 = vsub.s32 2, %v2308
  %v2310 = vrot.slane %v2157, %v2309
  %v2311 = vlaneseq
  %v2312 = vshrl.u32 %v2311, 7
  %v2313 = vsub.s32 6, %v2312
  %v2314 = vrot.slane %v2157, %v2313
  %v2315 = vlaneseq
  %v2316 = vshrl.u32 %v2315, 7
  %v2317 = vsub.s32 2, %v2316
  %v2318 = vrot.slane %v2158, %v2317
  %v2319 = vlaneseq
  %v2320 = vshrl.u32 %v2319, 7
  %v2321 = vsub.s32 6, %v2320
  %v2322 = vrot.slane %v2158, %v2321
  %v2331 = vlaneseq
  %v2332 = vshrl.u32 %v2331, 7
  %v2333 = vsub.s32 2, %v2332
  %v2334 = vrot.slane %v2294, %v2333
  %v2335 = vlaneseq
  %v2336 = vshrl.u32 %v2335, 7
  %v2337 = vsub.s32 2, %v2336
  %v2338 = vrot.slane %v2298, %v2337
  %v2339 = vlaneseq
  %v2340 = vshrl.u32 %v2339, 7
  %v2341 = vsub.s32 2, %v2340
  %v2342 = vrot.slane %v2302, %v2341
  %v2343 = vlaneseq
  %v2344 = vshrl.u32 %v2343, 7
  %v2345 = vsub.s32 2, %v2344
  %v2346 = vrot.slane %v2306, %v2345
  %v2347 = vlaneseq
  %v2348 = vshrl.u32 %v2347, 7
  %v2349 = vsub.s32 2, %v2348
  %v2350 = vrot.slane %v2310, %v2349
  %v2351 = vlaneseq
  %v2352 = vshrl.u32 %v2351, 7
  %v2353 = vsub.s32 2, %v2352
  %v2354 = vrot.slane %v2314, %v2353
  %v2355 = vlaneseq
  %v2356 = vshrl.u32 %v2355, 7
  %v2357 = vsub.s32 2, %v2356
  %v2358 = vrot.slane %v2318, %v2357
  %v2359 = vlaneseq
  %v2360 = vshrl.u32 %v2359, 7
  %v2361 = vsub.s32 2, %v2360
  %v2362 = vrot.slane %v2322, %v2361
  %v2363 = vmul.f32 %v2161, %v2334
  %v2364 = vmul.f32 %v2161, %v2338
  %v2365 = vmul.f32 %v2161, %v2342
  %v2366 = vmul.f32 %v2161, %v2346
  %v2367 = vmul.f32 %v2161, %v2350
  %v2368 = vmul.f32 %v2161, %v2354
  %v2369 = vmul.f32 %v2161, %v2358
  %v2370 = vmul.f32 %v2161, %v2362
  %v2371 = vmul.f32 %v2165, %v2334
  %v2372 = vmul.f32 %v2165, %v2338
  %v2373 = vmul.f32 %v2165, %v2342
  %v2374 = vmul.f32 %v2165, %v2346
  %v2375 = vmul.f32 %v2165, %v2350
  %v2376 = vmul.f32 %v2165, %v2354
  %v2377 = vmul.f32 %v2165, %v2358
  %v2378 = vmul.f32 %v2165, %v2362
  %v2379 = vmul.f32 %v2169, %v2334
  %v2380 = vmul.f32 %v2169, %v2338
  %v2381 = vmul.f32 %v2169, %v2342
  %v2382 = vmul.f32 %v2169, %v2346
  %v2383 = vmul.f32 %v2169, %v2350
  %v2384 = vmul.f32 %v2169, %v2354
  %v2385 = vmul.f32 %v2169, %v2358
  %v2386 = vmul.f32 %v2169, %v2362
  %v2387 = vmul.f32 %v2173, %v2334
  %v2388 = vmul.f32 %v2173, %v2338
  %v2389 = vmul.f32 %v2173, %v2342
  %v2390 = vmul.f32 %v2173, %v2346
  %v2391 = vmul.f32 %v2173, %v2350
  %v2392 = vmul.f32 %v2173, %v2354
  %v2393 = vmul.f32 %v2173, %v2358
  %v2394 = vmul.f32 %v2173, %v2362
  %v2395 = vmul.f32 %v2177, %v2334
  %v2396 = vmul.f32 %v2177, %v2338
  %v2397 = vmul.f32 %v2177, %v2342
  %v2398 = vmul.f32 %v2177, %v2346
  %v2399 = vmul.f32 %v2177, %v2350
  %v2400 = vmul.f32 %v2177, %v2354
  %v2401 = vmul.f32 %v2177, %v2358
  %v2402 = vmul.f32 %v2177, %v2362
  %v2403 = vmul.f32 %v2181, %v2334
  %v2404 = vmul.f32 %v2181, %v2338
  %v2405 = vmul.f32 %v2181, %v2342
  %v2406 = vmul.f32 %v2181, %v2346
  %v2407 = vmul.f32 %v2181, %v2350
  %v2408 = vmul.f32 %v2181, %v2354
  %v2409 = vmul.f32 %v2181, %v2358
  %v2410 = vmul.f32 %v2181, %v2362
  %v2411 = vmul.f32 %v2185, %v2334
  %v2412 = vmul.f32 %v2185, %v2338
  %v2413 = vmul.f32 %v2185, %v2342
  %v2414 = vmul.f32 %v2185, %v2346
  %v2415 = vmul.f32 %v2185, %v2350
  %v2416 = vmul.f32 %v2185, %v2354
  %v2417 = vmul.f32 %v2185, %v2358
  %v2418 = vmul.f32 %v2185, %v2362
  %v2419 = vmul.f32 %v2189, %v2334
  %v2420 = vmul.f32 %v2189, %v2338
  %v2421 = vmul.f32 %v2189, %v2342
  %v2422 = vmul.f32 %v2189, %v2346
  %v2423 = vmul.f32 %v2189, %v2350
  %v2424 = vmul.f32 %v2189, %v2354
  %v2425 = vmul.f32 %v2189, %v2358
  %v2426 = vmul.f32 %v2189, %v2362
  %v2427 = vmul.f32 %v2193, %v2334
  %v2428 = vmul.f32 %v2193, %v2338
  %v2429 = vmul.f32 %v2193, %v2342
  %v2430 = vmul.f32 %v2193, %v2346
  %v2431 = vmul.f32 %v2193, %v2350
  %v2432 = vmul.f32 %v2193, %v2354
  %v2433 = vmul.f32 %v2193, %v2358
  %v2434 = vmul.f32 %v2193, %v2362
  %v2435 = vmul.f32 %v2197, %v2334
  %v2436 = vmul.f32 %v2197, %v2338
  %v2437 = vmul.f32 %v2197, %v2342
  %v2438 = vmul.f32 %v2197, %v2346
  %v2439 = vmul.f32 %v2197, %v2350
  %v2440 = vmul.f32 %v2197, %v2354
  %v2441 = vmul.f32 %v2197, %v2358
  %v2442 = vmul.f32 %v2197, %v2362
  %v2443 = vmul.f32 %v2201, %v2334
  %v2444 = vmul.f32 %v2201, %v2338
  %v2445 = vmul.f32 %v2201, %v2342
  %v2446 = vmul.f32 %v2201, %v2346
  %v2447 = vmul.f32 %v2201, %v2350
  %v2448 = vmul.f32 %v2201, %v2354
  %v2449 = vmul.f32 %v2201, %v2358
  %v2450 = vmul.f32 %v2201, %v2362
  %v2451 = vmul.f32 %v2205, %v2334
  %v2452 = vmul.f32 %v2205, %v2338
  %v2453 = vmul.f32 %v2205, %v2342
  %v2454 = vmul.f32 %v2205, %v2346
  %v2455 = vmul.f32 %v2205, %v2350
  %v2456 = vmul.f32 %v2205, %v2354
  %v2457 = vmul.f32 %v2205, %v2358
  %v2458 = vmul.f32 %v2205, %v2362
  %v2459 = vmul.f32 %v2209, %v2334
  %v2460 = vmul.f32 %v2209, %v2338
  %v2461 = vmul.f32 %v2209, %v2342
  %v2462 = vmul.f32 %v2209, %v2346
  %v2463 = vmul.f32 %v2209, %v2350
  %v2464 = vmul.f32 %v2209, %v2354
  %v2465 = vmul.f32 %v2209, %v2358
  %v2466 = vmul.f32 %v2209, %v2362
  %v2467 = vmul.f32 %v2213, %v2334
  %v2468 = vmul.f32 %v2213, %v2338
  %v2469 = vmul.f32 %v2213, %v2342
  %v2470 = vmul.f32 %v2213, %v2346
  %v2471 = vmul.f32 %v2213, %v2350
  %v2472 = vmul.f32 %v2213, %v2354
  %v2473 = vmul.f32 %v2213, %v2358
  %v2474 = vmul.f32 %v2213, %v2362
  %v2475 = vmul.f32 %v2217, %v2334
  %v2476 = vmul.f32 %v2217, %v2338
  %v2477 = vmul.f32 %v2217, %v2342
  %v2478 = vmul.f32 %v2217, %v2346
  %v2479 = vmul.f32 %v2217, %v2350
  %v2480 = vmul.f32 %v2217, %v2354
  %v2481 = vmul.f32 %v2217, %v2358
  %v2482 = vmul.f32 %v2217, %v2362
  %v2483 = vmul.f32 %v2221, %v2334
  %v2484 = vmul.f32 %v2221, %v2338
  %v2485 = vmul.f32 %v2221, %v2342
  %v2486 = vmul.f32 %v2221, %v2346
  %v2487 = vmul.f32 %v2221, %v2350
  %v2488 = vmul.f32 %v2221, %v2354
  %v2489 = vmul.f32 %v2221, %v2358
  %v2490 = vmul.f32 %v2221, %v2362
  %v2491 = vmul.f32 %v2225, %v2334
  %v2492 = vmul.f32 %v2225, %v2338
  %v2493 = vmul.f32 %v2225, %v2342
  %v2494 = vmul.f32 %v2225, %v2346
  %v2495 = vmul.f32 %v2225, %v2350
  %v2496 = vmul.f32 %v2225, %v2354
  %v2497 = vmul.f32 %v2225, %v2358
  %v2498 = vmul.f32 %v2225, %v2362
  %v2499 = vmul.f32 %v2229, %v2334
  %v2500 = vmul.f32 %v2229, %v2338
  %v2501 = vmul.f32 %v2229, %v2342
  %v2502 = vmul.f32 %v2229, %v2346
  %v2503 = vmul.f32 %v2229, %v2350
  %v2504 = vmul.f32 %v2229, %v2354
  %v2505 = vmul.f32 %v2229, %v2358
  %v2506 = vmul.f32 %v2229, %v2362
  %v2507 = vmul.f32 %v2233, %v2334
  %v2508 = vmul.f32 %v2233, %v2338
  %v2509 = vmul.f32 %v2233, %v2342
  %v2510 = vmul.f32 %v2233, %v2346
  %v2511 = vmul.f32 %v2233, %v2350
  %v2512 = vmul.f32 %v2233, %v2354
  %v2513 = vmul.f32 %v2233, %v2358
  %v2514 = vmul.f32 %v2233, %v2362
  %v2515 = vmul.f32 %v2237, %v2334
  %v2516 = vmul.f32 %v2237, %v2338
  %v2517 = vmul.f32 %v2237, %v2342
  %v2518 = vmul.f32 %v2237, %v2346
  %v2519 = vmul.f32 %v2237, %v2350
  %v2520 = vmul.f32 %v2237, %v2354
  %v2521 = vmul.f32 %v2237, %v2358
  %v2522 = vmul.f32 %v2237, %v2362
  %v2523 = vmul.f32 %v2241, %v2334
  %v2524 = vmul.f32 %v2241, %v2338
  %v2525 = vmul.f32 %v2241, %v2342
  %v2526 = vmul.f32 %v2241, %v2346
  %v2527 = vmul.f32 %v2241, %v2350
  %v2528 = vmul.f32 %v2241, %v2354
  %v2529 = vmul.f32 %v2241, %v2358
  %v2530 = vmul.f32 %v2241, %v2362
  %v2531 = vmul.f32 %v2245, %v2334
  %v2532 = vmul.f32 %v2245, %v2338
  %v2533 = vmul.f32 %v2245, %v2342
  %v2534 = vmul.f32 %v2245, %v2346
  %v2535 = vmul.f32 %v2245, %v2350
  %v2536 = vmul.f32 %v2245, %v2354
  %v2537 = vmul.f32 %v2245, %v2358
  %v2538 = vmul.f32 %v2245, %v2362
  %v2539 = vmul.f32 %v2249, %v2334
  %v2540 = vmul.f32 %v2249, %v2338
  %v2541 = vmul.f32 %v2249, %v2342
  %v2542 = vmul.f32 %v2249, %v2346
  %v2543 = vmul.f32 %v2249, %v2350
  %v2544 = vmul.f32 %v2249, %v2354
  %v2545 = vmul.f32 %v2249, %v2358
  %v2546 = vmul.f32 %v2249, %v2362
  %v2547 = vmul.f32 %v2253, %v2334
  %v2548 = vmul.f32 %v2253, %v2338
  %v2549 = vmul.f32 %v2253, %v2342
  %v2550 = vmul.f32 %v2253, %v2346
  %v2551 = vmul.f32 %v2253, %v2350
  %v2552 = vmul.f32 %v2253, %v2354
  %v2553 = vmul.f32 %v2253, %v2358
  %v2554 = vmul.f32 %v2253, %v2362
  %v2555 = vmul.f32 %v2257, %v2334
  %v2556 = vmul.f32 %v2257, %v2338
  %v2557 = vmul.f32 %v2257, %v2342
  %v2558 = vmul.f32 %v2257, %v2346
  %v2559 = vmul.f32 %v2257, %v2350
  %v2560 = vmul.f32 %v2257, %v2354
  %v2561 = vmul.f32 %v2257, %v2358
  %v2562 = vmul.f32 %v2257, %v2362
  %v2563 = vmul.f32 %v2261, %v2334
  %v2564 = vmul.f32 %v2261, %v2338
  %v2565 = vmul.f32 %v2261, %v2342
  %v2566 = vmul.f32 %v2261, %v2346
  %v2567 = vmul.f32 %v2261, %v2350
  %v2568 = vmul.f32 %v2261, %v2354
  %v2569 = vmul.f32 %v2261, %v2358
  %v2570 = vmul.f32 %v2261, %v2362
  %v2571 = vmul.f32 %v2265, %v2334
  %v2572 = vmul.f32 %v2265, %v2338
  %v2573 = vmul.f32 %v2265, %v2342
  %v2574 = vmul.f32 %v2265, %v2346
  %v2575 = vmul.f32 %v2265, %v2350
  %v2576 = vmul.f32 %v2265, %v2354
  %v2577 = vmul.f32 %v2265, %v2358
  %v2578 = vmul.f32 %v2265, %v2362
  %v2579 = vmul.f32 %v2269, %v2334
  %v2580 = vmul.f32 %v2269, %v2338
  %v2581 = vmul.f32 %v2269, %v2342
  %v2582 = vmul.f32 %v2269, %v2346
  %v2583 = vmul.f32 %v2269, %v2350
  %v2584 = vmul.f32 %v2269, %v2354
  %v2585 = vmul.f32 %v2269, %v2358
  %v2586 = vmul.f32 %v2269, %v2362
  %v2587 = vmul.f32 %v2273, %v2334
  %v2588 = vmul.f32 %v2273, %v2338
  %v2589 = vmul.f32 %v2273, %v2342
  %v2590 = vmul.f32 %v2273, %v2346
  %v2591 = vmul.f32 %v2273, %v2350
  %v2592 = vmul.f32 %v2273, %v2354
  %v2593 = vmul.f32 %v2273, %v2358
  %v2594 = vmul.f32 %v2273, %v2362
  %v2595 = vmul.f32 %v2277, %v2334
  %v2596 = vmul.f32 %v2277, %v2338
  %v2597 = vmul.f32 %v2277, %v2342
  %v2598 = vmul.f32 %v2277, %v2346
  %v2599 = vmul.f32 %v2277, %v2350
  %v2600 = vmul.f32 %v2277, %v2354
  %v2601 = vmul.f32 %v2277, %v2358
  %v2602 = vmul.f32 %v2277, %v2362
  %v2603 = vmul.f32 %v2281, %v2334
  %v2604 = vmul.f32 %v2281, %v2338
  %v2605 = vmul.f32 %v2281, %v2342
  %v2606 = vmul.f32 %v2281, %v2346
  %v2607 = vmul.f32 %v2281, %v2350
  %v2608 = vmul.f32 %v2281, %v2354
  %v2609 = vmul.f32 %v2281, %v2358
  %v2610 = vmul.f32 %v2281, %v2362
  %v2611 = vmul.f32 %v2285, %v2334
  %v2612 = vmul.f32 %v2285, %v2338
  %v2613 = vmul.f32 %v2285, %v2342
  %v2614 = vmul.f32 %v2285, %v2346
  %v2615 = vmul.f32 %v2285, %v2350
  %v2616 = vmul.f32 %v2285, %v2354
  %v2617 = vmul.f32 %v2285, %v2358
  %v2618 = vmul.f32 %v2285, %v2362
  %v2619 = vadd.f32 %v1897, %v2363
  %v2620 = vadd.f32 %v1898, %v2364
  %v2621 = vadd.f32 %v1899, %v2365
  %v2622 = vadd.f32 %v1900, %v2366
  %v2623 = vadd.f32 %v1901, %v2367
  %v2624 = vadd.f32 %v1902, %v2368
  %v2625 = vadd.f32 %v1903, %v2369
  %v2626 = vadd.f32 %v1904, %v2370
  %v2627 = vadd.f32 %v1905, %v2371
  %v2628 = vadd.f32 %v1906, %v2372
  %v2629 = vadd.f32 %v1907, %v2373
  %v2630 = vadd.f32 %v1908, %v2374
  %v2631 = vadd.f32 %v1909, %v2375
  %v2632 = vadd.f32 %v1910, %v2376
  %v2633 = vadd.f32 %v1911, %v2377
  %v2634 = vadd.f32 %v1912, %v2378
  %v2635 = vadd.f32 %v1913, %v2379
  %v2636 = vadd.f32 %v1914, %v2380
  %v2637 = vadd.f32 %v1915, %v2381
  %v2638 = vadd.f32 %v1916, %v2382
  %v2639 = vadd.f32 %v1917, %v2383
  %v2640 = vadd.f32 %v1918, %v2384
  %v2641 = vadd.f32 %v1919, %v2385
  %v2642 = vadd.f32 %v1920, %v2386
  %v2643 = vadd.f32 %v1921, %v2387
  %v2644 = vadd.f32 %v1922, %v2388
  %v2645 = vadd.f32 %v1923, %v2389
  %v2646 = vadd.f32 %v1924, %v2390
  %v2647 = vadd.f32 %v1925, %v2391
  %v2648 = vadd.f32 %v1926, %v2392
  %v2649 = vadd.f32 %v1927, %v2393
  %v2650 = vadd.f32 %v1928, %v2394
  %v2651 = vadd.f32 %v1929, %v2395
  %v2652 = vadd.f32 %v1930, %v2396
  %v2653 = vadd.f32 %v1931, %v2397
  %v2654 = vadd.f32 %v1932, %v2398
  %v2655 = vadd.f32 %v1933, %v2399
  %v2656 = vadd.f32 %v1934, %v2400
  %v2657 = vadd.f32 %v1935, %v2401
  %v2658 = vadd.f32 %v1936, %v2402
  %v2659 = vadd.f32 %v1937, %v2403
  %v2660 = vadd.f32 %v1938, %v2404
  %v2661 = vadd.f32 %v1939, %v2405
  %v2662 = vadd.f32 %v1940, %v2406
  %v2663 = vadd.f32 %v1941, %v2407
  %v2664 = vadd.f32 %v1942, %v2408
  %v2665 = vadd.f32 %v1943, %v2409
  %v2666 = vadd.f32 %v1944, %v2410
  %v2667 = vadd.f32 %v1945, %v2411
  %v2668 = vadd.f32 %v1946, %v2412
  %v2669 = vadd.f32 %v1947, %v2413
  %v2670 = vadd.f32 %v1948, %v2414
  %v2671 = vadd.f32 %v1949, %v2415
  %v2672 = vadd.f32 %v1950, %v2416
  %v2673 = vadd.f32 %v1951, %v2417
  %v2674 = vadd.f32 %v1952, %v2418
  %v2675 = vadd.f32 %v1953, %v2419
  %v2676 = vadd.f32 %v1954, %v2420
  %v2677 = vadd.f32 %v1955, %v2421
  %v2678 = vadd.f32 %v1956, %v2422
  %v2679 = vadd.f32 %v1957, %v2423
  %v2680 = vadd.f32 %v1958, %v2424
  %v2681 = vadd.f32 %v1959, %v2425
  %v2682 = vadd.f32 %v1960, %v2426
  %v2683 = vadd.f32 %v1961, %v2427
  %v2684 = vadd.f32 %v1962, %v2428
  %v2685 = vadd.f32 %v1963, %v2429
  %v2686 = vadd.f32 %v1964, %v2430
  %v2687 = vadd.f32 %v1965, %v2431
  %v2688 = vadd.f32 %v1966, %v2432
  %v2689 = vadd.f32 %v1967, %v2433
  %v2690 = vadd.f32 %v1968, %v2434
  %v2691 = vadd.f32 %v1969, %v2435
  %v2692 = vadd.f32 %v1970, %v2436
  %v2693 = vadd.f32 %v1971, %v2437
  %v2694 = vadd.f32 %v1972, %v2438
  %v2695 = vadd.f32 %v1973, %v2439
  %v2696 = vadd.f32 %v1974, %v2440
  %v2697 = vadd.f32 %v1975, %v2441
  %v2698 = vadd.f32 %v1976, %v2442
  %v2699 = vadd.f32 %v1977, %v2443
  %v2700 = vadd.f32 %v1978, %v2444
  %v2701 = vadd.f32 %v1979, %v2445
  %v2702 = vadd.f32 %v1980, %v2446
  %v2703 = vadd.f32 %v1981, %v2447
  %v2704 = vadd.f32 %v1982, %v2448
  %v2705 = vadd.f32 %v1983, %v2449
  %v2706 = vadd.f32 %v1984, %v2450
  %v2707 = vadd.f32 %v1985, %v2451
  %v2708 = vadd.f32 %v1986, %v2452
  %v2709 = vadd.f32 %v1987, %v2453
  %v2710 = vadd.f32 %v1988, %v2454
  %v2711 = vadd.f32 %v1989, %v2455
  %v2712 = vadd.f32 %v1990, %v2456
  %v2713 = vadd.f32 %v1991, %v2457
  %v2714 = vadd.f32 %v1992, %v2458
  %v2715 = vadd.f32 %v1993, %v2459
  %v2716 = vadd.f32 %v1994, %v2460
  %v2717 = vadd.f32 %v1995, %v2461
  %v2718 = vadd.f32 %v1996, %v2462
  %v2719 = vadd.f32 %v1997, %v2463
  %v2720 = vadd.f32 %v1998, %v2464
  %v2721 = vadd.f32 %v1999, %v2465
  %v2722 = vadd.f32 %v2000, %v2466
  %v2723 = vadd.f32 %v2001, %v2467
  %v2724 = vadd.f32 %v2002, %v2468
  %v2725 = vadd.f32 %v2003, %v2469
  %v2726 = vadd.f32 %v2004, %v2470
  %v2727 = vadd.f32 %v2005, %v2471
  %v2728 = vadd.f32 %v2006, %v2472
  %v2729 = vadd.f32 %v2007, %v2473
  %v2730 = vadd.f32 %v2008, %v2474
  %v2731 = vadd.f32 %v2009, %v2475
  %v2732 = vadd.f32 %v2010, %v2476
  %v2733 = vadd.f32 %v2011, %v2477
  %v2734 = vadd.f32 %v2012, %v2478
  %v2735 = vadd.f32 %v2013, %v2479
  %v2736 = vadd.f32 %v2014, %v2480
  %v2737 = vadd.f32 %v2015, %v2481
  %v2738 = vadd.f32 %v2016, %v2482
  %v2739 = vadd.f32 %v2017, %v2483
  %v2740 = vadd.f32 %v2018, %v2484
  %v2741 = vadd.f32 %v2019, %v2485
  %v2742 = vadd.f32 %v2020, %v2486
  %v2743 = vadd.f32 %v2021, %v2487
  %v2744 = vadd.f32 %v2022, %v2488
  %v2745 = vadd.f32 %v2023, %v2489
  %v2746 = vadd.f32 %v2024, %v2490
  %v2747 = vadd.f32 %v2025, %v2491
  %v2748 = vadd.f32 %v2026, %v2492
  %v2749 = vadd.f32 %v2027, %v2493
  %v2750 = vadd.f32 %v2028, %v2494
  %v2751 = vadd.f32 %v2029, %v2495
  %v2752 = vadd.f32 %v2030, %v2496
  %v2753 = vadd.f32 %v2031, %v2497
  %v2754 = vadd.f32 %v2032, %v2498
  %v2755 = vadd.f32 %v2033, %v2499
  %v2756 = vadd.f32 %v2034, %v2500
  %v2757 = vadd.f32 %v2035, %v2501
  %v2758 = vadd.f32 %v2036, %v2502
  %v2759 = vadd.f32 %v2037, %v2503
  %v2760 = vadd.f32 %v2038, %v2504
  %v2761 = vadd.f32 %v2039, %v2505
  %v2762 = vadd.f32 %v2040, %v2506
  %v2763 = vadd.f32 %v2041, %v2507
  %v2764 = vadd.f32 %v2042, %v2508
  %v2765 = vadd.f32 %v2043, %v2509
  %v2766 = vadd.f32 %v2044, %v2510
  %v2767 = vadd.f32 %v2045, %v2511
  %v2768 = vadd.f32 %v2046, %v2512
  %v2769 = vadd.f32 %v2047, %v2513
  %v2770 = vadd.f32 %v2048, %v2514
  %v2771 = vadd.f32 %v2049, %v2515
  %v2772 = vadd.f32 %v2050, %v2516
  %v2773 = vadd.f32 %v2051, %v2517
  %v2774 = vadd.f32 %v2052, %v2518
  %v2775 = vadd.f32 %v2053, %v2519
  %v2776 = vadd.f32 %v2054, %v2520
  %v2777 = vadd.f32 %v2055, %v2521
  %v2778 = vadd.f32 %v2056, %v2522
  %v2779 = vadd.f32 %v2057, %v2523
  %v2780 = vadd.f32 %v2058, %v2524
  %v2781 = vadd.f32 %v2059, %v2525
  %v2782 = vadd.f32 %v2060, %v2526
  %v2783 = vadd.f32 %v2061, %v2527
  %v2784 = vadd.f32 %v2062, %v2528
  %v2785 = vadd.f32 %v2063, %v2529
  %v2786 = vadd.f32 %v2064, %v2530
  %v2787 = vadd.f32 %v2065, %v2531
  %v2788 = vadd.f32 %v2066, %v2532
  %v2789 = vadd.f32 %v2067, %v2533
  %v2790 = vadd.f32 %v2068, %v2534
  %v2791 = vadd.f32 %v2069, %v2535
  %v2792 = vadd.f32 %v2070, %v2536
  %v2793 = vadd.f32 %v2071, %v2537
  %v2794 = vadd.f32 %v2072, %v2538
  %v2795 = vadd.f32 %v2073, %v2539
  %v2796 = vadd.f32 %v2074, %v2540
  %v2797 = vadd.f32 %v2075, %v2541
  %v2798 = vadd.f32 %v2076, %v2542
  %v2799 = vadd.f32 %v2077, %v2543
  %v2800 = vadd.f32 %v2078, %v2544
  %v2801 = vadd.f32 %v2079, %v2545
  %v2802 = vadd.f32 %v2080, %v2546
  %v2803 = vadd.f32 %v2081, %v2547
  %v2804 = vadd.f32 %v2082, %v2548
  %v2805 = vadd.f32 %v2083, %v2549
  %v2806 = vadd.f32 %v2084, %v2550
  %v2807 = vadd.f32 %v2085, %v2551
  %v2808 = vadd.f32 %v2086, %v2552
  %v2809 = vadd.f32 %v2087, %v2553
  %v2810 = vadd.f32 %v2088, %v2554
  %v2811 = vadd.f32 %v2089, %v2555
  %v2812 = vadd.f32 %v2090, %v2556
  %v2813 = vadd.f32 %v2091, %v2557
  %v2814 = vadd.f32 %v2092, %v2558
  %v2815 = vadd.f32 %v2093, %v2559
  %v2816 = vadd.f32 %v2094, %v2560
  %v2817 = vadd.f32 %v2095, %v2561
  %v2818 = vadd.f32 %v2096, %v2562
  %v2819 = vadd.f32 %v2097, %v2563
  %v2820 = vadd.f32 %v2098, %v2564
  %v2821 = vadd.f32 %v2099, %v2565
  %v2822 = vadd.f32 %v2100, %v2566
  %v2823 = vadd.f32 %v2101, %v2567
  %v2824 = vadd.f32 %v2102, %v2568
  %v2825 = vadd.f32 %v2103, %v2569
  %v2826 = vadd.f32 %v2104, %v2570
  %v2827 = vadd.f32 %v2105, %v2571
  %v2828 = vadd.f32 %v2106, %v2572
  %v2829 = vadd.f32 %v2107, %v2573
  %v2830 = vadd.f32 %v2108, %v2574
  %v2831 = vadd.f32 %v2109, %v2575
  %v2832 = vadd.f32 %v2110, %v2576
  %v2833 = vadd.f32 %v2111, %v2577
  %v2834 = vadd.f32 %v2112, %v2578
  %v2835 = vadd.f32 %v2113, %v2579
  %v2836 = vadd.f32 %v2114, %v2580
  %v2837 = vadd.f32 %v2115, %v2581
  %v2838 = vadd.f32 %v2116, %v2582
  %v2839 = vadd.f32 %v2117, %v2583
  %v2840 = vadd.f32 %v2118, %v2584
  %v2841 = vadd.f32 %v2119, %v2585
  %v2842 = vadd.f32 %v2120, %v2586
  %v2843 = vadd.f32 %v2121, %v2587
  %v2844 = vadd.f32 %v2122, %v2588
  %v2845 = vadd.f32 %v2123, %v2589
  %v2846 = vadd.f32 %v2124, %v2590
  %v2847 = vadd.f32 %v2125, %v2591
  %v2848 = vadd.f32 %v2126, %v2592
  %v2849 = vadd.f32 %v2127, %v2593
  %v2850 = vadd.f32 %v2128, %v2594
  %v2851 = vadd.f32 %v2129, %v2595
  %v2852 = vadd.f32 %v2130, %v2596
  %v2853 = vadd.f32 %v2131, %v2597
  %v2854 = vadd.f32 %v2132, %v2598
  %v2855 = vadd.f32 %v2133, %v2599
  %v2856 = vadd.f32 %v2134, %v2600
  %v2857 = vadd.f32 %v2135, %v2601
  %v2858 = vadd.f32 %v2136, %v2602
  %v2859 = vadd.f32 %v2137, %v2603
  %v2860 = vadd.f32 %v2138, %v2604
  %v2861 = vadd.f32 %v2139, %v2605
  %v2862 = vadd.f32 %v2140, %v2606
  %v2863 = vadd.f32 %v2141, %v2607
  %v2864 = vadd.f32 %v2142, %v2608
  %v2865 = vadd.f32 %v2143, %v2609
  %v2866 = vadd.f32 %v2144, %v2610
  %v2867 = vadd.f32 %v2145, %v2611
  %v2868 = vadd.f32 %v2146, %v2612
  %v2869 = vadd.f32 %v2147, %v2613
  %v2870 = vadd.f32 %v2148, %v2614
  %v2871 = vadd.f32 %v2149, %v2615
  %v2872 = vadd.f32 %v2150, %v2616
  %v2873 = vadd.f32 %v2151, %v2617
  %v2874 = vadd.f32 %v2152, %v2618
  %2875 = vset.pattern.permute.xlu0 3
  %2876 = vperm.xlu0 %2875, %v655
  %v2877 = vpop.permute.xlu0 %2876
  %2879 = vset.pattern.permute.xlu0 3
  %2880 = vperm.xlu0 %2879, %v656
  %v2881 = vpop.permute.xlu0 %2880
  %2883 = vset.pattern.permute.xlu0 3
  %2884 = vperm.xlu0 %2883, %v657
  %v2885 = vpop.permute.xlu0 %2884
  %2887 = vset.pattern.permute.xlu0 3
  %2888 = vperm.xlu0 %2887, %v658
  %v2889 = vpop.permute.xlu0 %2888
  %2891 = vset.pattern.permute.xlu0 3
  %2892 = vperm.xlu0 %2891, %v659
  %v2893 = vpop.permute.xlu0 %2892
  %2895 = vset.pattern.permute.xlu0 3
  %2896 = vperm.xlu0 %2895, %v660
  %v2897 = vpop.permute.xlu0 %2896
  %2899 = vset.pattern.permute.xlu0 3
  %2900 = vperm.xlu0 %2899, %v661
  %v2901 = vpop.permute.xlu0 %2900
  %2903 = vset.pattern.permute.xlu0 3
  %2904 = vperm.xlu0 %2903, %v662
  %v2905 = vpop.permute.xlu0 %2904
  %2907 = vset.pattern.permute.xlu0 3
  %2908 = vperm.xlu0 %2907, %v663
  %v2909 = vpop.permute.xlu0 %2908
  %2911 = vset.pattern.permute.xlu0 3
  %2912 = vperm.xlu0 %2911, %v664
  %v2913 = vpop.permute.xlu0 %2912
  %2915 = vset.pattern.permute.xlu0 3
  %2916 = vperm.xlu0 %2915, %v665
  %v2917 = vpop.permute.xlu0 %2916
  %2919 = vset.pattern.permute.xlu0 3
  %2920 = vperm.xlu0 %2919, %v666
  %v2921 = vpop.permute.xlu0 %2920
  %2923 = vset.pattern.permute.xlu0 3
  %2924 = vperm.xlu0 %2923, %v667
  %v2925 = vpop.permute.xlu0 %2924
  %2927 = vset.pattern.permute.xlu0 3
  %2928 = vperm.xlu0 %2927, %v668
  %v2929 = vpop.permute.xlu0 %2928
  %2931 = vset.pattern.permute.xlu0 3
  %2932 = vperm.xlu0 %2931, %v669
  %v2933 = vpop.permute.xlu0 %2932
  %2935 = vset.pattern.permute.xlu0 3
  %2936 = vperm.xlu0 %2935, %v670
  %v2937 = vpop.permute.xlu0 %2936
  %2939 = vset.pattern.permute.xlu0 3
  %2940 = vperm.xlu0 %2939, %v671
  %v2941 = vpop.permute.xlu0 %2940
  %2943 = vset.pattern.permute.xlu0 3
  %2944 = vperm.xlu0 %2943, %v672
  %v2945 = vpop.permute.xlu0 %2944
  %2947 = vset.pattern.permute.xlu0 3
  %2948 = vperm.xlu0 %2947, %v673
  %v2949 = vpop.permute.xlu0 %2948
  %2951 = vset.pattern.permute.xlu0 3
  %2952 = vperm.xlu0 %2951, %v674
  %v2953 = vpop.permute.xlu0 %2952
  %2955 = vset.pattern.permute.xlu0 3
  %2956 = vperm.xlu0 %2955, %v675
  %v2957 = vpop.permute.xlu0 %2956
  %2959 = vset.pattern.permute.xlu0 3
  %2960 = vperm.xlu0 %2959, %v676
  %v2961 = vpop.permute.xlu0 %2960
  %2963 = vset.pattern.permute.xlu0 3
  %2964 = vperm.xlu0 %2963, %v677
  %v2965 = vpop.permute.xlu0 %2964
  %2967 = vset.pattern.permute.xlu0 3
  %2968 = vperm.xlu0 %2967, %v678
  %v2969 = vpop.permute.xlu0 %2968
  %2971 = vset.pattern.permute.xlu0 3
  %2972 = vperm.xlu0 %2971, %v679
  %v2973 = vpop.permute.xlu0 %2972
  %2975 = vset.pattern.permute.xlu0 3
  %2976 = vperm.xlu0 %2975, %v680
  %v2977 = vpop.permute.xlu0 %2976
  %2979 = vset.pattern.permute.xlu0 3
  %2980 = vperm.xlu0 %2979, %v681
  %v2981 = vpop.permute.xlu0 %2980
  %2983 = vset.pattern.permute.xlu0 3
  %2984 = vperm.xlu0 %2983, %v682
  %v2985 = vpop.permute.xlu0 %2984
  %2987 = vset.pattern.permute.xlu0 3
  %2988 = vperm.xlu0 %2987, %v683
  %v2989 = vpop.permute.xlu0 %2988
  %2991 = vset.pattern.permute.xlu0 3
  %2992 = vperm.xlu0 %2991, %v684
  %v2993 = vpop.permute.xlu0 %2992
  %2995 = vset.pattern.permute.xlu0 3
  %2996 = vperm.xlu0 %2995, %v685
  %v2997 = vpop.permute.xlu0 %2996
  %2999 = vset.pattern.permute.xlu0 3
  %3000 = vperm.xlu0 %2999, %v686
  %v3001 = vpop.permute.xlu0 %3000
  %v3003 = vlaneseq
  %v3004 = vshrl.u32 %v3003, 7
  %v3005 = vsub.s32 3, %v3004
  %v3006 = vrot.slane %v2155, %v3005
  %v3007 = vlaneseq
  %v3008 = vshrl.u32 %v3007, 7
  %v3009 = vsub.s32 7, %v3008
  %v3010 = vrot.slane %v2155, %v3009
  %v3011 = vlaneseq
  %v3012 = vshrl.u32 %v3011, 7
  %v3013 = vsub.s32 3, %v3012
  %v3014 = vrot.slane %v2156, %v3013
  %v3015 = vlaneseq
  %v3016 = vshrl.u32 %v3015, 7
  %v3017 = vsub.s32 7, %v3016
  %v3018 = vrot.slane %v2156, %v3017
  %v3019 = vlaneseq
  %v3020 = vshrl.u32 %v3019, 7
  %v3021 = vsub.s32 3, %v3020
  %v3022 = vrot.slane %v2157, %v3021
  %v3023 = vlaneseq
  %v3024 = vshrl.u32 %v3023, 7
  %v3025 = vsub.s32 7, %v3024
  %v3026 = vrot.slane %v2157, %v3025
  %v3027 = vlaneseq
  %v3028 = vshrl.u32 %v3027, 7
  %v3029 = vsub.s32 3, %v3028
  %v3030 = vrot.slane %v2158, %v3029
  %v3031 = vlaneseq
  %v3032 = vshrl.u32 %v3031, 7
  %v3033 = vsub.s32 7, %v3032
  %v3034 = vrot.slane %v2158, %v3033
  %v3043 = vlaneseq
  %v3044 = vshrl.u32 %v3043, 7
  %v3045 = vsub.s32 3, %v3044
  %v3046 = vrot.slane %v3006, %v3045
  %v3047 = vlaneseq
  %v3048 = vshrl.u32 %v3047, 7
  %v3049 = vsub.s32 3, %v3048
  %v3050 = vrot.slane %v3010, %v3049
  %v3051 = vlaneseq
  %v3052 = vshrl.u32 %v3051, 7
  %v3053 = vsub.s32 3, %v3052
  %v3054 = vrot.slane %v3014, %v3053
  %v3055 = vlaneseq
  %v3056 = vshrl.u32 %v3055, 7
  %v3057 = vsub.s32 3, %v3056
  %v3058 = vrot.slane %v3018, %v3057
  %v3059 = vlaneseq
  %v3060 = vshrl.u32 %v3059, 7
  %v3061 = vsub.s32 3, %v3060
  %v3062 = vrot.slane %v3022, %v3061
  %v3063 = vlaneseq
  %v3064 = vshrl.u32 %v3063, 7
  %v3065 = vsub.s32 3, %v3064
  %v3066 = vrot.slane %v3026, %v3065
  %v3067 = vlaneseq
  %v3068 = vshrl.u32 %v3067, 7
  %v3069 = vsub.s32 3, %v3068
  %v3070 = vrot.slane %v3030, %v3069
  %v3071 = vlaneseq
  %v3072 = vshrl.u32 %v3071, 7
  %v3073 = vsub.s32 3, %v3072
  %v3074 = vrot.slane %v3034, %v3073
  %v3075 = vmul.f32 %v2877, %v3046
  %v3076 = vmul.f32 %v2877, %v3050
  %v3077 = vmul.f32 %v2877, %v3054
  %v3078 = vmul.f32 %v2877, %v3058
  %v3079 = vmul.f32 %v2877, %v3062
  %v3080 = vmul.f32 %v2877, %v3066
  %v3081 = vmul.f32 %v2877, %v3070
  %v3082 = vmul.f32 %v2877, %v3074
  %v3083 = vmul.f32 %v2881, %v3046
  %v3084 = vmul.f32 %v2881, %v3050
  %v3085 = vmul.f32 %v2881, %v3054
  %v3086 = vmul.f32 %v2881, %v3058
  %v3087 = vmul.f32 %v2881, %v3062
  %v3088 = vmul.f32 %v2881, %v3066
  %v3089 = vmul.f32 %v2881, %v3070
  %v3090 = vmul.f32 %v2881, %v3074
  %v3091 = vmul.f32 %v2885, %v3046
  %v3092 = vmul.f32 %v2885, %v3050
  %v3093 = vmul.f32 %v2885, %v3054
  %v3094 = vmul.f32 %v2885, %v3058
  %v3095 = vmul.f32 %v2885, %v3062
  %v3096 = vmul.f32 %v2885, %v3066
  %v3097 = vmul.f32 %v2885, %v3070
  %v3098 = vmul.f32 %v2885, %v3074
  %v3099 = vmul.f32 %v2889, %v3046
  %v3100 = vmul.f32 %v2889, %v3050
  %v3101 = vmul.f32 %v2889, %v3054
  %v3102 = vmul.f32 %v2889, %v3058
  %v3103 = vmul.f32 %v2889, %v3062
  %v3104 = vmul.f32 %v2889, %v3066
  %v3105 = vmul.f32 %v2889, %v3070
  %v3106 = vmul.f32 %v2889, %v3074
  %v3107 = vmul.f32 %v2893, %v3046
  %v3108 = vmul.f32 %v2893, %v3050
  %v3109 = vmul.f32 %v2893, %v3054
  %v3110 = vmul.f32 %v2893, %v3058
  %v3111 = vmul.f32 %v2893, %v3062
  %v3112 = vmul.f32 %v2893, %v3066
  %v3113 = vmul.f32 %v2893, %v3070
  %v3114 = vmul.f32 %v2893, %v3074
  %v3115 = vmul.f32 %v2897, %v3046
  %v3116 = vmul.f32 %v2897, %v3050
  %v3117 = vmul.f32 %v2897, %v3054
  %v3118 = vmul.f32 %v2897, %v3058
  %v3119 = vmul.f32 %v2897, %v3062
  %v3120 = vmul.f32 %v2897, %v3066
  %v3121 = vmul.f32 %v2897, %v3070
  %v3122 = vmul.f32 %v2897, %v3074
  %v3123 = vmul.f32 %v2901, %v3046
  %v3124 = vmul.f32 %v2901, %v3050
  %v3125 = vmul.f32 %v2901, %v3054
  %v3126 = vmul.f32 %v2901, %v3058
  %v3127 = vmul.f32 %v2901, %v3062
  %v3128 = vmul.f32 %v2901, %v3066
  %v3129 = vmul.f32 %v2901, %v3070
  %v3130 = vmul.f32 %v2901, %v3074
  %v3131 = vmul.f32 %v2905, %v3046
  %v3132 = vmul.f32 %v2905, %v3050
  %v3133 = vmul.f32 %v2905, %v3054
  %v3134 = vmul.f32 %v2905, %v3058
  %v3135 = vmul.f32 %v2905, %v3062
  %v3136 = vmul.f32 %v2905, %v3066
  %v3137 = vmul.f32 %v2905, %v3070
  %v3138 = vmul.f32 %v2905, %v3074
  %v3139 = vmul.f32 %v2909, %v3046
  %v3140 = vmul.f32 %v2909, %v3050
  %v3141 = vmul.f32 %v2909, %v3054
  %v3142 = vmul.f32 %v2909, %v3058
  %v3143 = vmul.f32 %v2909, %v3062
  %v3144 = vmul.f32 %v2909, %v3066
  %v3145 = vmul.f32 %v2909, %v3070
  %v3146 = vmul.f32 %v2909, %v3074
  %v3147 = vmul.f32 %v2913, %v3046
  %v3148 = vmul.f32 %v2913, %v3050
  %v3149 = vmul.f32 %v2913, %v3054
  %v3150 = vmul.f32 %v2913, %v3058
  %v3151 = vmul.f32 %v2913, %v3062
  %v3152 = vmul.f32 %v2913, %v3066
  %v3153 = vmul.f32 %v2913, %v3070
  %v3154 = vmul.f32 %v2913, %v3074
  %v3155 = vmul.f32 %v2917, %v3046
  %v3156 = vmul.f32 %v2917, %v3050
  %v3157 = vmul.f32 %v2917, %v3054
  %v3158 = vmul.f32 %v2917, %v3058
  %v3159 = vmul.f32 %v2917, %v3062
  %v3160 = vmul.f32 %v2917, %v3066
  %v3161 = vmul.f32 %v2917, %v3070
  %v3162 = vmul.f32 %v2917, %v3074
  %v3163 = vmul.f32 %v2921, %v3046
  %v3164 = vmul.f32 %v2921, %v3050
  %v3165 = vmul.f32 %v2921, %v3054
  %v3166 = vmul.f32 %v2921, %v3058
  %v3167 = vmul.f32 %v2921, %v3062
  %v3168 = vmul.f32 %v2921, %v3066
  %v3169 = vmul.f32 %v2921, %v3070
  %v3170 = vmul.f32 %v2921, %v3074
  %v3171 = vmul.f32 %v2925, %v3046
  %v3172 = vmul.f32 %v2925, %v3050
  %v3173 = vmul.f32 %v2925, %v3054
  %v3174 = vmul.f32 %v2925, %v3058
  %v3175 = vmul.f32 %v2925, %v3062
  %v3176 = vmul.f32 %v2925, %v3066
  %v3177 = vmul.f32 %v2925, %v3070
  %v3178 = vmul.f32 %v2925, %v3074
  %v3179 = vmul.f32 %v2929, %v3046
  %v3180 = vmul.f32 %v2929, %v3050
  %v3181 = vmul.f32 %v2929, %v3054
  %v3182 = vmul.f32 %v2929, %v3058
  %v3183 = vmul.f32 %v2929, %v3062
  %v3184 = vmul.f32 %v2929, %v3066
  %v3185 = vmul.f32 %v2929, %v3070
  %v3186 = vmul.f32 %v2929, %v3074
  %v3187 = vmul.f32 %v2933, %v3046
  %v3188 = vmul.f32 %v2933, %v3050
  %v3189 = vmul.f32 %v2933, %v3054
  %v3190 = vmul.f32 %v2933, %v3058
  %v3191 = vmul.f32 %v2933, %v3062
  %v3192 = vmul.f32 %v2933, %v3066
  %v3193 = vmul.f32 %v2933, %v3070
  %v3194 = vmul.f32 %v2933, %v3074
  %v3195 = vmul.f32 %v2937, %v3046
  %v3196 = vmul.f32 %v2937, %v3050
  %v3197 = vmul.f32 %v2937, %v3054
  %v3198 = vmul.f32 %v2937, %v3058
  %v3199 = vmul.f32 %v2937, %v3062
  %v3200 = vmul.f32 %v2937, %v3066
  %v3201 = vmul.f32 %v2937, %v3070
  %v3202 = vmul.f32 %v2937, %v3074
  %v3203 = vmul.f32 %v2941, %v3046
  %v3204 = vmul.f32 %v2941, %v3050
  %v3205 = vmul.f32 %v2941, %v3054
  %v3206 = vmul.f32 %v2941, %v3058
  %v3207 = vmul.f32 %v2941, %v3062
  %v3208 = vmul.f32 %v2941, %v3066
  %v3209 = vmul.f32 %v2941, %v3070
  %v3210 = vmul.f32 %v2941, %v3074
  %v3211 = vmul.f32 %v2945, %v3046
  %v3212 = vmul.f32 %v2945, %v3050
  %v3213 = vmul.f32 %v2945, %v3054
  %v3214 = vmul.f32 %v2945, %v3058
  %v3215 = vmul.f32 %v2945, %v3062
  %v3216 = vmul.f32 %v2945, %v3066
  %v3217 = vmul.f32 %v2945, %v3070
  %v3218 = vmul.f32 %v2945, %v3074
  %v3219 = vmul.f32 %v2949, %v3046
  %v3220 = vmul.f32 %v2949, %v3050
  %v3221 = vmul.f32 %v2949, %v3054
  %v3222 = vmul.f32 %v2949, %v3058
  %v3223 = vmul.f32 %v2949, %v3062
  %v3224 = vmul.f32 %v2949, %v3066
  %v3225 = vmul.f32 %v2949, %v3070
  %v3226 = vmul.f32 %v2949, %v3074
  %v3227 = vmul.f32 %v2953, %v3046
  %v3228 = vmul.f32 %v2953, %v3050
  %v3229 = vmul.f32 %v2953, %v3054
  %v3230 = vmul.f32 %v2953, %v3058
  %v3231 = vmul.f32 %v2953, %v3062
  %v3232 = vmul.f32 %v2953, %v3066
  %v3233 = vmul.f32 %v2953, %v3070
  %v3234 = vmul.f32 %v2953, %v3074
  %v3235 = vmul.f32 %v2957, %v3046
  %v3236 = vmul.f32 %v2957, %v3050
  %v3237 = vmul.f32 %v2957, %v3054
  %v3238 = vmul.f32 %v2957, %v3058
  %v3239 = vmul.f32 %v2957, %v3062
  %v3240 = vmul.f32 %v2957, %v3066
  %v3241 = vmul.f32 %v2957, %v3070
  %v3242 = vmul.f32 %v2957, %v3074
  %v3243 = vmul.f32 %v2961, %v3046
  %v3244 = vmul.f32 %v2961, %v3050
  %v3245 = vmul.f32 %v2961, %v3054
  %v3246 = vmul.f32 %v2961, %v3058
  %v3247 = vmul.f32 %v2961, %v3062
  %v3248 = vmul.f32 %v2961, %v3066
  %v3249 = vmul.f32 %v2961, %v3070
  %v3250 = vmul.f32 %v2961, %v3074
  %v3251 = vmul.f32 %v2965, %v3046
  %v3252 = vmul.f32 %v2965, %v3050
  %v3253 = vmul.f32 %v2965, %v3054
  %v3254 = vmul.f32 %v2965, %v3058
  %v3255 = vmul.f32 %v2965, %v3062
  %v3256 = vmul.f32 %v2965, %v3066
  %v3257 = vmul.f32 %v2965, %v3070
  %v3258 = vmul.f32 %v2965, %v3074
  %v3259 = vmul.f32 %v2969, %v3046
  %v3260 = vmul.f32 %v2969, %v3050
  %v3261 = vmul.f32 %v2969, %v3054
  %v3262 = vmul.f32 %v2969, %v3058
  %v3263 = vmul.f32 %v2969, %v3062
  %v3264 = vmul.f32 %v2969, %v3066
  %v3265 = vmul.f32 %v2969, %v3070
  %v3266 = vmul.f32 %v2969, %v3074
  %v3267 = vmul.f32 %v2973, %v3046
  %v3268 = vmul.f32 %v2973, %v3050
  %v3269 = vmul.f32 %v2973, %v3054
  %v3270 = vmul.f32 %v2973, %v3058
  %v3271 = vmul.f32 %v2973, %v3062
  %v3272 = vmul.f32 %v2973, %v3066
  %v3273 = vmul.f32 %v2973, %v3070
  %v3274 = vmul.f32 %v2973, %v3074
  %v3275 = vmul.f32 %v2977, %v3046
  %v3276 = vmul.f32 %v2977, %v3050
  %v3277 = vmul.f32 %v2977, %v3054
  %v3278 = vmul.f32 %v2977, %v3058
  %v3279 = vmul.f32 %v2977, %v3062
  %v3280 = vmul.f32 %v2977, %v3066
  %v3281 = vmul.f32 %v2977, %v3070
  %v3282 = vmul.f32 %v2977, %v3074
  %v3283 = vmul.f32 %v2981, %v3046
  %v3284 = vmul.f32 %v2981, %v3050
  %v3285 = vmul.f32 %v2981, %v3054
  %v3286 = vmul.f32 %v2981, %v3058
  %v3287 = vmul.f32 %v2981, %v3062
  %v3288 = vmul.f32 %v2981, %v3066
  %v3289 = vmul.f32 %v2981, %v3070
  %v3290 = vmul.f32 %v2981, %v3074
  %v3291 = vmul.f32 %v2985, %v3046
  %v3292 = vmul.f32 %v2985, %v3050
  %v3293 = vmul.f32 %v2985, %v3054
  %v3294 = vmul.f32 %v2985, %v3058
  %v3295 = vmul.f32 %v2985, %v3062
  %v3296 = vmul.f32 %v2985, %v3066
  %v3297 = vmul.f32 %v2985, %v3070
  %v3298 = vmul.f32 %v2985, %v3074
  %v3299 = vmul.f32 %v2989, %v3046
  %v3300 = vmul.f32 %v2989, %v3050
  %v3301 = vmul.f32 %v2989, %v3054
  %v3302 = vmul.f32 %v2989, %v3058
  %v3303 = vmul.f32 %v2989, %v3062
  %v3304 = vmul.f32 %v2989, %v3066
  %v3305 = vmul.f32 %v2989, %v3070
  %v3306 = vmul.f32 %v2989, %v3074
  %v3307 = vmul.f32 %v2993, %v3046
  %v3308 = vmul.f32 %v2993, %v3050
  %v3309 = vmul.f32 %v2993, %v3054
  %v3310 = vmul.f32 %v2993, %v3058
  %v3311 = vmul.f32 %v2993, %v3062
  %v3312 = vmul.f32 %v2993, %v3066
  %v3313 = vmul.f32 %v2993, %v3070
  %v3314 = vmul.f32 %v2993, %v3074
  %v3315 = vmul.f32 %v2997, %v3046
  %v3316 = vmul.f32 %v2997, %v3050
  %v3317 = vmul.f32 %v2997, %v3054
  %v3318 = vmul.f32 %v2997, %v3058
  %v3319 = vmul.f32 %v2997, %v3062
  %v3320 = vmul.f32 %v2997, %v3066
  %v3321 = vmul.f32 %v2997, %v3070
  %v3322 = vmul.f32 %v2997, %v3074
  %v3323 = vmul.f32 %v3001, %v3046
  %v3324 = vmul.f32 %v3001, %v3050
  %v3325 = vmul.f32 %v3001, %v3054
  %v3326 = vmul.f32 %v3001, %v3058
  %v3327 = vmul.f32 %v3001, %v3062
  %v3328 = vmul.f32 %v3001, %v3066
  %v3329 = vmul.f32 %v3001, %v3070
  %v3330 = vmul.f32 %v3001, %v3074
  %v3331 = vadd.f32 %v2619, %v3075
  %v3332 = vadd.f32 %v2620, %v3076
  %v3333 = vadd.f32 %v2621, %v3077
  %v3334 = vadd.f32 %v2622, %v3078
  %v3335 = vadd.f32 %v2623, %v3079
  %v3336 = vadd.f32 %v2624, %v3080
  %v3337 = vadd.f32 %v2625, %v3081
  %v3338 = vadd.f32 %v2626, %v3082
  %v3339 = vadd.f32 %v2627, %v3083
  %v3340 = vadd.f32 %v2628, %v3084
  %v3341 = vadd.f32 %v2629, %v3085
  %v3342 = vadd.f32 %v2630, %v3086
  %v3343 = vadd.f32 %v2631, %v3087
  %v3344 = vadd.f32 %v2632, %v3088
  %v3345 = vadd.f32 %v2633, %v3089
  %v3346 = vadd.f32 %v2634, %v3090
  %v3347 = vadd.f32 %v2635, %v3091
  %v3348 = vadd.f32 %v2636, %v3092
  %v3349 = vadd.f32 %v2637, %v3093
  %v3350 = vadd.f32 %v2638, %v3094
  %v3351 = vadd.f32 %v2639, %v3095
  %v3352 = vadd.f32 %v2640, %v3096
  %v3353 = vadd.f32 %v2641, %v3097
  %v3354 = vadd.f32 %v2642, %v3098
  %v3355 = vadd.f32 %v2643, %v3099
  %v3356 = vadd.f32 %v2644, %v3100
  %v3357 = vadd.f32 %v2645, %v3101
  %v3358 = vadd.f32 %v2646, %v3102
  %v3359 = vadd.f32 %v2647, %v3103
  %v3360 = vadd.f32 %v2648, %v3104
  %v3361 = vadd.f32 %v2649, %v3105
  %v3362 = vadd.f32 %v2650, %v3106
  %v3363 = vadd.f32 %v2651, %v3107
  %v3364 = vadd.f32 %v2652, %v3108
  %v3365 = vadd.f32 %v2653, %v3109
  %v3366 = vadd.f32 %v2654, %v3110
  %v3367 = vadd.f32 %v2655, %v3111
  %v3368 = vadd.f32 %v2656, %v3112
  %v3369 = vadd.f32 %v2657, %v3113
  %v3370 = vadd.f32 %v2658, %v3114
  %v3371 = vadd.f32 %v2659, %v3115
  %v3372 = vadd.f32 %v2660, %v3116
  %v3373 = vadd.f32 %v2661, %v3117
  %v3374 = vadd.f32 %v2662, %v3118
  %v3375 = vadd.f32 %v2663, %v3119
  %v3376 = vadd.f32 %v2664, %v3120
  %v3377 = vadd.f32 %v2665, %v3121
  %v3378 = vadd.f32 %v2666, %v3122
  %v3379 = vadd.f32 %v2667, %v3123
  %v3380 = vadd.f32 %v2668, %v3124
  %v3381 = vadd.f32 %v2669, %v3125
  %v3382 = vadd.f32 %v2670, %v3126
  %v3383 = vadd.f32 %v2671, %v3127
  %v3384 = vadd.f32 %v2672, %v3128
  %v3385 = vadd.f32 %v2673, %v3129
  %v3386 = vadd.f32 %v2674, %v3130
  %v3387 = vadd.f32 %v2675, %v3131
  %v3388 = vadd.f32 %v2676, %v3132
  %v3389 = vadd.f32 %v2677, %v3133
  %v3390 = vadd.f32 %v2678, %v3134
  %v3391 = vadd.f32 %v2679, %v3135
  %v3392 = vadd.f32 %v2680, %v3136
  %v3393 = vadd.f32 %v2681, %v3137
  %v3394 = vadd.f32 %v2682, %v3138
  %v3395 = vadd.f32 %v2683, %v3139
  %v3396 = vadd.f32 %v2684, %v3140
  %v3397 = vadd.f32 %v2685, %v3141
  %v3398 = vadd.f32 %v2686, %v3142
  %v3399 = vadd.f32 %v2687, %v3143
  %v3400 = vadd.f32 %v2688, %v3144
  %v3401 = vadd.f32 %v2689, %v3145
  %v3402 = vadd.f32 %v2690, %v3146
  %v3403 = vadd.f32 %v2691, %v3147
  %v3404 = vadd.f32 %v2692, %v3148
  %v3405 = vadd.f32 %v2693, %v3149
  %v3406 = vadd.f32 %v2694, %v3150
  %v3407 = vadd.f32 %v2695, %v3151
  %v3408 = vadd.f32 %v2696, %v3152
  %v3409 = vadd.f32 %v2697, %v3153
  %v3410 = vadd.f32 %v2698, %v3154
  %v3411 = vadd.f32 %v2699, %v3155
  %v3412 = vadd.f32 %v2700, %v3156
  %v3413 = vadd.f32 %v2701, %v3157
  %v3414 = vadd.f32 %v2702, %v3158
  %v3415 = vadd.f32 %v2703, %v3159
  %v3416 = vadd.f32 %v2704, %v3160
  %v3417 = vadd.f32 %v2705, %v3161
  %v3418 = vadd.f32 %v2706, %v3162
  %v3419 = vadd.f32 %v2707, %v3163
  %v3420 = vadd.f32 %v2708, %v3164
  %v3421 = vadd.f32 %v2709, %v3165
  %v3422 = vadd.f32 %v2710, %v3166
  %v3423 = vadd.f32 %v2711, %v3167
  %v3424 = vadd.f32 %v2712, %v3168
  %v3425 = vadd.f32 %v2713, %v3169
  %v3426 = vadd.f32 %v2714, %v3170
  %v3427 = vadd.f32 %v2715, %v3171
  %v3428 = vadd.f32 %v2716, %v3172
  %v3429 = vadd.f32 %v2717, %v3173
  %v3430 = vadd.f32 %v2718, %v3174
  %v3431 = vadd.f32 %v2719, %v3175
  %v3432 = vadd.f32 %v2720, %v3176
  %v3433 = vadd.f32 %v2721, %v3177
  %v3434 = vadd.f32 %v2722, %v3178
  %v3435 = vadd.f32 %v2723, %v3179
  %v3436 = vadd.f32 %v2724, %v3180
  %v3437 = vadd.f32 %v2725, %v3181
  %v3438 = vadd.f32 %v2726, %v3182
  %v3439 = vadd.f32 %v2727, %v3183
  %v3440 = vadd.f32 %v2728, %v3184
  %v3441 = vadd.f32 %v2729, %v3185
  %v3442 = vadd.f32 %v2730, %v3186
  %v3443 = vadd.f32 %v2731, %v3187
  %v3444 = vadd.f32 %v2732, %v3188
  %v3445 = vadd.f32 %v2733, %v3189
  %v3446 = vadd.f32 %v2734, %v3190
  %v3447 = vadd.f32 %v2735, %v3191
  %v3448 = vadd.f32 %v2736, %v3192
  %v3449 = vadd.f32 %v2737, %v3193
  %v3450 = vadd.f32 %v2738, %v3194
  %v3451 = vadd.f32 %v2739, %v3195
  %v3452 = vadd.f32 %v2740, %v3196
  %v3453 = vadd.f32 %v2741, %v3197
  %v3454 = vadd.f32 %v2742, %v3198
  %v3455 = vadd.f32 %v2743, %v3199
  %v3456 = vadd.f32 %v2744, %v3200
  %v3457 = vadd.f32 %v2745, %v3201
  %v3458 = vadd.f32 %v2746, %v3202
  %v3459 = vadd.f32 %v2747, %v3203
  %v3460 = vadd.f32 %v2748, %v3204
  %v3461 = vadd.f32 %v2749, %v3205
  %v3462 = vadd.f32 %v2750, %v3206
  %v3463 = vadd.f32 %v2751, %v3207
  %v3464 = vadd.f32 %v2752, %v3208
  %v3465 = vadd.f32 %v2753, %v3209
  %v3466 = vadd.f32 %v2754, %v3210
  %v3467 = vadd.f32 %v2755, %v3211
  %v3468 = vadd.f32 %v2756, %v3212
  %v3469 = vadd.f32 %v2757, %v3213
  %v3470 = vadd.f32 %v2758, %v3214
  %v3471 = vadd.f32 %v2759, %v3215
  %v3472 = vadd.f32 %v2760, %v3216
  %v3473 = vadd.f32 %v2761, %v3217
  %v3474 = vadd.f32 %v2762, %v3218
  %v3475 = vadd.f32 %v2763, %v3219
  %v3476 = vadd.f32 %v2764, %v3220
  %v3477 = vadd.f32 %v2765, %v3221
  %v3478 = vadd.f32 %v2766, %v3222
  %v3479 = vadd.f32 %v2767, %v3223
  %v3480 = vadd.f32 %v2768, %v3224
  %v3481 = vadd.f32 %v2769, %v3225
  %v3482 = vadd.f32 %v2770, %v3226
  %v3483 = vadd.f32 %v2771, %v3227
  %v3484 = vadd.f32 %v2772, %v3228
  %v3485 = vadd.f32 %v2773, %v3229
  %v3486 = vadd.f32 %v2774, %v3230
  %v3487 = vadd.f32 %v2775, %v3231
  %v3488 = vadd.f32 %v2776, %v3232
  %v3489 = vadd.f32 %v2777, %v3233
  %v3490 = vadd.f32 %v2778, %v3234
  %v3491 = vadd.f32 %v2779, %v3235
  %v3492 = vadd.f32 %v2780, %v3236
  %v3493 = vadd.f32 %v2781, %v3237
  %v3494 = vadd.f32 %v2782, %v3238
  %v3495 = vadd.f32 %v2783, %v3239
  %v3496 = vadd.f32 %v2784, %v3240
  %v3497 = vadd.f32 %v2785, %v3241
  %v3498 = vadd.f32 %v2786, %v3242
  %v3499 = vadd.f32 %v2787, %v3243
  %v3500 = vadd.f32 %v2788, %v3244
  %v3501 = vadd.f32 %v2789, %v3245
  %v3502 = vadd.f32 %v2790, %v3246
  %v3503 = vadd.f32 %v2791, %v3247
  %v3504 = vadd.f32 %v2792, %v3248
  %v3505 = vadd.f32 %v2793, %v3249
  %v3506 = vadd.f32 %v2794, %v3250
  %v3507 = vadd.f32 %v2795, %v3251
  %v3508 = vadd.f32 %v2796, %v3252
  %v3509 = vadd.f32 %v2797, %v3253
  %v3510 = vadd.f32 %v2798, %v3254
  %v3511 = vadd.f32 %v2799, %v3255
  %v3512 = vadd.f32 %v2800, %v3256
  %v3513 = vadd.f32 %v2801, %v3257
  %v3514 = vadd.f32 %v2802, %v3258
  %v3515 = vadd.f32 %v2803, %v3259
  %v3516 = vadd.f32 %v2804, %v3260
  %v3517 = vadd.f32 %v2805, %v3261
  %v3518 = vadd.f32 %v2806, %v3262
  %v3519 = vadd.f32 %v2807, %v3263
  %v3520 = vadd.f32 %v2808, %v3264
  %v3521 = vadd.f32 %v2809, %v3265
  %v3522 = vadd.f32 %v2810, %v3266
  %v3523 = vadd.f32 %v2811, %v3267
  %v3524 = vadd.f32 %v2812, %v3268
  %v3525 = vadd.f32 %v2813, %v3269
  %v3526 = vadd.f32 %v2814, %v3270
  %v3527 = vadd.f32 %v2815, %v3271
  %v3528 = vadd.f32 %v2816, %v3272
  %v3529 = vadd.f32 %v2817, %v3273
  %v3530 = vadd.f32 %v2818, %v3274
  %v3531 = vadd.f32 %v2819, %v3275
  %v3532 = vadd.f32 %v2820, %v3276
  %v3533 = vadd.f32 %v2821, %v3277
  %v3534 = vadd.f32 %v2822, %v3278
  %v3535 = vadd.f32 %v2823, %v3279
  %v3536 = vadd.f32 %v2824, %v3280
  %v3537 = vadd.f32 %v2825, %v3281
  %v3538 = vadd.f32 %v2826, %v3282
  %v3539 = vadd.f32 %v2827, %v3283
  %v3540 = vadd.f32 %v2828, %v3284
  %v3541 = vadd.f32 %v2829, %v3285
  %v3542 = vadd.f32 %v2830, %v3286
  %v3543 = vadd.f32 %v2831, %v3287
  %v3544 = vadd.f32 %v2832, %v3288
  %v3545 = vadd.f32 %v2833, %v3289
  %v3546 = vadd.f32 %v2834, %v3290
  %v3547 = vadd.f32 %v2835, %v3291
  %v3548 = vadd.f32 %v2836, %v3292
  %v3549 = vadd.f32 %v2837, %v3293
  %v3550 = vadd.f32 %v2838, %v3294
  %v3551 = vadd.f32 %v2839, %v3295
  %v3552 = vadd.f32 %v2840, %v3296
  %v3553 = vadd.f32 %v2841, %v3297
  %v3554 = vadd.f32 %v2842, %v3298
  %v3555 = vadd.f32 %v2843, %v3299
  %v3556 = vadd.f32 %v2844, %v3300
  %v3557 = vadd.f32 %v2845, %v3301
  %v3558 = vadd.f32 %v2846, %v3302
  %v3559 = vadd.f32 %v2847, %v3303
  %v3560 = vadd.f32 %v2848, %v3304
  %v3561 = vadd.f32 %v2849, %v3305
  %v3562 = vadd.f32 %v2850, %v3306
  %v3563 = vadd.f32 %v2851, %v3307
  %v3564 = vadd.f32 %v2852, %v3308
  %v3565 = vadd.f32 %v2853, %v3309
  %v3566 = vadd.f32 %v2854, %v3310
  %v3567 = vadd.f32 %v2855, %v3311
  %v3568 = vadd.f32 %v2856, %v3312
  %v3569 = vadd.f32 %v2857, %v3313
  %v3570 = vadd.f32 %v2858, %v3314
  %v3571 = vadd.f32 %v2859, %v3315
  %v3572 = vadd.f32 %v2860, %v3316
  %v3573 = vadd.f32 %v2861, %v3317
  %v3574 = vadd.f32 %v2862, %v3318
  %v3575 = vadd.f32 %v2863, %v3319
  %v3576 = vadd.f32 %v2864, %v3320
  %v3577 = vadd.f32 %v2865, %v3321
  %v3578 = vadd.f32 %v2866, %v3322
  %v3579 = vadd.f32 %v2867, %v3323
  %v3580 = vadd.f32 %v2868, %v3324
  %v3581 = vadd.f32 %v2869, %v3325
  %v3582 = vadd.f32 %v2870, %v3326
  %v3583 = vadd.f32 %v2871, %v3327
  %v3584 = vadd.f32 %v2872, %v3328
  %v3585 = vadd.f32 %v2873, %v3329
  %v3586 = vadd.f32 %v2874, %v3330
  %v3587 = vtanh.pop %v3331
  %v3588 = vtanh.pop %v3332
  %v3589 = vtanh.pop %v3333
  %v3590 = vtanh.pop %v3334
  %v3591 = vtanh.pop %v3335
  %v3592 = vtanh.pop %v3336
  %v3593 = vtanh.pop %v3337
  %v3594 = vtanh.pop %v3338
  %v3595 = vtanh.pop %v3339
  %v3596 = vtanh.pop %v3340
  %v3597 = vtanh.pop %v3341
  %v3598 = vtanh.pop %v3342
  %v3599 = vtanh.pop %v3343
  %v3600 = vtanh.pop %v3344
  %v3601 = vtanh.pop %v3345
  %v3602 = vtanh.pop %v3346
  %v3603 = vtanh.pop %v3347
  %v3604 = vtanh.pop %v3348
  %v3605 = vtanh.pop %v3349
  %v3606 = vtanh.pop %v3350
  %v3607 = vtanh.pop %v3351
  %v3608 = vtanh.pop %v3352
  %v3609 = vtanh.pop %v3353
  %v3610 = vtanh.pop %v3354
  %v3611 = vtanh.pop %v3355
  %v3612 = vtanh.pop %v3356
  %v3613 = vtanh.pop %v3357
  %v3614 = vtanh.pop %v3358
  %v3615 = vtanh.pop %v3359
  %v3616 = vtanh.pop %v3360
  %v3617 = vtanh.pop %v3361
  %v3618 = vtanh.pop %v3362
  %v3619 = vtanh.pop %v3363
  %v3620 = vtanh.pop %v3364
  %v3621 = vtanh.pop %v3365
  %v3622 = vtanh.pop %v3366
  %v3623 = vtanh.pop %v3367
  %v3624 = vtanh.pop %v3368
  %v3625 = vtanh.pop %v3369
  %v3626 = vtanh.pop %v3370
  %v3627 = vtanh.pop %v3371
  %v3628 = vtanh.pop %v3372
  %v3629 = vtanh.pop %v3373
  %v3630 = vtanh.pop %v3374
  %v3631 = vtanh.pop %v3375
  %v3632 = vtanh.pop %v3376
  %v3633 = vtanh.pop %v3377
  %v3634 = vtanh.pop %v3378
  %v3635 = vtanh.pop %v3379
  %v3636 = vtanh.pop %v3380
  %v3637 = vtanh.pop %v3381
  %v3638 = vtanh.pop %v3382
  %v3639 = vtanh.pop %v3383
  %v3640 = vtanh.pop %v3384
  %v3641 = vtanh.pop %v3385
  %v3642 = vtanh.pop %v3386
  %v3643 = vtanh.pop %v3387
  %v3644 = vtanh.pop %v3388
  %v3645 = vtanh.pop %v3389
  %v3646 = vtanh.pop %v3390
  %v3647 = vtanh.pop %v3391
  %v3648 = vtanh.pop %v3392
  %v3649 = vtanh.pop %v3393
  %v3650 = vtanh.pop %v3394
  %v3651 = vtanh.pop %v3395
  %v3652 = vtanh.pop %v3396
  %v3653 = vtanh.pop %v3397
  %v3654 = vtanh.pop %v3398
  %v3655 = vtanh.pop %v3399
  %v3656 = vtanh.pop %v3400
  %v3657 = vtanh.pop %v3401
  %v3658 = vtanh.pop %v3402
  %v3659 = vtanh.pop %v3403
  %v3660 = vtanh.pop %v3404
  %v3661 = vtanh.pop %v3405
  %v3662 = vtanh.pop %v3406
  %v3663 = vtanh.pop %v3407
  %v3664 = vtanh.pop %v3408
  %v3665 = vtanh.pop %v3409
  %v3666 = vtanh.pop %v3410
  %v3667 = vtanh.pop %v3411
  %v3668 = vtanh.pop %v3412
  %v3669 = vtanh.pop %v3413
  %v3670 = vtanh.pop %v3414
  %v3671 = vtanh.pop %v3415
  %v3672 = vtanh.pop %v3416
  %v3673 = vtanh.pop %v3417
  %v3674 = vtanh.pop %v3418
  %v3675 = vtanh.pop %v3419
  %v3676 = vtanh.pop %v3420
  %v3677 = vtanh.pop %v3421
  %v3678 = vtanh.pop %v3422
  %v3679 = vtanh.pop %v3423
  %v3680 = vtanh.pop %v3424
  %v3681 = vtanh.pop %v3425
  %v3682 = vtanh.pop %v3426
  %v3683 = vtanh.pop %v3427
  %v3684 = vtanh.pop %v3428
  %v3685 = vtanh.pop %v3429
  %v3686 = vtanh.pop %v3430
  %v3687 = vtanh.pop %v3431
  %v3688 = vtanh.pop %v3432
  %v3689 = vtanh.pop %v3433
  %v3690 = vtanh.pop %v3434
  %v3691 = vtanh.pop %v3435
  %v3692 = vtanh.pop %v3436
  %v3693 = vtanh.pop %v3437
  %v3694 = vtanh.pop %v3438
  %v3695 = vtanh.pop %v3439
  %v3696 = vtanh.pop %v3440
  %v3697 = vtanh.pop %v3441
  %v3698 = vtanh.pop %v3442
  %v3699 = vtanh.pop %v3443
  %v3700 = vtanh.pop %v3444
  %v3701 = vtanh.pop %v3445
  %v3702 = vtanh.pop %v3446
  %v3703 = vtanh.pop %v3447
  %v3704 = vtanh.pop %v3448
  %v3705 = vtanh.pop %v3449
  %v3706 = vtanh.pop %v3450
  %v3707 = vtanh.pop %v3451
  %v3708 = vtanh.pop %v3452
  %v3709 = vtanh.pop %v3453
  %v3710 = vtanh.pop %v3454
  %v3711 = vtanh.pop %v3455
  %v3712 = vtanh.pop %v3456
  %v3713 = vtanh.pop %v3457
  %v3714 = vtanh.pop %v3458
  %v3715 = vtanh.pop %v3459
  %v3716 = vtanh.pop %v3460
  %v3717 = vtanh.pop %v3461
  %v3718 = vtanh.pop %v3462
  %v3719 = vtanh.pop %v3463
  %v3720 = vtanh.pop %v3464
  %v3721 = vtanh.pop %v3465
  %v3722 = vtanh.pop %v3466
  %v3723 = vtanh.pop %v3467
  %v3724 = vtanh.pop %v3468
  %v3725 = vtanh.pop %v3469
  %v3726 = vtanh.pop %v3470
  %v3727 = vtanh.pop %v3471
  %v3728 = vtanh.pop %v3472
  %v3729 = vtanh.pop %v3473
  %v3730 = vtanh.pop %v3474
  %v3731 = vtanh.pop %v3475
  %v3732 = vtanh.pop %v3476
  %v3733 = vtanh.pop %v3477
  %v3734 = vtanh.pop %v3478
  %v3735 = vtanh.pop %v3479
  %v3736 = vtanh.pop %v3480
  %v3737 = vtanh.pop %v3481
  %v3738 = vtanh.pop %v3482
  %v3739 = vtanh.pop %v3483
  %v3740 = vtanh.pop %v3484
  %v3741 = vtanh.pop %v3485
  %v3742 = vtanh.pop %v3486
  %v3743 = vtanh.pop %v3487
  %v3744 = vtanh.pop %v3488
  %v3745 = vtanh.pop %v3489
  %v3746 = vtanh.pop %v3490
  %v3747 = vtanh.pop %v3491
  %v3748 = vtanh.pop %v3492
  %v3749 = vtanh.pop %v3493
  %v3750 = vtanh.pop %v3494
  %v3751 = vtanh.pop %v3495
  %v3752 = vtanh.pop %v3496
  %v3753 = vtanh.pop %v3497
  %v3754 = vtanh.pop %v3498
  %v3755 = vtanh.pop %v3499
  %v3756 = vtanh.pop %v3500
  %v3757 = vtanh.pop %v3501
  %v3758 = vtanh.pop %v3502
  %v3759 = vtanh.pop %v3503
  %v3760 = vtanh.pop %v3504
  %v3761 = vtanh.pop %v3505
  %v3762 = vtanh.pop %v3506
  %v3763 = vtanh.pop %v3507
  %v3764 = vtanh.pop %v3508
  %v3765 = vtanh.pop %v3509
  %v3766 = vtanh.pop %v3510
  %v3767 = vtanh.pop %v3511
  %v3768 = vtanh.pop %v3512
  %v3769 = vtanh.pop %v3513
  %v3770 = vtanh.pop %v3514
  %v3771 = vtanh.pop %v3515
  %v3772 = vtanh.pop %v3516
  %v3773 = vtanh.pop %v3517
  %v3774 = vtanh.pop %v3518
  %v3775 = vtanh.pop %v3519
  %v3776 = vtanh.pop %v3520
  %v3777 = vtanh.pop %v3521
  %v3778 = vtanh.pop %v3522
  %v3779 = vtanh.pop %v3523
  %v3780 = vtanh.pop %v3524
  %v3781 = vtanh.pop %v3525
  %v3782 = vtanh.pop %v3526
  %v3783 = vtanh.pop %v3527
  %v3784 = vtanh.pop %v3528
  %v3785 = vtanh.pop %v3529
  %v3786 = vtanh.pop %v3530
  %v3787 = vtanh.pop %v3531
  %v3788 = vtanh.pop %v3532
  %v3789 = vtanh.pop %v3533
  %v3790 = vtanh.pop %v3534
  %v3791 = vtanh.pop %v3535
  %v3792 = vtanh.pop %v3536
  %v3793 = vtanh.pop %v3537
  %v3794 = vtanh.pop %v3538
  %v3795 = vtanh.pop %v3539
  %v3796 = vtanh.pop %v3540
  %v3797 = vtanh.pop %v3541
  %v3798 = vtanh.pop %v3542
  %v3799 = vtanh.pop %v3543
  %v3800 = vtanh.pop %v3544
  %v3801 = vtanh.pop %v3545
  %v3802 = vtanh.pop %v3546
  %v3803 = vtanh.pop %v3547
  %v3804 = vtanh.pop %v3548
  %v3805 = vtanh.pop %v3549
  %v3806 = vtanh.pop %v3550
  %v3807 = vtanh.pop %v3551
  %v3808 = vtanh.pop %v3552
  %v3809 = vtanh.pop %v3553
  %v3810 = vtanh.pop %v3554
  %v3811 = vtanh.pop %v3555
  %v3812 = vtanh.pop %v3556
  %v3813 = vtanh.pop %v3557
  %v3814 = vtanh.pop %v3558
  %v3815 = vtanh.pop %v3559
  %v3816 = vtanh.pop %v3560
  %v3817 = vtanh.pop %v3561
  %v3818 = vtanh.pop %v3562
  %v3819 = vtanh.pop %v3563
  %v3820 = vtanh.pop %v3564
  %v3821 = vtanh.pop %v3565
  %v3822 = vtanh.pop %v3566
  %v3823 = vtanh.pop %v3567
  %v3824 = vtanh.pop %v3568
  %v3825 = vtanh.pop %v3569
  %v3826 = vtanh.pop %v3570
  %v3827 = vtanh.pop %v3571
  %v3828 = vtanh.pop %v3572
  %v3829 = vtanh.pop %v3573
  %v3830 = vtanh.pop %v3574
  %v3831 = vtanh.pop %v3575
  %v3832 = vtanh.pop %v3576
  %v3833 = vtanh.pop %v3577
  %v3834 = vtanh.pop %v3578
  %v3835 = vtanh.pop %v3579
  %v3836 = vtanh.pop %v3580
  %v3837 = vtanh.pop %v3581
  %v3838 = vtanh.pop %v3582
  %v3839 = vtanh.pop %v3583
  %v3840 = vtanh.pop %v3584
  %v3841 = vtanh.pop %v3585
  %v3842 = vtanh.pop %v3586
  %v3843 = vld [vmem:[%s9] sm:$0xff]
  %v3844 = vld [vmem:[%s9 + $0x8] sm:$0xff]
  %v3845 = vld [vmem:[%s9 + $0x10] sm:$0xff]
  %v3846 = vld [vmem:[%s9 + $0x18] sm:$0xff]
  %v3847 = vpack.c.bf16 %v3595, %v3587
  %v3848 = vpack.c.bf16 %v3596, %v3588
  %v3849 = vpack.c.bf16 %v3597, %v3589
  %v3850 = vpack.c.bf16 %v3598, %v3590
  %v3851 = vpack.c.bf16 %v3599, %v3591
  %v3852 = vpack.c.bf16 %v3600, %v3592
  %v3853 = vpack.c.bf16 %v3601, %v3593
  %v3854 = vpack.c.bf16 %v3602, %v3594
  %v3855 = vpack.c.bf16 %v3611, %v3603
  %v3856 = vpack.c.bf16 %v3612, %v3604
  %v3857 = vpack.c.bf16 %v3613, %v3605
  %v3858 = vpack.c.bf16 %v3614, %v3606
  %v3859 = vpack.c.bf16 %v3615, %v3607
  %v3860 = vpack.c.bf16 %v3616, %v3608
  %v3861 = vpack.c.bf16 %v3617, %v3609
  %v3862 = vpack.c.bf16 %v3618, %v3610
  %v3863 = vpack.c.bf16 %v3627, %v3619
  %v3864 = vpack.c.bf16 %v3628, %v3620
  %v3865 = vpack.c.bf16 %v3629, %v3621
  %v3866 = vpack.c.bf16 %v3630, %v3622
  %v3867 = vpack.c.bf16 %v3631, %v3623
  %v3868 = vpack.c.bf16 %v3632, %v3624
  %v3869 = vpack.c.bf16 %v3633, %v3625
  %v3870 = vpack.c.bf16 %v3634, %v3626
  %v3871 = vpack.c.bf16 %v3643, %v3635
  %v3872 = vpack.c.bf16 %v3644, %v3636
  %v3873 = vpack.c.bf16 %v3645, %v3637
  %v3874 = vpack.c.bf16 %v3646, %v3638
  %v3875 = vpack.c.bf16 %v3647, %v3639
  %v3876 = vpack.c.bf16 %v3648, %v3640
  %v3877 = vpack.c.bf16 %v3649, %v3641
  %v3878 = vpack.c.bf16 %v3650, %v3642
  %v3879 = vpack.c.bf16 %v3659, %v3651
  %v3880 = vpack.c.bf16 %v3660, %v3652
  %v3881 = vpack.c.bf16 %v3661, %v3653
  %v3882 = vpack.c.bf16 %v3662, %v3654
  %v3883 = vpack.c.bf16 %v3663, %v3655
  %v3884 = vpack.c.bf16 %v3664, %v3656
  %v3885 = vpack.c.bf16 %v3665, %v3657
  %v3886 = vpack.c.bf16 %v3666, %v3658
  %v3887 = vpack.c.bf16 %v3675, %v3667
  %v3888 = vpack.c.bf16 %v3676, %v3668
  %v3889 = vpack.c.bf16 %v3677, %v3669
  %v3890 = vpack.c.bf16 %v3678, %v3670
  %v3891 = vpack.c.bf16 %v3679, %v3671
  %v3892 = vpack.c.bf16 %v3680, %v3672
  %v3893 = vpack.c.bf16 %v3681, %v3673
  %v3894 = vpack.c.bf16 %v3682, %v3674
  %v3895 = vpack.c.bf16 %v3691, %v3683
  %v3896 = vpack.c.bf16 %v3692, %v3684
  %v3897 = vpack.c.bf16 %v3693, %v3685
  %v3898 = vpack.c.bf16 %v3694, %v3686
  %v3899 = vpack.c.bf16 %v3695, %v3687
  %v3900 = vpack.c.bf16 %v3696, %v3688
  %v3901 = vpack.c.bf16 %v3697, %v3689
  %v3902 = vpack.c.bf16 %v3698, %v3690
  %v3903 = vpack.c.bf16 %v3707, %v3699
  %v3904 = vpack.c.bf16 %v3708, %v3700
  %v3905 = vpack.c.bf16 %v3709, %v3701
  %v3906 = vpack.c.bf16 %v3710, %v3702
  %v3907 = vpack.c.bf16 %v3711, %v3703
  %v3908 = vpack.c.bf16 %v3712, %v3704
  %v3909 = vpack.c.bf16 %v3713, %v3705
  %v3910 = vpack.c.bf16 %v3714, %v3706
  %v3911 = vpack.c.bf16 %v3723, %v3715
  %v3912 = vpack.c.bf16 %v3724, %v3716
  %v3913 = vpack.c.bf16 %v3725, %v3717
  %v3914 = vpack.c.bf16 %v3726, %v3718
  %v3915 = vpack.c.bf16 %v3727, %v3719
  %v3916 = vpack.c.bf16 %v3728, %v3720
  %v3917 = vpack.c.bf16 %v3729, %v3721
  %v3918 = vpack.c.bf16 %v3730, %v3722
  %v3919 = vpack.c.bf16 %v3739, %v3731
  %v3920 = vpack.c.bf16 %v3740, %v3732
  %v3921 = vpack.c.bf16 %v3741, %v3733
  %v3922 = vpack.c.bf16 %v3742, %v3734
  %v3923 = vpack.c.bf16 %v3743, %v3735
  %v3924 = vpack.c.bf16 %v3744, %v3736
  %v3925 = vpack.c.bf16 %v3745, %v3737
  %v3926 = vpack.c.bf16 %v3746, %v3738
  %v3927 = vpack.c.bf16 %v3755, %v3747
  %v3928 = vpack.c.bf16 %v3756, %v3748
  %v3929 = vpack.c.bf16 %v3757, %v3749
  %v3930 = vpack.c.bf16 %v3758, %v3750
  %v3931 = vpack.c.bf16 %v3759, %v3751
  %v3932 = vpack.c.bf16 %v3760, %v3752
  %v3933 = vpack.c.bf16 %v3761, %v3753
  %v3934 = vpack.c.bf16 %v3762, %v3754
  %v3935 = vpack.c.bf16 %v3771, %v3763
  %v3936 = vpack.c.bf16 %v3772, %v3764
  %v3937 = vpack.c.bf16 %v3773, %v3765
  %v3938 = vpack.c.bf16 %v3774, %v3766
  %v3939 = vpack.c.bf16 %v3775, %v3767
  %v3940 = vpack.c.bf16 %v3776, %v3768
  %v3941 = vpack.c.bf16 %v3777, %v3769
  %v3942 = vpack.c.bf16 %v3778, %v3770
  %v3943 = vpack.c.bf16 %v3787, %v3779
  %v3944 = vpack.c.bf16 %v3788, %v3780
  %v3945 = vpack.c.bf16 %v3789, %v3781
  %v3946 = vpack.c.bf16 %v3790, %v3782
  %v3947 = vpack.c.bf16 %v3791, %v3783
  %v3948 = vpack.c.bf16 %v3792, %v3784
  %v3949 = vpack.c.bf16 %v3793, %v3785
  %v3950 = vpack.c.bf16 %v3794, %v3786
  %v3951 = vpack.c.bf16 %v3803, %v3795
  %v3952 = vpack.c.bf16 %v3804, %v3796
  %v3953 = vpack.c.bf16 %v3805, %v3797
  %v3954 = vpack.c.bf16 %v3806, %v3798
  %v3955 = vpack.c.bf16 %v3807, %v3799
  %v3956 = vpack.c.bf16 %v3808, %v3800
  %v3957 = vpack.c.bf16 %v3809, %v3801
  %v3958 = vpack.c.bf16 %v3810, %v3802
  %v3959 = vpack.c.bf16 %v3819, %v3811
  %v3960 = vpack.c.bf16 %v3820, %v3812
  %v3961 = vpack.c.bf16 %v3821, %v3813
  %v3962 = vpack.c.bf16 %v3822, %v3814
  %v3963 = vpack.c.bf16 %v3823, %v3815
  %v3964 = vpack.c.bf16 %v3824, %v3816
  %v3965 = vpack.c.bf16 %v3825, %v3817
  %v3966 = vpack.c.bf16 %v3826, %v3818
  %v3967 = vpack.c.bf16 %v3835, %v3827
  %v3968 = vpack.c.bf16 %v3836, %v3828
  %v3969 = vpack.c.bf16 %v3837, %v3829
  %v3970 = vpack.c.bf16 %v3838, %v3830
  %v3971 = vpack.c.bf16 %v3839, %v3831
  %v3972 = vpack.c.bf16 %v3840, %v3832
  %v3973 = vpack.c.bf16 %v3841, %v3833
  %v3974 = vpack.c.bf16 %v3842, %v3834
  %v3975 = vld [vmem:[%s10] sm:$0xff]
  %v3976 = vld [vmem:[%s10 + $0x8] sm:$0xff]
  %v3977 = vld [vmem:[%s10 + $0x10] sm:$0xff]
  %v3978 = vld [vmem:[%s10 + $0x18] sm:$0xff]
  %3980 = vset.pattern.permute.xlu0 0
  %3981 = vperm.xlu0 %3980, %v3975
  %v3982 = vpop.permute.xlu0 %3981
  %3985 = vset.pattern.permute.xlu0 0
  %3986 = vperm.xlu0 %3985, %v3976
  %v3987 = vpop.permute.xlu0 %3986
  %3990 = vset.pattern.permute.xlu0 0
  %3991 = vperm.xlu0 %3990, %v3977
  %v3992 = vpop.permute.xlu0 %3991
  %3995 = vset.pattern.permute.xlu0 0
  %3996 = vperm.xlu0 %3995, %v3978
  %v3997 = vpop.permute.xlu0 %3996
  %v4003 = vunpack.c.l.b16 %v3843
  %v4004 = vunpack.c.h.b16 %v3843
  %v4005 = vunpack.c.l.b16 %v3844
  %v4006 = vunpack.c.h.b16 %v3844
  %v4007 = vunpack.c.l.b16 %v3845
  %v4008 = vunpack.c.h.b16 %v3845
  %v4009 = vunpack.c.l.b16 %v3846
  %v4010 = vunpack.c.h.b16 %v3846
  %v4011 = vpack.c.b16 %v4005, %v4003
  %v4012 = vpack.c.b16 %v4006, %v4004
  %v4013 = vpack.c.b16 %v4009, %v4007
  %v4014 = vpack.c.b16 %v4010, %v4008
  %4019 = vmatprep.subr.bf16.mxu0 %v3904
  %4020 = vmatpush1.bf16.msra.mxu0 %v3903
  %4021 = vmatprep.subr.bf16.mxu0 %v3896
  %4022 = vmatpush1.bf16.msra.mxu0 %v3895
  %4023 = vmatprep.subr.bf16.mxu0 %v3888
  %4024 = vmatpush1.bf16.msra.mxu0 %v3887
  %4025 = vmatprep.subr.bf16.mxu0 %v3880
  %4026 = vmatpush1.bf16.msra.mxu0 %v3879
  %4027 = vmatprep.subr.bf16.mxu0 %v3872
  %4028 = vmatpush1.bf16.msra.mxu0 %v3871
  %4029 = vmatprep.subr.bf16.mxu0 %v3864
  %4030 = vmatpush1.bf16.msra.mxu0 %v3863
  %4031 = vmatprep.subr.bf16.mxu0 %v3856
  %4032 = vmatpush1.bf16.msra.mxu0 %v3855
  %4033 = vmatprep.subr.bf16.mxu0 %v3848
  %4034 = vmatpush1.bf16.msra.mxu0 %v3847
  %4035 = vmatprep.subr.bf16.mxu0 %v3968
  %4036 = vmatpush2.bf16.msra.mxu0 %v3967
  %4037 = vmatprep.subr.bf16.mxu0 %v3960
  %4038 = vmatpush2.bf16.msra.mxu0 %v3959
  %4039 = vmatprep.subr.bf16.mxu0 %v3952
  %4040 = vmatpush2.bf16.msra.mxu0 %v3951
  %4041 = vmatprep.subr.bf16.mxu0 %v3944
  %4042 = vmatpush2.bf16.msra.mxu0 %v3943
  %4043 = vmatprep.subr.bf16.mxu0 %v3936
  %4044 = vmatpush2.bf16.msra.mxu0 %v3935
  %4045 = vmatprep.subr.bf16.mxu0 %v3928
  %4046 = vmatpush2.bf16.msra.mxu0 %v3927
  %4047 = vmatprep.subr.bf16.mxu0 %v3920
  %4048 = vmatpush2.bf16.msra.mxu0 %v3919
  %4049 = vmatprep.subr.bf16.mxu0 %v3912
  %4050 = vmatpush2.bf16.msra.mxu0 %v3911
  %4051 = vmatprep.mubr.bf16.mxu0 %v4012
  %4052 = vmatmul.mubr.bf16.gmra.mxu0 %v4011
  %v4053 = vpop.f32.mrf.mxu0
  %v4054 = vadd.f32 %v3982, %v4053
  %v4055 = vpop.f32.mrf.mxu0
  %v4056 = vadd.f32 %v3982, %v4055
  %v4057 = vpop.f32.mrf.mxu0
  %v4058 = vadd.f32 %v3987, %v4057
  %v4059 = vpop.f32.mrf.mxu0
  %v4060 = vadd.f32 %v3987, %v4059
  %4061 = vmatprep.mubr.bf16.mxu0 %v4014
  %4062 = vmatmul.mubr.bf16.gmra.mxu0 %v4013
  %v4063 = vpop.f32.mrf.mxu0
  %v4064 = vadd.f32 %v3992, %v4063
  %v4065 = vpop.f32.mrf.mxu0
  %v4066 = vadd.f32 %v3992, %v4065
  %v4067 = vpop.f32.mrf.mxu0
  %v4068 = vadd.f32 %v3997, %v4067
  %v4069 = vpop.f32.mrf.mxu0
  %v4070 = vadd.f32 %v3997, %v4069
  %4071 = vdwg.mxu0
  %4072 = vmatprep.subr.bf16.mxu0 %v3906
  %4073 = vmatpush1.bf16.msra.mxu0 %v3905
  %4074 = vmatprep.subr.bf16.mxu0 %v3898
  %4075 = vmatpush1.bf16.msra.mxu0 %v3897
  %4076 = vmatprep.subr.bf16.mxu0 %v3890
  %4077 = vmatpush1.bf16.msra.mxu0 %v3889
  %4078 = vmatprep.subr.bf16.mxu0 %v3882
  %4079 = vmatpush1.bf16.msra.mxu0 %v3881
  %4080 = vmatprep.subr.bf16.mxu0 %v3874
  %4081 = vmatpush1.bf16.msra.mxu0 %v3873
  %4082 = vmatprep.subr.bf16.mxu0 %v3866
  %4083 = vmatpush1.bf16.msra.mxu0 %v3865
  %4084 = vmatprep.subr.bf16.mxu0 %v3858
  %4085 = vmatpush1.bf16.msra.mxu0 %v3857
  %4086 = vmatprep.subr.bf16.mxu0 %v3850
  %4087 = vmatpush1.bf16.msra.mxu0 %v3849
  %4088 = vmatprep.subr.bf16.mxu0 %v3970
  %4089 = vmatpush2.bf16.msra.mxu0 %v3969
  %4090 = vmatprep.subr.bf16.mxu0 %v3962
  %4091 = vmatpush2.bf16.msra.mxu0 %v3961
  %4092 = vmatprep.subr.bf16.mxu0 %v3954
  %4093 = vmatpush2.bf16.msra.mxu0 %v3953
  %4094 = vmatprep.subr.bf16.mxu0 %v3946
  %4095 = vmatpush2.bf16.msra.mxu0 %v3945
  %4096 = vmatprep.subr.bf16.mxu0 %v3938
  %4097 = vmatpush2.bf16.msra.mxu0 %v3937
  %4098 = vmatprep.subr.bf16.mxu0 %v3930
  %4099 = vmatpush2.bf16.msra.mxu0 %v3929
  %4100 = vmatprep.subr.bf16.mxu0 %v3922
  %4101 = vmatpush2.bf16.msra.mxu0 %v3921
  %4102 = vmatprep.subr.bf16.mxu0 %v3914
  %4103 = vmatpush2.bf16.msra.mxu0 %v3913
  %4104 = vmatprep.mubr.bf16.mxu0 %v4012
  %4105 = vmatmul.mubr.bf16.gmra.mxu0 %v4011
  %v4106 = vpop.f32.mrf.mxu0
  %v4107 = vadd.f32 %v3982, %v4106
  %v4108 = vpop.f32.mrf.mxu0
  %v4109 = vadd.f32 %v3982, %v4108
  %v4110 = vpop.f32.mrf.mxu0
  %v4111 = vadd.f32 %v3987, %v4110
  %v4112 = vpop.f32.mrf.mxu0
  %v4113 = vadd.f32 %v3987, %v4112
  %4114 = vmatprep.mubr.bf16.mxu0 %v4014
  %4115 = vmatmul.mubr.bf16.gmra.mxu0 %v4013
  %v4116 = vpop.f32.mrf.mxu0
  %v4117 = vadd.f32 %v3992, %v4116
  %v4118 = vpop.f32.mrf.mxu0
  %v4119 = vadd.f32 %v3992, %v4118
  %v4120 = vpop.f32.mrf.mxu0
  %v4121 = vadd.f32 %v3997, %v4120
  %v4122 = vpop.f32.mrf.mxu0
  %v4123 = vadd.f32 %v3997, %v4122
  %4124 = vdwg.mxu0
  %4125 = vmatprep.subr.bf16.mxu0 %v3908
  %4126 = vmatpush1.bf16.msra.mxu0 %v3907
  %4127 = vmatprep.subr.bf16.mxu0 %v3900
  %4128 = vmatpush1.bf16.msra.mxu0 %v3899
  %4129 = vmatprep.subr.bf16.mxu0 %v3892
  %4130 = vmatpush1.bf16.msra.mxu0 %v3891
  %4131 = vmatprep.subr.bf16.mxu0 %v3884
  %4132 = vmatpush1.bf16.msra.mxu0 %v3883
  %4133 = vmatprep.subr.bf16.mxu0 %v3876
  %4134 = vmatpush1.bf16.msra.mxu0 %v3875
  %4135 = vmatprep.subr.bf16.mxu0 %v3868
  %4136 = vmatpush1.bf16.msra.mxu0 %v3867
  %4137 = vmatprep.subr.bf16.mxu0 %v3860
  %4138 = vmatpush1.bf16.msra.mxu0 %v3859
  %4139 = vmatprep.subr.bf16.mxu0 %v3852
  %4140 = vmatpush1.bf16.msra.mxu0 %v3851
  %4141 = vmatprep.subr.bf16.mxu0 %v3972
  %4142 = vmatpush2.bf16.msra.mxu0 %v3971
  %4143 = vmatprep.subr.bf16.mxu0 %v3964
  %4144 = vmatpush2.bf16.msra.mxu0 %v3963
  %4145 = vmatprep.subr.bf16.mxu0 %v3956
  %4146 = vmatpush2.bf16.msra.mxu0 %v3955
  %4147 = vmatprep.subr.bf16.mxu0 %v3948
  %4148 = vmatpush2.bf16.msra.mxu0 %v3947
  %4149 = vmatprep.subr.bf16.mxu0 %v3940
  %4150 = vmatpush2.bf16.msra.mxu0 %v3939
  %4151 = vmatprep.subr.bf16.mxu0 %v3932
  %4152 = vmatpush2.bf16.msra.mxu0 %v3931
  %4153 = vmatprep.subr.bf16.mxu0 %v3924
  %4154 = vmatpush2.bf16.msra.mxu0 %v3923
  %4155 = vmatprep.subr.bf16.mxu0 %v3916
  %4156 = vmatpush2.bf16.msra.mxu0 %v3915
  %4157 = vmatprep.mubr.bf16.mxu0 %v4012
  %4158 = vmatmul.mubr.bf16.gmra.mxu0 %v4011
  %v4159 = vpop.f32.mrf.mxu0
  %v4160 = vadd.f32 %v3982, %v4159
  %v4161 = vpop.f32.mrf.mxu0
  %v4162 = vadd.f32 %v3982, %v4161
  %v4163 = vpop.f32.mrf.mxu0
  %v4164 = vadd.f32 %v3987, %v4163
  %v4165 = vpop.f32.mrf.mxu0
  %v4166 = vadd.f32 %v3987, %v4165
  %4167 = vmatprep.mubr.bf16.mxu0 %v4014
  %4168 = vmatmul.mubr.bf16.gmra.mxu0 %v4013
  %v4169 = vpop.f32.mrf.mxu0
  %v4170 = vadd.f32 %v3992, %v4169
  %v4171 = vpop.f32.mrf.mxu0
  %v4172 = vadd.f32 %v3992, %v4171
  %v4173 = vpop.f32.mrf.mxu0
  %v4174 = vadd.f32 %v3997, %v4173
  %v4175 = vpop.f32.mrf.mxu0
  %v4176 = vadd.f32 %v3997, %v4175
  %4177 = vdwg.mxu0
  %4178 = vmatprep.subr.bf16.mxu0 %v3910
  %4179 = vmatpush1.bf16.msra.mxu0 %v3909
  %4180 = vmatprep.subr.bf16.mxu0 %v3902
  %4181 = vmatpush1.bf16.msra.mxu0 %v3901
  %4182 = vmatprep.subr.bf16.mxu0 %v3894
  %4183 = vmatpush1.bf16.msra.mxu0 %v3893
  %4184 = vmatprep.subr.bf16.mxu0 %v3886
  %4185 = vmatpush1.bf16.msra.mxu0 %v3885
  %4186 = vmatprep.subr.bf16.mxu0 %v3878
  %4187 = vmatpush1.bf16.msra.mxu0 %v3877
  %4188 = vmatprep.subr.bf16.mxu0 %v3870
  %4189 = vmatpush1.bf16.msra.mxu0 %v3869
  %4190 = vmatprep.subr.bf16.mxu0 %v3862
  %4191 = vmatpush1.bf16.msra.mxu0 %v3861
  %4192 = vmatprep.subr.bf16.mxu0 %v3854
  %4193 = vmatpush1.bf16.msra.mxu0 %v3853
  %4194 = vmatprep.subr.bf16.mxu0 %v3974
  %4195 = vmatpush2.bf16.msra.mxu0 %v3973
  %4196 = vmatprep.subr.bf16.mxu0 %v3966
  %4197 = vmatpush2.bf16.msra.mxu0 %v3965
  %4198 = vmatprep.subr.bf16.mxu0 %v3958
  %4199 = vmatpush2.bf16.msra.mxu0 %v3957
  %4200 = vmatprep.subr.bf16.mxu0 %v3950
  %4201 = vmatpush2.bf16.msra.mxu0 %v3949
  %4202 = vmatprep.subr.bf16.mxu0 %v3942
  %4203 = vmatpush2.bf16.msra.mxu0 %v3941
  %4204 = vmatprep.subr.bf16.mxu0 %v3934
  %4205 = vmatpush2.bf16.msra.mxu0 %v3933
  %4206 = vmatprep.subr.bf16.mxu0 %v3926
  %4207 = vmatpush2.bf16.msra.mxu0 %v3925
  %4208 = vmatprep.subr.bf16.mxu0 %v3918
  %4209 = vmatpush2.bf16.msra.mxu0 %v3917
  %4210 = vmatprep.mubr.bf16.mxu0 %v4012
  %4211 = vmatmul.mubr.bf16.gmra.mxu0 %v4011
  %v4212 = vpop.f32.mrf.mxu0
  %v4213 = vadd.f32 %v3982, %v4212
  %v4214 = vpop.f32.mrf.mxu0
  %v4215 = vadd.f32 %v3982, %v4214
  %v4216 = vpop.f32.mrf.mxu0
  %v4217 = vadd.f32 %v3987, %v4216
  %v4218 = vpop.f32.mrf.mxu0
  %v4219 = vadd.f32 %v3987, %v4218
  %4220 = vmatprep.mubr.bf16.mxu0 %v4014
  %4221 = vmatmul.mubr.bf16.gmra.mxu0 %v4013
  %v4222 = vpop.f32.mrf.mxu0
  %v4223 = vadd.f32 %v3992, %v4222
  %v4224 = vpop.f32.mrf.mxu0
  %v4225 = vadd.f32 %v3992, %v4224
  %v4226 = vpop.f32.mrf.mxu0
  %v4227 = vadd.f32 %v3997, %v4226
  %v4228 = vpop.f32.mrf.mxu0
  %v4229 = vadd.f32 %v3997, %v4228
  %4230 = vdwg.mxu0
  %v4231 = vtanh.pop %v4054
  %v4232 = vtanh.pop %v4056
  %v4233 = vtanh.pop %v4107
  %v4234 = vtanh.pop %v4109
  %v4235 = vtanh.pop %v4160
  %v4236 = vtanh.pop %v4162
  %v4237 = vtanh.pop %v4213
  %v4238 = vtanh.pop %v4215
  %v4239 = vtanh.pop %v4058
  %v4240 = vtanh.pop %v4060
  %v4241 = vtanh.pop %v4111
  %v4242 = vtanh.pop %v4113
  %v4243 = vtanh.pop %v4164
  %v4244 = vtanh.pop %v4166
  %v4245 = vtanh.pop %v4217
  %v4246 = vtanh.pop %v4219
  %v4247 = vtanh.pop %v4064
  %v4248 = vtanh.pop %v4066
  %v4249 = vtanh.pop %v4117
  %v4250 = vtanh.pop %v4119
  %v4251 = vtanh.pop %v4170
  %v4252 = vtanh.pop %v4172
  %v4253 = vtanh.pop %v4223
  %v4254 = vtanh.pop %v4225
  %v4255 = vtanh.pop %v4068
  %v4256 = vtanh.pop %v4070
  %v4257 = vtanh.pop %v4121
  %v4258 = vtanh.pop %v4123
  %v4259 = vtanh.pop %v4174
  %v4260 = vtanh.pop %v4176
  %v4261 = vtanh.pop %v4227
  %v4262 = vtanh.pop %v4229
  %4263 = vxpose.xlu0.b32.start [1/16] %v4231, 128
  %4264 = vxpose.xlu0.b32.cont [2/16] %v4239, 128
  %4265 = vxpose.xlu0.b32.cont [3/16] %v4247, 128
  %4266 = vxpose.xlu0.b32.cont [4/16] %v4255, 128
  %4267 = vxpose.xlu0.b32.cont [5/16] 0.0, 128
  %4268 = vxpose.xlu0.b32.cont [6/16] 0.0, 128
  %4269 = vxpose.xlu0.b32.cont [7/16] 0.0, 128
  %4270 = vxpose.xlu0.b32.cont [8/16] 0.0, 128
  %4271 = vxpose.xlu0.b32.cont [9/16] 0.0, 128
  %4272 = vxpose.xlu0.b32.cont [10/16] 0.0, 128
  %4273 = vxpose.xlu0.b32.cont [11/16] 0.0, 128
  %4274 = vxpose.xlu0.b32.cont [12/16] 0.0, 128
  %4275 = vxpose.xlu0.b32.cont [13/16] 0.0, 128
  %4276 = vxpose.xlu0.b32.cont [14/16] 0.0, 128
  %4277 = vxpose.xlu0.b32.cont [15/16] 0.0, 128
  %4278 = vxpose.xlu0.b32.end [16/16] 0.0, 128
  %v4279 = vpop.trf.xlu0
  %v4280 = vpop.trf.xlu0
  %v4281 = vpop.trf.xlu0
  %v4282 = vpop.trf.xlu0
  %v4283 = vpop.trf.xlu0
  %v4284 = vpop.trf.xlu0
  %v4285 = vpop.trf.xlu0
  %v4286 = vpop.trf.xlu0
  %v4287 = vpop.trf.xlu0
  %v4288 = vpop.trf.xlu0
  %v4289 = vpop.trf.xlu0
  %v4290 = vpop.trf.xlu0
  %v4291 = vpop.trf.xlu0
  %v4292 = vpop.trf.xlu0
  %v4293 = vpop.trf.xlu0
  %v4294 = vpop.trf.xlu0
  %4295 = vxpose.xlu0.b32.start [1/16] %v4232, 128
  %4296 = vxpose.xlu0.b32.cont [2/16] %v4240, 128
  %4297 = vxpose.xlu0.b32.cont [3/16] %v4248, 128
  %4298 = vxpose.xlu0.b32.cont [4/16] %v4256, 128
  %4299 = vxpose.xlu0.b32.cont [5/16] 0.0, 128
  %4300 = vxpose.xlu0.b32.cont [6/16] 0.0, 128
  %4301 = vxpose.xlu0.b32.cont [7/16] 0.0, 128
  %4302 = vxpose.xlu0.b32.cont [8/16] 0.0, 128
  %4303 = vxpose.xlu0.b32.cont [9/16] 0.0, 128
  %4304 = vxpose.xlu0.b32.cont [10/16] 0.0, 128
  %4305 = vxpose.xlu0.b32.cont [11/16] 0.0, 128
  %4306 = vxpose.xlu0.b32.cont [12/16] 0.0, 128
  %4307 = vxpose.xlu0.b32.cont [13/16] 0.0, 128
  %4308 = vxpose.xlu0.b32.cont [14/16] 0.0, 128
  %4309 = vxpose.xlu0.b32.cont [15/16] 0.0, 128
  %4310 = vxpose.xlu0.b32.end [16/16] 0.0, 128
  %v4311 = vpop.trf.xlu0
  %v4312 = vpop.trf.xlu0
  %v4313 = vpop.trf.xlu0
  %v4314 = vpop.trf.xlu0
  %v4315 = vpop.trf.xlu0
  %v4316 = vpop.trf.xlu0
  %v4317 = vpop.trf.xlu0
  %v4318 = vpop.trf.xlu0
  %v4319 = vpop.trf.xlu0
  %v4320 = vpop.trf.xlu0
  %v4321 = vpop.trf.xlu0
  %v4322 = vpop.trf.xlu0
  %v4323 = vpop.trf.xlu0
  %v4324 = vpop.trf.xlu0
  %v4325 = vpop.trf.xlu0
  %v4326 = vpop.trf.xlu0
  %4327 = vxpose.xlu0.b32.start [1/16] %v4233, 128
  %4328 = vxpose.xlu0.b32.cont [2/16] %v4241, 128
  %4329 = vxpose.xlu0.b32.cont [3/16] %v4249, 128
  %4330 = vxpose.xlu0.b32.cont [4/16] %v4257, 128
  %4331 = vxpose.xlu0.b32.cont [5/16] 0.0, 128
  %4332 = vxpose.xlu0.b32.cont [6/16] 0.0, 128
  %4333 = vxpose.xlu0.b32.cont [7/16] 0.0, 128
  %4334 = vxpose.xlu0.b32.cont [8/16] 0.0, 128
  %4335 = vxpose.xlu0.b32.cont [9/16] 0.0, 128
  %4336 = vxpose.xlu0.b32.cont [10/16] 0.0, 128
  %4337 = vxpose.xlu0.b32.cont [11/16] 0.0, 128
  %4338 = vxpose.xlu0.b32.cont [12/16] 0.0, 128
  %4339 = vxpose.xlu0.b32.cont [13/16] 0.0, 128
  %4340 = vxpose.xlu0.b32.cont [14/16] 0.0, 128
  %4341 = vxpose.xlu0.b32.cont [15/16] 0.0, 128
  %4342 = vxpose.xlu0.b32.end [16/16] 0.0, 128
  %v4343 = vpop.trf.xlu0
  %v4344 = vpop.trf.xlu0
  %v4345 = vpop.trf.xlu0
  %v4346 = vpop.trf.xlu0
  %v4347 = vpop.trf.xlu0
  %v4348 = vpop.trf.xlu0
  %v4349 = vpop.trf.xlu0
  %v4350 = vpop.trf.xlu0
  %v4351 = vpop.trf.xlu0
  %v4352 = vpop.trf.xlu0
  %v4353 = vpop.trf.xlu0
  %v4354 = vpop.trf.xlu0
  %v4355 = vpop.trf.xlu0
  %v4356 = vpop.trf.xlu0
  %v4357 = vpop.trf.xlu0
  %v4358 = vpop.trf.xlu0
  %4359 = vxpose.xlu0.b32.start [1/16] %v4234, 128
  %4360 = vxpose.xlu0.b32.cont [2/16] %v4242, 128
  %4361 = vxpose.xlu0.b32.cont [3/16] %v4250, 128
  %4362 = vxpose.xlu0.b32.cont [4/16] %v4258, 128
  %4363 = vxpose.xlu0.b32.cont [5/16] 0.0, 128
  %4364 = vxpose.xlu0.b32.cont [6/16] 0.0, 128
  %4365 = vxpose.xlu0.b32.cont [7/16] 0.0, 128
  %4366 = vxpose.xlu0.b32.cont [8/16] 0.0, 128
  %4367 = vxpose.xlu0.b32.cont [9/16] 0.0, 128
  %4368 = vxpose.xlu0.b32.cont [10/16] 0.0, 128
  %4369 = vxpose.xlu0.b32.cont [11/16] 0.0, 128
  %4370 = vxpose.xlu0.b32.cont [12/16] 0.0, 128
  %4371 = vxpose.xlu0.b32.cont [13/16] 0.0, 128
  %4372 = vxpose.xlu0.b32.cont [14/16] 0.0, 128
  %4373 = vxpose.xlu0.b32.cont [15/16] 0.0, 128
  %4374 = vxpose.xlu0.b32.end [16/16] 0.0, 128
  %v4375 = vpop.trf.xlu0
  %v4376 = vpop.trf.xlu0
  %v4377 = vpop.trf.xlu0
  %v4378 = vpop.trf.xlu0
  %v4379 = vpop.trf.xlu0
  %v4380 = vpop.trf.xlu0
  %v4381 = vpop.trf.xlu0
  %v4382 = vpop.trf.xlu0
  %v4383 = vpop.trf.xlu0
  %v4384 = vpop.trf.xlu0
  %v4385 = vpop.trf.xlu0
  %v4386 = vpop.trf.xlu0
  %v4387 = vpop.trf.xlu0
  %v4388 = vpop.trf.xlu0
  %v4389 = vpop.trf.xlu0
  %v4390 = vpop.trf.xlu0
  %4391 = vxpose.xlu0.b32.start [1/16] %v4235, 128
  %4392 = vxpose.xlu0.b32.cont [2/16] %v4243, 128
  %4393 = vxpose.xlu0.b32.cont [3/16] %v4251, 128
  %4394 = vxpose.xlu0.b32.cont [4/16] %v4259, 128
  %4395 = vxpose.xlu0.b32.cont [5/16] 0.0, 128
  %4396 = vxpose.xlu0.b32.cont [6/16] 0.0, 128
  %4397 = vxpose.xlu0.b32.cont [7/16] 0.0, 128
  %4398 = vxpose.xlu0.b32.cont [8/16] 0.0, 128
  %4399 = vxpose.xlu0.b32.cont [9/16] 0.0, 128
  %4400 = vxpose.xlu0.b32.cont [10/16] 0.0, 128
  %4401 = vxpose.xlu0.b32.cont [11/16] 0.0, 128
  %4402 = vxpose.xlu0.b32.cont [12/16] 0.0, 128
  %4403 = vxpose.xlu0.b32.cont [13/16] 0.0, 128
  %4404 = vxpose.xlu0.b32.cont [14/16] 0.0, 128
  %4405 = vxpose.xlu0.b32.cont [15/16] 0.0, 128
  %4406 = vxpose.xlu0.b32.end [16/16] 0.0, 128
  %v4407 = vpop.trf.xlu0
  %v4408 = vpop.trf.xlu0
  %v4409 = vpop.trf.xlu0
  %v4410 = vpop.trf.xlu0
  %v4411 = vpop.trf.xlu0
  %v4412 = vpop.trf.xlu0
  %v4413 = vpop.trf.xlu0
  %v4414 = vpop.trf.xlu0
  %v4415 = vpop.trf.xlu0
  %v4416 = vpop.trf.xlu0
  %v4417 = vpop.trf.xlu0
  %v4418 = vpop.trf.xlu0
  %v4419 = vpop.trf.xlu0
  %v4420 = vpop.trf.xlu0
  %v4421 = vpop.trf.xlu0
  %v4422 = vpop.trf.xlu0
  %4423 = vxpose.xlu0.b32.start [1/16] %v4236, 128
  %4424 = vxpose.xlu0.b32.cont [2/16] %v4244, 128
  %4425 = vxpose.xlu0.b32.cont [3/16] %v4252, 128
  %4426 = vxpose.xlu0.b32.cont [4/16] %v4260, 128
  %4427 = vxpose.xlu0.b32.cont [5/16] 0.0, 128
  %4428 = vxpose.xlu0.b32.cont [6/16] 0.0, 128
  %4429 = vxpose.xlu0.b32.cont [7/16] 0.0, 128
  %4430 = vxpose.xlu0.b32.cont [8/16] 0.0, 128
  %4431 = vxpose.xlu0.b32.cont [9/16] 0.0, 128
  %4432 = vxpose.xlu0.b32.cont [10/16] 0.0, 128
  %4433 = vxpose.xlu0.b32.cont [11/16] 0.0, 128
  %4434 = vxpose.xlu0.b32.cont [12/16] 0.0, 128
  %4435 = vxpose.xlu0.b32.cont [13/16] 0.0, 128
  %4436 = vxpose.xlu0.b32.cont [14/16] 0.0, 128
  %4437 = vxpose.xlu0.b32.cont [15/16] 0.0, 128
  %4438 = vxpose.xlu0.b32.end [16/16] 0.0, 128
  %v4439 = vpop.trf.xlu0
  %v4440 = vpop.trf.xlu0
  %v4441 = vpop.trf.xlu0
  %v4442 = vpop.trf.xlu0
  %v4443 = vpop.trf.xlu0
  %v4444 = vpop.trf.xlu0
  %v4445 = vpop.trf.xlu0
  %v4446 = vpop.trf.xlu0
  %v4447 = vpop.trf.xlu0
  %v4448 = vpop.trf.xlu0
  %v4449 = vpop.trf.xlu0
  %v4450 = vpop.trf.xlu0
  %v4451 = vpop.trf.xlu0
  %v4452 = vpop.trf.xlu0
  %v4453 = vpop.trf.xlu0
  %v4454 = vpop.trf.xlu0
  %4455 = vxpose.xlu0.b32.start [1/16] %v4237, 128
  %4456 = vxpose.xlu0.b32.cont [2/16] %v4245, 128
  %4457 = vxpose.xlu0.b32.cont [3/16] %v4253, 128
  %4458 = vxpose.xlu0.b32.cont [4/16] %v4261, 128
  %4459 = vxpose.xlu0.b32.cont [5/16] 0.0, 128
  %4460 = vxpose.xlu0.b32.cont [6/16] 0.0, 128
  %4461 = vxpose.xlu0.b32.cont [7/16] 0.0, 128
  %4462 = vxpose.xlu0.b32.cont [8/16] 0.0, 128
  %4463 = vxpose.xlu0.b32.cont [9/16] 0.0, 128
  %4464 = vxpose.xlu0.b32.cont [10/16] 0.0, 128
  %4465 = vxpose.xlu0.b32.cont [11/16] 0.0, 128
  %4466 = vxpose.xlu0.b32.cont [12/16] 0.0, 128
  %4467 = vxpose.xlu0.b32.cont [13/16] 0.0, 128
  %4468 = vxpose.xlu0.b32.cont [14/16] 0.0, 128
  %4469 = vxpose.xlu0.b32.cont [15/16] 0.0, 128
  %4470 = vxpose.xlu0.b32.end [16/16] 0.0, 128
  %v4471 = vpop.trf.xlu0
  %v4472 = vpop.trf.xlu0
  %v4473 = vpop.trf.xlu0
  %v4474 = vpop.trf.xlu0
  %v4475 = vpop.trf.xlu0
  %v4476 = vpop.trf.xlu0
  %v4477 = vpop.trf.xlu0
  %v4478 = vpop.trf.xlu0
  %v4479 = vpop.trf.xlu0
  %v4480 = vpop.trf.xlu0
  %v4481 = vpop.trf.xlu0
  %v4482 = vpop.trf.xlu0
  %v4483 = vpop.trf.xlu0
  %v4484 = vpop.trf.xlu0
  %v4485 = vpop.trf.xlu0
  %v4486 = vpop.trf.xlu0
  %4487 = vxpose.xlu0.b32.start [1/16] %v4238, 128
  %4488 = vxpose.xlu0.b32.cont [2/16] %v4246, 128
  %4489 = vxpose.xlu0.b32.cont [3/16] %v4254, 128
  %4490 = vxpose.xlu0.b32.cont [4/16] %v4262, 128
  %4491 = vxpose.xlu0.b32.cont [5/16] 0.0, 128
  %4492 = vxpose.xlu0.b32.cont [6/16] 0.0, 128
  %4493 = vxpose.xlu0.b32.cont [7/16] 0.0, 128
  %4494 = vxpose.xlu0.b32.cont [8/16] 0.0, 128
  %4495 = vxpose.xlu0.b32.cont [9/16] 0.0, 128
  %4496 = vxpose.xlu0.b32.cont [10/16] 0.0, 128
  %4497 = vxpose.xlu0.b32.cont [11/16] 0.0, 128
  %4498 = vxpose.xlu0.b32.cont [12/16] 0.0, 128
  %4499 = vxpose.xlu0.b32.cont [13/16] 0.0, 128
  %4500 = vxpose.xlu0.b32.cont [14/16] 0.0, 128
  %4501 = vxpose.xlu0.b32.cont [15/16] 0.0, 128
  %4502 = vxpose.xlu0.b32.end [16/16] 0.0, 128
  %v4503 = vpop.trf.xlu0
  %v4504 = vpop.trf.xlu0
  %v4505 = vpop.trf.xlu0
  %v4506 = vpop.trf.xlu0
  %v4507 = vpop.trf.xlu0
  %v4508 = vpop.trf.xlu0
  %v4509 = vpop.trf.xlu0
  %v4510 = vpop.trf.xlu0
  %v4511 = vpop.trf.xlu0
  %v4512 = vpop.trf.xlu0
  %v4513 = vpop.trf.xlu0
  %v4514 = vpop.trf.xlu0
  %v4515 = vpop.trf.xlu0
  %v4516 = vpop.trf.xlu0
  %v4517 = vpop.trf.xlu0
  %v4518 = vpop.trf.xlu0
  %vm4519 = vcmask 261120
  %v4520 = vsel %vm4519, %v4279, 0.0
  %4521 = vadd.xlane.f32.xlu0 %v4520
  %v4522 = vpop.xlane.xlu0 %4521
  %v4523 = vsel %vm4519, %v4280, 0.0
  %4524 = vadd.xlane.f32.xlu0 %v4523
  %v4525 = vpop.xlane.xlu0 %4524
  %v4526 = vsel %vm4519, %v4281, 0.0
  %4527 = vadd.xlane.f32.xlu0 %v4526
  %v4528 = vpop.xlane.xlu0 %4527
  %v4529 = vsel %vm4519, %v4282, 0.0
  %4530 = vadd.xlane.f32.xlu0 %v4529
  %v4531 = vpop.xlane.xlu0 %4530
  %v4532 = vsel %vm4519, %v4283, 0.0
  %4533 = vadd.xlane.f32.xlu0 %v4532
  %v4534 = vpop.xlane.xlu0 %4533
  %v4535 = vsel %vm4519, %v4284, 0.0
  %4536 = vadd.xlane.f32.xlu0 %v4535
  %v4537 = vpop.xlane.xlu0 %4536
  %v4538 = vsel %vm4519, %v4285, 0.0
  %4539 = vadd.xlane.f32.xlu0 %v4538
  %v4540 = vpop.xlane.xlu0 %4539
  %v4541 = vsel %vm4519, %v4286, 0.0
  %4542 = vadd.xlane.f32.xlu0 %v4541
  %v4543 = vpop.xlane.xlu0 %4542
  %v4544 = vsel %vm4519, %v4287, 0.0
  %4545 = vadd.xlane.f32.xlu0 %v4544
  %v4546 = vpop.xlane.xlu0 %4545
  %v4547 = vsel %vm4519, %v4288, 0.0
  %4548 = vadd.xlane.f32.xlu0 %v4547
  %v4549 = vpop.xlane.xlu0 %4548
  %v4550 = vsel %vm4519, %v4289, 0.0
  %4551 = vadd.xlane.f32.xlu0 %v4550
  %v4552 = vpop.xlane.xlu0 %4551
  %v4553 = vsel %vm4519, %v4290, 0.0
  %4554 = vadd.xlane.f32.xlu0 %v4553
  %v4555 = vpop.xlane.xlu0 %4554
  %v4556 = vsel %vm4519, %v4291, 0.0
  %4557 = vadd.xlane.f32.xlu0 %v4556
  %v4558 = vpop.xlane.xlu0 %4557
  %v4559 = vsel %vm4519, %v4292, 0.0
  %4560 = vadd.xlane.f32.xlu0 %v4559
  %v4561 = vpop.xlane.xlu0 %4560
  %v4562 = vsel %vm4519, %v4293, 0.0
  %4563 = vadd.xlane.f32.xlu0 %v4562
  %v4564 = vpop.xlane.xlu0 %4563
  %v4565 = vsel %vm4519, %v4294, 0.0
  %4566 = vadd.xlane.f32.xlu0 %v4565
  %v4567 = vpop.xlane.xlu0 %4566
  %v4568 = vsel %vm4519, %v4311, 0.0
  %4569 = vadd.xlane.f32.xlu0 %v4568
  %v4570 = vpop.xlane.xlu0 %4569
  %v4571 = vsel %vm4519, %v4312, 0.0
  %4572 = vadd.xlane.f32.xlu0 %v4571
  %v4573 = vpop.xlane.xlu0 %4572
  %v4574 = vsel %vm4519, %v4313, 0.0
  %4575 = vadd.xlane.f32.xlu0 %v4574
  %v4576 = vpop.xlane.xlu0 %4575
  %v4577 = vsel %vm4519, %v4314, 0.0
  %4578 = vadd.xlane.f32.xlu0 %v4577
  %v4579 = vpop.xlane.xlu0 %4578
  %v4580 = vsel %vm4519, %v4315, 0.0
  %4581 = vadd.xlane.f32.xlu0 %v4580
  %v4582 = vpop.xlane.xlu0 %4581
  %v4583 = vsel %vm4519, %v4316, 0.0
  %4584 = vadd.xlane.f32.xlu0 %v4583
  %v4585 = vpop.xlane.xlu0 %4584
  %v4586 = vsel %vm4519, %v4317, 0.0
  %4587 = vadd.xlane.f32.xlu0 %v4586
  %v4588 = vpop.xlane.xlu0 %4587
  %v4589 = vsel %vm4519, %v4318, 0.0
  %4590 = vadd.xlane.f32.xlu0 %v4589
  %v4591 = vpop.xlane.xlu0 %4590
  %v4592 = vsel %vm4519, %v4319, 0.0
  %4593 = vadd.xlane.f32.xlu0 %v4592
  %v4594 = vpop.xlane.xlu0 %4593
  %v4595 = vsel %vm4519, %v4320, 0.0
  %4596 = vadd.xlane.f32.xlu0 %v4595
  %v4597 = vpop.xlane.xlu0 %4596
  %v4598 = vsel %vm4519, %v4321, 0.0
  %4599 = vadd.xlane.f32.xlu0 %v4598
  %v4600 = vpop.xlane.xlu0 %4599
  %v4601 = vsel %vm4519, %v4322, 0.0
  %4602 = vadd.xlane.f32.xlu0 %v4601
  %v4603 = vpop.xlane.xlu0 %4602
  %v4604 = vsel %vm4519, %v4323, 0.0
  %4605 = vadd.xlane.f32.xlu0 %v4604
  %v4606 = vpop.xlane.xlu0 %4605
  %v4607 = vsel %vm4519, %v4324, 0.0
  %4608 = vadd.xlane.f32.xlu0 %v4607
  %v4609 = vpop.xlane.xlu0 %4608
  %v4610 = vsel %vm4519, %v4325, 0.0
  %4611 = vadd.xlane.f32.xlu0 %v4610
  %v4612 = vpop.xlane.xlu0 %4611
  %v4613 = vsel %vm4519, %v4326, 0.0
  %4614 = vadd.xlane.f32.xlu0 %v4613
  %v4615 = vpop.xlane.xlu0 %4614
  %v4616 = vsel %vm4519, %v4343, 0.0
  %4617 = vadd.xlane.f32.xlu0 %v4616
  %v4618 = vpop.xlane.xlu0 %4617
  %v4619 = vsel %vm4519, %v4344, 0.0
  %4620 = vadd.xlane.f32.xlu0 %v4619
  %v4621 = vpop.xlane.xlu0 %4620
  %v4622 = vsel %vm4519, %v4345, 0.0
  %4623 = vadd.xlane.f32.xlu0 %v4622
  %v4624 = vpop.xlane.xlu0 %4623
  %v4625 = vsel %vm4519, %v4346, 0.0
  %4626 = vadd.xlane.f32.xlu0 %v4625
  %v4627 = vpop.xlane.xlu0 %4626
  %v4628 = vsel %vm4519, %v4347, 0.0
  %4629 = vadd.xlane.f32.xlu0 %v4628
  %v4630 = vpop.xlane.xlu0 %4629
  %v4631 = vsel %vm4519, %v4348, 0.0
  %4632 = vadd.xlane.f32.xlu0 %v4631
  %v4633 = vpop.xlane.xlu0 %4632
  %v4634 = vsel %vm4519, %v4349, 0.0
  %4635 = vadd.xlane.f32.xlu0 %v4634
  %v4636 = vpop.xlane.xlu0 %4635
  %v4637 = vsel %vm4519, %v4350, 0.0
  %4638 = vadd.xlane.f32.xlu0 %v4637
  %v4639 = vpop.xlane.xlu0 %4638
  %v4640 = vsel %vm4519, %v4351, 0.0
  %4641 = vadd.xlane.f32.xlu0 %v4640
  %v4642 = vpop.xlane.xlu0 %4641
  %v4643 = vsel %vm4519, %v4352, 0.0
  %4644 = vadd.xlane.f32.xlu0 %v4643
  %v4645 = vpop.xlane.xlu0 %4644
  %v4646 = vsel %vm4519, %v4353, 0.0
  %4647 = vadd.xlane.f32.xlu0 %v4646
  %v4648 = vpop.xlane.xlu0 %4647
  %v4649 = vsel %vm4519, %v4354, 0.0
  %4650 = vadd.xlane.f32.xlu0 %v4649
  %v4651 = vpop.xlane.xlu0 %4650
  %v4652 = vsel %vm4519, %v4355, 0.0
  %4653 = vadd.xlane.f32.xlu0 %v4652
  %v4654 = vpop.xlane.xlu0 %4653
  %v4655 = vsel %vm4519, %v4356, 0.0
  %4656 = vadd.xlane.f32.xlu0 %v4655
  %v4657 = vpop.xlane.xlu0 %4656
  %v4658 = vsel %vm4519, %v4357, 0.0
  %4659 = vadd.xlane.f32.xlu0 %v4658
  %v4660 = vpop.xlane.xlu0 %4659
  %v4661 = vsel %vm4519, %v4358, 0.0
  %4662 = vadd.xlane.f32.xlu0 %v4661
  %v4663 = vpop.xlane.xlu0 %4662
  %v4664 = vsel %vm4519, %v4375, 0.0
  %4665 = vadd.xlane.f32.xlu0 %v4664
  %v4666 = vpop.xlane.xlu0 %4665
  %v4667 = vsel %vm4519, %v4376, 0.0
  %4668 = vadd.xlane.f32.xlu0 %v4667
  %v4669 = vpop.xlane.xlu0 %4668
  %v4670 = vsel %vm4519, %v4377, 0.0
  %4671 = vadd.xlane.f32.xlu0 %v4670
  %v4672 = vpop.xlane.xlu0 %4671
  %v4673 = vsel %vm4519, %v4378, 0.0
  %4674 = vadd.xlane.f32.xlu0 %v4673
  %v4675 = vpop.xlane.xlu0 %4674
  %v4676 = vsel %vm4519, %v4379, 0.0
  %4677 = vadd.xlane.f32.xlu0 %v4676
  %v4678 = vpop.xlane.xlu0 %4677
  %v4679 = vsel %vm4519, %v4380, 0.0
  %4680 = vadd.xlane.f32.xlu0 %v4679
  %v4681 = vpop.xlane.xlu0 %4680
  %v4682 = vsel %vm4519, %v4381, 0.0
  %4683 = vadd.xlane.f32.xlu0 %v4682
  %v4684 = vpop.xlane.xlu0 %4683
  %v4685 = vsel %vm4519, %v4382, 0.0
  %4686 = vadd.xlane.f32.xlu0 %v4685
  %v4687 = vpop.xlane.xlu0 %4686
  %v4688 = vsel %vm4519, %v4383, 0.0
  %4689 = vadd.xlane.f32.xlu0 %v4688
  %v4690 = vpop.xlane.xlu0 %4689
  %v4691 = vsel %vm4519, %v4384, 0.0
  %4692 = vadd.xlane.f32.xlu0 %v4691
  %v4693 = vpop.xlane.xlu0 %4692
  %v4694 = vsel %vm4519, %v4385, 0.0
  %4695 = vadd.xlane.f32.xlu0 %v4694
  %v4696 = vpop.xlane.xlu0 %4695
  %v4697 = vsel %vm4519, %v4386, 0.0
  %4698 = vadd.xlane.f32.xlu0 %v4697
  %v4699 = vpop.xlane.xlu0 %4698
  %v4700 = vsel %vm4519, %v4387, 0.0
  %4701 = vadd.xlane.f32.xlu0 %v4700
  %v4702 = vpop.xlane.xlu0 %4701
  %v4703 = vsel %vm4519, %v4388, 0.0
  %4704 = vadd.xlane.f32.xlu0 %v4703
  %v4705 = vpop.xlane.xlu0 %4704
  %v4706 = vsel %vm4519, %v4389, 0.0
  %4707 = vadd.xlane.f32.xlu0 %v4706
  %v4708 = vpop.xlane.xlu0 %4707
  %v4709 = vsel %vm4519, %v4390, 0.0
  %4710 = vadd.xlane.f32.xlu0 %v4709
  %v4711 = vpop.xlane.xlu0 %4710
  %v4712 = vsel %vm4519, %v4407, 0.0
  %4713 = vadd.xlane.f32.xlu0 %v4712
  %v4714 = vpop.xlane.xlu0 %4713
  %v4715 = vsel %vm4519, %v4408, 0.0
  %4716 = vadd.xlane.f32.xlu0 %v4715
  %v4717 = vpop.xlane.xlu0 %4716
  %v4718 = vsel %vm4519, %v4409, 0.0
  %4719 = vadd.xlane.f32.xlu0 %v4718
  %v4720 = vpop.xlane.xlu0 %4719
  %v4721 = vsel %vm4519, %v4410, 0.0
  %4722 = vadd.xlane.f32.xlu0 %v4721
  %v4723 = vpop.xlane.xlu0 %4722
  %v4724 = vsel %vm4519, %v4411, 0.0
  %4725 = vadd.xlane.f32.xlu0 %v4724
  %v4726 = vpop.xlane.xlu0 %4725
  %v4727 = vsel %vm4519, %v4412, 0.0
  %4728 = vadd.xlane.f32.xlu0 %v4727
  %v4729 = vpop.xlane.xlu0 %4728
  %v4730 = vsel %vm4519, %v4413, 0.0
  %4731 = vadd.xlane.f32.xlu0 %v4730
  %v4732 = vpop.xlane.xlu0 %4731
  %v4733 = vsel %vm4519, %v4414, 0.0
  %4734 = vadd.xlane.f32.xlu0 %v4733
  %v4735 = vpop.xlane.xlu0 %4734
  %v4736 = vsel %vm4519, %v4415, 0.0
  %4737 = vadd.xlane.f32.xlu0 %v4736
  %v4738 = vpop.xlane.xlu0 %4737
  %v4739 = vsel %vm4519, %v4416, 0.0
  %4740 = vadd.xlane.f32.xlu0 %v4739
  %v4741 = vpop.xlane.xlu0 %4740
  %v4742 = vsel %vm4519, %v4417, 0.0
  %4743 = vadd.xlane.f32.xlu0 %v4742
  %v4744 = vpop.xlane.xlu0 %4743
  %v4745 = vsel %vm4519, %v4418, 0.0
  %4746 = vadd.xlane.f32.xlu0 %v4745
  %v4747 = vpop.xlane.xlu0 %4746
  %v4748 = vsel %vm4519, %v4419, 0.0
  %4749 = vadd.xlane.f32.xlu0 %v4748
  %v4750 = vpop.xlane.xlu0 %4749
  %v4751 = vsel %vm4519, %v4420, 0.0
  %4752 = vadd.xlane.f32.xlu0 %v4751
  %v4753 = vpop.xlane.xlu0 %4752
  %v4754 = vsel %vm4519, %v4421, 0.0
  %4755 = vadd.xlane.f32.xlu0 %v4754
  %v4756 = vpop.xlane.xlu0 %4755
  %v4757 = vsel %vm4519, %v4422, 0.0
  %4758 = vadd.xlane.f32.xlu0 %v4757
  %v4759 = vpop.xlane.xlu0 %4758
  %v4760 = vsel %vm4519, %v4439, 0.0
  %4761 = vadd.xlane.f32.xlu0 %v4760
  %v4762 = vpop.xlane.xlu0 %4761
  %v4763 = vsel %vm4519, %v4440, 0.0
  %4764 = vadd.xlane.f32.xlu0 %v4763
  %v4765 = vpop.xlane.xlu0 %4764
  %v4766 = vsel %vm4519, %v4441, 0.0
  %4767 = vadd.xlane.f32.xlu0 %v4766
  %v4768 = vpop.xlane.xlu0 %4767
  %v4769 = vsel %vm4519, %v4442, 0.0
  %4770 = vadd.xlane.f32.xlu0 %v4769
  %v4771 = vpop.xlane.xlu0 %4770
  %v4772 = vsel %vm4519, %v4443, 0.0
  %4773 = vadd.xlane.f32.xlu0 %v4772
  %v4774 = vpop.xlane.xlu0 %4773
  %v4775 = vsel %vm4519, %v4444, 0.0
  %4776 = vadd.xlane.f32.xlu0 %v4775
  %v4777 = vpop.xlane.xlu0 %4776
  %v4778 = vsel %vm4519, %v4445, 0.0
  %4779 = vadd.xlane.f32.xlu0 %v4778
  %v4780 = vpop.xlane.xlu0 %4779
  %v4781 = vsel %vm4519, %v4446, 0.0
  %4782 = vadd.xlane.f32.xlu0 %v4781
  %v4783 = vpop.xlane.xlu0 %4782
  %v4784 = vsel %vm4519, %v4447, 0.0
  %4785 = vadd.xlane.f32.xlu0 %v4784
  %v4786 = vpop.xlane.xlu0 %4785
  %v4787 = vsel %vm4519, %v4448, 0.0
  %4788 = vadd.xlane.f32.xlu0 %v4787
  %v4789 = vpop.xlane.xlu0 %4788
  %v4790 = vsel %vm4519, %v4449, 0.0
  %4791 = vadd.xlane.f32.xlu0 %v4790
  %v4792 = vpop.xlane.xlu0 %4791
  %v4793 = vsel %vm4519, %v4450, 0.0
  %4794 = vadd.xlane.f32.xlu0 %v4793
  %v4795 = vpop.xlane.xlu0 %4794
  %v4796 = vsel %vm4519, %v4451, 0.0
  %4797 = vadd.xlane.f32.xlu0 %v4796
  %v4798 = vpop.xlane.xlu0 %4797
  %v4799 = vsel %vm4519, %v4452, 0.0
  %4800 = vadd.xlane.f32.xlu0 %v4799
  %v4801 = vpop.xlane.xlu0 %4800
  %v4802 = vsel %vm4519, %v4453, 0.0
  %4803 = vadd.xlane.f32.xlu0 %v4802
  %v4804 = vpop.xlane.xlu0 %4803
  %v4805 = vsel %vm4519, %v4454, 0.0
  %4806 = vadd.xlane.f32.xlu0 %v4805
  %v4807 = vpop.xlane.xlu0 %4806
  %v4808 = vsel %vm4519, %v4471, 0.0
  %4809 = vadd.xlane.f32.xlu0 %v4808
  %v4810 = vpop.xlane.xlu0 %4809
  %v4811 = vsel %vm4519, %v4472, 0.0
  %4812 = vadd.xlane.f32.xlu0 %v4811
  %v4813 = vpop.xlane.xlu0 %4812
  %v4814 = vsel %vm4519, %v4473, 0.0
  %4815 = vadd.xlane.f32.xlu0 %v4814
  %v4816 = vpop.xlane.xlu0 %4815
  %v4817 = vsel %vm4519, %v4474, 0.0
  %4818 = vadd.xlane.f32.xlu0 %v4817
  %v4819 = vpop.xlane.xlu0 %4818
  %v4820 = vsel %vm4519, %v4475, 0.0
  %4821 = vadd.xlane.f32.xlu0 %v4820
  %v4822 = vpop.xlane.xlu0 %4821
  %v4823 = vsel %vm4519, %v4476, 0.0
  %4824 = vadd.xlane.f32.xlu0 %v4823
  %v4825 = vpop.xlane.xlu0 %4824
  %v4826 = vsel %vm4519, %v4477, 0.0
  %4827 = vadd.xlane.f32.xlu0 %v4826
  %v4828 = vpop.xlane.xlu0 %4827
  %v4829 = vsel %vm4519, %v4478, 0.0
  %4830 = vadd.xlane.f32.xlu0 %v4829
  %v4831 = vpop.xlane.xlu0 %4830
  %v4832 = vsel %vm4519, %v4479, 0.0
  %4833 = vadd.xlane.f32.xlu0 %v4832
  %v4834 = vpop.xlane.xlu0 %4833
  %v4835 = vsel %vm4519, %v4480, 0.0
  %4836 = vadd.xlane.f32.xlu0 %v4835
  %v4837 = vpop.xlane.xlu0 %4836
  %v4838 = vsel %vm4519, %v4481, 0.0
  %4839 = vadd.xlane.f32.xlu0 %v4838
  %v4840 = vpop.xlane.xlu0 %4839
  %v4841 = vsel %vm4519, %v4482, 0.0
  %4842 = vadd.xlane.f32.xlu0 %v4841
  %v4843 = vpop.xlane.xlu0 %4842
  %v4844 = vsel %vm4519, %v4483, 0.0
  %4845 = vadd.xlane.f32.xlu0 %v4844
  %v4846 = vpop.xlane.xlu0 %4845
  %v4847 = vsel %vm4519, %v4484, 0.0
  %4848 = vadd.xlane.f32.xlu0 %v4847
  %v4849 = vpop.xlane.xlu0 %4848
  %v4850 = vsel %vm4519, %v4485, 0.0
  %4851 = vadd.xlane.f32.xlu0 %v4850
  %v4852 = vpop.xlane.xlu0 %4851
  %v4853 = vsel %vm4519, %v4486, 0.0
  %4854 = vadd.xlane.f32.xlu0 %v4853
  %v4855 = vpop.xlane.xlu0 %4854
  %v4856 = vsel %vm4519, %v4503, 0.0
  %4857 = vadd.xlane.f32.xlu0 %v4856
  %v4858 = vpop.xlane.xlu0 %4857
  %v4859 = vsel %vm4519, %v4504, 0.0
  %4860 = vadd.xlane.f32.xlu0 %v4859
  %v4861 = vpop.xlane.xlu0 %4860
  %v4862 = vsel %vm4519, %v4505, 0.0
  %4863 = vadd.xlane.f32.xlu0 %v4862
  %v4864 = vpop.xlane.xlu0 %4863
  %v4865 = vsel %vm4519, %v4506, 0.0
  %4866 = vadd.xlane.f32.xlu0 %v4865
  %v4867 = vpop.xlane.xlu0 %4866
  %v4868 = vsel %vm4519, %v4507, 0.0
  %4869 = vadd.xlane.f32.xlu0 %v4868
  %v4870 = vpop.xlane.xlu0 %4869
  %v4871 = vsel %vm4519, %v4508, 0.0
  %4872 = vadd.xlane.f32.xlu0 %v4871
  %v4873 = vpop.xlane.xlu0 %4872
  %v4874 = vsel %vm4519, %v4509, 0.0
  %4875 = vadd.xlane.f32.xlu0 %v4874
  %v4876 = vpop.xlane.xlu0 %4875
  %v4877 = vsel %vm4519, %v4510, 0.0
  %4878 = vadd.xlane.f32.xlu0 %v4877
  %v4879 = vpop.xlane.xlu0 %4878
  %v4880 = vsel %vm4519, %v4511, 0.0
  %4881 = vadd.xlane.f32.xlu0 %v4880
  %v4882 = vpop.xlane.xlu0 %4881
  %v4883 = vsel %vm4519, %v4512, 0.0
  %4884 = vadd.xlane.f32.xlu0 %v4883
  %v4885 = vpop.xlane.xlu0 %4884
  %v4886 = vsel %vm4519, %v4513, 0.0
  %4887 = vadd.xlane.f32.xlu0 %v4886
  %v4888 = vpop.xlane.xlu0 %4887
  %v4889 = vsel %vm4519, %v4514, 0.0
  %4890 = vadd.xlane.f32.xlu0 %v4889
  %v4891 = vpop.xlane.xlu0 %4890
  %v4892 = vsel %vm4519, %v4515, 0.0
  %4893 = vadd.xlane.f32.xlu0 %v4892
  %v4894 = vpop.xlane.xlu0 %4893
  %v4895 = vsel %vm4519, %v4516, 0.0
  %4896 = vadd.xlane.f32.xlu0 %v4895
  %v4897 = vpop.xlane.xlu0 %4896
  %v4898 = vsel %vm4519, %v4517, 0.0
  %4899 = vadd.xlane.f32.xlu0 %v4898
  %v4900 = vpop.xlane.xlu0 %4899
  %v4901 = vsel %vm4519, %v4518, 0.0
  %4902 = vadd.xlane.f32.xlu0 %v4901
  %v4903 = vpop.xlane.xlu0 %4902
  %v4904 = vld [vmem:[%s0] sm:$0xf]
  %v4905 = vld [vmem:[%s0 + $0x4] sm:$0xf]
  %v4906 = vld [vmem:[%s0 + $0x8] sm:$0xf]
  %v4907 = vld [vmem:[%s0 + $0xc] sm:$0xf]
  %v4908 = vld [vmem:[%s0 + $0x10] sm:$0xf]
  %v4909 = vld [vmem:[%s0 + $0x14] sm:$0xf]
  %v4910 = vld [vmem:[%s0 + $0x18] sm:$0xf]
  %v4911 = vld [vmem:[%s0 + $0x1c] sm:$0xf]
  %v4912 = vpack.c.bf16 %v4525, %v4522
  %v4913 = vpack.c.bf16 %v4531, %v4528
  %v4914 = vpack.c.bf16 %v4537, %v4534
  %v4915 = vpack.c.bf16 %v4543, %v4540
  %v4916 = vpack.c.bf16 %v4549, %v4546
  %v4917 = vpack.c.bf16 %v4555, %v4552
  %v4918 = vpack.c.bf16 %v4561, %v4558
  %v4919 = vpack.c.bf16 %v4567, %v4564
  %v4920 = vpack.c.bf16 %v4573, %v4570
  %v4921 = vpack.c.bf16 %v4579, %v4576
  %v4922 = vpack.c.bf16 %v4585, %v4582
  %v4923 = vpack.c.bf16 %v4591, %v4588
  %v4924 = vpack.c.bf16 %v4597, %v4594
  %v4925 = vpack.c.bf16 %v4603, %v4600
  %v4926 = vpack.c.bf16 %v4609, %v4606
  %v4927 = vpack.c.bf16 %v4615, %v4612
  %v4928 = vpack.c.bf16 %v4621, %v4618
  %v4929 = vpack.c.bf16 %v4627, %v4624
  %v4930 = vpack.c.bf16 %v4633, %v4630
  %v4931 = vpack.c.bf16 %v4639, %v4636
  %v4932 = vpack.c.bf16 %v4645, %v4642
  %v4933 = vpack.c.bf16 %v4651, %v4648
  %v4934 = vpack.c.bf16 %v4657, %v4654
  %v4935 = vpack.c.bf16 %v4663, %v4660
  %v4936 = vpack.c.bf16 %v4669, %v4666
  %v4937 = vpack.c.bf16 %v4675, %v4672
  %v4938 = vpack.c.bf16 %v4681, %v4678
  %v4939 = vpack.c.bf16 %v4687, %v4684
  %v4940 = vpack.c.bf16 %v4693, %v4690
  %v4941 = vpack.c.bf16 %v4699, %v4696
  %v4942 = vpack.c.bf16 %v4705, %v4702
  %v4943 = vpack.c.bf16 %v4711, %v4708
  %v4944 = vpack.c.bf16 %v4717, %v4714
  %v4945 = vpack.c.bf16 %v4723, %v4720
  %v4946 = vpack.c.bf16 %v4729, %v4726
  %v4947 = vpack.c.bf16 %v4735, %v4732
  %v4948 = vpack.c.bf16 %v4741, %v4738
  %v4949 = vpack.c.bf16 %v4747, %v4744
  %v4950 = vpack.c.bf16 %v4753, %v4750
  %v4951 = vpack.c.bf16 %v4759, %v4756
  %v4952 = vpack.c.bf16 %v4765, %v4762
  %v4953 = vpack.c.bf16 %v4771, %v4768
  %v4954 = vpack.c.bf16 %v4777, %v4774
  %v4955 = vpack.c.bf16 %v4783, %v4780
  %v4956 = vpack.c.bf16 %v4789, %v4786
  %v4957 = vpack.c.bf16 %v4795, %v4792
  %v4958 = vpack.c.bf16 %v4801, %v4798
  %v4959 = vpack.c.bf16 %v4807, %v4804
  %v4960 = vpack.c.bf16 %v4813, %v4810
  %v4961 = vpack.c.bf16 %v4819, %v4816
  %v4962 = vpack.c.bf16 %v4825, %v4822
  %v4963 = vpack.c.bf16 %v4831, %v4828
  %v4964 = vpack.c.bf16 %v4837, %v4834
  %v4965 = vpack.c.bf16 %v4843, %v4840
  %v4966 = vpack.c.bf16 %v4849, %v4846
  %v4967 = vpack.c.bf16 %v4855, %v4852
  %v4968 = vpack.c.bf16 %v4861, %v4858
  %v4969 = vpack.c.bf16 %v4867, %v4864
  %v4970 = vpack.c.bf16 %v4873, %v4870
  %v4971 = vpack.c.bf16 %v4879, %v4876
  %v4972 = vpack.c.bf16 %v4885, %v4882
  %v4973 = vpack.c.bf16 %v4891, %v4888
  %v4974 = vpack.c.bf16 %v4897, %v4894
  %v4975 = vpack.c.bf16 %v4903, %v4900
  %v4976 = vlaneseq
  %v4977 = vshrl.u32 %v4976, 7
  %v4978 = vadd.s32 %v4977, 8
  %v4979 = vlaneseq
  %v4980 = vand.u32 %v4979, 127
  %vm4981 = vcmp.eq.s32.totalorder %v4980, %v4977
  %vm4982 = vcmp.eq.s32.totalorder %v4980, %v4978
  %v4983 = vsel %vm4981, 1, 0
  %v4984 = vsel %vm4982, 1, 0
  %v4985 = vcvt.s32.f32 %v4983
  %v4986 = vcvt.s32.f32 %v4984
  %v4987 = vadd.f32 %v4985, 0.0
  %v4988 = vadd.f32 %v4986, 0.0
  %v4989 = vadd.s32 %v4977, 16
  %v4990 = vadd.s32 %v4978, 16
  %vm4991 = vcmp.eq.s32.totalorder %v4980, %v4989
  %vm4992 = vcmp.eq.s32.totalorder %v4980, %v4990
  %v4993 = vsel %vm4991, 1, 0
  %v4994 = vsel %vm4992, 1, 0
  %v4995 = vcvt.s32.f32 %v4993
  %v4996 = vcvt.s32.f32 %v4994
  %v4997 = vadd.f32 %v4987, %v4995
  %v4998 = vadd.f32 %v4988, %v4996
  %v4999 = vadd.s32 %v4977, 32
  %v5000 = vadd.s32 %v4978, 32
  %vm5001 = vcmp.eq.s32.totalorder %v4980, %v4999
  %vm5002 = vcmp.eq.s32.totalorder %v4980, %v5000
  %v5003 = vsel %vm5001, 1, 0
  %v5004 = vsel %vm5002, 1, 0
  %v5005 = vcvt.s32.f32 %v5003
  %v5006 = vcvt.s32.f32 %v5004
  %v5007 = vadd.f32 %v4997, %v5005
  %v5008 = vadd.f32 %v4998, %v5006
  %v5009 = vadd.s32 %v4977, 48
  %v5010 = vadd.s32 %v4978, 48
  %vm5011 = vcmp.eq.s32.totalorder %v4980, %v5009
  %vm5012 = vcmp.eq.s32.totalorder %v4980, %v5010
  %v5013 = vsel %vm5011, 1, 0
  %v5014 = vsel %vm5012, 1, 0
  %v5015 = vcvt.s32.f32 %v5013
  %v5016 = vcvt.s32.f32 %v5014
  %v5017 = vadd.f32 %v5007, %v5015
  %v5018 = vadd.f32 %v5008, %v5016
  %v5019 = vpack.c.bf16 %v5018, %v5017
  %v5020 = vadd.s32 %v4977, 24
  %v5021 = vadd.s32 %v4977, 40
  %v5022 = vadd.s32 %v4977, 56
  %vm5023 = vcmp.ge.s32.totalorder %v4977, 16
  %vm5024 = vcmp.ge.s32.totalorder %v4978, 16
  %vm5025 = vcmp.ge.s32.totalorder %v4989, 16
  %vm5026 = vcmp.ge.s32.totalorder %v5020, 16
  %vm5027 = vcmp.ge.s32.totalorder %v4999, 16
  %vm5028 = vcmp.ge.s32.totalorder %v5021, 16
  %vm5029 = vcmp.ge.s32.totalorder %v5009, 16
  %vm5030 = vcmp.ge.s32.totalorder %v5022, 16
  %v5031 = vsel %vm5023, 1, 0
  %v5032 = vsel %vm5024, 1, 0
  %v5033 = vsel %vm5025, 1, 0
  %v5034 = vsel %vm5026, 1, 0
  %v5035 = vsel %vm5027, 1, 0
  %v5036 = vsel %vm5028, 1, 0
  %v5037 = vsel %vm5029, 1, 0
  %v5038 = vsel %vm5030, 1, 0
  %vm5039 = vcmp.ge.s32.totalorder %v4980, 16
  %v5040 = vsel %vm5039, 1, 0
  %vm5041 = vcmp.ge.s32.totalorder %v4977, 32
  %vm5042 = vcmp.ge.s32.totalorder %v4978, 32
  %vm5043 = vcmp.ge.s32.totalorder %v4989, 32
  %vm5044 = vcmp.ge.s32.totalorder %v5020, 32
  %vm5045 = vcmp.ge.s32.totalorder %v4999, 32
  %vm5046 = vcmp.ge.s32.totalorder %v5021, 32
  %vm5047 = vcmp.ge.s32.totalorder %v5009, 32
  %vm5048 = vcmp.ge.s32.totalorder %v5022, 32
  %v5049 = vsel %vm5041, 1, 0
  %v5050 = vsel %vm5042, 1, 0
  %v5051 = vsel %vm5043, 1, 0
  %v5052 = vsel %vm5044, 1, 0
  %v5053 = vsel %vm5045, 1, 0
  %v5054 = vsel %vm5046, 1, 0
  %v5055 = vsel %vm5047, 1, 0
  %v5056 = vsel %vm5048, 1, 0
  %v5057 = vadd.s32 %v5031, %v5049
  %v5058 = vadd.s32 %v5032, %v5050
  %v5059 = vadd.s32 %v5033, %v5051
  %v5060 = vadd.s32 %v5034, %v5052
  %v5061 = vadd.s32 %v5035, %v5053
  %v5062 = vadd.s32 %v5036, %v5054
  %v5063 = vadd.s32 %v5037, %v5055
  %v5064 = vadd.s32 %v5038, %v5056
  %vm5065 = vcmp.ge.s32.totalorder %v4980, 32
  %v5066 = vsel %vm5065, 1, 0
  %v5067 = vadd.s32 %v5040, %v5066
  %vm5068 = vcmp.ge.s32.totalorder %v4977, 48
  %vm5069 = vcmp.ge.s32.totalorder %v4978, 48
  %vm5070 = vcmp.ge.s32.totalorder %v4989, 48
  %vm5071 = vcmp.ge.s32.totalorder %v5020, 48
  %vm5072 = vcmp.ge.s32.totalorder %v4999, 48
  %vm5073 = vcmp.ge.s32.totalorder %v5021, 48
  %vm5074 = vcmp.ge.s32.totalorder %v5009, 48
  %vm5075 = vcmp.ge.s32.totalorder %v5022, 48
  %v5076 = vsel %vm5068, 1, 0
  %v5077 = vsel %vm5069, 1, 0
  %v5078 = vsel %vm5070, 1, 0
  %v5079 = vsel %vm5071, 1, 0
  %v5080 = vsel %vm5072, 1, 0
  %v5081 = vsel %vm5073, 1, 0
  %v5082 = vsel %vm5074, 1, 0
  %v5083 = vsel %vm5075, 1, 0
  %v5084 = vadd.s32 %v5057, %v5076
  %v5085 = vadd.s32 %v5058, %v5077
  %v5086 = vadd.s32 %v5059, %v5078
  %v5087 = vadd.s32 %v5060, %v5079
  %v5088 = vadd.s32 %v5061, %v5080
  %v5089 = vadd.s32 %v5062, %v5081
  %v5090 = vadd.s32 %v5063, %v5082
  %v5091 = vadd.s32 %v5064, %v5083
  %vm5092 = vcmp.ge.s32.totalorder %v4980, 48
  %v5093 = vsel %vm5092, 1, 0
  %v5094 = vadd.s32 %v5067, %v5093
  %vm5095 = vcmp.eq.s32.totalorder %v5084, %v5094
  %vm5096 = vcmp.eq.s32.totalorder %v5085, %v5094
  %vm5097 = vcmp.eq.s32.totalorder %v5086, %v5094
  %vm5098 = vcmp.eq.s32.totalorder %v5087, %v5094
  %vm5099 = vcmp.eq.s32.totalorder %v5088, %v5094
  %vm5100 = vcmp.eq.s32.totalorder %v5089, %v5094
  %vm5101 = vcmp.eq.s32.totalorder %v5090, %v5094
  %vm5102 = vcmp.eq.s32.totalorder %v5091, %v5094
  %v5111 = vunpack.c.l.b16 %v4904
  %v5112 = vunpack.c.l.b16 %v4905
  %v5113 = vunpack.c.l.b16 %v4906
  %v5114 = vunpack.c.l.b16 %v4907
  %v5115 = vunpack.c.l.b16 %v4908
  %v5116 = vunpack.c.l.b16 %v4909
  %v5117 = vunpack.c.l.b16 %v4910
  %v5118 = vunpack.c.l.b16 %v4911
  %v5119 = vpack.c.b16 %v5112, %v5111
  %v5120 = vpack.c.b16 %v5114, %v5113
  %v5121 = vpack.c.b16 %v5116, %v5115
  %v5122 = vpack.c.b16 %v5118, %v5117
  %vm5123 = vcmask 130048
  %v5125 = vsel %vm5123, %v5119, 0
  %v5128 = vsel %vm5123, %v5120, 0
  %v5131 = vsel %vm5123, %v5121, 0
  %v5134 = vsel %vm5123, %v5122, 0
  %5136 = vmatprep.subr.bf16.mxu0 0
  %5137 = vmatpush1.bf16.msra.mxu0 0
  %5138 = vmatprep.subr.bf16.mxu0 0
  %5139 = vmatpush1.bf16.msra.mxu0 0
  %5140 = vmatprep.subr.bf16.mxu0 0
  %5141 = vmatpush1.bf16.msra.mxu0 0
  %5142 = vmatprep.subr.bf16.mxu0 0
  %5143 = vmatpush1.bf16.msra.mxu0 0
  %5144 = vmatprep.subr.bf16.mxu0 0
  %5145 = vmatpush1.bf16.msra.mxu0 0
  %5146 = vmatprep.subr.bf16.mxu0 0
  %5147 = vmatpush1.bf16.msra.mxu0 0
  %5148 = vmatprep.subr.bf16.mxu0 0
  %5149 = vmatpush1.bf16.msra.mxu0 0
  %5150 = vmatprep.subr.bf16.mxu0 0
  %5151 = vmatpush1.bf16.msra.mxu0 %v5019
  %5152 = vmatprep.subr.bf16.mxu0 0
  %5153 = vmatpush2.bf16.msra.mxu0 0
  %5154 = vmatprep.subr.bf16.mxu0 0
  %5155 = vmatpush2.bf16.msra.mxu0 0
  %5156 = vmatprep.subr.bf16.mxu0 0
  %5157 = vmatpush2.bf16.msra.mxu0 0
  %5158 = vmatprep.subr.bf16.mxu0 0
  %5159 = vmatpush2.bf16.msra.mxu0 0
  %5160 = vmatprep.subr.bf16.mxu0 0
  %5161 = vmatpush2.bf16.msra.mxu0 0
  %5162 = vmatprep.subr.bf16.mxu0 0
  %5163 = vmatpush2.bf16.msra.mxu0 0
  %5164 = vmatprep.subr.bf16.mxu0 0
  %5165 = vmatpush2.bf16.msra.mxu0 0
  %5166 = vmatprep.subr.bf16.mxu0 0
  %5167 = vmatpush2.bf16.msra.mxu0 0
  %5168 = vmatprep.mubr.bf16.mxu0 0
  %5169 = vmatmul.mubr.bf16.gmra.mxu0 %v5125
  %v5170 = vpop.f32.mrf.mxu0
  %v5171 = vadd.f32 0.0, %v5170
  %v5172 = vpop.f32.mrf.mxu0
  %v5173 = vpop.f32.mrf.mxu0
  %v5174 = vadd.f32 0.0, %v5173
  %v5175 = vpop.f32.mrf.mxu0
  %5176 = vmatprep.mubr.bf16.mxu0 0
  %5177 = vmatmul.mubr.bf16.gmra.mxu0 %v5128
  %v5178 = vpop.f32.mrf.mxu0
  %v5179 = vadd.f32 0.0, %v5178
  %v5180 = vpop.f32.mrf.mxu0
  %v5181 = vpop.f32.mrf.mxu0
  %v5182 = vadd.f32 0.0, %v5181
  %v5183 = vpop.f32.mrf.mxu0
  %5184 = vmatprep.mubr.bf16.mxu0 0
  %5185 = vmatmul.mubr.bf16.gmra.mxu0 %v5131
  %v5186 = vpop.f32.mrf.mxu0
  %v5187 = vadd.f32 0.0, %v5186
  %v5188 = vpop.f32.mrf.mxu0
  %v5189 = vpop.f32.mrf.mxu0
  %v5190 = vadd.f32 0.0, %v5189
  %v5191 = vpop.f32.mrf.mxu0
  %5192 = vmatprep.mubr.bf16.mxu0 0
  %5193 = vmatmul.mubr.bf16.gmra.mxu0 %v5134
  %v5194 = vpop.f32.mrf.mxu0
  %v5195 = vadd.f32 0.0, %v5194
  %v5196 = vpop.f32.mrf.mxu0
  %v5197 = vpop.f32.mrf.mxu0
  %v5198 = vadd.f32 0.0, %v5197
  %v5199 = vpop.f32.mrf.mxu0
  %5200 = vdwg.mxu0
  %v5201 = vsel %vm5095, %v5171, 0.0
  %v5202 = vsel %vm5096, %v5174, 0.0
  %v5203 = vsel %vm5097, %v5179, 0.0
  %v5204 = vsel %vm5098, %v5182, 0.0
  %v5205 = vsel %vm5099, %v5187, 0.0
  %v5206 = vsel %vm5100, %v5190, 0.0
  %v5207 = vsel %vm5101, %v5195, 0.0
  %v5208 = vsel %vm5102, %v5198, 0.0
  %v5209 = vpack.c.bf16 %v5202, %v5201
  %v5210 = vpack.c.bf16 %v5204, %v5203
  %v5211 = vpack.c.bf16 %v5206, %v5205
  %v5212 = vpack.c.bf16 %v5208, %v5207
  %v5277 = vunpack.c.l.b16 %v4912
  %v5278 = vunpack.c.h.b16 %v4912
  %v5279 = vunpack.c.l.b16 %v4913
  %v5280 = vunpack.c.h.b16 %v4913
  %v5281 = vunpack.c.l.b16 %v4914
  %v5282 = vunpack.c.h.b16 %v4914
  %v5283 = vunpack.c.l.b16 %v4915
  %v5284 = vunpack.c.h.b16 %v4915
  %v5285 = vunpack.c.l.b16 %v4916
  %v5286 = vunpack.c.h.b16 %v4916
  %v5287 = vunpack.c.l.b16 %v4917
  %v5288 = vunpack.c.h.b16 %v4917
  %v5289 = vunpack.c.l.b16 %v4918
  %v5290 = vunpack.c.h.b16 %v4918
  %v5291 = vunpack.c.l.b16 %v4919
  %v5292 = vunpack.c.h.b16 %v4919
  %v5293 = vunpack.c.l.b16 %v4920
  %v5294 = vunpack.c.h.b16 %v4920
  %v5295 = vunpack.c.l.b16 %v4921
  %v5296 = vunpack.c.h.b16 %v4921
  %v5297 = vunpack.c.l.b16 %v4922
  %v5298 = vunpack.c.h.b16 %v4922
  %v5299 = vunpack.c.l.b16 %v4923
  %v5300 = vunpack.c.h.b16 %v4923
  %v5301 = vunpack.c.l.b16 %v4924
  %v5302 = vunpack.c.h.b16 %v4924
  %v5303 = vunpack.c.l.b16 %v4925
  %v5304 = vunpack.c.h.b16 %v4925
  %v5305 = vunpack.c.l.b16 %v4926
  %v5306 = vunpack.c.h.b16 %v4926
  %v5307 = vunpack.c.l.b16 %v4927
  %v5308 = vunpack.c.h.b16 %v4927
  %v5309 = vunpack.c.l.b16 %v4928
  %v5310 = vunpack.c.h.b16 %v4928
  %v5311 = vunpack.c.l.b16 %v4929
  %v5312 = vunpack.c.h.b16 %v4929
  %v5313 = vunpack.c.l.b16 %v4930
  %v5314 = vunpack.c.h.b16 %v4930
  %v5315 = vunpack.c.l.b16 %v4931
  %v5316 = vunpack.c.h.b16 %v4931
  %v5317 = vunpack.c.l.b16 %v4932
  %v5318 = vunpack.c.h.b16 %v4932
  %v5319 = vunpack.c.l.b16 %v4933
  %v5320 = vunpack.c.h.b16 %v4933
  %v5321 = vunpack.c.l.b16 %v4934
  %v5322 = vunpack.c.h.b16 %v4934
  %v5323 = vunpack.c.l.b16 %v4935
  %v5324 = vunpack.c.h.b16 %v4935
  %v5325 = vunpack.c.l.b16 %v4936
  %v5326 = vunpack.c.h.b16 %v4936
  %v5327 = vunpack.c.l.b16 %v4937
  %v5328 = vunpack.c.h.b16 %v4937
  %v5329 = vunpack.c.l.b16 %v4938
  %v5330 = vunpack.c.h.b16 %v4938
  %v5331 = vunpack.c.l.b16 %v4939
  %v5332 = vunpack.c.h.b16 %v4939
  %v5333 = vunpack.c.l.b16 %v4940
  %v5334 = vunpack.c.h.b16 %v4940
  %v5335 = vunpack.c.l.b16 %v4941
  %v5336 = vunpack.c.h.b16 %v4941
  %v5337 = vunpack.c.l.b16 %v4942
  %v5338 = vunpack.c.h.b16 %v4942
  %v5339 = vunpack.c.l.b16 %v4943
  %v5340 = vunpack.c.h.b16 %v4943
  %v5341 = vunpack.c.l.b16 %v4944
  %v5342 = vunpack.c.h.b16 %v4944
  %v5343 = vunpack.c.l.b16 %v4945
  %v5344 = vunpack.c.h.b16 %v4945
  %v5345 = vunpack.c.l.b16 %v4946
  %v5346 = vunpack.c.h.b16 %v4946
  %v5347 = vunpack.c.l.b16 %v4947
  %v5348 = vunpack.c.h.b16 %v4947
  %v5349 = vunpack.c.l.b16 %v4948
  %v5350 = vunpack.c.h.b16 %v4948
  %v5351 = vunpack.c.l.b16 %v4949
  %v5352 = vunpack.c.h.b16 %v4949
  %v5353 = vunpack.c.l.b16 %v4950
  %v5354 = vunpack.c.h.b16 %v4950
  %v5355 = vunpack.c.l.b16 %v4951
  %v5356 = vunpack.c.h.b16 %v4951
  %v5357 = vunpack.c.l.b16 %v4952
  %v5358 = vunpack.c.h.b16 %v4952
  %v5359 = vunpack.c.l.b16 %v4953
  %v5360 = vunpack.c.h.b16 %v4953
  %v5361 = vunpack.c.l.b16 %v4954
  %v5362 = vunpack.c.h.b16 %v4954
  %v5363 = vunpack.c.l.b16 %v4955
  %v5364 = vunpack.c.h.b16 %v4955
  %v5365 = vunpack.c.l.b16 %v4956
  %v5366 = vunpack.c.h.b16 %v4956
  %v5367 = vunpack.c.l.b16 %v4957
  %v5368 = vunpack.c.h.b16 %v4957
  %v5369 = vunpack.c.l.b16 %v4958
  %v5370 = vunpack.c.h.b16 %v4958
  %v5371 = vunpack.c.l.b16 %v4959
  %v5372 = vunpack.c.h.b16 %v4959
  %v5373 = vunpack.c.l.b16 %v4960
  %v5374 = vunpack.c.h.b16 %v4960
  %v5375 = vunpack.c.l.b16 %v4961
  %v5376 = vunpack.c.h.b16 %v4961
  %v5377 = vunpack.c.l.b16 %v4962
  %v5378 = vunpack.c.h.b16 %v4962
  %v5379 = vunpack.c.l.b16 %v4963
  %v5380 = vunpack.c.h.b16 %v4963
  %v5381 = vunpack.c.l.b16 %v4964
  %v5382 = vunpack.c.h.b16 %v4964
  %v5383 = vunpack.c.l.b16 %v4965
  %v5384 = vunpack.c.h.b16 %v4965
  %v5385 = vunpack.c.l.b16 %v4966
  %v5386 = vunpack.c.h.b16 %v4966
  %v5387 = vunpack.c.l.b16 %v4967
  %v5388 = vunpack.c.h.b16 %v4967
  %v5389 = vunpack.c.l.b16 %v4968
  %v5390 = vunpack.c.h.b16 %v4968
  %v5391 = vunpack.c.l.b16 %v4969
  %v5392 = vunpack.c.h.b16 %v4969
  %v5393 = vunpack.c.l.b16 %v4970
  %v5394 = vunpack.c.h.b16 %v4970
  %v5395 = vunpack.c.l.b16 %v4971
  %v5396 = vunpack.c.h.b16 %v4971
  %v5397 = vunpack.c.l.b16 %v4972
  %v5398 = vunpack.c.h.b16 %v4972
  %v5399 = vunpack.c.l.b16 %v4973
  %v5400 = vunpack.c.h.b16 %v4973
  %v5401 = vunpack.c.l.b16 %v4974
  %v5402 = vunpack.c.h.b16 %v4974
  %v5403 = vunpack.c.l.b16 %v4975
  %v5404 = vunpack.c.h.b16 %v4975
  %v5405 = vlaneseq
  %v5406 = vshrl.u32 %v5405, 7
  %v5407 = vsub.s32 %v4980, %v5406
  %v5408 = vrot.slane %v5277, %v5407
  %v5409 = vadd.s32 %v4980, 4294967288
  %v5410 = vlaneseq
  %v5411 = vshrl.u32 %v5410, 7
  %v5412 = vsub.s32 %v5409, %v5411
  %v5413 = vrot.slane %v5278, %v5412
  %vm5414 = vcmask 130112
  %v5415 = vsel %vm5414, %v5413, %v5408
  %v5416 = vlaneseq
  %v5417 = vshrl.u32 %v5416, 7
  %v5418 = vsub.s32 %v4980, %v5417
  %v5419 = vrot.slane %v5279, %v5418
  %v5420 = vlaneseq
  %v5421 = vshrl.u32 %v5420, 7
  %v5422 = vsub.s32 %v5409, %v5421
  %v5423 = vrot.slane %v5280, %v5422
  %v5424 = vsel %vm5414, %v5423, %v5419
  %v5425 = vlaneseq
  %v5426 = vshrl.u32 %v5425, 7
  %v5427 = vsub.s32 %v4980, %v5426
  %v5428 = vrot.slane %v5281, %v5427
  %v5429 = vlaneseq
  %v5430 = vshrl.u32 %v5429, 7
  %v5431 = vsub.s32 %v5409, %v5430
  %v5432 = vrot.slane %v5282, %v5431
  %v5433 = vsel %vm5414, %v5432, %v5428
  %v5434 = vlaneseq
  %v5435 = vshrl.u32 %v5434, 7
  %v5436 = vsub.s32 %v4980, %v5435
  %v5437 = vrot.slane %v5283, %v5436
  %v5438 = vlaneseq
  %v5439 = vshrl.u32 %v5438, 7
  %v5440 = vsub.s32 %v5409, %v5439
  %v5441 = vrot.slane %v5284, %v5440
  %v5442 = vsel %vm5414, %v5441, %v5437
  %v5443 = vlaneseq
  %v5444 = vshrl.u32 %v5443, 7
  %v5445 = vsub.s32 %v4980, %v5444
  %v5446 = vrot.slane %v5285, %v5445
  %v5447 = vlaneseq
  %v5448 = vshrl.u32 %v5447, 7
  %v5449 = vsub.s32 %v5409, %v5448
  %v5450 = vrot.slane %v5286, %v5449
  %v5451 = vsel %vm5414, %v5450, %v5446
  %v5452 = vlaneseq
  %v5453 = vshrl.u32 %v5452, 7
  %v5454 = vsub.s32 %v4980, %v5453
  %v5455 = vrot.slane %v5287, %v5454
  %v5456 = vlaneseq
  %v5457 = vshrl.u32 %v5456, 7
  %v5458 = vsub.s32 %v5409, %v5457
  %v5459 = vrot.slane %v5288, %v5458
  %v5460 = vsel %vm5414, %v5459, %v5455
  %v5461 = vlaneseq
  %v5462 = vshrl.u32 %v5461, 7
  %v5463 = vsub.s32 %v4980, %v5462
  %v5464 = vrot.slane %v5289, %v5463
  %v5465 = vlaneseq
  %v5466 = vshrl.u32 %v5465, 7
  %v5467 = vsub.s32 %v5409, %v5466
  %v5468 = vrot.slane %v5290, %v5467
  %v5469 = vsel %vm5414, %v5468, %v5464
  %v5470 = vlaneseq
  %v5471 = vshrl.u32 %v5470, 7
  %v5472 = vsub.s32 %v4980, %v5471
  %v5473 = vrot.slane %v5291, %v5472
  %v5474 = vlaneseq
  %v5475 = vshrl.u32 %v5474, 7
  %v5476 = vsub.s32 %v5409, %v5475
  %v5477 = vrot.slane %v5292, %v5476
  %v5478 = vsel %vm5414, %v5477, %v5473
  %v5479 = vlaneseq
  %v5480 = vshrl.u32 %v5479, 7
  %v5481 = vsub.s32 %v4980, %v5480
  %v5482 = vrot.slane %v5293, %v5481
  %v5483 = vlaneseq
  %v5484 = vshrl.u32 %v5483, 7
  %v5485 = vsub.s32 %v5409, %v5484
  %v5486 = vrot.slane %v5294, %v5485
  %v5487 = vsel %vm5414, %v5486, %v5482
  %v5488 = vlaneseq
  %v5489 = vshrl.u32 %v5488, 7
  %v5490 = vsub.s32 %v4980, %v5489
  %v5491 = vrot.slane %v5295, %v5490
  %v5492 = vlaneseq
  %v5493 = vshrl.u32 %v5492, 7
  %v5494 = vsub.s32 %v5409, %v5493
  %v5495 = vrot.slane %v5296, %v5494
  %v5496 = vsel %vm5414, %v5495, %v5491
  %v5497 = vlaneseq
  %v5498 = vshrl.u32 %v5497, 7
  %v5499 = vsub.s32 %v4980, %v5498
  %v5500 = vrot.slane %v5297, %v5499
  %v5501 = vlaneseq
  %v5502 = vshrl.u32 %v5501, 7
  %v5503 = vsub.s32 %v5409, %v5502
  %v5504 = vrot.slane %v5298, %v5503
  %v5505 = vsel %vm5414, %v5504, %v5500
  %v5506 = vlaneseq
  %v5507 = vshrl.u32 %v5506, 7
  %v5508 = vsub.s32 %v4980, %v5507
  %v5509 = vrot.slane %v5299, %v5508
  %v5510 = vlaneseq
  %v5511 = vshrl.u32 %v5510, 7
  %v5512 = vsub.s32 %v5409, %v5511
  %v5513 = vrot.slane %v5300, %v5512
  %v5514 = vsel %vm5414, %v5513, %v5509
  %v5515 = vlaneseq
  %v5516 = vshrl.u32 %v5515, 7
  %v5517 = vsub.s32 %v4980, %v5516
  %v5518 = vrot.slane %v5301, %v5517
  %v5519 = vlaneseq
  %v5520 = vshrl.u32 %v5519, 7
  %v5521 = vsub.s32 %v5409, %v5520
  %v5522 = vrot.slane %v5302, %v5521
  %v5523 = vsel %vm5414, %v5522, %v5518
  %v5524 = vlaneseq
  %v5525 = vshrl.u32 %v5524, 7
  %v5526 = vsub.s32 %v4980, %v5525
  %v5527 = vrot.slane %v5303, %v5526
  %v5528 = vlaneseq
  %v5529 = vshrl.u32 %v5528, 7
  %v5530 = vsub.s32 %v5409, %v5529
  %v5531 = vrot.slane %v5304, %v5530
  %v5532 = vsel %vm5414, %v5531, %v5527
  %v5533 = vlaneseq
  %v5534 = vshrl.u32 %v5533, 7
  %v5535 = vsub.s32 %v4980, %v5534
  %v5536 = vrot.slane %v5305, %v5535
  %v5537 = vlaneseq
  %v5538 = vshrl.u32 %v5537, 7
  %v5539 = vsub.s32 %v5409, %v5538
  %v5540 = vrot.slane %v5306, %v5539
  %v5541 = vsel %vm5414, %v5540, %v5536
  %v5542 = vlaneseq
  %v5543 = vshrl.u32 %v5542, 7
  %v5544 = vsub.s32 %v4980, %v5543
  %v5545 = vrot.slane %v5307, %v5544
  %v5546 = vlaneseq
  %v5547 = vshrl.u32 %v5546, 7
  %v5548 = vsub.s32 %v5409, %v5547
  %v5549 = vrot.slane %v5308, %v5548
  %v5550 = vsel %vm5414, %v5549, %v5545
  %v5551 = vlaneseq
  %v5552 = vshrl.u32 %v5551, 7
  %v5553 = vsub.s32 %v4980, %v5552
  %v5554 = vrot.slane %v5309, %v5553
  %v5555 = vlaneseq
  %v5556 = vshrl.u32 %v5555, 7
  %v5557 = vsub.s32 %v5409, %v5556
  %v5558 = vrot.slane %v5310, %v5557
  %v5559 = vsel %vm5414, %v5558, %v5554
  %v5560 = vlaneseq
  %v5561 = vshrl.u32 %v5560, 7
  %v5562 = vsub.s32 %v4980, %v5561
  %v5563 = vrot.slane %v5311, %v5562
  %v5564 = vlaneseq
  %v5565 = vshrl.u32 %v5564, 7
  %v5566 = vsub.s32 %v5409, %v5565
  %v5567 = vrot.slane %v5312, %v5566
  %v5568 = vsel %vm5414, %v5567, %v5563
  %v5569 = vlaneseq
  %v5570 = vshrl.u32 %v5569, 7
  %v5571 = vsub.s32 %v4980, %v5570
  %v5572 = vrot.slane %v5313, %v5571
  %v5573 = vlaneseq
  %v5574 = vshrl.u32 %v5573, 7
  %v5575 = vsub.s32 %v5409, %v5574
  %v5576 = vrot.slane %v5314, %v5575
  %v5577 = vsel %vm5414, %v5576, %v5572
  %v5578 = vlaneseq
  %v5579 = vshrl.u32 %v5578, 7
  %v5580 = vsub.s32 %v4980, %v5579
  %v5581 = vrot.slane %v5315, %v5580
  %v5582 = vlaneseq
  %v5583 = vshrl.u32 %v5582, 7
  %v5584 = vsub.s32 %v5409, %v5583
  %v5585 = vrot.slane %v5316, %v5584
  %v5586 = vsel %vm5414, %v5585, %v5581
  %v5587 = vlaneseq
  %v5588 = vshrl.u32 %v5587, 7
  %v5589 = vsub.s32 %v4980, %v5588
  %v5590 = vrot.slane %v5317, %v5589
  %v5591 = vlaneseq
  %v5592 = vshrl.u32 %v5591, 7
  %v5593 = vsub.s32 %v5409, %v5592
  %v5594 = vrot.slane %v5318, %v5593
  %v5595 = vsel %vm5414, %v5594, %v5590
  %v5596 = vlaneseq
  %v5597 = vshrl.u32 %v5596, 7
  %v5598 = vsub.s32 %v4980, %v5597
  %v5599 = vrot.slane %v5319, %v5598
  %v5600 = vlaneseq
  %v5601 = vshrl.u32 %v5600, 7
  %v5602 = vsub.s32 %v5409, %v5601
  %v5603 = vrot.slane %v5320, %v5602
  %v5604 = vsel %vm5414, %v5603, %v5599
  %v5605 = vlaneseq
  %v5606 = vshrl.u32 %v5605, 7
  %v5607 = vsub.s32 %v4980, %v5606
  %v5608 = vrot.slane %v5321, %v5607
  %v5609 = vlaneseq
  %v5610 = vshrl.u32 %v5609, 7
  %v5611 = vsub.s32 %v5409, %v5610
  %v5612 = vrot.slane %v5322, %v5611
  %v5613 = vsel %vm5414, %v5612, %v5608
  %v5614 = vlaneseq
  %v5615 = vshrl.u32 %v5614, 7
  %v5616 = vsub.s32 %v4980, %v5615
  %v5617 = vrot.slane %v5323, %v5616
  %v5618 = vlaneseq
  %v5619 = vshrl.u32 %v5618, 7
  %v5620 = vsub.s32 %v5409, %v5619
  %v5621 = vrot.slane %v5324, %v5620
  %v5622 = vsel %vm5414, %v5621, %v5617
  %v5623 = vlaneseq
  %v5624 = vshrl.u32 %v5623, 7
  %v5625 = vsub.s32 %v4980, %v5624
  %v5626 = vrot.slane %v5325, %v5625
  %v5627 = vlaneseq
  %v5628 = vshrl.u32 %v5627, 7
  %v5629 = vsub.s32 %v5409, %v5628
  %v5630 = vrot.slane %v5326, %v5629
  %v5631 = vsel %vm5414, %v5630, %v5626
  %v5632 = vlaneseq
  %v5633 = vshrl.u32 %v5632, 7
  %v5634 = vsub.s32 %v4980, %v5633
  %v5635 = vrot.slane %v5327, %v5634
  %v5636 = vlaneseq
  %v5637 = vshrl.u32 %v5636, 7
  %v5638 = vsub.s32 %v5409, %v5637
  %v5639 = vrot.slane %v5328, %v5638
  %v5640 = vsel %vm5414, %v5639, %v5635
  %v5641 = vlaneseq
  %v5642 = vshrl.u32 %v5641, 7
  %v5643 = vsub.s32 %v4980, %v5642
  %v5644 = vrot.slane %v5329, %v5643
  %v5645 = vlaneseq
  %v5646 = vshrl.u32 %v5645, 7
  %v5647 = vsub.s32 %v5409, %v5646
  %v5648 = vrot.slane %v5330, %v5647
  %v5649 = vsel %vm5414, %v5648, %v5644
  %v5650 = vlaneseq
  %v5651 = vshrl.u32 %v5650, 7
  %v5652 = vsub.s32 %v4980, %v5651
  %v5653 = vrot.slane %v5331, %v5652
  %v5654 = vlaneseq
  %v5655 = vshrl.u32 %v5654, 7
  %v5656 = vsub.s32 %v5409, %v5655
  %v5657 = vrot.slane %v5332, %v5656
  %v5658 = vsel %vm5414, %v5657, %v5653
  %v5659 = vlaneseq
  %v5660 = vshrl.u32 %v5659, 7
  %v5661 = vsub.s32 %v4980, %v5660
  %v5662 = vrot.slane %v5333, %v5661
  %v5663 = vlaneseq
  %v5664 = vshrl.u32 %v5663, 7
  %v5665 = vsub.s32 %v5409, %v5664
  %v5666 = vrot.slane %v5334, %v5665
  %v5667 = vsel %vm5414, %v5666, %v5662
  %v5668 = vlaneseq
  %v5669 = vshrl.u32 %v5668, 7
  %v5670 = vsub.s32 %v4980, %v5669
  %v5671 = vrot.slane %v5335, %v5670
  %v5672 = vlaneseq
  %v5673 = vshrl.u32 %v5672, 7
  %v5674 = vsub.s32 %v5409, %v5673
  %v5675 = vrot.slane %v5336, %v5674
  %v5676 = vsel %vm5414, %v5675, %v5671
  %v5677 = vlaneseq
  %v5678 = vshrl.u32 %v5677, 7
  %v5679 = vsub.s32 %v4980, %v5678
  %v5680 = vrot.slane %v5337, %v5679
  %v5681 = vlaneseq
  %v5682 = vshrl.u32 %v5681, 7
  %v5683 = vsub.s32 %v5409, %v5682
  %v5684 = vrot.slane %v5338, %v5683
  %v5685 = vsel %vm5414, %v5684, %v5680
  %v5686 = vlaneseq
  %v5687 = vshrl.u32 %v5686, 7
  %v5688 = vsub.s32 %v4980, %v5687
  %v5689 = vrot.slane %v5339, %v5688
  %v5690 = vlaneseq
  %v5691 = vshrl.u32 %v5690, 7
  %v5692 = vsub.s32 %v5409, %v5691
  %v5693 = vrot.slane %v5340, %v5692
  %v5694 = vsel %vm5414, %v5693, %v5689
  %v5695 = vlaneseq
  %v5696 = vshrl.u32 %v5695, 7
  %v5697 = vsub.s32 %v4980, %v5696
  %v5698 = vrot.slane %v5341, %v5697
  %v5699 = vlaneseq
  %v5700 = vshrl.u32 %v5699, 7
  %v5701 = vsub.s32 %v5409, %v5700
  %v5702 = vrot.slane %v5342, %v5701
  %v5703 = vsel %vm5414, %v5702, %v5698
  %v5704 = vlaneseq
  %v5705 = vshrl.u32 %v5704, 7
  %v5706 = vsub.s32 %v4980, %v5705
  %v5707 = vrot.slane %v5343, %v5706
  %v5708 = vlaneseq
  %v5709 = vshrl.u32 %v5708, 7
  %v5710 = vsub.s32 %v5409, %v5709
  %v5711 = vrot.slane %v5344, %v5710
  %v5712 = vsel %vm5414, %v5711, %v5707
  %v5713 = vlaneseq
  %v5714 = vshrl.u32 %v5713, 7
  %v5715 = vsub.s32 %v4980, %v5714
  %v5716 = vrot.slane %v5345, %v5715
  %v5717 = vlaneseq
  %v5718 = vshrl.u32 %v5717, 7
  %v5719 = vsub.s32 %v5409, %v5718
  %v5720 = vrot.slane %v5346, %v5719
  %v5721 = vsel %vm5414, %v5720, %v5716
  %v5722 = vlaneseq
  %v5723 = vshrl.u32 %v5722, 7
  %v5724 = vsub.s32 %v4980, %v5723
  %v5725 = vrot.slane %v5347, %v5724
  %v5726 = vlaneseq
  %v5727 = vshrl.u32 %v5726, 7
  %v5728 = vsub.s32 %v5409, %v5727
  %v5729 = vrot.slane %v5348, %v5728
  %v5730 = vsel %vm5414, %v5729, %v5725
  %v5731 = vlaneseq
  %v5732 = vshrl.u32 %v5731, 7
  %v5733 = vsub.s32 %v4980, %v5732
  %v5734 = vrot.slane %v5349, %v5733
  %v5735 = vlaneseq
  %v5736 = vshrl.u32 %v5735, 7
  %v5737 = vsub.s32 %v5409, %v5736
  %v5738 = vrot.slane %v5350, %v5737
  %v5739 = vsel %vm5414, %v5738, %v5734
  %v5740 = vlaneseq
  %v5741 = vshrl.u32 %v5740, 7
  %v5742 = vsub.s32 %v4980, %v5741
  %v5743 = vrot.slane %v5351, %v5742
  %v5744 = vlaneseq
  %v5745 = vshrl.u32 %v5744, 7
  %v5746 = vsub.s32 %v5409, %v5745
  %v5747 = vrot.slane %v5352, %v5746
  %v5748 = vsel %vm5414, %v5747, %v5743
  %v5749 = vlaneseq
  %v5750 = vshrl.u32 %v5749, 7
  %v5751 = vsub.s32 %v4980, %v5750
  %v5752 = vrot.slane %v5353, %v5751
  %v5753 = vlaneseq
  %v5754 = vshrl.u32 %v5753, 7
  %v5755 = vsub.s32 %v5409, %v5754
  %v5756 = vrot.slane %v5354, %v5755
  %v5757 = vsel %vm5414, %v5756, %v5752
  %v5758 = vlaneseq
  %v5759 = vshrl.u32 %v5758, 7
  %v5760 = vsub.s32 %v4980, %v5759
  %v5761 = vrot.slane %v5355, %v5760
  %v5762 = vlaneseq
  %v5763 = vshrl.u32 %v5762, 7
  %v5764 = vsub.s32 %v5409, %v5763
  %v5765 = vrot.slane %v5356, %v5764
  %v5766 = vsel %vm5414, %v5765, %v5761
  %v5767 = vlaneseq
  %v5768 = vshrl.u32 %v5767, 7
  %v5769 = vsub.s32 %v4980, %v5768
  %v5770 = vrot.slane %v5357, %v5769
  %v5771 = vlaneseq
  %v5772 = vshrl.u32 %v5771, 7
  %v5773 = vsub.s32 %v5409, %v5772
  %v5774 = vrot.slane %v5358, %v5773
  %v5775 = vsel %vm5414, %v5774, %v5770
  %v5776 = vlaneseq
  %v5777 = vshrl.u32 %v5776, 7
  %v5778 = vsub.s32 %v4980, %v5777
  %v5779 = vrot.slane %v5359, %v5778
  %v5780 = vlaneseq
  %v5781 = vshrl.u32 %v5780, 7
  %v5782 = vsub.s32 %v5409, %v5781
  %v5783 = vrot.slane %v5360, %v5782
  %v5784 = vsel %vm5414, %v5783, %v5779
  %v5785 = vlaneseq
  %v5786 = vshrl.u32 %v5785, 7
  %v5787 = vsub.s32 %v4980, %v5786
  %v5788 = vrot.slane %v5361, %v5787
  %v5789 = vlaneseq
  %v5790 = vshrl.u32 %v5789, 7
  %v5791 = vsub.s32 %v5409, %v5790
  %v5792 = vrot.slane %v5362, %v5791
  %v5793 = vsel %vm5414, %v5792, %v5788
  %v5794 = vlaneseq
  %v5795 = vshrl.u32 %v5794, 7
  %v5796 = vsub.s32 %v4980, %v5795
  %v5797 = vrot.slane %v5363, %v5796
  %v5798 = vlaneseq
  %v5799 = vshrl.u32 %v5798, 7
  %v5800 = vsub.s32 %v5409, %v5799
  %v5801 = vrot.slane %v5364, %v5800
  %v5802 = vsel %vm5414, %v5801, %v5797
  %v5803 = vlaneseq
  %v5804 = vshrl.u32 %v5803, 7
  %v5805 = vsub.s32 %v4980, %v5804
  %v5806 = vrot.slane %v5365, %v5805
  %v5807 = vlaneseq
  %v5808 = vshrl.u32 %v5807, 7
  %v5809 = vsub.s32 %v5409, %v5808
  %v5810 = vrot.slane %v5366, %v5809
  %v5811 = vsel %vm5414, %v5810, %v5806
  %v5812 = vlaneseq
  %v5813 = vshrl.u32 %v5812, 7
  %v5814 = vsub.s32 %v4980, %v5813
  %v5815 = vrot.slane %v5367, %v5814
  %v5816 = vlaneseq
  %v5817 = vshrl.u32 %v5816, 7
  %v5818 = vsub.s32 %v5409, %v5817
  %v5819 = vrot.slane %v5368, %v5818
  %v5820 = vsel %vm5414, %v5819, %v5815
  %v5821 = vlaneseq
  %v5822 = vshrl.u32 %v5821, 7
  %v5823 = vsub.s32 %v4980, %v5822
  %v5824 = vrot.slane %v5369, %v5823
  %v5825 = vlaneseq
  %v5826 = vshrl.u32 %v5825, 7
  %v5827 = vsub.s32 %v5409, %v5826
  %v5828 = vrot.slane %v5370, %v5827
  %v5829 = vsel %vm5414, %v5828, %v5824
  %v5830 = vlaneseq
  %v5831 = vshrl.u32 %v5830, 7
  %v5832 = vsub.s32 %v4980, %v5831
  %v5833 = vrot.slane %v5371, %v5832
  %v5834 = vlaneseq
  %v5835 = vshrl.u32 %v5834, 7
  %v5836 = vsub.s32 %v5409, %v5835
  %v5837 = vrot.slane %v5372, %v5836
  %v5838 = vsel %vm5414, %v5837, %v5833
  %v5839 = vlaneseq
  %v5840 = vshrl.u32 %v5839, 7
  %v5841 = vsub.s32 %v4980, %v5840
  %v5842 = vrot.slane %v5373, %v5841
  %v5843 = vlaneseq
  %v5844 = vshrl.u32 %v5843, 7
  %v5845 = vsub.s32 %v5409, %v5844
  %v5846 = vrot.slane %v5374, %v5845
  %v5847 = vsel %vm5414, %v5846, %v5842
  %v5848 = vlaneseq
  %v5849 = vshrl.u32 %v5848, 7
  %v5850 = vsub.s32 %v4980, %v5849
  %v5851 = vrot.slane %v5375, %v5850
  %v5852 = vlaneseq
  %v5853 = vshrl.u32 %v5852, 7
  %v5854 = vsub.s32 %v5409, %v5853
  %v5855 = vrot.slane %v5376, %v5854
  %v5856 = vsel %vm5414, %v5855, %v5851
  %v5857 = vlaneseq
  %v5858 = vshrl.u32 %v5857, 7
  %v5859 = vsub.s32 %v4980, %v5858
  %v5860 = vrot.slane %v5377, %v5859
  %v5861 = vlaneseq
  %v5862 = vshrl.u32 %v5861, 7
  %v5863 = vsub.s32 %v5409, %v5862
  %v5864 = vrot.slane %v5378, %v5863
  %v5865 = vsel %vm5414, %v5864, %v5860
  %v5866 = vlaneseq
  %v5867 = vshrl.u32 %v5866, 7
  %v5868 = vsub.s32 %v4980, %v5867
  %v5869 = vrot.slane %v5379, %v5868
  %v5870 = vlaneseq
  %v5871 = vshrl.u32 %v5870, 7
  %v5872 = vsub.s32 %v5409, %v5871
  %v5873 = vrot.slane %v5380, %v5872
  %v5874 = vsel %vm5414, %v5873, %v5869
  %v5875 = vlaneseq
  %v5876 = vshrl.u32 %v5875, 7
  %v5877 = vsub.s32 %v4980, %v5876
  %v5878 = vrot.slane %v5381, %v5877
  %v5879 = vlaneseq
  %v5880 = vshrl.u32 %v5879, 7
  %v5881 = vsub.s32 %v5409, %v5880
  %v5882 = vrot.slane %v5382, %v5881
  %v5883 = vsel %vm5414, %v5882, %v5878
  %v5884 = vlaneseq
  %v5885 = vshrl.u32 %v5884, 7
  %v5886 = vsub.s32 %v4980, %v5885
  %v5887 = vrot.slane %v5383, %v5886
  %v5888 = vlaneseq
  %v5889 = vshrl.u32 %v5888, 7
  %v5890 = vsub.s32 %v5409, %v5889
  %v5891 = vrot.slane %v5384, %v5890
  %v5892 = vsel %vm5414, %v5891, %v5887
  %v5893 = vlaneseq
  %v5894 = vshrl.u32 %v5893, 7
  %v5895 = vsub.s32 %v4980, %v5894
  %v5896 = vrot.slane %v5385, %v5895
  %v5897 = vlaneseq
  %v5898 = vshrl.u32 %v5897, 7
  %v5899 = vsub.s32 %v5409, %v5898
  %v5900 = vrot.slane %v5386, %v5899
  %v5901 = vsel %vm5414, %v5900, %v5896
  %v5902 = vlaneseq
  %v5903 = vshrl.u32 %v5902, 7
  %v5904 = vsub.s32 %v4980, %v5903
  %v5905 = vrot.slane %v5387, %v5904
  %v5906 = vlaneseq
  %v5907 = vshrl.u32 %v5906, 7
  %v5908 = vsub.s32 %v5409, %v5907
  %v5909 = vrot.slane %v5388, %v5908
  %v5910 = vsel %vm5414, %v5909, %v5905
  %v5911 = vlaneseq
  %v5912 = vshrl.u32 %v5911, 7
  %v5913 = vsub.s32 %v4980, %v5912
  %v5914 = vrot.slane %v5389, %v5913
  %v5915 = vlaneseq
  %v5916 = vshrl.u32 %v5915, 7
  %v5917 = vsub.s32 %v5409, %v5916
  %v5918 = vrot.slane %v5390, %v5917
  %v5919 = vsel %vm5414, %v5918, %v5914
  %v5920 = vlaneseq
  %v5921 = vshrl.u32 %v5920, 7
  %v5922 = vsub.s32 %v4980, %v5921
  %v5923 = vrot.slane %v5391, %v5922
  %v5924 = vlaneseq
  %v5925 = vshrl.u32 %v5924, 7
  %v5926 = vsub.s32 %v5409, %v5925
  %v5927 = vrot.slane %v5392, %v5926
  %v5928 = vsel %vm5414, %v5927, %v5923
  %v5929 = vlaneseq
  %v5930 = vshrl.u32 %v5929, 7
  %v5931 = vsub.s32 %v4980, %v5930
  %v5932 = vrot.slane %v5393, %v5931
  %v5933 = vlaneseq
  %v5934 = vshrl.u32 %v5933, 7
  %v5935 = vsub.s32 %v5409, %v5934
  %v5936 = vrot.slane %v5394, %v5935
  %v5937 = vsel %vm5414, %v5936, %v5932
  %v5938 = vlaneseq
  %v5939 = vshrl.u32 %v5938, 7
  %v5940 = vsub.s32 %v4980, %v5939
  %v5941 = vrot.slane %v5395, %v5940
  %v5942 = vlaneseq
  %v5943 = vshrl.u32 %v5942, 7
  %v5944 = vsub.s32 %v5409, %v5943
  %v5945 = vrot.slane %v5396, %v5944
  %v5946 = vsel %vm5414, %v5945, %v5941
  %v5947 = vlaneseq
  %v5948 = vshrl.u32 %v5947, 7
  %v5949 = vsub.s32 %v4980, %v5948
  %v5950 = vrot.slane %v5397, %v5949
  %v5951 = vlaneseq
  %v5952 = vshrl.u32 %v5951, 7
  %v5953 = vsub.s32 %v5409, %v5952
  %v5954 = vrot.slane %v5398, %v5953
  %v5955 = vsel %vm5414, %v5954, %v5950
  %v5956 = vlaneseq
  %v5957 = vshrl.u32 %v5956, 7
  %v5958 = vsub.s32 %v4980, %v5957
  %v5959 = vrot.slane %v5399, %v5958
  %v5960 = vlaneseq
  %v5961 = vshrl.u32 %v5960, 7
  %v5962 = vsub.s32 %v5409, %v5961
  %v5963 = vrot.slane %v5400, %v5962
  %v5964 = vsel %vm5414, %v5963, %v5959
  %v5965 = vlaneseq
  %v5966 = vshrl.u32 %v5965, 7
  %v5967 = vsub.s32 %v4980, %v5966
  %v5968 = vrot.slane %v5401, %v5967
  %v5969 = vlaneseq
  %v5970 = vshrl.u32 %v5969, 7
  %v5971 = vsub.s32 %v5409, %v5970
  %v5972 = vrot.slane %v5402, %v5971
  %v5973 = vsel %vm5414, %v5972, %v5968
  %v5974 = vlaneseq
  %v5975 = vshrl.u32 %v5974, 7
  %v5976 = vsub.s32 %v4980, %v5975
  %v5977 = vrot.slane %v5403, %v5976
  %v5978 = vlaneseq
  %v5979 = vshrl.u32 %v5978, 7
  %v5980 = vsub.s32 %v5409, %v5979
  %v5981 = vrot.slane %v5404, %v5980
  %v5982 = vsel %vm5414, %v5981, %v5977
  %vm5983 = vcmask 1041409
  %v5984 = vsel %vm5983, %v5424, %v5415
  %vm5985 = vcmask 1042434
  %v5986 = vsel %vm5985, %v5433, %v5984
  %vm5987 = vcmask 1043459
  %v5988 = vsel %vm5987, %v5442, %v5986
  %vm5989 = vcmask 1044484
  %v5990 = vsel %vm5989, %v5451, %v5988
  %vm5991 = vcmask 1045509
  %v5992 = vsel %vm5991, %v5460, %v5990
  %vm5993 = vcmask 1046534
  %v5994 = vsel %vm5993, %v5469, %v5992
  %vm5995 = vcmask 1047559
  %v5996 = vsel %vm5995, %v5478, %v5994
  %v5997 = vsel %vm5983, %v5496, %v5487
  %v5998 = vsel %vm5985, %v5505, %v5997
  %v5999 = vsel %vm5987, %v5514, %v5998
  %v6000 = vsel %vm5989, %v5523, %v5999
  %v6001 = vsel %vm5991, %v5532, %v6000
  %v6002 = vsel %vm5993, %v5541, %v6001
  %v6003 = vsel %vm5995, %v5550, %v6002
  %v6004 = vsel %vm5983, %v5568, %v5559
  %v6005 = vsel %vm5985, %v5577, %v6004
  %v6006 = vsel %vm5987, %v5586, %v6005
  %v6007 = vsel %vm5989, %v5595, %v6006
  %v6008 = vsel %vm5991, %v5604, %v6007
  %v6009 = vsel %vm5993, %v5613, %v6008
  %v6010 = vsel %vm5995, %v5622, %v6009
  %v6011 = vsel %vm5983, %v5640, %v5631
  %v6012 = vsel %vm5985, %v5649, %v6011
  %v6013 = vsel %vm5987, %v5658, %v6012
  %v6014 = vsel %vm5989, %v5667, %v6013
  %v6015 = vsel %vm5991, %v5676, %v6014
  %v6016 = vsel %vm5993, %v5685, %v6015
  %v6017 = vsel %vm5995, %v5694, %v6016
  %v6018 = vsel %vm5983, %v5712, %v5703
  %v6019 = vsel %vm5985, %v5721, %v6018
  %v6020 = vsel %vm5987, %v5730, %v6019
  %v6021 = vsel %vm5989, %v5739, %v6020
  %v6022 = vsel %vm5991, %v5748, %v6021
  %v6023 = vsel %vm5993, %v5757, %v6022
  %v6024 = vsel %vm5995, %v5766, %v6023
  %v6025 = vsel %vm5983, %v5784, %v5775
  %v6026 = vsel %vm5985, %v5793, %v6025
  %v6027 = vsel %vm5987, %v5802, %v6026
  %v6028 = vsel %vm5989, %v5811, %v6027
  %v6029 = vsel %vm5991, %v5820, %v6028
  %v6030 = vsel %vm5993, %v5829, %v6029
  %v6031 = vsel %vm5995, %v5838, %v6030
  %v6032 = vsel %vm5983, %v5856, %v5847
  %v6033 = vsel %vm5985, %v5865, %v6032
  %v6034 = vsel %vm5987, %v5874, %v6033
  %v6035 = vsel %vm5989, %v5883, %v6034
  %v6036 = vsel %vm5991, %v5892, %v6035
  %v6037 = vsel %vm5993, %v5901, %v6036
  %v6038 = vsel %vm5995, %v5910, %v6037
  %v6039 = vsel %vm5983, %v5928, %v5919
  %v6040 = vsel %vm5985, %v5937, %v6039
  %v6041 = vsel %vm5987, %v5946, %v6040
  %v6042 = vsel %vm5989, %v5955, %v6041
  %v6043 = vsel %vm5991, %v5964, %v6042
  %v6044 = vsel %vm5993, %v5973, %v6043
  %v6045 = vsel %vm5995, %v5982, %v6044
  %v6046 = vpack.c.b16 %v6003, %v5996
  %v6047 = vpack.c.b16 %v6017, %v6010
  %v6048 = vpack.c.b16 %v6031, %v6024
  %v6049 = vpack.c.b16 %v6045, %v6038
  %v6051 = vsel %vm5123, %v6046, 0
  %v6054 = vsel %vm5123, %v6047, 0
  %v6057 = vsel %vm5123, %v6048, 0
  %v6060 = vsel %vm5123, %v6049, 0
  %6062 = vmatprep.subr.bf16.mxu0 0
  %6063 = vmatpush1.bf16.msra.mxu0 0
  %6064 = vmatprep.subr.bf16.mxu0 0
  %6065 = vmatpush1.bf16.msra.mxu0 0
  %6066 = vmatprep.subr.bf16.mxu0 0
  %6067 = vmatpush1.bf16.msra.mxu0 0
  %6068 = vmatprep.subr.bf16.mxu0 0
  %6069 = vmatpush1.bf16.msra.mxu0 0
  %6070 = vmatprep.subr.bf16.mxu0 0
  %6071 = vmatpush1.bf16.msra.mxu0 0
  %6072 = vmatprep.subr.bf16.mxu0 0
  %6073 = vmatpush1.bf16.msra.mxu0 0
  %6074 = vmatprep.subr.bf16.mxu0 0
  %6075 = vmatpush1.bf16.msra.mxu0 0
  %6076 = vmatprep.subr.bf16.mxu0 0
  %6077 = vmatpush1.bf16.msra.mxu0 %v5019
  %6078 = vmatprep.subr.bf16.mxu0 0
  %6079 = vmatpush2.bf16.msra.mxu0 0
  %6080 = vmatprep.subr.bf16.mxu0 0
  %6081 = vmatpush2.bf16.msra.mxu0 0
  %6082 = vmatprep.subr.bf16.mxu0 0
  %6083 = vmatpush2.bf16.msra.mxu0 0
  %6084 = vmatprep.subr.bf16.mxu0 0
  %6085 = vmatpush2.bf16.msra.mxu0 0
  %6086 = vmatprep.subr.bf16.mxu0 0
  %6087 = vmatpush2.bf16.msra.mxu0 0
  %6088 = vmatprep.subr.bf16.mxu0 0
  %6089 = vmatpush2.bf16.msra.mxu0 0
  %6090 = vmatprep.subr.bf16.mxu0 0
  %6091 = vmatpush2.bf16.msra.mxu0 0
  %6092 = vmatprep.subr.bf16.mxu0 0
  %6093 = vmatpush2.bf16.msra.mxu0 0
  %6094 = vmatprep.mubr.bf16.mxu0 0
  %6095 = vmatmul.mubr.bf16.gmra.mxu0 %v6051
  %v6096 = vpop.f32.mrf.mxu0
  %v6097 = vadd.f32 0.0, %v6096
  %v6098 = vpop.f32.mrf.mxu0
  %v6099 = vpop.f32.mrf.mxu0
  %v6100 = vadd.f32 0.0, %v6099
  %v6101 = vpop.f32.mrf.mxu0
  %6102 = vmatprep.mubr.bf16.mxu0 0
  %6103 = vmatmul.mubr.bf16.gmra.mxu0 %v6054
  %v6104 = vpop.f32.mrf.mxu0
  %v6105 = vadd.f32 0.0, %v6104
  %v6106 = vpop.f32.mrf.mxu0
  %v6107 = vpop.f32.mrf.mxu0
  %v6108 = vadd.f32 0.0, %v6107
  %v6109 = vpop.f32.mrf.mxu0
  %6110 = vmatprep.mubr.bf16.mxu0 0
  %6111 = vmatmul.mubr.bf16.gmra.mxu0 %v6057
  %v6112 = vpop.f32.mrf.mxu0
  %v6113 = vadd.f32 0.0, %v6112
  %v6114 = vpop.f32.mrf.mxu0
  %v6115 = vpop.f32.mrf.mxu0
  %v6116 = vadd.f32 0.0, %v6115
  %v6117 = vpop.f32.mrf.mxu0
  %6118 = vmatprep.mubr.bf16.mxu0 0
  %6119 = vmatmul.mubr.bf16.gmra.mxu0 %v6060
  %v6120 = vpop.f32.mrf.mxu0
  %v6121 = vadd.f32 0.0, %v6120
  %v6122 = vpop.f32.mrf.mxu0
  %v6123 = vpop.f32.mrf.mxu0
  %v6124 = vadd.f32 0.0, %v6123
  %v6125 = vpop.f32.mrf.mxu0
  %6126 = vdwg.mxu0
  %v6127 = vsel %vm5095, %v6097, 0.0
  %v6128 = vsel %vm5096, %v6100, 0.0
  %v6129 = vsel %vm5097, %v6105, 0.0
  %v6130 = vsel %vm5098, %v6108, 0.0
  %v6131 = vsel %vm5099, %v6113, 0.0
  %v6132 = vsel %vm5100, %v6116, 0.0
  %v6133 = vsel %vm5101, %v6121, 0.0
  %v6134 = vsel %vm5102, %v6124, 0.0
  %v6135 = vpack.c.bf16 %v6128, %v6127
  %v6136 = vpack.c.bf16 %v6130, %v6129
  %v6137 = vpack.c.bf16 %v6132, %v6131
  %v6138 = vpack.c.bf16 %v6134, %v6133
  %v6139 = vpack.c.bf16 %v424, %v423
  %v6140 = vpack.c.bf16 %v426, %v425
  %v6141 = vpack.c.bf16 %v428, %v427
  %v6142 = vpack.c.bf16 %v430, %v429
  %v6143 = vld [vmem:[%s11] sm:$0xf]
  %v6144 = vld [vmem:[%s11 + $0x4] sm:$0xf]
  %v6145 = vld [vmem:[%s11 + $0x8] sm:$0xf]
  %v6146 = vld [vmem:[%s11 + $0xc] sm:$0xf]
  %v6151 = vunpack.c.l.b16 %v6143
  %v6152 = vunpack.c.l.b16 %v6144
  %v6153 = vunpack.c.l.b16 %v6145
  %v6154 = vunpack.c.l.b16 %v6146
  %v6155 = vpack.c.b16 %v6152, %v6151
  %v6156 = vpack.c.b16 %v6154, %v6153
  %v6160 = vsel %vm4519, %v6139, 0
  %v6163 = vsel %vm4519, %v6140, 0
  %v6166 = vsel %vm4519, %v6141, 0
  %v6169 = vsel %vm4519, %v6142, 0
  %6171 = vmatprep.subr.bf16.mxu0 0
  %6172 = vmatpush1.bf16.msra.mxu0 0
  %6173 = vmatprep.subr.bf16.mxu0 0
  %6174 = vmatpush1.bf16.msra.mxu0 0
  %6175 = vmatprep.subr.bf16.mxu0 0
  %6176 = vmatpush1.bf16.msra.mxu0 0
  %6177 = vmatprep.subr.bf16.mxu0 0
  %6178 = vmatpush1.bf16.msra.mxu0 0
  %6179 = vmatprep.subr.bf16.mxu0 0
  %6180 = vmatpush1.bf16.msra.mxu0 0
  %6181 = vmatprep.subr.bf16.mxu0 0
  %6182 = vmatpush1.bf16.msra.mxu0 0
  %6183 = vmatprep.subr.bf16.mxu0 0
  %6184 = vmatpush1.bf16.msra.mxu0 %v6156
  %6185 = vmatprep.subr.bf16.mxu0 0
  %6186 = vmatpush1.bf16.msra.mxu0 %v6155
  %6187 = vmatprep.subr.bf16.mxu0 0
  %6188 = vmatpush2.bf16.msra.mxu0 0
  %6189 = vmatprep.subr.bf16.mxu0 0
  %6190 = vmatpush2.bf16.msra.mxu0 0
  %6191 = vmatprep.subr.bf16.mxu0 0
  %6192 = vmatpush2.bf16.msra.mxu0 0
  %6193 = vmatprep.subr.bf16.mxu0 0
  %6194 = vmatpush2.bf16.msra.mxu0 0
  %6195 = vmatprep.subr.bf16.mxu0 0
  %6196 = vmatpush2.bf16.msra.mxu0 0
  %6197 = vmatprep.subr.bf16.mxu0 0
  %6198 = vmatpush2.bf16.msra.mxu0 0
  %6199 = vmatprep.subr.bf16.mxu0 0
  %6200 = vmatpush2.bf16.msra.mxu0 0
  %6201 = vmatprep.subr.bf16.mxu0 0
  %6202 = vmatpush2.bf16.msra.mxu0 0
  %6203 = vmatprep.mubr.bf16.mxu0 0
  %6204 = vmatmul.mubr.bf16.gmra.mxu0 %v6160
  %v6205 = vpop.f32.mrf.mxu0
  %v6206 = vadd.f32 0.0, %v6205
  %v6207 = vpop.f32.mrf.mxu0
  %v6208 = vpop.f32.mrf.mxu0
  %v6209 = vadd.f32 0.0, %v6208
  %v6210 = vpop.f32.mrf.mxu0
  %6211 = vmatprep.mubr.bf16.mxu0 0
  %6212 = vmatmul.mubr.bf16.gmra.mxu0 %v6163
  %v6213 = vpop.f32.mrf.mxu0
  %v6214 = vadd.f32 0.0, %v6213
  %v6215 = vpop.f32.mrf.mxu0
  %v6216 = vpop.f32.mrf.mxu0
  %v6217 = vadd.f32 0.0, %v6216
  %v6218 = vpop.f32.mrf.mxu0
  %6219 = vmatprep.mubr.bf16.mxu0 0
  %6220 = vmatmul.mubr.bf16.gmra.mxu0 %v6166
  %v6221 = vpop.f32.mrf.mxu0
  %v6222 = vadd.f32 0.0, %v6221
  %v6223 = vpop.f32.mrf.mxu0
  %v6224 = vpop.f32.mrf.mxu0
  %v6225 = vadd.f32 0.0, %v6224
  %v6226 = vpop.f32.mrf.mxu0
  %6227 = vmatprep.mubr.bf16.mxu0 0
  %6228 = vmatmul.mubr.bf16.gmra.mxu0 %v6169
  %v6229 = vpop.f32.mrf.mxu0
  %v6230 = vadd.f32 0.0, %v6229
  %v6231 = vpop.f32.mrf.mxu0
  %v6232 = vpop.f32.mrf.mxu0
  %v6233 = vadd.f32 0.0, %v6232
  %v6234 = vpop.f32.mrf.mxu0
  %6235 = vdwg.mxu0
  %v6236 = vpack.c.bf16 %v6209, %v6206
  %v6237 = vpack.c.bf16 %v6217, %v6214
  %v6238 = vpack.c.bf16 %v6225, %v6222
  %v6239 = vpack.c.bf16 %v6233, %v6230
  %vm6240 = vcmask 523264
  %v6242 = vsel %vm6240, %v5209, 0
  %v6245 = vsel %vm6240, %v5210, 0
  %v6248 = vsel %vm6240, %v5211, 0
  %v6251 = vsel %vm6240, %v5212, 0
  %6253 = vmatprep.subr.bf16.mxu0 0
  %6254 = vmatpush1.bf16.msra.mxu0 0
  %6255 = vmatprep.subr.bf16.mxu0 0
  %6256 = vmatpush1.bf16.msra.mxu0 0
  %6257 = vmatprep.subr.bf16.mxu0 0
  %6258 = vmatpush1.bf16.msra.mxu0 0
  %6259 = vmatprep.subr.bf16.mxu0 0
  %6260 = vmatpush1.bf16.msra.mxu0 0
  %6261 = vmatprep.subr.bf16.mxu0 0
  %6262 = vmatpush1.bf16.msra.mxu0 %v6239
  %6263 = vmatprep.subr.bf16.mxu0 0
  %6264 = vmatpush1.bf16.msra.mxu0 %v6238
  %6265 = vmatprep.subr.bf16.mxu0 0
  %6266 = vmatpush1.bf16.msra.mxu0 %v6237
  %6267 = vmatprep.subr.bf16.mxu0 0
  %6268 = vmatpush1.bf16.msra.mxu0 %v6236
  %6269 = vmatprep.subr.bf16.mxu0 0
  %6270 = vmatpush2.bf16.msra.mxu0 0
  %6271 = vmatprep.subr.bf16.mxu0 0
  %6272 = vmatpush2.bf16.msra.mxu0 0
  %6273 = vmatprep.subr.bf16.mxu0 0
  %6274 = vmatpush2.bf16.msra.mxu0 0
  %6275 = vmatprep.subr.bf16.mxu0 0
  %6276 = vmatpush2.bf16.msra.mxu0 0
  %6277 = vmatprep.subr.bf16.mxu0 0
  %6278 = vmatpush2.bf16.msra.mxu0 0
  %6279 = vmatprep.subr.bf16.mxu0 0
  %6280 = vmatpush2.bf16.msra.mxu0 0
  %6281 = vmatprep.subr.bf16.mxu0 0
  %6282 = vmatpush2.bf16.msra.mxu0 0
  %6283 = vmatprep.subr.bf16.mxu0 0
  %6284 = vmatpush2.bf16.msra.mxu0 0
  %6285 = vmatprep.mubr.bf16.mxu0 0
  %6286 = vmatmul.mubr.bf16.gmra.mxu0 %v6242
  %v6287 = vpop.f32.mrf.mxu0
  %v6288 = vadd.f32 0.0, %v6287
  %v6289 = vpop.f32.mrf.mxu0
  %v6290 = vpop.f32.mrf.mxu0
  %v6291 = vadd.f32 0.0, %v6290
  %v6292 = vpop.f32.mrf.mxu0
  %6293 = vmatprep.mubr.bf16.mxu0 0
  %6294 = vmatmul.mubr.bf16.gmra.mxu0 %v6245
  %v6295 = vpop.f32.mrf.mxu0
  %v6296 = vadd.f32 0.0, %v6295
  %v6297 = vpop.f32.mrf.mxu0
  %v6298 = vpop.f32.mrf.mxu0
  %v6299 = vadd.f32 0.0, %v6298
  %v6300 = vpop.f32.mrf.mxu0
  %6301 = vmatprep.mubr.bf16.mxu0 0
  %6302 = vmatmul.mubr.bf16.gmra.mxu0 %v6248
  %v6303 = vpop.f32.mrf.mxu0
  %v6304 = vadd.f32 0.0, %v6303
  %v6305 = vpop.f32.mrf.mxu0
  %v6306 = vpop.f32.mrf.mxu0
  %v6307 = vadd.f32 0.0, %v6306
  %v6308 = vpop.f32.mrf.mxu0
  %6309 = vmatprep.mubr.bf16.mxu0 0
  %6310 = vmatmul.mubr.bf16.gmra.mxu0 %v6251
  %v6311 = vpop.f32.mrf.mxu0
  %v6312 = vadd.f32 0.0, %v6311
  %v6313 = vpop.f32.mrf.mxu0
  %v6314 = vpop.f32.mrf.mxu0
  %v6315 = vadd.f32 0.0, %v6314
  %v6316 = vpop.f32.mrf.mxu0
  %6317 = vdwg.mxu0
  %v6318 = vtanh.pop %v6288
  %v6319 = vtanh.pop %v6291
  %v6320 = vtanh.pop %v6296
  %v6321 = vtanh.pop %v6299
  %v6322 = vtanh.pop %v6304
  %v6323 = vtanh.pop %v6307
  %v6324 = vtanh.pop %v6312
  %v6325 = vtanh.pop %v6315
  %v6326 = vpack.c.bf16 %v6319, %v6318
  %v6327 = vpack.c.bf16 %v6321, %v6320
  %v6328 = vpack.c.bf16 %v6323, %v6322
  %v6329 = vpack.c.bf16 %v6325, %v6324
  %v6331 = vsel %vm6240, %v6135, 0
  %v6334 = vsel %vm6240, %v6136, 0
  %v6337 = vsel %vm6240, %v6137, 0
  %v6340 = vsel %vm6240, %v6138, 0
  %6342 = vmatprep.subr.bf16.mxu0 0
  %6343 = vmatpush1.bf16.msra.mxu0 0
  %6344 = vmatprep.subr.bf16.mxu0 0
  %6345 = vmatpush1.bf16.msra.mxu0 0
  %6346 = vmatprep.subr.bf16.mxu0 0
  %6347 = vmatpush1.bf16.msra.mxu0 0
  %6348 = vmatprep.subr.bf16.mxu0 0
  %6349 = vmatpush1.bf16.msra.mxu0 0
  %6350 = vmatprep.subr.bf16.mxu0 0
  %6351 = vmatpush1.bf16.msra.mxu0 %v6329
  %6352 = vmatprep.subr.bf16.mxu0 0
  %6353 = vmatpush1.bf16.msra.mxu0 %v6328
  %6354 = vmatprep.subr.bf16.mxu0 0
  %6355 = vmatpush1.bf16.msra.mxu0 %v6327
  %6356 = vmatprep.subr.bf16.mxu0 0
  %6357 = vmatpush1.bf16.msra.mxu0 %v6326
  %6358 = vmatprep.subr.bf16.mxu0 0
  %6359 = vmatpush2.bf16.msra.mxu0 0
  %6360 = vmatprep.subr.bf16.mxu0 0
  %6361 = vmatpush2.bf16.msra.mxu0 0
  %6362 = vmatprep.subr.bf16.mxu0 0
  %6363 = vmatpush2.bf16.msra.mxu0 0
  %6364 = vmatprep.subr.bf16.mxu0 0
  %6365 = vmatpush2.bf16.msra.mxu0 0
  %6366 = vmatprep.subr.bf16.mxu0 0
  %6367 = vmatpush2.bf16.msra.mxu0 0
  %6368 = vmatprep.subr.bf16.mxu0 0
  %6369 = vmatpush2.bf16.msra.mxu0 0
  %6370 = vmatprep.subr.bf16.mxu0 0
  %6371 = vmatpush2.bf16.msra.mxu0 0
  %6372 = vmatprep.subr.bf16.mxu0 0
  %6373 = vmatpush2.bf16.msra.mxu0 0
  %6374 = vmatprep.mubr.bf16.mxu0 0
  %6375 = vmatmul.mubr.bf16.gmra.mxu0 %v6331
  %v6376 = vpop.f32.mrf.mxu0
  %v6377 = vadd.f32 0.0, %v6376
  %v6378 = vpop.f32.mrf.mxu0
  %v6379 = vpop.f32.mrf.mxu0
  %v6380 = vadd.f32 0.0, %v6379
  %v6381 = vpop.f32.mrf.mxu0
  %6382 = vmatprep.mubr.bf16.mxu0 0
  %6383 = vmatmul.mubr.bf16.gmra.mxu0 %v6334
  %v6384 = vpop.f32.mrf.mxu0
  %v6385 = vadd.f32 0.0, %v6384
  %v6386 = vpop.f32.mrf.mxu0
  %v6387 = vpop.f32.mrf.mxu0
  %v6388 = vadd.f32 0.0, %v6387
  %v6389 = vpop.f32.mrf.mxu0
  %6390 = vmatprep.mubr.bf16.mxu0 0
  %6391 = vmatmul.mubr.bf16.gmra.mxu0 %v6337
  %v6392 = vpop.f32.mrf.mxu0
  %v6393 = vadd.f32 0.0, %v6392
  %v6394 = vpop.f32.mrf.mxu0
  %v6395 = vpop.f32.mrf.mxu0
  %v6396 = vadd.f32 0.0, %v6395
  %v6397 = vpop.f32.mrf.mxu0
  %6398 = vmatprep.mubr.bf16.mxu0 0
  %6399 = vmatmul.mubr.bf16.gmra.mxu0 %v6340
  %v6400 = vpop.f32.mrf.mxu0
  %v6401 = vadd.f32 0.0, %v6400
  %v6402 = vpop.f32.mrf.mxu0
  %v6403 = vpop.f32.mrf.mxu0
  %v6404 = vadd.f32 0.0, %v6403
  %v6405 = vpop.f32.mrf.mxu0
  %6406 = vdwg.mxu0
  %v6407 = vtanh.pop %v6377
  %v6408 = vtanh.pop %v6380
  %v6409 = vtanh.pop %v6385
  %v6410 = vtanh.pop %v6388
  %v6411 = vtanh.pop %v6393
  %v6412 = vtanh.pop %v6396
  %v6413 = vtanh.pop %v6401
  %v6414 = vtanh.pop %v6404
  %6423 = vrot.lane.b32.xlu0 %v6407, 32
  %v6424 = vpop.permute.xlu0 %6423
  %6425 = vrot.lane.b32.xlu0 %v6408, 32
  %v6426 = vpop.permute.xlu0 %6425
  %6427 = vrot.lane.b32.xlu0 %v6409, 32
  %v6428 = vpop.permute.xlu0 %6427
  %6429 = vrot.lane.b32.xlu0 %v6410, 32
  %v6430 = vpop.permute.xlu0 %6429
  %6431 = vrot.lane.b32.xlu0 %v6411, 32
  %v6432 = vpop.permute.xlu0 %6431
  %6433 = vrot.lane.b32.xlu0 %v6412, 32
  %v6434 = vpop.permute.xlu0 %6433
  %6435 = vrot.lane.b32.xlu0 %v6413, 32
  %v6436 = vpop.permute.xlu0 %6435
  %6437 = vrot.lane.b32.xlu0 %v6414, 32
  %v6438 = vpop.permute.xlu0 %6437
  %v6447 = vsel %vm4519, %v6318, %v6424
  %v6448 = vsel %vm4519, %v6319, %v6426
  %v6449 = vsel %vm4519, %v6320, %v6428
  %v6450 = vsel %vm4519, %v6321, %v6430
  %v6451 = vsel %vm4519, %v6322, %v6432
  %v6452 = vsel %vm4519, %v6323, %v6434
  %v6453 = vsel %vm4519, %v6324, %v6436
  %v6454 = vsel %vm4519, %v6325, %v6438
  %v6455 = vpack.c.bf16 %v6448, %v6447
  %v6456 = vpack.c.bf16 %v6450, %v6449
  %v6457 = vpack.c.bf16 %v6452, %v6451
  %v6458 = vpack.c.bf16 %v6454, %v6453
  %v6459 = vld [vmem:[%s12] sm:$0xf]
  %v6460 = vld [vmem:[%s12 + $0x4] sm:$0xf]
  %v6461 = vld [vmem:[%s12 + $0x8] sm:$0xf]
  %v6462 = vld [vmem:[%s12 + $0xc] sm:$0xf]
  %v6463 = vld [vmem:[%s12 + $0x10] sm:$0xf]
  %v6464 = vld [vmem:[%s12 + $0x14] sm:$0xf]
  %v6465 = vld [vmem:[%s12 + $0x18] sm:$0xf]
  %v6466 = vld [vmem:[%s12 + $0x1c] sm:$0xf]
  %v6467 = vld [vmem:[%s13] sm:$0x1]
  %v6469 = vlaneseq
  %v6470 = vshrl.u32 %v6469, 7
  %v6471 = vsub.s32 0, %v6470
  %v6472 = vrot.slane %v6467, %v6471
  %v6482 = vunpack.c.l.b16 %v6459
  %v6483 = vunpack.c.l.b16 %v6460
  %v6484 = vunpack.c.l.b16 %v6461
  %v6485 = vunpack.c.l.b16 %v6462
  %v6486 = vunpack.c.l.b16 %v6463
  %v6487 = vunpack.c.l.b16 %v6464
  %v6488 = vunpack.c.l.b16 %v6465
  %v6489 = vunpack.c.l.b16 %v6466
  %v6490 = vpack.c.b16 %v6483, %v6482
  %v6491 = vpack.c.b16 %v6485, %v6484
  %v6492 = vpack.c.b16 %v6487, %v6486
  %v6493 = vpack.c.b16 %v6489, %v6488
  %v6499 = vsel %vm6240, %v6455, 0
  %v6502 = vsel %vm6240, %v6456, 0
  %v6505 = vsel %vm6240, %v6457, 0
  %v6508 = vsel %vm6240, %v6458, 0
  %6510 = vmatprep.subr.bf16.mxu0 0
  %6511 = vmatpush1.bf16.msra.mxu0 0
  %6512 = vmatprep.subr.bf16.mxu0 0
  %6513 = vmatpush1.bf16.msra.mxu0 0
  %6514 = vmatprep.subr.bf16.mxu0 0
  %6515 = vmatpush1.bf16.msra.mxu0 0
  %6516 = vmatprep.subr.bf16.mxu0 0
  %6517 = vmatpush1.bf16.msra.mxu0 0
  %6518 = vmatprep.subr.bf16.mxu0 0
  %6519 = vmatpush1.bf16.msra.mxu0 %v6493
  %6520 = vmatprep.subr.bf16.mxu0 0
  %6521 = vmatpush1.bf16.msra.mxu0 %v6492
  %6522 = vmatprep.subr.bf16.mxu0 0
  %6523 = vmatpush1.bf16.msra.mxu0 %v6491
  %6524 = vmatprep.subr.bf16.mxu0 0
  %6525 = vmatpush1.bf16.msra.mxu0 %v6490
  %6526 = vmatprep.subr.bf16.mxu0 0
  %6527 = vmatpush2.bf16.msra.mxu0 0
  %6528 = vmatprep.subr.bf16.mxu0 0
  %6529 = vmatpush2.bf16.msra.mxu0 0
  %6530 = vmatprep.subr.bf16.mxu0 0
  %6531 = vmatpush2.bf16.msra.mxu0 0
  %6532 = vmatprep.subr.bf16.mxu0 0
  %6533 = vmatpush2.bf16.msra.mxu0 0
  %6534 = vmatprep.subr.bf16.mxu0 0
  %6535 = vmatpush2.bf16.msra.mxu0 0
  %6536 = vmatprep.subr.bf16.mxu0 0
  %6537 = vmatpush2.bf16.msra.mxu0 0
  %6538 = vmatprep.subr.bf16.mxu0 0
  %6539 = vmatpush2.bf16.msra.mxu0 0
  %6540 = vmatprep.subr.bf16.mxu0 0
  %6541 = vmatpush2.bf16.msra.mxu0 0
  %6542 = vmatprep.mubr.bf16.mxu0 0
  %6543 = vmatmul.mubr.bf16.gmra.mxu0 %v6499
  %v6544 = vpop.f32.mrf.mxu0
  %v6545 = vadd.f32 %v6472, %v6544
  %v6546 = vpop.f32.mrf.mxu0
  %v6547 = vpop.f32.mrf.mxu0
  %v6548 = vadd.f32 %v6472, %v6547
  %v6549 = vpop.f32.mrf.mxu0
  %6550 = vmatprep.mubr.bf16.mxu0 0
  %6551 = vmatmul.mubr.bf16.gmra.mxu0 %v6502
  %v6552 = vpop.f32.mrf.mxu0
  %v6553 = vadd.f32 %v6472, %v6552
  %v6554 = vpop.f32.mrf.mxu0
  %v6555 = vpop.f32.mrf.mxu0
  %v6556 = vadd.f32 %v6472, %v6555
  %v6557 = vpop.f32.mrf.mxu0
  %6558 = vmatprep.mubr.bf16.mxu0 0
  %6559 = vmatmul.mubr.bf16.gmra.mxu0 %v6505
  %v6560 = vpop.f32.mrf.mxu0
  %v6561 = vadd.f32 %v6472, %v6560
  %v6562 = vpop.f32.mrf.mxu0
  %v6563 = vpop.f32.mrf.mxu0
  %v6564 = vadd.f32 %v6472, %v6563
  %v6565 = vpop.f32.mrf.mxu0
  %6566 = vmatprep.mubr.bf16.mxu0 0
  %6567 = vmatmul.mubr.bf16.gmra.mxu0 %v6508
  %v6568 = vpop.f32.mrf.mxu0
  %v6569 = vadd.f32 %v6472, %v6568
  %v6570 = vpop.f32.mrf.mxu0
  %v6571 = vpop.f32.mrf.mxu0
  %v6572 = vadd.f32 %v6472, %v6571
  %v6573 = vpop.f32.mrf.mxu0
  %6574 = vdwg.mxu0
  %v6575 = vtanh.pop %v6545
  %v6576 = vtanh.pop %v6548
  %v6577 = vtanh.pop %v6553
  %v6578 = vtanh.pop %v6556
  %v6579 = vtanh.pop %v6561
  %v6580 = vtanh.pop %v6564
  %v6581 = vtanh.pop %v6569
  %v6582 = vtanh.pop %v6572
  %v6583 = vpack.c.bf16 %v6576, %v6575
  %v6584 = vpack.c.bf16 %v6578, %v6577
  %v6585 = vpack.c.bf16 %v6580, %v6579
  %v6586 = vpack.c.bf16 %v6582, %v6581
  %s6587 = scalar_lea.vmem %s11, 16
  %v6588 = vld [vmem:[%s6587] sm:$0xf]
  %v6589 = vld [vmem:[%s6587 + $0x4] sm:$0xf]
  %v6590 = vld [vmem:[%s6587 + $0x8] sm:$0xf]
  %v6591 = vld [vmem:[%s6587 + $0xc] sm:$0xf]
  %v6596 = vunpack.c.l.b16 %v6588
  %v6597 = vunpack.c.l.b16 %v6589
  %v6598 = vunpack.c.l.b16 %v6590
  %v6599 = vunpack.c.l.b16 %v6591
  %v6600 = vpack.c.b16 %v6597, %v6596
  %v6601 = vpack.c.b16 %v6599, %v6598
  %v6605 = vsel %vm4519, %v6583, 0
  %v6608 = vsel %vm4519, %v6584, 0
  %v6611 = vsel %vm4519, %v6585, 0
  %v6614 = vsel %vm4519, %v6586, 0
  %6616 = vmatprep.subr.bf16.mxu0 0
  %6617 = vmatpush1.bf16.msra.mxu0 0
  %6618 = vmatprep.subr.bf16.mxu0 0
  %6619 = vmatpush1.bf16.msra.mxu0 0
  %6620 = vmatprep.subr.bf16.mxu0 0
  %6621 = vmatpush1.bf16.msra.mxu0 0
  %6622 = vmatprep.subr.bf16.mxu0 0
  %6623 = vmatpush1.bf16.msra.mxu0 0
  %6624 = vmatprep.subr.bf16.mxu0 0
  %6625 = vmatpush1.bf16.msra.mxu0 0
  %6626 = vmatprep.subr.bf16.mxu0 0
  %6627 = vmatpush1.bf16.msra.mxu0 0
  %6628 = vmatprep.subr.bf16.mxu0 0
  %6629 = vmatpush1.bf16.msra.mxu0 %v6601
  %6630 = vmatprep.subr.bf16.mxu0 0
  %6631 = vmatpush1.bf16.msra.mxu0 %v6600
  %6632 = vmatprep.subr.bf16.mxu0 0
  %6633 = vmatpush2.bf16.msra.mxu0 0
  %6634 = vmatprep.subr.bf16.mxu0 0
  %6635 = vmatpush2.bf16.msra.mxu0 0
  %6636 = vmatprep.subr.bf16.mxu0 0
  %6637 = vmatpush2.bf16.msra.mxu0 0
  %6638 = vmatprep.subr.bf16.mxu0 0
  %6639 = vmatpush2.bf16.msra.mxu0 0
  %6640 = vmatprep.subr.bf16.mxu0 0
  %6641 = vmatpush2.bf16.msra.mxu0 0
  %6642 = vmatprep.subr.bf16.mxu0 0
  %6643 = vmatpush2.bf16.msra.mxu0 0
  %6644 = vmatprep.subr.bf16.mxu0 0
  %6645 = vmatpush2.bf16.msra.mxu0 0
  %6646 = vmatprep.subr.bf16.mxu0 0
  %6647 = vmatpush2.bf16.msra.mxu0 0
  %6648 = vmatprep.mubr.bf16.mxu0 0
  %6649 = vmatmul.mubr.bf16.gmra.mxu0 %v6605
  %v6650 = vpop.f32.mrf.mxu0
  %v6651 = vadd.f32 0.0, %v6650
  %v6652 = vpop.f32.mrf.mxu0
  %v6653 = vpop.f32.mrf.mxu0
  %v6654 = vadd.f32 0.0, %v6653
  %v6655 = vpop.f32.mrf.mxu0
  %6656 = vmatprep.mubr.bf16.mxu0 0
  %6657 = vmatmul.mubr.bf16.gmra.mxu0 %v6608
  %v6658 = vpop.f32.mrf.mxu0
  %v6659 = vadd.f32 0.0, %v6658
  %v6660 = vpop.f32.mrf.mxu0
  %v6661 = vpop.f32.mrf.mxu0
  %v6662 = vadd.f32 0.0, %v6661
  %v6663 = vpop.f32.mrf.mxu0
  %6664 = vmatprep.mubr.bf16.mxu0 0
  %6665 = vmatmul.mubr.bf16.gmra.mxu0 %v6611
  %v6666 = vpop.f32.mrf.mxu0
  %v6667 = vadd.f32 0.0, %v6666
  %v6668 = vpop.f32.mrf.mxu0
  %v6669 = vpop.f32.mrf.mxu0
  %v6670 = vadd.f32 0.0, %v6669
  %v6671 = vpop.f32.mrf.mxu0
  %6672 = vmatprep.mubr.bf16.mxu0 0
  %6673 = vmatmul.mubr.bf16.gmra.mxu0 %v6614
  %v6674 = vpop.f32.mrf.mxu0
  %v6675 = vadd.f32 0.0, %v6674
  %v6676 = vpop.f32.mrf.mxu0
  %v6677 = vpop.f32.mrf.mxu0
  %v6678 = vadd.f32 0.0, %v6677
  %v6679 = vpop.f32.mrf.mxu0
  %6680 = vdwg.mxu0
  %v6681 = vpack.c.bf16 %v6654, %v6651
  %v6682 = vpack.c.bf16 %v6662, %v6659
  %v6683 = vpack.c.bf16 %v6670, %v6667
  %v6684 = vpack.c.bf16 %v6678, %v6675
  %6685 = vmatprep.subr.bf16.mxu0 0
  %6686 = vmatpush1.bf16.msra.mxu0 0
  %6687 = vmatprep.subr.bf16.mxu0 0
  %6688 = vmatpush1.bf16.msra.mxu0 0
  %6689 = vmatprep.subr.bf16.mxu0 0
  %6690 = vmatpush1.bf16.msra.mxu0 0
  %6691 = vmatprep.subr.bf16.mxu0 0
  %6692 = vmatpush1.bf16.msra.mxu0 0
  %6693 = vmatprep.subr.bf16.mxu0 0
  %6694 = vmatpush1.bf16.msra.mxu0 %v6684
  %6695 = vmatprep.subr.bf16.mxu0 0
  %6696 = vmatpush1.bf16.msra.mxu0 %v6683
  %6697 = vmatprep.subr.bf16.mxu0 0
  %6698 = vmatpush1.bf16.msra.mxu0 %v6682
  %6699 = vmatprep.subr.bf16.mxu0 0
  %6700 = vmatpush1.bf16.msra.mxu0 %v6681
  %6701 = vmatprep.subr.bf16.mxu0 0
  %6702 = vmatpush2.bf16.msra.mxu0 0
  %6703 = vmatprep.subr.bf16.mxu0 0
  %6704 = vmatpush2.bf16.msra.mxu0 0
  %6705 = vmatprep.subr.bf16.mxu0 0
  %6706 = vmatpush2.bf16.msra.mxu0 0
  %6707 = vmatprep.subr.bf16.mxu0 0
  %6708 = vmatpush2.bf16.msra.mxu0 0
  %6709 = vmatprep.subr.bf16.mxu0 0
  %6710 = vmatpush2.bf16.msra.mxu0 0
  %6711 = vmatprep.subr.bf16.mxu0 0
  %6712 = vmatpush2.bf16.msra.mxu0 0
  %6713 = vmatprep.subr.bf16.mxu0 0
  %6714 = vmatpush2.bf16.msra.mxu0 0
  %6715 = vmatprep.subr.bf16.mxu0 0
  %6716 = vmatpush2.bf16.msra.mxu0 0
  %6717 = vmatprep.mubr.bf16.mxu0 0
  %6718 = vmatmul.mubr.bf16.gmra.mxu0 %v6242
  %v6719 = vpop.f32.mrf.mxu0
  %v6720 = vadd.f32 0.0, %v6719
  %v6721 = vpop.f32.mrf.mxu0
  %v6722 = vpop.f32.mrf.mxu0
  %v6723 = vadd.f32 0.0, %v6722
  %v6724 = vpop.f32.mrf.mxu0
  %6725 = vmatprep.mubr.bf16.mxu0 0
  %6726 = vmatmul.mubr.bf16.gmra.mxu0 %v6245
  %v6727 = vpop.f32.mrf.mxu0
  %v6728 = vadd.f32 0.0, %v6727
  %v6729 = vpop.f32.mrf.mxu0
  %v6730 = vpop.f32.mrf.mxu0
  %v6731 = vadd.f32 0.0, %v6730
  %v6732 = vpop.f32.mrf.mxu0
  %6733 = vmatprep.mubr.bf16.mxu0 0
  %6734 = vmatmul.mubr.bf16.gmra.mxu0 %v6248
  %v6735 = vpop.f32.mrf.mxu0
  %v6736 = vadd.f32 0.0, %v6735
  %v6737 = vpop.f32.mrf.mxu0
  %v6738 = vpop.f32.mrf.mxu0
  %v6739 = vadd.f32 0.0, %v6738
  %v6740 = vpop.f32.mrf.mxu0
  %6741 = vmatprep.mubr.bf16.mxu0 0
  %6742 = vmatmul.mubr.bf16.gmra.mxu0 %v6251
  %v6743 = vpop.f32.mrf.mxu0
  %v6744 = vadd.f32 0.0, %v6743
  %v6745 = vpop.f32.mrf.mxu0
  %v6746 = vpop.f32.mrf.mxu0
  %v6747 = vadd.f32 0.0, %v6746
  %v6748 = vpop.f32.mrf.mxu0
  %6749 = vdwg.mxu0
  %v6750 = vtanh.pop %v6720
  %v6751 = vtanh.pop %v6723
  %v6752 = vtanh.pop %v6728
  %v6753 = vtanh.pop %v6731
  %v6754 = vtanh.pop %v6736
  %v6755 = vtanh.pop %v6739
  %v6756 = vtanh.pop %v6744
  %v6757 = vtanh.pop %v6747
  %v6758 = vpack.c.bf16 %v6751, %v6750
  %v6759 = vpack.c.bf16 %v6753, %v6752
  %v6760 = vpack.c.bf16 %v6755, %v6754
  %v6761 = vpack.c.bf16 %v6757, %v6756
  %6762 = vmatprep.subr.bf16.mxu0 0
  %6763 = vmatpush1.bf16.msra.mxu0 0
  %6764 = vmatprep.subr.bf16.mxu0 0
  %6765 = vmatpush1.bf16.msra.mxu0 0
  %6766 = vmatprep.subr.bf16.mxu0 0
  %6767 = vmatpush1.bf16.msra.mxu0 0
  %6768 = vmatprep.subr.bf16.mxu0 0
  %6769 = vmatpush1.bf16.msra.mxu0 0
  %6770 = vmatprep.subr.bf16.mxu0 0
  %6771 = vmatpush1.bf16.msra.mxu0 %v6761
  %6772 = vmatprep.subr.bf16.mxu0 0
  %6773 = vmatpush1.bf16.msra.mxu0 %v6760
  %6774 = vmatprep.subr.bf16.mxu0 0
  %6775 = vmatpush1.bf16.msra.mxu0 %v6759
  %6776 = vmatprep.subr.bf16.mxu0 0
  %6777 = vmatpush1.bf16.msra.mxu0 %v6758
  %6778 = vmatprep.subr.bf16.mxu0 0
  %6779 = vmatpush2.bf16.msra.mxu0 0
  %6780 = vmatprep.subr.bf16.mxu0 0
  %6781 = vmatpush2.bf16.msra.mxu0 0
  %6782 = vmatprep.subr.bf16.mxu0 0
  %6783 = vmatpush2.bf16.msra.mxu0 0
  %6784 = vmatprep.subr.bf16.mxu0 0
  %6785 = vmatpush2.bf16.msra.mxu0 0
  %6786 = vmatprep.subr.bf16.mxu0 0
  %6787 = vmatpush2.bf16.msra.mxu0 0
  %6788 = vmatprep.subr.bf16.mxu0 0
  %6789 = vmatpush2.bf16.msra.mxu0 0
  %6790 = vmatprep.subr.bf16.mxu0 0
  %6791 = vmatpush2.bf16.msra.mxu0 0
  %6792 = vmatprep.subr.bf16.mxu0 0
  %6793 = vmatpush2.bf16.msra.mxu0 0
  %6794 = vmatprep.mubr.bf16.mxu0 0
  %6795 = vmatmul.mubr.bf16.gmra.mxu0 %v6331
  %v6796 = vpop.f32.mrf.mxu0
  %v6797 = vadd.f32 0.0, %v6796
  %v6798 = vpop.f32.mrf.mxu0
  %v6799 = vpop.f32.mrf.mxu0
  %v6800 = vadd.f32 0.0, %v6799
  %v6801 = vpop.f32.mrf.mxu0
  %6802 = vmatprep.mubr.bf16.mxu0 0
  %6803 = vmatmul.mubr.bf16.gmra.mxu0 %v6334
  %v6804 = vpop.f32.mrf.mxu0
  %v6805 = vadd.f32 0.0, %v6804
  %v6806 = vpop.f32.mrf.mxu0
  %v6807 = vpop.f32.mrf.mxu0
  %v6808 = vadd.f32 0.0, %v6807
  %v6809 = vpop.f32.mrf.mxu0
  %6810 = vmatprep.mubr.bf16.mxu0 0
  %6811 = vmatmul.mubr.bf16.gmra.mxu0 %v6337
  %v6812 = vpop.f32.mrf.mxu0
  %v6813 = vadd.f32 0.0, %v6812
  %v6814 = vpop.f32.mrf.mxu0
  %v6815 = vpop.f32.mrf.mxu0
  %v6816 = vadd.f32 0.0, %v6815
  %v6817 = vpop.f32.mrf.mxu0
  %6818 = vmatprep.mubr.bf16.mxu0 0
  %6819 = vmatmul.mubr.bf16.gmra.mxu0 %v6340
  %v6820 = vpop.f32.mrf.mxu0
  %v6821 = vadd.f32 0.0, %v6820
  %v6822 = vpop.f32.mrf.mxu0
  %v6823 = vpop.f32.mrf.mxu0
  %v6824 = vadd.f32 0.0, %v6823
  %v6825 = vpop.f32.mrf.mxu0
  %6826 = vdwg.mxu0
  %v6827 = vtanh.pop %v6797
  %v6828 = vtanh.pop %v6800
  %v6829 = vtanh.pop %v6805
  %v6830 = vtanh.pop %v6808
  %v6831 = vtanh.pop %v6813
  %v6832 = vtanh.pop %v6816
  %v6833 = vtanh.pop %v6821
  %v6834 = vtanh.pop %v6824
  %6843 = vrot.lane.b32.xlu0 %v6827, 32
  %v6844 = vpop.permute.xlu0 %6843
  %6845 = vrot.lane.b32.xlu0 %v6828, 32
  %v6846 = vpop.permute.xlu0 %6845
  %6847 = vrot.lane.b32.xlu0 %v6829, 32
  %v6848 = vpop.permute.xlu0 %6847
  %6849 = vrot.lane.b32.xlu0 %v6830, 32
  %v6850 = vpop.permute.xlu0 %6849
  %6851 = vrot.lane.b32.xlu0 %v6831, 32
  %v6852 = vpop.permute.xlu0 %6851
  %6853 = vrot.lane.b32.xlu0 %v6832, 32
  %v6854 = vpop.permute.xlu0 %6853
  %6855 = vrot.lane.b32.xlu0 %v6833, 32
  %v6856 = vpop.permute.xlu0 %6855
  %6857 = vrot.lane.b32.xlu0 %v6834, 32
  %v6858 = vpop.permute.xlu0 %6857
  %v6867 = vsel %vm4519, %v6750, %v6844
  %v6868 = vsel %vm4519, %v6751, %v6846
  %v6869 = vsel %vm4519, %v6752, %v6848
  %v6870 = vsel %vm4519, %v6753, %v6850
  %v6871 = vsel %vm4519, %v6754, %v6852
  %v6872 = vsel %vm4519, %v6755, %v6854
  %v6873 = vsel %vm4519, %v6756, %v6856
  %v6874 = vsel %vm4519, %v6757, %v6858
  %v6875 = vpack.c.bf16 %v6868, %v6867
  %v6876 = vpack.c.bf16 %v6870, %v6869
  %v6877 = vpack.c.bf16 %v6872, %v6871
  %v6878 = vpack.c.bf16 %v6874, %v6873
  %s6879 = scalar_lea.vmem %s12, 32
  %v6880 = vld [vmem:[%s6879] sm:$0xf]
  %v6881 = vld [vmem:[%s6879 + $0x4] sm:$0xf]
  %v6882 = vld [vmem:[%s6879 + $0x8] sm:$0xf]
  %v6883 = vld [vmem:[%s6879 + $0xc] sm:$0xf]
  %v6884 = vld [vmem:[%s6879 + $0x10] sm:$0xf]
  %v6885 = vld [vmem:[%s6879 + $0x14] sm:$0xf]
  %v6886 = vld [vmem:[%s6879 + $0x18] sm:$0xf]
  %v6887 = vld [vmem:[%s6879 + $0x1c] sm:$0xf]
  %s6888 = scalar_lea.vmem %s13, 1
  %v6889 = vld [vmem:[%s6888] sm:$0x1]
  %v6891 = vlaneseq
  %v6892 = vshrl.u32 %v6891, 7
  %v6893 = vsub.s32 0, %v6892
  %v6894 = vrot.slane %v6889, %v6893
  %v6904 = vunpack.c.l.b16 %v6880
  %v6905 = vunpack.c.l.b16 %v6881
  %v6906 = vunpack.c.l.b16 %v6882
  %v6907 = vunpack.c.l.b16 %v6883
  %v6908 = vunpack.c.l.b16 %v6884
  %v6909 = vunpack.c.l.b16 %v6885
  %v6910 = vunpack.c.l.b16 %v6886
  %v6911 = vunpack.c.l.b16 %v6887
  %v6912 = vpack.c.b16 %v6905, %v6904
  %v6913 = vpack.c.b16 %v6907, %v6906
  %v6914 = vpack.c.b16 %v6909, %v6908
  %v6915 = vpack.c.b16 %v6911, %v6910
  %v6921 = vsel %vm6240, %v6875, 0
  %v6924 = vsel %vm6240, %v6876, 0
  %v6927 = vsel %vm6240, %v6877, 0
  %v6930 = vsel %vm6240, %v6878, 0
  %6932 = vmatprep.subr.bf16.mxu0 0
  %6933 = vmatpush1.bf16.msra.mxu0 0
  %6934 = vmatprep.subr.bf16.mxu0 0
  %6935 = vmatpush1.bf16.msra.mxu0 0
  %6936 = vmatprep.subr.bf16.mxu0 0
  %6937 = vmatpush1.bf16.msra.mxu0 0
  %6938 = vmatprep.subr.bf16.mxu0 0
  %6939 = vmatpush1.bf16.msra.mxu0 0
  %6940 = vmatprep.subr.bf16.mxu0 0
  %6941 = vmatpush1.bf16.msra.mxu0 %v6915
  %6942 = vmatprep.subr.bf16.mxu0 0
  %6943 = vmatpush1.bf16.msra.mxu0 %v6914
  %6944 = vmatprep.subr.bf16.mxu0 0
  %6945 = vmatpush1.bf16.msra.mxu0 %v6913
  %6946 = vmatprep.subr.bf16.mxu0 0
  %6947 = vmatpush1.bf16.msra.mxu0 %v6912
  %6948 = vmatprep.subr.bf16.mxu0 0
  %6949 = vmatpush2.bf16.msra.mxu0 0
  %6950 = vmatprep.subr.bf16.mxu0 0
  %6951 = vmatpush2.bf16.msra.mxu0 0
  %6952 = vmatprep.subr.bf16.mxu0 0
  %6953 = vmatpush2.bf16.msra.mxu0 0
  %6954 = vmatprep.subr.bf16.mxu0 0
  %6955 = vmatpush2.bf16.msra.mxu0 0
  %6956 = vmatprep.subr.bf16.mxu0 0
  %6957 = vmatpush2.bf16.msra.mxu0 0
  %6958 = vmatprep.subr.bf16.mxu0 0
  %6959 = vmatpush2.bf16.msra.mxu0 0
  %6960 = vmatprep.subr.bf16.mxu0 0
  %6961 = vmatpush2.bf16.msra.mxu0 0
  %6962 = vmatprep.subr.bf16.mxu0 0
  %6963 = vmatpush2.bf16.msra.mxu0 0
  %6964 = vmatprep.mubr.bf16.mxu0 0
  %6965 = vmatmul.mubr.bf16.gmra.mxu0 %v6921
  %v6966 = vpop.f32.mrf.mxu0
  %v6967 = vadd.f32 %v6894, %v6966
  %v6968 = vpop.f32.mrf.mxu0
  %v6969 = vpop.f32.mrf.mxu0
  %v6970 = vadd.f32 %v6894, %v6969
  %v6971 = vpop.f32.mrf.mxu0
  %6972 = vmatprep.mubr.bf16.mxu0 0
  %6973 = vmatmul.mubr.bf16.gmra.mxu0 %v6924
  %v6974 = vpop.f32.mrf.mxu0
  %v6975 = vadd.f32 %v6894, %v6974
  %v6976 = vpop.f32.mrf.mxu0
  %v6977 = vpop.f32.mrf.mxu0
  %v6978 = vadd.f32 %v6894, %v6977
  %v6979 = vpop.f32.mrf.mxu0
  %6980 = vmatprep.mubr.bf16.mxu0 0
  %6981 = vmatmul.mubr.bf16.gmra.mxu0 %v6927
  %v6982 = vpop.f32.mrf.mxu0
  %v6983 = vadd.f32 %v6894, %v6982
  %v6984 = vpop.f32.mrf.mxu0
  %v6985 = vpop.f32.mrf.mxu0
  %v6986 = vadd.f32 %v6894, %v6985
  %v6987 = vpop.f32.mrf.mxu0
  %6988 = vmatprep.mubr.bf16.mxu0 0
  %6989 = vmatmul.mubr.bf16.gmra.mxu0 %v6930
  %v6990 = vpop.f32.mrf.mxu0
  %v6991 = vadd.f32 %v6894, %v6990
  %v6992 = vpop.f32.mrf.mxu0
  %v6993 = vpop.f32.mrf.mxu0
  %v6994 = vadd.f32 %v6894, %v6993
  %v6995 = vpop.f32.mrf.mxu0
  %6996 = vdwg.mxu0
  %v6997 = vtanh.pop %v6967
  %v6998 = vtanh.pop %v6970
  %v6999 = vtanh.pop %v6975
  %v7000 = vtanh.pop %v6978
  %v7001 = vtanh.pop %v6983
  %v7002 = vtanh.pop %v6986
  %v7003 = vtanh.pop %v6991
  %v7004 = vtanh.pop %v6994
  %v7005 = vpack.c.bf16 %v6998, %v6997
  %v7006 = vpack.c.bf16 %v7000, %v6999
  %v7007 = vpack.c.bf16 %v7002, %v7001
  %v7008 = vpack.c.bf16 %v7004, %v7003
  %s7009 = scalar_lea.vmem %s11, 32
  %v7010 = vld [vmem:[%s7009] sm:$0xf]
  %v7011 = vld [vmem:[%s7009 + $0x4] sm:$0xf]
  %v7012 = vld [vmem:[%s7009 + $0x8] sm:$0xf]
  %v7013 = vld [vmem:[%s7009 + $0xc] sm:$0xf]
  %v7018 = vunpack.c.l.b16 %v7010
  %v7019 = vunpack.c.l.b16 %v7011
  %v7020 = vunpack.c.l.b16 %v7012
  %v7021 = vunpack.c.l.b16 %v7013
  %v7022 = vpack.c.b16 %v7019, %v7018
  %v7023 = vpack.c.b16 %v7021, %v7020
  %v7027 = vsel %vm4519, %v7005, 0
  %v7030 = vsel %vm4519, %v7006, 0
  %v7033 = vsel %vm4519, %v7007, 0
  %v7036 = vsel %vm4519, %v7008, 0
  %7038 = vmatprep.subr.bf16.mxu0 0
  %7039 = vmatpush1.bf16.msra.mxu0 0
  %7040 = vmatprep.subr.bf16.mxu0 0
  %7041 = vmatpush1.bf16.msra.mxu0 0
  %7042 = vmatprep.subr.bf16.mxu0 0
  %7043 = vmatpush1.bf16.msra.mxu0 0
  %7044 = vmatprep.subr.bf16.mxu0 0
  %7045 = vmatpush1.bf16.msra.mxu0 0
  %7046 = vmatprep.subr.bf16.mxu0 0
  %7047 = vmatpush1.bf16.msra.mxu0 0
  %7048 = vmatprep.subr.bf16.mxu0 0
  %7049 = vmatpush1.bf16.msra.mxu0 0
  %7050 = vmatprep.subr.bf16.mxu0 0
  %7051 = vmatpush1.bf16.msra.mxu0 %v7023
  %7052 = vmatprep.subr.bf16.mxu0 0
  %7053 = vmatpush1.bf16.msra.mxu0 %v7022
  %7054 = vmatprep.subr.bf16.mxu0 0
  %7055 = vmatpush2.bf16.msra.mxu0 0
  %7056 = vmatprep.subr.bf16.mxu0 0
  %7057 = vmatpush2.bf16.msra.mxu0 0
  %7058 = vmatprep.subr.bf16.mxu0 0
  %7059 = vmatpush2.bf16.msra.mxu0 0
  %7060 = vmatprep.subr.bf16.mxu0 0
  %7061 = vmatpush2.bf16.msra.mxu0 0
  %7062 = vmatprep.subr.bf16.mxu0 0
  %7063 = vmatpush2.bf16.msra.mxu0 0
  %7064 = vmatprep.subr.bf16.mxu0 0
  %7065 = vmatpush2.bf16.msra.mxu0 0
  %7066 = vmatprep.subr.bf16.mxu0 0
  %7067 = vmatpush2.bf16.msra.mxu0 0
  %7068 = vmatprep.subr.bf16.mxu0 0
  %7069 = vmatpush2.bf16.msra.mxu0 0
  %7070 = vmatprep.mubr.bf16.mxu0 0
  %7071 = vmatmul.mubr.bf16.gmra.mxu0 %v7027
  %v7072 = vpop.f32.mrf.mxu0
  %v7073 = vadd.f32 0.0, %v7072
  %v7074 = vpop.f32.mrf.mxu0
  %v7075 = vpop.f32.mrf.mxu0
  %v7076 = vadd.f32 0.0, %v7075
  %v7077 = vpop.f32.mrf.mxu0
  %7078 = vmatprep.mubr.bf16.mxu0 0
  %7079 = vmatmul.mubr.bf16.gmra.mxu0 %v7030
  %v7080 = vpop.f32.mrf.mxu0
  %v7081 = vadd.f32 0.0, %v7080
  %v7082 = vpop.f32.mrf.mxu0
  %v7083 = vpop.f32.mrf.mxu0
  %v7084 = vadd.f32 0.0, %v7083
  %v7085 = vpop.f32.mrf.mxu0
  %7086 = vmatprep.mubr.bf16.mxu0 0
  %7087 = vmatmul.mubr.bf16.gmra.mxu0 %v7033
  %v7088 = vpop.f32.mrf.mxu0
  %v7089 = vadd.f32 0.0, %v7088
  %v7090 = vpop.f32.mrf.mxu0
  %v7091 = vpop.f32.mrf.mxu0
  %v7092 = vadd.f32 0.0, %v7091
  %v7093 = vpop.f32.mrf.mxu0
  %7094 = vmatprep.mubr.bf16.mxu0 0
  %7095 = vmatmul.mubr.bf16.gmra.mxu0 %v7036
  %v7096 = vpop.f32.mrf.mxu0
  %v7097 = vadd.f32 0.0, %v7096
  %v7098 = vpop.f32.mrf.mxu0
  %v7099 = vpop.f32.mrf.mxu0
  %v7100 = vadd.f32 0.0, %v7099
  %v7101 = vpop.f32.mrf.mxu0
  %7102 = vdwg.mxu0
  %v7103 = vpack.c.bf16 %v7076, %v7073
  %v7104 = vpack.c.bf16 %v7084, %v7081
  %v7105 = vpack.c.bf16 %v7092, %v7089
  %v7106 = vpack.c.bf16 %v7100, %v7097
  %7107 = vmatprep.subr.bf16.mxu0 0
  %7108 = vmatpush1.bf16.msra.mxu0 0
  %7109 = vmatprep.subr.bf16.mxu0 0
  %7110 = vmatpush1.bf16.msra.mxu0 0
  %7111 = vmatprep.subr.bf16.mxu0 0
  %7112 = vmatpush1.bf16.msra.mxu0 0
  %7113 = vmatprep.subr.bf16.mxu0 0
  %7114 = vmatpush1.bf16.msra.mxu0 0
  %7115 = vmatprep.subr.bf16.mxu0 0
  %7116 = vmatpush1.bf16.msra.mxu0 %v7106
  %7117 = vmatprep.subr.bf16.mxu0 0
  %7118 = vmatpush1.bf16.msra.mxu0 %v7105
  %7119 = vmatprep.subr.bf16.mxu0 0
  %7120 = vmatpush1.bf16.msra.mxu0 %v7104
  %7121 = vmatprep.subr.bf16.mxu0 0
  %7122 = vmatpush1.bf16.msra.mxu0 %v7103
  %7123 = vmatprep.subr.bf16.mxu0 0
  %7124 = vmatpush2.bf16.msra.mxu0 0
  %7125 = vmatprep.subr.bf16.mxu0 0
  %7126 = vmatpush2.bf16.msra.mxu0 0
  %7127 = vmatprep.subr.bf16.mxu0 0
  %7128 = vmatpush2.bf16.msra.mxu0 0
  %7129 = vmatprep.subr.bf16.mxu0 0
  %7130 = vmatpush2.bf16.msra.mxu0 0
  %7131 = vmatprep.subr.bf16.mxu0 0
  %7132 = vmatpush2.bf16.msra.mxu0 0
  %7133 = vmatprep.subr.bf16.mxu0 0
  %7134 = vmatpush2.bf16.msra.mxu0 0
  %7135 = vmatprep.subr.bf16.mxu0 0
  %7136 = vmatpush2.bf16.msra.mxu0 0
  %7137 = vmatprep.subr.bf16.mxu0 0
  %7138 = vmatpush2.bf16.msra.mxu0 0
  %7139 = vmatprep.mubr.bf16.mxu0 0
  %7140 = vmatmul.mubr.bf16.gmra.mxu0 %v6242
  %v7141 = vpop.f32.mrf.mxu0
  %v7142 = vadd.f32 0.0, %v7141
  %v7143 = vpop.f32.mrf.mxu0
  %v7144 = vpop.f32.mrf.mxu0
  %v7145 = vadd.f32 0.0, %v7144
  %v7146 = vpop.f32.mrf.mxu0
  %7147 = vmatprep.mubr.bf16.mxu0 0
  %7148 = vmatmul.mubr.bf16.gmra.mxu0 %v6245
  %v7149 = vpop.f32.mrf.mxu0
  %v7150 = vadd.f32 0.0, %v7149
  %v7151 = vpop.f32.mrf.mxu0
  %v7152 = vpop.f32.mrf.mxu0
  %v7153 = vadd.f32 0.0, %v7152
  %v7154 = vpop.f32.mrf.mxu0
  %7155 = vmatprep.mubr.bf16.mxu0 0
  %7156 = vmatmul.mubr.bf16.gmra.mxu0 %v6248
  %v7157 = vpop.f32.mrf.mxu0
  %v7158 = vadd.f32 0.0, %v7157
  %v7159 = vpop.f32.mrf.mxu0
  %v7160 = vpop.f32.mrf.mxu0
  %v7161 = vadd.f32 0.0, %v7160
  %v7162 = vpop.f32.mrf.mxu0
  %7163 = vmatprep.mubr.bf16.mxu0 0
  %7164 = vmatmul.mubr.bf16.gmra.mxu0 %v6251
  %v7165 = vpop.f32.mrf.mxu0
  %v7166 = vadd.f32 0.0, %v7165
  %v7167 = vpop.f32.mrf.mxu0
  %v7168 = vpop.f32.mrf.mxu0
  %v7169 = vadd.f32 0.0, %v7168
  %v7170 = vpop.f32.mrf.mxu0
  %7171 = vdwg.mxu0
  %v7172 = vtanh.pop %v7142
  %v7173 = vtanh.pop %v7145
  %v7174 = vtanh.pop %v7150
  %v7175 = vtanh.pop %v7153
  %v7176 = vtanh.pop %v7158
  %v7177 = vtanh.pop %v7161
  %v7178 = vtanh.pop %v7166
  %v7179 = vtanh.pop %v7169
  %v7180 = vpack.c.bf16 %v7173, %v7172
  %v7181 = vpack.c.bf16 %v7175, %v7174
  %v7182 = vpack.c.bf16 %v7177, %v7176
  %v7183 = vpack.c.bf16 %v7179, %v7178
  %7184 = vmatprep.subr.bf16.mxu0 0
  %7185 = vmatpush1.bf16.msra.mxu0 0
  %7186 = vmatprep.subr.bf16.mxu0 0
  %7187 = vmatpush1.bf16.msra.mxu0 0
  %7188 = vmatprep.subr.bf16.mxu0 0
  %7189 = vmatpush1.bf16.msra.mxu0 0
  %7190 = vmatprep.subr.bf16.mxu0 0
  %7191 = vmatpush1.bf16.msra.mxu0 0
  %7192 = vmatprep.subr.bf16.mxu0 0
  %7193 = vmatpush1.bf16.msra.mxu0 %v7183
  %7194 = vmatprep.subr.bf16.mxu0 0
  %7195 = vmatpush1.bf16.msra.mxu0 %v7182
  %7196 = vmatprep.subr.bf16.mxu0 0
  %7197 = vmatpush1.bf16.msra.mxu0 %v7181
  %7198 = vmatprep.subr.bf16.mxu0 0
  %7199 = vmatpush1.bf16.msra.mxu0 %v7180
  %7200 = vmatprep.subr.bf16.mxu0 0
  %7201 = vmatpush2.bf16.msra.mxu0 0
  %7202 = vmatprep.subr.bf16.mxu0 0
  %7203 = vmatpush2.bf16.msra.mxu0 0
  %7204 = vmatprep.subr.bf16.mxu0 0
  %7205 = vmatpush2.bf16.msra.mxu0 0
  %7206 = vmatprep.subr.bf16.mxu0 0
  %7207 = vmatpush2.bf16.msra.mxu0 0
  %7208 = vmatprep.subr.bf16.mxu0 0
  %7209 = vmatpush2.bf16.msra.mxu0 0
  %7210 = vmatprep.subr.bf16.mxu0 0
  %7211 = vmatpush2.bf16.msra.mxu0 0
  %7212 = vmatprep.subr.bf16.mxu0 0
  %7213 = vmatpush2.bf16.msra.mxu0 0
  %7214 = vmatprep.subr.bf16.mxu0 0
  %7215 = vmatpush2.bf16.msra.mxu0 0
  %7216 = vmatprep.mubr.bf16.mxu0 0
  %7217 = vmatmul.mubr.bf16.gmra.mxu0 %v6331
  %v7218 = vpop.f32.mrf.mxu0
  %v7219 = vadd.f32 0.0, %v7218
  %v7220 = vpop.f32.mrf.mxu0
  %v7221 = vpop.f32.mrf.mxu0
  %v7222 = vadd.f32 0.0, %v7221
  %v7223 = vpop.f32.mrf.mxu0
  %7224 = vmatprep.mubr.bf16.mxu0 0
  %7225 = vmatmul.mubr.bf16.gmra.mxu0 %v6334
  %v7226 = vpop.f32.mrf.mxu0
  %v7227 = vadd.f32 0.0, %v7226
  %v7228 = vpop.f32.mrf.mxu0
  %v7229 = vpop.f32.mrf.mxu0
  %v7230 = vadd.f32 0.0, %v7229
  %v7231 = vpop.f32.mrf.mxu0
  %7232 = vmatprep.mubr.bf16.mxu0 0
  %7233 = vmatmul.mubr.bf16.gmra.mxu0 %v6337
  %v7234 = vpop.f32.mrf.mxu0
  %v7235 = vadd.f32 0.0, %v7234
  %v7236 = vpop.f32.mrf.mxu0
  %v7237 = vpop.f32.mrf.mxu0
  %v7238 = vadd.f32 0.0, %v7237
  %v7239 = vpop.f32.mrf.mxu0
  %7240 = vmatprep.mubr.bf16.mxu0 0
  %7241 = vmatmul.mubr.bf16.gmra.mxu0 %v6340
  %v7242 = vpop.f32.mrf.mxu0
  %v7243 = vadd.f32 0.0, %v7242
  %v7244 = vpop.f32.mrf.mxu0
  %v7245 = vpop.f32.mrf.mxu0
  %v7246 = vadd.f32 0.0, %v7245
  %v7247 = vpop.f32.mrf.mxu0
  %7248 = vdwg.mxu0
  %v7249 = vtanh.pop %v7219
  %v7250 = vtanh.pop %v7222
  %v7251 = vtanh.pop %v7227
  %v7252 = vtanh.pop %v7230
  %v7253 = vtanh.pop %v7235
  %v7254 = vtanh.pop %v7238
  %v7255 = vtanh.pop %v7243
  %v7256 = vtanh.pop %v7246
  %7265 = vrot.lane.b32.xlu0 %v7249, 32
  %v7266 = vpop.permute.xlu0 %7265
  %7267 = vrot.lane.b32.xlu0 %v7250, 32
  %v7268 = vpop.permute.xlu0 %7267
  %7269 = vrot.lane.b32.xlu0 %v7251, 32
  %v7270 = vpop.permute.xlu0 %7269
  %7271 = vrot.lane.b32.xlu0 %v7252, 32
  %v7272 = vpop.permute.xlu0 %7271
  %7273 = vrot.lane.b32.xlu0 %v7253, 32
  %v7274 = vpop.permute.xlu0 %7273
  %7275 = vrot.lane.b32.xlu0 %v7254, 32
  %v7276 = vpop.permute.xlu0 %7275
  %7277 = vrot.lane.b32.xlu0 %v7255, 32
  %v7278 = vpop.permute.xlu0 %7277
  %7279 = vrot.lane.b32.xlu0 %v7256, 32
  %v7280 = vpop.permute.xlu0 %7279
  %v7289 = vsel %vm4519, %v7172, %v7266
  %v7290 = vsel %vm4519, %v7173, %v7268
  %v7291 = vsel %vm4519, %v7174, %v7270
  %v7292 = vsel %vm4519, %v7175, %v7272
  %v7293 = vsel %vm4519, %v7176, %v7274
  %v7294 = vsel %vm4519, %v7177, %v7276
  %v7295 = vsel %vm4519, %v7178, %v7278
  %v7296 = vsel %vm4519, %v7179, %v7280
  %v7297 = vpack.c.bf16 %v7290, %v7289
  %v7298 = vpack.c.bf16 %v7292, %v7291
  %v7299 = vpack.c.bf16 %v7294, %v7293
  %v7300 = vpack.c.bf16 %v7296, %v7295
  %s7301 = scalar_lea.vmem %s12, 64
  %v7302 = vld [vmem:[%s7301] sm:$0xf]
  %v7303 = vld [vmem:[%s7301 + $0x4] sm:$0xf]
  %v7304 = vld [vmem:[%s7301 + $0x8] sm:$0xf]
  %v7305 = vld [vmem:[%s7301 + $0xc] sm:$0xf]
  %v7306 = vld [vmem:[%s7301 + $0x10] sm:$0xf]
  %v7307 = vld [vmem:[%s7301 + $0x14] sm:$0xf]
  %v7308 = vld [vmem:[%s7301 + $0x18] sm:$0xf]
  %v7309 = vld [vmem:[%s7301 + $0x1c] sm:$0xf]
  %s7310 = scalar_lea.vmem %s13, 2
  %v7311 = vld [vmem:[%s7310] sm:$0x1]
  %v7313 = vlaneseq
  %v7314 = vshrl.u32 %v7313, 7
  %v7315 = vsub.s32 0, %v7314
  %v7316 = vrot.slane %v7311, %v7315
  %v7326 = vunpack.c.l.b16 %v7302
  %v7327 = vunpack.c.l.b16 %v7303
  %v7328 = vunpack.c.l.b16 %v7304
  %v7329 = vunpack.c.l.b16 %v7305
  %v7330 = vunpack.c.l.b16 %v7306
  %v7331 = vunpack.c.l.b16 %v7307
  %v7332 = vunpack.c.l.b16 %v7308
  %v7333 = vunpack.c.l.b16 %v7309
  %v7334 = vpack.c.b16 %v7327, %v7326
  %v7335 = vpack.c.b16 %v7329, %v7328
  %v7336 = vpack.c.b16 %v7331, %v7330
  %v7337 = vpack.c.b16 %v7333, %v7332
  %v7343 = vsel %vm6240, %v7297, 0
  %v7346 = vsel %vm6240, %v7298, 0
  %v7349 = vsel %vm6240, %v7299, 0
  %v7352 = vsel %vm6240, %v7300, 0
  %7354 = vmatprep.subr.bf16.mxu0 0
  %7355 = vmatpush1.bf16.msra.mxu0 0
  %7356 = vmatprep.subr.bf16.mxu0 0
  %7357 = vmatpush1.bf16.msra.mxu0 0
  %7358 = vmatprep.subr.bf16.mxu0 0
  %7359 = vmatpush1.bf16.msra.mxu0 0
  %7360 = vmatprep.subr.bf16.mxu0 0
  %7361 = vmatpush1.bf16.msra.mxu0 0
  %7362 = vmatprep.subr.bf16.mxu0 0
  %7363 = vmatpush1.bf16.msra.mxu0 %v7337
  %7364 = vmatprep.subr.bf16.mxu0 0
  %7365 = vmatpush1.bf16.msra.mxu0 %v7336
  %7366 = vmatprep.subr.bf16.mxu0 0
  %7367 = vmatpush1.bf16.msra.mxu0 %v7335
  %7368 = vmatprep.subr.bf16.mxu0 0
  %7369 = vmatpush1.bf16.msra.mxu0 %v7334
  %7370 = vmatprep.subr.bf16.mxu0 0
  %7371 = vmatpush2.bf16.msra.mxu0 0
  %7372 = vmatprep.subr.bf16.mxu0 0
  %7373 = vmatpush2.bf16.msra.mxu0 0
  %7374 = vmatprep.subr.bf16.mxu0 0
  %7375 = vmatpush2.bf16.msra.mxu0 0
  %7376 = vmatprep.subr.bf16.mxu0 0
  %7377 = vmatpush2.bf16.msra.mxu0 0
  %7378 = vmatprep.subr.bf16.mxu0 0
  %7379 = vmatpush2.bf16.msra.mxu0 0
  %7380 = vmatprep.subr.bf16.mxu0 0
  %7381 = vmatpush2.bf16.msra.mxu0 0
  %7382 = vmatprep.subr.bf16.mxu0 0
  %7383 = vmatpush2.bf16.msra.mxu0 0
  %7384 = vmatprep.subr.bf16.mxu0 0
  %7385 = vmatpush2.bf16.msra.mxu0 0
  %7386 = vmatprep.mubr.bf16.mxu0 0
  %7387 = vmatmul.mubr.bf16.gmra.mxu0 %v7343
  %v7388 = vpop.f32.mrf.mxu0
  %v7389 = vadd.f32 %v7316, %v7388
  %v7390 = vpop.f32.mrf.mxu0
  %v7391 = vpop.f32.mrf.mxu0
  %v7392 = vadd.f32 %v7316, %v7391
  %v7393 = vpop.f32.mrf.mxu0
  %7394 = vmatprep.mubr.bf16.mxu0 0
  %7395 = vmatmul.mubr.bf16.gmra.mxu0 %v7346
  %v7396 = vpop.f32.mrf.mxu0
  %v7397 = vadd.f32 %v7316, %v7396
  %v7398 = vpop.f32.mrf.mxu0
  %v7399 = vpop.f32.mrf.mxu0
  %v7400 = vadd.f32 %v7316, %v7399
  %v7401 = vpop.f32.mrf.mxu0
  %7402 = vmatprep.mubr.bf16.mxu0 0
  %7403 = vmatmul.mubr.bf16.gmra.mxu0 %v7349
  %v7404 = vpop.f32.mrf.mxu0
  %v7405 = vadd.f32 %v7316, %v7404
  %v7406 = vpop.f32.mrf.mxu0
  %v7407 = vpop.f32.mrf.mxu0
  %v7408 = vadd.f32 %v7316, %v7407
  %v7409 = vpop.f32.mrf.mxu0
  %7410 = vmatprep.mubr.bf16.mxu0 0
  %7411 = vmatmul.mubr.bf16.gmra.mxu0 %v7352
  %v7412 = vpop.f32.mrf.mxu0
  %v7413 = vadd.f32 %v7316, %v7412
  %v7414 = vpop.f32.mrf.mxu0
  %v7415 = vpop.f32.mrf.mxu0
  %v7416 = vadd.f32 %v7316, %v7415
  %v7417 = vpop.f32.mrf.mxu0
  %7418 = vdwg.mxu0
  %v7419 = vtanh.pop %v7389
  %v7420 = vtanh.pop %v7392
  %v7421 = vtanh.pop %v7397
  %v7422 = vtanh.pop %v7400
  %v7423 = vtanh.pop %v7405
  %v7424 = vtanh.pop %v7408
  %v7425 = vtanh.pop %v7413
  %v7426 = vtanh.pop %v7416
  %7435 = vrot.lane.b32.xlu0 %v6575, 32
  %v7436 = vpop.permute.xlu0 %7435
  %7437 = vrot.lane.b32.xlu0 %v6576, 32
  %v7438 = vpop.permute.xlu0 %7437
  %7439 = vrot.lane.b32.xlu0 %v6577, 32
  %v7440 = vpop.permute.xlu0 %7439
  %7441 = vrot.lane.b32.xlu0 %v6578, 32
  %v7442 = vpop.permute.xlu0 %7441
  %7443 = vrot.lane.b32.xlu0 %v6579, 32
  %v7444 = vpop.permute.xlu0 %7443
  %7445 = vrot.lane.b32.xlu0 %v6580, 32
  %v7446 = vpop.permute.xlu0 %7445
  %7447 = vrot.lane.b32.xlu0 %v6581, 32
  %v7448 = vpop.permute.xlu0 %7447
  %7449 = vrot.lane.b32.xlu0 %v6582, 32
  %v7450 = vpop.permute.xlu0 %7449
  %7467 = vrot.lane.b32.xlu0 %v6997, 64
  %v7468 = vpop.permute.xlu0 %7467
  %7469 = vrot.lane.b32.xlu0 %v6998, 64
  %v7470 = vpop.permute.xlu0 %7469
  %7471 = vrot.lane.b32.xlu0 %v6999, 64
  %v7472 = vpop.permute.xlu0 %7471
  %7473 = vrot.lane.b32.xlu0 %v7000, 64
  %v7474 = vpop.permute.xlu0 %7473
  %7475 = vrot.lane.b32.xlu0 %v7001, 64
  %v7476 = vpop.permute.xlu0 %7475
  %7477 = vrot.lane.b32.xlu0 %v7002, 64
  %v7478 = vpop.permute.xlu0 %7477
  %7479 = vrot.lane.b32.xlu0 %v7003, 64
  %v7480 = vpop.permute.xlu0 %7479
  %7481 = vrot.lane.b32.xlu0 %v7004, 64
  %v7482 = vpop.permute.xlu0 %7481
  %7499 = vrot.lane.b32.xlu0 %v7419, 96
  %v7500 = vpop.permute.xlu0 %7499
  %7501 = vrot.lane.b32.xlu0 %v7420, 96
  %v7502 = vpop.permute.xlu0 %7501
  %7503 = vrot.lane.b32.xlu0 %v7421, 96
  %v7504 = vpop.permute.xlu0 %7503
  %7505 = vrot.lane.b32.xlu0 %v7422, 96
  %v7506 = vpop.permute.xlu0 %7505
  %7507 = vrot.lane.b32.xlu0 %v7423, 96
  %v7508 = vpop.permute.xlu0 %7507
  %7509 = vrot.lane.b32.xlu0 %v7424, 96
  %v7510 = vpop.permute.xlu0 %7509
  %7511 = vrot.lane.b32.xlu0 %v7425, 96
  %v7512 = vpop.permute.xlu0 %7511
  %7513 = vrot.lane.b32.xlu0 %v7426, 96
  %v7514 = vpop.permute.xlu0 %7513
  %v7523 = vsel %vm4519, %v423, %v7436
  %v7524 = vsel %vm4519, %v424, %v7438
  %v7525 = vsel %vm4519, %v425, %v7440
  %v7526 = vsel %vm4519, %v426, %v7442
  %v7527 = vsel %vm4519, %v427, %v7444
  %v7528 = vsel %vm4519, %v428, %v7446
  %v7529 = vsel %vm4519, %v429, %v7448
  %v7530 = vsel %vm4519, %v430, %v7450
  %v7531 = vsel %vm6240, %v7523, %v7468
  %v7532 = vsel %vm6240, %v7524, %v7470
  %v7533 = vsel %vm6240, %v7525, %v7472
  %v7534 = vsel %vm6240, %v7526, %v7474
  %v7535 = vsel %vm6240, %v7527, %v7476
  %v7536 = vsel %vm6240, %v7528, %v7478
  %v7537 = vsel %vm6240, %v7529, %v7480
  %v7538 = vsel %vm6240, %v7530, %v7482
  %vm7539 = vcmask 785408
  %v7540 = vsel %vm7539, %v7531, %v7500
  %v7541 = vsel %vm7539, %v7532, %v7502
  %v7542 = vsel %vm7539, %v7533, %v7504
  %v7543 = vsel %vm7539, %v7534, %v7506
  %v7544 = vsel %vm7539, %v7535, %v7508
  %v7545 = vsel %vm7539, %v7536, %v7510
  %v7546 = vsel %vm7539, %v7537, %v7512
  %v7547 = vsel %vm7539, %v7538, %v7514
  %v7548 = vpack.c.bf16 %v7541, %v7540
  %v7549 = vpack.c.bf16 %v7543, %v7542
  %v7550 = vpack.c.bf16 %v7545, %v7544
  %v7551 = vpack.c.bf16 %v7547, %v7546
  %v7552 = vld [vmem:[%s14] sm:$0xff]
  %v7553 = vld [vmem:[%s14 + $0x8] sm:$0xff]
  %v7554 = vld [vmem:[%s14 + $0x10] sm:$0xff]
  %v7555 = vld [vmem:[%s14 + $0x18] sm:$0xff]
  %v7556 = vld [vmem:[%s14 + $0x20] sm:$0xff]
  %v7557 = vld [vmem:[%s14 + $0x28] sm:$0xff]
  %v7558 = vld [vmem:[%s14 + $0x30] sm:$0xff]
  %v7559 = vld [vmem:[%s14 + $0x38] sm:$0xff]
  %v7560 = vld [vmem:[%s14 + $0x40] sm:$0xff]
  %v7561 = vld [vmem:[%s14 + $0x48] sm:$0xff]
  %v7562 = vld [vmem:[%s14 + $0x50] sm:$0xff]
  %v7563 = vld [vmem:[%s14 + $0x58] sm:$0xff]
  %v7564 = vld [vmem:[%s14 + $0x60] sm:$0xff]
  %v7565 = vld [vmem:[%s14 + $0x68] sm:$0xff]
  %v7566 = vld [vmem:[%s14 + $0x70] sm:$0xff]
  %v7567 = vld [vmem:[%s14 + $0x78] sm:$0xff]
  %v7568 = vld [vmem:[%s15] sm:$0x3]
  %v7570 = vlaneseq
  %v7571 = vshrl.u32 %v7570, 7
  %v7572 = vsub.s32 0, %v7571
  %v7573 = vrot.slane %v7568, %v7572
  %v7574 = vlaneseq
  %v7575 = vshrl.u32 %v7574, 7
  %v7576 = vsub.s32 1, %v7575
  %v7577 = vrot.slane %v7568, %v7576
  %v7596 = vunpack.c.l.b16 %v7552
  %v7597 = vunpack.c.h.b16 %v7552
  %v7598 = vunpack.c.l.b16 %v7553
  %v7599 = vunpack.c.h.b16 %v7553
  %v7600 = vunpack.c.l.b16 %v7554
  %v7601 = vunpack.c.h.b16 %v7554
  %v7602 = vunpack.c.l.b16 %v7555
  %v7603 = vunpack.c.h.b16 %v7555
  %v7604 = vunpack.c.l.b16 %v7556
  %v7605 = vunpack.c.h.b16 %v7556
  %v7606 = vunpack.c.l.b16 %v7557
  %v7607 = vunpack.c.h.b16 %v7557
  %v7608 = vunpack.c.l.b16 %v7558
  %v7609 = vunpack.c.h.b16 %v7558
  %v7610 = vunpack.c.l.b16 %v7559
  %v7611 = vunpack.c.h.b16 %v7559
  %v7612 = vunpack.c.l.b16 %v7560
  %v7613 = vunpack.c.h.b16 %v7560
  %v7614 = vunpack.c.l.b16 %v7561
  %v7615 = vunpack.c.h.b16 %v7561
  %v7616 = vunpack.c.l.b16 %v7562
  %v7617 = vunpack.c.h.b16 %v7562
  %v7618 = vunpack.c.l.b16 %v7563
  %v7619 = vunpack.c.h.b16 %v7563
  %v7620 = vunpack.c.l.b16 %v7564
  %v7621 = vunpack.c.h.b16 %v7564
  %v7622 = vunpack.c.l.b16 %v7565
  %v7623 = vunpack.c.h.b16 %v7565
  %v7624 = vunpack.c.l.b16 %v7566
  %v7625 = vunpack.c.h.b16 %v7566
  %v7626 = vunpack.c.l.b16 %v7567
  %v7627 = vunpack.c.h.b16 %v7567
  %v7628 = vpack.c.b16 %v7598, %v7596
  %v7629 = vpack.c.b16 %v7599, %v7597
  %v7630 = vpack.c.b16 %v7602, %v7600
  %v7631 = vpack.c.b16 %v7603, %v7601
  %v7632 = vpack.c.b16 %v7606, %v7604
  %v7633 = vpack.c.b16 %v7607, %v7605
  %v7634 = vpack.c.b16 %v7610, %v7608
  %v7635 = vpack.c.b16 %v7611, %v7609
  %v7636 = vpack.c.b16 %v7614, %v7612
  %v7637 = vpack.c.b16 %v7615, %v7613
  %v7638 = vpack.c.b16 %v7618, %v7616
  %v7639 = vpack.c.b16 %v7619, %v7617
  %v7640 = vpack.c.b16 %v7622, %v7620
  %v7641 = vpack.c.b16 %v7623, %v7621
  %v7642 = vpack.c.b16 %v7626, %v7624
  %v7643 = vpack.c.b16 %v7627, %v7625
  %7660 = vmatprep.subr.bf16.mxu0 %v7643
  %7661 = vmatpush1.bf16.msra.mxu0 %v7642
  %7662 = vmatprep.subr.bf16.mxu0 %v7641
  %7663 = vmatpush1.bf16.msra.mxu0 %v7640
  %7664 = vmatprep.subr.bf16.mxu0 %v7639
  %7665 = vmatpush1.bf16.msra.mxu0 %v7638
  %7666 = vmatprep.subr.bf16.mxu0 %v7637
  %7667 = vmatpush1.bf16.msra.mxu0 %v7636
  %7668 = vmatprep.subr.bf16.mxu0 %v7635
  %7669 = vmatpush1.bf16.msra.mxu0 %v7634
  %7670 = vmatprep.subr.bf16.mxu0 %v7633
  %7671 = vmatpush1.bf16.msra.mxu0 %v7632
  %7672 = vmatprep.subr.bf16.mxu0 %v7631
  %7673 = vmatpush1.bf16.msra.mxu0 %v7630
  %7674 = vmatprep.subr.bf16.mxu0 %v7629
  %7675 = vmatpush1.bf16.msra.mxu0 %v7628
  %7676 = vmatprep.subr.bf16.mxu0 0
  %7677 = vmatpush2.bf16.msra.mxu0 0
  %7678 = vmatprep.subr.bf16.mxu0 0
  %7679 = vmatpush2.bf16.msra.mxu0 0
  %7680 = vmatprep.subr.bf16.mxu0 0
  %7681 = vmatpush2.bf16.msra.mxu0 0
  %7682 = vmatprep.subr.bf16.mxu0 0
  %7683 = vmatpush2.bf16.msra.mxu0 0
  %7684 = vmatprep.subr.bf16.mxu0 0
  %7685 = vmatpush2.bf16.msra.mxu0 0
  %7686 = vmatprep.subr.bf16.mxu0 0
  %7687 = vmatpush2.bf16.msra.mxu0 0
  %7688 = vmatprep.subr.bf16.mxu0 0
  %7689 = vmatpush2.bf16.msra.mxu0 0
  %7690 = vmatprep.subr.bf16.mxu0 0
  %7691 = vmatpush2.bf16.msra.mxu0 0
  %7692 = vmatprep.mubr.bf16.mxu0 0
  %7693 = vmatmul.mubr.bf16.gmra.mxu0 %v7548
  %v7694 = vpop.f32.mrf.mxu0
  %v7695 = vadd.f32 %v7573, %v7694
  %v7696 = vpop.f32.mrf.mxu0
  %v7697 = vadd.f32 %v7577, %v7696
  %v7698 = vpop.f32.mrf.mxu0
  %v7699 = vadd.f32 %v7573, %v7698
  %v7700 = vpop.f32.mrf.mxu0
  %v7701 = vadd.f32 %v7577, %v7700
  %7702 = vmatprep.mubr.bf16.mxu0 0
  %7703 = vmatmul.mubr.bf16.gmra.mxu0 %v7549
  %v7704 = vpop.f32.mrf.mxu0
  %v7705 = vadd.f32 %v7573, %v7704
  %v7706 = vpop.f32.mrf.mxu0
  %v7707 = vadd.f32 %v7577, %v7706
  %v7708 = vpop.f32.mrf.mxu0
  %v7709 = vadd.f32 %v7573, %v7708
  %v7710 = vpop.f32.mrf.mxu0
  %v7711 = vadd.f32 %v7577, %v7710
  %7712 = vmatprep.mubr.bf16.mxu0 0
  %7713 = vmatmul.mubr.bf16.gmra.mxu0 %v7550
  %v7714 = vpop.f32.mrf.mxu0
  %v7715 = vadd.f32 %v7573, %v7714
  %v7716 = vpop.f32.mrf.mxu0
  %v7717 = vadd.f32 %v7577, %v7716
  %v7718 = vpop.f32.mrf.mxu0
  %v7719 = vadd.f32 %v7573, %v7718
  %v7720 = vpop.f32.mrf.mxu0
  %v7721 = vadd.f32 %v7577, %v7720
  %7722 = vmatprep.mubr.bf16.mxu0 0
  %7723 = vmatmul.mubr.bf16.gmra.mxu0 %v7551
  %v7724 = vpop.f32.mrf.mxu0
  %v7725 = vadd.f32 %v7573, %v7724
  %v7726 = vpop.f32.mrf.mxu0
  %v7727 = vadd.f32 %v7577, %v7726
  %v7728 = vpop.f32.mrf.mxu0
  %v7729 = vadd.f32 %v7573, %v7728
  %v7730 = vpop.f32.mrf.mxu0
  %v7731 = vadd.f32 %v7577, %v7730
  %7732 = vdwg.mxu0
  %v7733 = vtanh.pop %v7695
  %v7734 = vtanh.pop %v7697
  %v7735 = vtanh.pop %v7699
  %v7736 = vtanh.pop %v7701
  %v7737 = vtanh.pop %v7705
  %v7738 = vtanh.pop %v7707
  %v7739 = vtanh.pop %v7709
  %v7740 = vtanh.pop %v7711
  %v7741 = vtanh.pop %v7715
  %v7742 = vtanh.pop %v7717
  %v7743 = vtanh.pop %v7719
  %v7744 = vtanh.pop %v7721
  %v7745 = vtanh.pop %v7725
  %v7746 = vtanh.pop %v7727
  %v7747 = vtanh.pop %v7729
  %v7748 = vtanh.pop %v7731
  %v7749 = vpack.c.bf16 %v7735, %v7733
  %v7750 = vpack.c.bf16 %v7736, %v7734
  %v7751 = vpack.c.bf16 %v7739, %v7737
  %v7752 = vpack.c.bf16 %v7740, %v7738
  %v7753 = vpack.c.bf16 %v7743, %v7741
  %v7754 = vpack.c.bf16 %v7744, %v7742
  %v7755 = vpack.c.bf16 %v7747, %v7745
  %v7756 = vpack.c.bf16 %v7748, %v7746
  %v7757 = vld [vmem:[%s16] sm:$0xf]
  %v7758 = vld [vmem:[%s16 + $0x4] sm:$0xf]
  %v7759 = vld [vmem:[%s16 + $0x8] sm:$0xf]
  %v7760 = vld [vmem:[%s16 + $0xc] sm:$0xf]
  %v7761 = vld [vmem:[%s16 + $0x10] sm:$0xf]
  %v7762 = vld [vmem:[%s16 + $0x14] sm:$0xf]
  %v7763 = vld [vmem:[%s16 + $0x18] sm:$0xf]
  %v7764 = vld [vmem:[%s16 + $0x1c] sm:$0xf]
  %v7765 = vld [vmem:[%s16 + $0x20] sm:$0xf]
  %v7766 = vld [vmem:[%s16 + $0x24] sm:$0xf]
  %v7767 = vld [vmem:[%s16 + $0x28] sm:$0xf]
  %v7768 = vld [vmem:[%s16 + $0x2c] sm:$0xf]
  %v7769 = vld [vmem:[%s16 + $0x30] sm:$0xf]
  %v7770 = vld [vmem:[%s16 + $0x34] sm:$0xf]
  %v7771 = vld [vmem:[%s16 + $0x38] sm:$0xf]
  %v7772 = vld [vmem:[%s16 + $0x3c] sm:$0xf]
  %v7773 = vld [vmem:[%s16 + $0x40] sm:$0xf]
  %v7774 = vld [vmem:[%s16 + $0x44] sm:$0xf]
  %v7775 = vld [vmem:[%s16 + $0x48] sm:$0xf]
  %v7776 = vld [vmem:[%s16 + $0x4c] sm:$0xf]
  %v7777 = vld [vmem:[%s16 + $0x50] sm:$0xf]
  %v7778 = vld [vmem:[%s16 + $0x54] sm:$0xf]
  %v7779 = vld [vmem:[%s16 + $0x58] sm:$0xf]
  %v7780 = vld [vmem:[%s16 + $0x5c] sm:$0xf]
  %v7781 = vld [vmem:[%s16 + $0x60] sm:$0xf]
  %v7782 = vld [vmem:[%s16 + $0x64] sm:$0xf]
  %v7783 = vld [vmem:[%s16 + $0x68] sm:$0xf]
  %v7784 = vld [vmem:[%s16 + $0x6c] sm:$0xf]
  %v7785 = vld [vmem:[%s16 + $0x70] sm:$0xf]
  %v7786 = vld [vmem:[%s16 + $0x74] sm:$0xf]
  %v7787 = vld [vmem:[%s16 + $0x78] sm:$0xf]
  %v7788 = vld [vmem:[%s16 + $0x7c] sm:$0xf]
  %v7789 = vld [vmem:[%s17] sm:$0x1]
  %v7791 = vlaneseq
  %v7792 = vshrl.u32 %v7791, 7
  %v7793 = vsub.s32 0, %v7792
  %v7794 = vrot.slane %v7789, %v7793
  %v7828 = vunpack.c.l.b16 %v7757
  %v7829 = vunpack.c.l.b16 %v7758
  %v7830 = vunpack.c.l.b16 %v7759
  %v7831 = vunpack.c.l.b16 %v7760
  %v7832 = vunpack.c.l.b16 %v7761
  %v7833 = vunpack.c.l.b16 %v7762
  %v7834 = vunpack.c.l.b16 %v7763
  %v7835 = vunpack.c.l.b16 %v7764
  %v7836 = vunpack.c.l.b16 %v7765
  %v7837 = vunpack.c.l.b16 %v7766
  %v7838 = vunpack.c.l.b16 %v7767
  %v7839 = vunpack.c.l.b16 %v7768
  %v7840 = vunpack.c.l.b16 %v7769
  %v7841 = vunpack.c.l.b16 %v7770
  %v7842 = vunpack.c.l.b16 %v7771
  %v7843 = vunpack.c.l.b16 %v7772
  %v7844 = vunpack.c.l.b16 %v7773
  %v7845 = vunpack.c.l.b16 %v7774
  %v7846 = vunpack.c.l.b16 %v7775
  %v7847 = vunpack.c.l.b16 %v7776
  %v7848 = vunpack.c.l.b16 %v7777
  %v7849 = vunpack.c.l.b16 %v7778
  %v7850 = vunpack.c.l.b16 %v7779
  %v7851 = vunpack.c.l.b16 %v7780
  %v7852 = vunpack.c.l.b16 %v7781
  %v7853 = vunpack.c.l.b16 %v7782
  %v7854 = vunpack.c.l.b16 %v7783
  %v7855 = vunpack.c.l.b16 %v7784
  %v7856 = vunpack.c.l.b16 %v7785
  %v7857 = vunpack.c.l.b16 %v7786
  %v7858 = vunpack.c.l.b16 %v7787
  %v7859 = vunpack.c.l.b16 %v7788
  %v7860 = vpack.c.b16 %v7829, %v7828
  %v7861 = vpack.c.b16 %v7831, %v7830
  %v7862 = vpack.c.b16 %v7833, %v7832
  %v7863 = vpack.c.b16 %v7835, %v7834
  %v7864 = vpack.c.b16 %v7837, %v7836
  %v7865 = vpack.c.b16 %v7839, %v7838
  %v7866 = vpack.c.b16 %v7841, %v7840
  %v7867 = vpack.c.b16 %v7843, %v7842
  %v7868 = vpack.c.b16 %v7845, %v7844
  %v7869 = vpack.c.b16 %v7847, %v7846
  %v7870 = vpack.c.b16 %v7849, %v7848
  %v7871 = vpack.c.b16 %v7851, %v7850
  %v7872 = vpack.c.b16 %v7853, %v7852
  %v7873 = vpack.c.b16 %v7855, %v7854
  %v7874 = vpack.c.b16 %v7857, %v7856
  %v7875 = vpack.c.b16 %v7859, %v7858
  %7892 = vmatprep.subr.bf16.mxu0 0
  %7893 = vmatpush1.bf16.msra.mxu0 %v7867
  %7894 = vmatprep.subr.bf16.mxu0 0
  %7895 = vmatpush1.bf16.msra.mxu0 %v7866
  %7896 = vmatprep.subr.bf16.mxu0 0
  %7897 = vmatpush1.bf16.msra.mxu0 %v7865
  %7898 = vmatprep.subr.bf16.mxu0 0
  %7899 = vmatpush1.bf16.msra.mxu0 %v7864
  %7900 = vmatprep.subr.bf16.mxu0 0
  %7901 = vmatpush1.bf16.msra.mxu0 %v7863
  %7902 = vmatprep.subr.bf16.mxu0 0
  %7903 = vmatpush1.bf16.msra.mxu0 %v7862
  %7904 = vmatprep.subr.bf16.mxu0 0
  %7905 = vmatpush1.bf16.msra.mxu0 %v7861
  %7906 = vmatprep.subr.bf16.mxu0 0
  %7907 = vmatpush1.bf16.msra.mxu0 %v7860
  %7908 = vmatprep.subr.bf16.mxu0 0
  %7909 = vmatpush2.bf16.msra.mxu0 %v7875
  %7910 = vmatprep.subr.bf16.mxu0 0
  %7911 = vmatpush2.bf16.msra.mxu0 %v7874
  %7912 = vmatprep.subr.bf16.mxu0 0
  %7913 = vmatpush2.bf16.msra.mxu0 %v7873
  %7914 = vmatprep.subr.bf16.mxu0 0
  %7915 = vmatpush2.bf16.msra.mxu0 %v7872
  %7916 = vmatprep.subr.bf16.mxu0 0
  %7917 = vmatpush2.bf16.msra.mxu0 %v7871
  %7918 = vmatprep.subr.bf16.mxu0 0
  %7919 = vmatpush2.bf16.msra.mxu0 %v7870
  %7920 = vmatprep.subr.bf16.mxu0 0
  %7921 = vmatpush2.bf16.msra.mxu0 %v7869
  %7922 = vmatprep.subr.bf16.mxu0 0
  %7923 = vmatpush2.bf16.msra.mxu0 %v7868
  %7924 = vmatprep.mubr.bf16.mxu0 %v7750
  %7925 = vmatmul.mubr.bf16.gmra.mxu0 %v7749
  %v7926 = vpop.f32.mrf.mxu0
  %v7927 = vadd.f32 %v7794, %v7926
  %v7928 = vpop.f32.mrf.mxu0
  %v7929 = vpop.f32.mrf.mxu0
  %v7930 = vadd.f32 %v7794, %v7929
  %v7931 = vpop.f32.mrf.mxu0
  %7932 = vmatprep.mubr.bf16.mxu0 %v7752
  %7933 = vmatmul.mubr.bf16.gmra.mxu0 %v7751
  %v7934 = vpop.f32.mrf.mxu0
  %v7935 = vadd.f32 %v7794, %v7934
  %v7936 = vpop.f32.mrf.mxu0
  %v7937 = vpop.f32.mrf.mxu0
  %v7938 = vadd.f32 %v7794, %v7937
  %v7939 = vpop.f32.mrf.mxu0
  %7940 = vmatprep.mubr.bf16.mxu0 %v7754
  %7941 = vmatmul.mubr.bf16.gmra.mxu0 %v7753
  %v7942 = vpop.f32.mrf.mxu0
  %v7943 = vadd.f32 %v7794, %v7942
  %v7944 = vpop.f32.mrf.mxu0
  %v7945 = vpop.f32.mrf.mxu0
  %v7946 = vadd.f32 %v7794, %v7945
  %v7947 = vpop.f32.mrf.mxu0
  %7948 = vmatprep.mubr.bf16.mxu0 %v7756
  %7949 = vmatmul.mubr.bf16.gmra.mxu0 %v7755
  %v7950 = vpop.f32.mrf.mxu0
  %v7951 = vadd.f32 %v7794, %v7950
  %v7952 = vpop.f32.mrf.mxu0
  %v7953 = vpop.f32.mrf.mxu0
  %v7954 = vadd.f32 %v7794, %v7953
  %v7955 = vpop.f32.mrf.mxu0
  %7956 = vdwg.mxu0
  %v7957 = vtanh.pop %v7927
  %v7958 = vtanh.pop %v7930
  %v7959 = vtanh.pop %v7935
  %v7960 = vtanh.pop %v7938
  %v7961 = vtanh.pop %v7943
  %v7962 = vtanh.pop %v7946
  %v7963 = vtanh.pop %v7951
  %v7964 = vtanh.pop %v7954
  %7965 = vst.msk [vmem:[%s18] sm:$0xff] %vm4519, %v7957
  %7966 = vst.msk [vmem:[%s18 + $0x8] sm:$0xff] %vm4519, %v7958
  %7967 = vst.msk [vmem:[%s18 + $0x10] sm:$0xff] %vm4519, %v7959
  %7968 = vst.msk [vmem:[%s18 + $0x18] sm:$0xff] %vm4519, %v7960
  %7969 = vst.msk [vmem:[%s18 + $0x20] sm:$0xff] %vm4519, %v7961
  %7970 = vst.msk [vmem:[%s18 + $0x28] sm:$0xff] %vm4519, %v7962
  %7971 = vst.msk [vmem:[%s18 + $0x30] sm:$0xff] %vm4519, %v7963
  %7972 = vst.msk [vmem:[%s18 + $0x38] sm:$0xff] %vm4519, %v7964
  // Predicated region
  $region74: #{tpu_custom_call.1} parent=0 // pred_check
    _
  $region75: #{tpu_custom_call.1} parent=0 // pred_check_branch
    %7974 = sbr.rel (0) target = $region77
  $region76: #{tpu_custom_call.1} parent=0 // pred_region
    _
  $region77: #{tpu_custom_call.1} parent=0 // pred_fallthru
    _
  // Predicated region
  $region78: #{tpu_custom_call.1} parent=0 // pred_check
    _
  $region79: #{tpu_custom_call.1} parent=0 // pred_check_branch
    %7976 = sbr.rel (0) target = $region81
  $region80: #{tpu_custom_call.1} parent=0 // pred_region
    _
  $region81: #{tpu_custom_call.1} parent=0 // pred_fallthru
    _

</llo_original>
